<compile_context>
chip_gen: v7x
topology: tpu7x:2x2x1
jax: 0.10.0
libtpu: 0.0.40
codegen_flags: <defaults>
</compile_context>

<pallas_src>
import math

import numpy as np
import jax
import jax.numpy as jnp
from jax.experimental import pallas as pl
from jax.experimental.pallas import tpu as pltpu


SEG = 128          # lane-aligned segment width of one conv2 y-tap (120 live + 8 pad lanes)
K2 = 5 * SEG       # conv2 contraction dim


# --------------------------------- kernel ------------------------------------
def _make_kernel(batch, reps):
    B, R = batch, reps
    M = R * B
    f32 = jnp.float32

    def kernel(xrows_ref, w1e_ref, w1o_ref, b1_ref, m1_ref,
               w2e_ref, w2o_ref, b2_ref, m2e_ref, m2o_ref,
               m3_ref, fc1w_ref, fc1b_ref, m4_ref, fc2w_ref, fc2b_ref, avg_ref,
               o_ref,
               xm1_s, p1_s, lhs2_s, xm2_s):
        # ---- conv1 (shared by every MC replica): two Toeplitz matmuls whose column
        #      sets are the even/odd output columns -> the 2x2 W-pool is a plain max.
        #      rows = (b, y) [B*24], lanes = (x', c) [120]
        h1e = jnp.dot(xrows_ref[...], w1e_ref[...], preferred_element_type=f32) + b1_ref[...]
        h1o = jnp.dot(xrows_ref[...], w1o_ref[...], preferred_element_type=f32) + b1_ref[...]
        xm1_s[...] = jnp.maximum(h1e, h1o).reshape(B, 24, 120)
        # H-pool (strided sublane reads) + ReLU
        p1 = jnp.maximum(xm1_s[:, pl.ds(0, 12, stride=2), :],
                         xm1_s[:, pl.ds(1, 12, stride=2), :])
        p1_s[...] = jnp.maximum(p1, 0.0)                                   # [B,12,120]

        # ---- conv2 im2col rows [M*8, 640]: segment dy = p1[:, dy:dy+8, :], replicated
        #      across the R MC passes and multiplied by the host-windowed dropout(0.3)
        #      mask (inverted scaling already applied).  Pad lanes stay zero.
        lhs2_s[...] = jnp.zeros_like(lhs2_s)
        for dy in range(5):
            seg = p1_s[:, dy:dy + 8, :].reshape(1, B * 8, 120)
            seg = jnp.broadcast_to(seg, (R, B * 8, 120)).reshape(M * 8, 120)
            lhs2_s[:, dy * SEG:dy * SEG + 120] = (
                seg * m1_ref[:, dy * SEG:dy * SEG + 120])

        # ---- conv2: one big-K matmul per even/odd W column set
        #      rows = (m, y) [M*8], lanes = (x', c) [80]
        h2e = jnp.dot(lhs2_s[...], w2e_ref[...], preferred_element_type=f32) + b2_ref[...]
        h2o = jnp.dot(lhs2_s[...], w2o_ref[...], preferred_element_type=f32) + b2_ref[...]
        # dropout(0.5) BEFORE the pool, element-wise, as in the module
        h2e = h2e * m2e_ref[...]
        h2o = h2o * m2o_ref[...]
        xm2_s[...] = jnp.maximum(h2e, h2o).reshape(M, 8, 80)               # W-pooled

        # ---- H-pool + ReLU + dropout(0.3) + fc1 (4 accumulated K=80 matmuls)
        f = fc1b_ref[...]                                                  # [1,50]
        for yp in range(4):
            row = jnp.maximum(xm2_s[:, 2 * yp, :], xm2_s[:, 2 * yp + 1, :])   # [M,80]
            row = jnp.maximum(row, 0.0) * m3_ref[yp]
            f = f + jnp.dot(row, fc1w_ref[yp], preferred_element_type=f32)
        # fc1 ReLU + dropout(0.5)
        f = jnp.maximum(f, 0.0) * m4_ref[...]                              # [M,50]

        # ---- fc2 (50 -> 2) + softmax(dim=1)
        logits = jnp.dot(f, fc2w_ref[...], preferred_element_type=f32) + fc2b_ref[...]
        mx = jnp.max(logits, axis=-1, keepdims=True)
        e = jnp.exp(logits - mx)
        probs = e / jnp.sum(e, axis=-1, keepdims=True)                     # [M,2]

        # ---- Monte-Carlo mean over the R stochastic passes (tiny [B,M] matmul; kept
        #      instead of a reshape-based reduce for lowering robustness, ~4 KB)
        o_ref[...] = jnp.dot(avg_ref[...], probs, preferred_element_type=f32)

    return kernel


# --------------------------------- wrapper -----------------------------------
def net_forward(x_nchw, params, forward_passes=20, mode="mean", seed=0):
    """Pallas implementation of Net.forward (mode='mean' default, or 'point')."""
    f32 = jnp.float32
    B = int(x_nchw.shape[0])
    assert x_nchw.shape[1:] == (1, 28, 28), "Net expects [B,1,28,28] (MNIST-like)"

    use_dropout = (mode != "point")
    R = int(forward_passes) if use_dropout else 1
    M = R * B

    # -------- weights -> Toeplitz / lane-dense layouts (host-side numpy) --------
    w1 = np.asarray(params["w1"], np.float32)            # [10,1,5,5]
    b1 = np.asarray(params["b1"], np.float32)            # [10]
    w2 = np.asarray(params["w2"], np.float32)            # [20,10,5,5]
    b2 = np.asarray(params["b2"], np.float32)            # [20]

    # conv1: lhs row (b, y) = x[b, y:y+5, :] (lanes dy*28+xin); even/odd output columns
    # are separate weight column sets -> the W-pool becomes a plain elementwise max.
    w1e = np.zeros((140, 120), np.float32)
    w1o = np.zeros((140, 120), np.float32)
    for dy in range(5):
        for dx in range(5):
            for xp in range(12):
                w1e[dy * 28 + 2 * xp + dx, xp * 10:(xp + 1) * 10] = w1[:, 0, dy, dx]
                w1o[dy * 28 + 2 * xp + 1 + dx, xp * 10:(xp + 1) * 10] = w1[:, 0, dy, dx]
    b1t = np.tile(b1, 12)[None, :]                        # [1,120]

    # conv2: lhs row (m, y) = a1[m, y:y+5, :, :] with 128-aligned 120-wide y-tap segments.
    w2e = np.zeros((K2, 80), np.float32)
    w2o = np.zeros((K2, 80), np.float32)
    for dy in range(5):
        for dx in range(5):
            for xp in range(4):
                blk = w2[:, :, dy, dx].T                  # [10(cin), 20(cout)]
                re = dy * SEG + (2 * xp + dx) * 10
                ro = dy * SEG + (2 * xp + 1 + dx) * 10
                w2e[re:re + 10, xp * 20:(xp + 1) * 20] = blk
                w2o[ro:ro + 10, xp * 20:(xp + 1) * 20] = blk
    b2t = np.tile(b2, 4)[None, :]                         # [1,80]

    # fc1 weight: PyTorch view(-1,320) flattens (C=20,H=4,W=4); split per pooled-H row,
    # input lanes are (w, c).
    fc1w = np.transpose(np.asarray(params["fc1_w"], np.float32).reshape(50, 20, 4, 4),
                        (2, 3, 1, 0)).reshape(4, 80, 50)
    fc1b = np.asarray(params["fc1_b"], np.float32)[None, :]               # [1,50]
    fc2w = np.asarray(params["fc2_w"], np.float32).T                      # [50,2]
    fc2b = np.asarray(params["fc2_b"], np.float32)[None, :]               # [1,2]

    # -------- conv1 input slabs --------
    x_img = jnp.asarray(x_nchw, f32)[:, 0]                                # [B,28,28]
    x_rows = jnp.concatenate([x_img[:, dy:dy + 24, :] for dy in range(5)],
                             axis=-1).reshape(B * 24, 140)                # rows (b,y)

    # -------- host-generated inverted-dropout masks --------
    key = jax.random.PRNGKey(seed)
    k1, k2, k3, k4 = jax.random.split(key, 4)

    def mk(k, shape, p):
        if not use_dropout:
            return jnp.ones(shape, f32)
        keep = jax.random.bernoulli(k, 1.0 - p, shape)
        return keep.astype(f32) / (1.0 - p)

    # dropout(0.3) after pool1+relu, pre-windowed into the conv2 im2col layout
    # (every replicated copy of an activation carries the same mask value).
    mask1 = mk(k1, (R, B, 12, 12, 10), 0.3).reshape(R, B, 12, 120)
    segs = [jnp.pad(mask1[:, :, dy:dy + 8, :], ((0, 0), (0, 0), (0, 0), (0, SEG - 120)))
            for dy in range(5)]
    mask1rows = jnp.concatenate(segs, axis=-1).reshape(M * 8, K2)          # [M*8,640]

    # dropout(0.5) after conv2 (element-wise nn.Dropout), split into even/odd W columns.
    mask2 = mk(k2, (R, B, 8, 8, 20), 0.5)
    mask2e = mask2[:, :, :, 0::2, :].reshape(M * 8, 80)
    mask2o = mask2[:, :, :, 1::2, :].reshape(M * 8, 80)

    # dropout(0.3) after pool2+relu: one [M,80] slab per pooled-H position.
    mask3 = jnp.transpose(mk(k3, (R, B, 4, 4, 20), 0.3),
                          (2, 0, 1, 3, 4)).reshape(4, M, 80)
    # dropout(0.5) after fc1+relu
    mask4 = mk(k4, (R, B, 50), 0.5).reshape(M, 50)

    # MC-mean matrix: out[b] = (1/R) * sum_m [m % B == b] * probs[m]
    m_idx = jnp.arange(M)
    avgmat = (jnp.equal(m_idx[None, :] % B,
                        jnp.arange(B)[:, None]).astype(f32) / R)           # [B,M]

    operands = (x_rows, jnp.asarray(w1e), jnp.asarray(w1o), jnp.asarray(b1t), mask1rows,
                jnp.asarray(w2e), jnp.asarray(w2o), jnp.asarray(b2t), mask2e, mask2o,
                mask3, jnp.asarray(fc1w), jnp.asarray(fc1b), mask4,
                jnp.asarray(fc2w), jnp.asarray(fc2b), avgmat)

    kernel = _make_kernel(B, R)

    # Single invocation (no grid): the whole working set is a few MB of VMEM.
    # (On v7x, a CORE_PARALLEL replica axis could be added if B*forward_passes grows.)
    out = pl.pallas_call(
        kernel,
        out_shape=jax.ShapeDtypeStruct((B, 2), f32),
        scratch_shapes=[
            pltpu.VMEM((B, 24, 120), f32),     # conv1 W-pooled (strided H-pool reads)
            pltpu.VMEM((B, 12, 120), f32),     # pooled+ReLU conv1 output
            pltpu.VMEM((M * 8, K2), f32),      # conv2 im2col rows (replicated + masked)
            pltpu.VMEM((M, 8, 80), f32),       # conv2 W-pooled (per-H fc1 loop)
        ],
        compiler_params=pltpu.CompilerParams(vmem_limit_bytes=32 * 1024 * 1024),
    )(*operands)
    return out                                  # [B, 2]


# ------------------------- deterministic parameter init ----------------------
def init_params(key):
    ks = jax.random.split(key, 8)

    def u(k, shape, fan_in):
        b = 1.0 / math.sqrt(fan_in)
        return jax.random.uniform(k, shape, jnp.float32, -b, b)

    return {
        "w1": u(ks[0], (10, 1, 5, 5), 1 * 5 * 5),
        "b1": u(ks[1], (10,), 1 * 5 * 5),
        "w2": u(ks[2], (20, 10, 5, 5), 10 * 5 * 5),
        "b2": u(ks[3], (20,), 10 * 5 * 5),
        "fc1_w": u(ks[4], (50, 320), 320),
        "fc1_b": u(ks[5], (50,), 320),
        "fc2_w": u(ks[6], (2, 50), 50),
        "fc2_b": u(ks[7], (2,), 50),
    }


if __name__ == "__main__":
    root = jax.random.PRNGKey(0)
    kp, kx = jax.random.split(root)
    params = init_params(kp)
    x = jax.random.normal(kx, (2, 1, 28, 28), jnp.float32)   # NCHW, like PyTorch

    out = net_forward(x, params, forward_passes=20, mode="mean", seed=0)
    out = jax.block_until_ready(out)

    assert out.shape == (2, 2)
    assert bool(jnp.all(jnp.isfinite(out)))
    # mean of softmax outputs: each row sums to 1
    assert bool(jnp.allclose(out.sum(axis=-1), 1.0, atol=1e-4))
    print("KERNEL_OK")
</pallas_src>

<mosaic_0001>
module attributes {stable_mosaic.version = 11 : i64} {
  func.func @kernel(%arg0: memref<48x140xf32, #tpu.memory_space<vmem>>, %arg1: memref<140x120xf32, #tpu.memory_space<vmem>>, %arg2: memref<140x120xf32, #tpu.memory_space<vmem>>, %arg3: memref<1x120xf32, #tpu.memory_space<vmem>>, %arg4: memref<320x640xf32, #tpu.memory_space<vmem>>, %arg5: memref<640x80xf32, #tpu.memory_space<vmem>>, %arg6: memref<640x80xf32, #tpu.memory_space<vmem>>, %arg7: memref<1x80xf32, #tpu.memory_space<vmem>>, %arg8: memref<320x80xf32, #tpu.memory_space<vmem>>, %arg9: memref<320x80xf32, #tpu.memory_space<vmem>>, %arg10: memref<4x40x80xf32, #tpu.memory_space<vmem>>, %arg11: memref<4x80x50xf32, #tpu.memory_space<vmem>>, %arg12: memref<1x50xf32, #tpu.memory_space<vmem>>, %arg13: memref<40x50xf32, #tpu.memory_space<vmem>>, %arg14: memref<50x2xf32, #tpu.memory_space<vmem>>, %arg15: memref<1x2xf32, #tpu.memory_space<vmem>>, %arg16: memref<2x40xf32, #tpu.memory_space<vmem>>, %arg17: memref<2x2xf32, #tpu.memory_space<vmem>>, %arg18: memref<2x24x120xf32, #tpu.memory_space<vmem>>, %arg19: memref<2x12x120xf32, #tpu.memory_space<vmem>>, %arg20: memref<320x640xf32, #tpu.memory_space<vmem>>, %arg21: memref<40x8x80xf32, #tpu.memory_space<vmem>>) attributes {dimension_semantics = [], scalar_prefetch = 0 : i64, scratch_operands = 4 : i64, tpu.core_type = #tpu.core_type<tc>} {
    %c0 = arith.constant 0 : index
    %c0_0 = arith.constant 0 : index
    %0 = vector.load %arg0[%c0, %c0_0] : memref<48x140xf32, #tpu.memory_space<vmem>>, vector<48x140xf32>
    %c0_1 = arith.constant 0 : index
    %c0_2 = arith.constant 0 : index
    %1 = vector.load %arg1[%c0_1, %c0_2] : memref<140x120xf32, #tpu.memory_space<vmem>>, vector<140x120xf32>
    %cst = arith.constant dense<0.000000e+00> : vector<48x120xf32>
    %2 = tpu.matmul %0, %1, %cst {dimension_numbers = #tpu.dot_dimension_numbers<[1], [0], [0], [1], [0, 0, 1, 1], [], []>} : vector<48x140xf32>, vector<140x120xf32>, vector<48x120xf32> -> vector<48x120xf32>
    %c0_3 = arith.constant 0 : index
    %c0_4 = arith.constant 0 : index
    %3 = vector.load %arg3[%c0_3, %c0_4] : memref<1x120xf32, #tpu.memory_space<vmem>>, vector<1x120xf32>
    %4 = vector.broadcast %3 : vector<1x120xf32> to vector<48x120xf32>
    %5 = arith.addf %2, %4 : vector<48x120xf32>
    %c0_5 = arith.constant 0 : index
    %c0_6 = arith.constant 0 : index
    %6 = vector.load %arg0[%c0_5, %c0_6] : memref<48x140xf32, #tpu.memory_space<vmem>>, vector<48x140xf32>
    %c0_7 = arith.constant 0 : index
    %c0_8 = arith.constant 0 : index
    %7 = vector.load %arg2[%c0_7, %c0_8] : memref<140x120xf32, #tpu.memory_space<vmem>>, vector<140x120xf32>
    %cst_9 = arith.constant dense<0.000000e+00> : vector<48x120xf32>
    %8 = tpu.matmul %6, %7, %cst_9 {dimension_numbers = #tpu.dot_dimension_numbers<[1], [0], [0], [1], [0, 0, 1, 1], [], []>} : vector<48x140xf32>, vector<140x120xf32>, vector<48x120xf32> -> vector<48x120xf32>
    %c0_10 = arith.constant 0 : index
    %c0_11 = arith.constant 0 : index
    %9 = vector.load %arg3[%c0_10, %c0_11] : memref<1x120xf32, #tpu.memory_space<vmem>>, vector<1x120xf32>
    %10 = vector.broadcast %9 : vector<1x120xf32> to vector<48x120xf32>
    %11 = arith.addf %8, %10 : vector<48x120xf32>
    %12 = arith.maximumf %5, %11 : vector<48x120xf32>
    %13 = vector.shape_cast %12 : vector<48x120xf32> to vector<2x24x120xf32>
    %c0_12 = arith.constant 0 : index
    %c0_13 = arith.constant 0 : index
    %c0_14 = arith.constant 0 : index
    %14 = vector.load %arg18[%c0_12, %c0_13, %c0_14] : memref<2x24x120xf32, #tpu.memory_space<vmem>>, vector<2x24x120xf32>
    tpu.vector_store %arg18[%c0_12, %c0_13, %c0_14], %13 {strides = array<i32>} : memref<2x24x120xf32, #tpu.memory_space<vmem>>, vector<2x24x120xf32>,
    %c0_15 = arith.constant 0 : index
    %c0_16 = arith.constant 0 : index
    %c0_17 = arith.constant 0 : index
    %15 = tpu.strided_load %arg18[%c0_15, %c0_16, %c0_17] {strides = array<i32: 1, 2, 1>} : memref<2x24x120xf32, #tpu.memory_space<vmem>>, vector<2x12x120xf32>
    %c0_18 = arith.constant 0 : index
    %c1 = arith.constant 1 : index
    %c0_19 = arith.constant 0 : index
    %16 = tpu.strided_load %arg18[%c0_18, %c1, %c0_19] {strides = array<i32: 1, 2, 1>} : memref<2x24x120xf32, #tpu.memory_space<vmem>>, vector<2x12x120xf32>
    %17 = arith.maximumf %15, %16 : vector<2x12x120xf32>
    %cst_20 = arith.constant 0.000000e+00 : f32
    %18 = vector.broadcast %cst_20 : f32 to vector<2x12x120xf32>
    %19 = arith.maximumf %17, %18 : vector<2x12x120xf32>
    %c0_21 = arith.constant 0 : index
    %c0_22 = arith.constant 0 : index
    %c0_23 = arith.constant 0 : index
    %20 = vector.load %arg19[%c0_21, %c0_22, %c0_23] : memref<2x12x120xf32, #tpu.memory_space<vmem>>, vector<2x12x120xf32>
    tpu.vector_store %arg19[%c0_21, %c0_22, %c0_23], %19 {strides = array<i32>} : memref<2x12x120xf32, #tpu.memory_space<vmem>>, vector<2x12x120xf32>,
    %cst_24 = arith.constant 0.000000e+00 : f32
    %21 = vector.broadcast %cst_24 : f32 to vector<320x640xf32>
    %c0_25 = arith.constant 0 : index
    %c0_26 = arith.constant 0 : index
    %22 = vector.load %arg20[%c0_25, %c0_26] : memref<320x640xf32, #tpu.memory_space<vmem>>, vector<320x640xf32>
    tpu.vector_store %arg20[%c0_25, %c0_26], %21 {strides = array<i32>} : memref<320x640xf32, #tpu.memory_space<vmem>>, vector<320x640xf32>,
    %c0_27 = arith.constant 0 : index
    %c0_28 = arith.constant 0 : index
    %c0_29 = arith.constant 0 : index
    %23 = vector.load %arg19[%c0_27, %c0_28, %c0_29] : memref<2x12x120xf32, #tpu.memory_space<vmem>>, vector<2x8x120xf32>
    %24 = vector.shape_cast %23 : vector<2x8x120xf32> to vector<1x16x120xf32>
    %25 = vector.shape_cast %24 : vector<1x16x120xf32> to vector<1x16x120xf32>
    %26 = vector.broadcast %25 : vector<1x16x120xf32> to vector<20x16x120xf32>
    %27 = vector.shape_cast %26 : vector<20x16x120xf32> to vector<320x120xf32>
    %c0_30 = arith.constant 0 : index
    %c0_31 = arith.constant 0 : index
    %28 = vector.load %arg4[%c0_30, %c0_31] : memref<320x640xf32, #tpu.memory_space<vmem>>, vector<320x120xf32>
    %29 = arith.mulf %27, %28 : vector<320x120xf32>
    %c0_32 = arith.constant 0 : index
    %c0_33 = arith.constant 0 : index
    %30 = vector.load %arg20[%c0_32, %c0_33] : memref<320x640xf32, #tpu.memory_space<vmem>>, vector<320x120xf32>
    tpu.vector_store %arg20[%c0_32, %c0_33], %29 {strides = array<i32>} : memref<320x640xf32, #tpu.memory_space<vmem>>, vector<320x120xf32>,
    %c0_34 = arith.constant 0 : index
    %c1_35 = arith.constant 1 : index
    %c0_36 = arith.constant 0 : index
    %31 = vector.load %arg19[%c0_34, %c1_35, %c0_36] : memref<2x12x120xf32, #tpu.memory_space<vmem>>, vector<2x8x120xf32>
    %32 = vector.shape_cast %31 : vector<2x8x120xf32> to vector<1x16x120xf32>
    %33 = vector.shape_cast %32 : vector<1x16x120xf32> to vector<1x16x120xf32>
    %34 = vector.broadcast %33 : vector<1x16x120xf32> to vector<20x16x120xf32>
    %35 = vector.shape_cast %34 : vector<20x16x120xf32> to vector<320x120xf32>
    %c0_37 = arith.constant 0 : index
    %c128 = arith.constant 128 : index
    %36 = vector.load %arg4[%c0_37, %c128] : memref<320x640xf32, #tpu.memory_space<vmem>>, vector<320x120xf32>
    %37 = arith.mulf %35, %36 : vector<320x120xf32>
    %c0_38 = arith.constant 0 : index
    %c128_39 = arith.constant 128 : index
    %38 = vector.load %arg20[%c0_38, %c128_39] : memref<320x640xf32, #tpu.memory_space<vmem>>, vector<320x120xf32>
    tpu.vector_store %arg20[%c0_38, %c128_39], %37 {strides = array<i32>} : memref<320x640xf32, #tpu.memory_space<vmem>>, vector<320x120xf32>,
    %c0_40 = arith.constant 0 : index
    %c2 = arith.constant 2 : index
    %c0_41 = arith.constant 0 : index
    %39 = vector.load %arg19[%c0_40, %c2, %c0_41] : memref<2x12x120xf32, #tpu.memory_space<vmem>>, vector<2x8x120xf32>
    %40 = vector.shape_cast %39 : vector<2x8x120xf32> to vector<1x16x120xf32>
    %41 = vector.shape_cast %40 : vector<1x16x120xf32> to vector<1x16x120xf32>
    %42 = vector.broadcast %41 : vector<1x16x120xf32> to vector<20x16x120xf32>
    %43 = vector.shape_cast %42 : vector<20x16x120xf32> to vector<320x120xf32>
    %c0_42 = arith.constant 0 : index
    %c256 = arith.constant 256 : index
    %44 = vector.load %arg4[%c0_42, %c256] : memref<320x640xf32, #tpu.memory_space<vmem>>, vector<320x120xf32>
    %45 = arith.mulf %43, %44 : vector<320x120xf32>
    %c0_43 = arith.constant 0 : index
    %c256_44 = arith.constant 256 : index
    %46 = vector.load %arg20[%c0_43, %c256_44] : memref<320x640xf32, #tpu.memory_space<vmem>>, vector<320x120xf32>
    tpu.vector_store %arg20[%c0_43, %c256_44], %45 {strides = array<i32>} : memref<320x640xf32, #tpu.memory_space<vmem>>, vector<320x120xf32>,
    %c0_45 = arith.constant 0 : index
    %c3 = arith.constant 3 : index
    %c0_46 = arith.constant 0 : index
    %47 = vector.load %arg19[%c0_45, %c3, %c0_46] : memref<2x12x120xf32, #tpu.memory_space<vmem>>, vector<2x8x120xf32>
    %48 = vector.shape_cast %47 : vector<2x8x120xf32> to vector<1x16x120xf32>
    %49 = vector.shape_cast %48 : vector<1x16x120xf32> to vector<1x16x120xf32>
    %50 = vector.broadcast %49 : vector<1x16x120xf32> to vector<20x16x120xf32>
    %51 = vector.shape_cast %50 : vector<20x16x120xf32> to vector<320x120xf32>
    %c0_47 = arith.constant 0 : index
    %c384 = arith.constant 384 : index
    %52 = vector.load %arg4[%c0_47, %c384] : memref<320x640xf32, #tpu.memory_space<vmem>>, vector<320x120xf32>
    %53 = arith.mulf %51, %52 : vector<320x120xf32>
    %c0_48 = arith.constant 0 : index
    %c384_49 = arith.constant 384 : index
    %54 = vector.load %arg20[%c0_48, %c384_49] : memref<320x640xf32, #tpu.memory_space<vmem>>, vector<320x120xf32>
    tpu.vector_store %arg20[%c0_48, %c384_49], %53 {strides = array<i32>} : memref<320x640xf32, #tpu.memory_space<vmem>>, vector<320x120xf32>,
    %c0_50 = arith.constant 0 : index
    %c4 = arith.constant 4 : index
    %c0_51 = arith.constant 0 : index
    %55 = vector.load %arg19[%c0_50, %c4, %c0_51] : memref<2x12x120xf32, #tpu.memory_space<vmem>>, vector<2x8x120xf32>
    %56 = vector.shape_cast %55 : vector<2x8x120xf32> to vector<1x16x120xf32>
    %57 = vector.shape_cast %56 : vector<1x16x120xf32> to vector<1x16x120xf32>
    %58 = vector.broadcast %57 : vector<1x16x120xf32> to vector<20x16x120xf32>
    %59 = vector.shape_cast %58 : vector<20x16x120xf32> to vector<320x120xf32>
    %c0_52 = arith.constant 0 : index
    %c512 = arith.constant 512 : index
    %60 = vector.load %arg4[%c0_52, %c512] : memref<320x640xf32, #tpu.memory_space<vmem>>, vector<320x120xf32>
    %61 = arith.mulf %59, %60 : vector<320x120xf32>
    %c0_53 = arith.constant 0 : index
    %c512_54 = arith.constant 512 : index
    %62 = vector.load %arg20[%c0_53, %c512_54] : memref<320x640xf32, #tpu.memory_space<vmem>>, vector<320x120xf32>
    tpu.vector_store %arg20[%c0_53, %c512_54], %61 {strides = array<i32>} : memref<320x640xf32, #tpu.memory_space<vmem>>, vector<320x120xf32>,
    %c0_55 = arith.constant 0 : index
    %c0_56 = arith.constant 0 : index
    %63 = vector.load %arg20[%c0_55, %c0_56] : memref<320x640xf32, #tpu.memory_space<vmem>>, vector<320x640xf32>
    %c0_57 = arith.constant 0 : index
    %c0_58 = arith.constant 0 : index
    %64 = vector.load %arg5[%c0_57, %c0_58] : memref<640x80xf32, #tpu.memory_space<vmem>>, vector<640x80xf32>
    %cst_59 = arith.constant dense<0.000000e+00> : vector<320x80xf32>
    %65 = tpu.matmul %63, %64, %cst_59 {dimension_numbers = #tpu.dot_dimension_numbers<[1], [0], [0], [1], [0, 0, 1, 1], [], []>} : vector<320x640xf32>, vector<640x80xf32>, vector<320x80xf32> -> vector<320x80xf32>
    %c0_60 = arith.constant 0 : index
    %c0_61 = arith.constant 0 : index
    %66 = vector.load %arg7[%c0_60, %c0_61] : memref<1x80xf32, #tpu.memory_space<vmem>>, vector<1x80xf32>
    %67 = vector.broadcast %66 : vector<1x80xf32> to vector<320x80xf32>
    %68 = arith.addf %65, %67 : vector<320x80xf32>
    %c0_62 = arith.constant 0 : index
    %c0_63 = arith.constant 0 : index
    %69 = vector.load %arg20[%c0_62, %c0_63] : memref<320x640xf32, #tpu.memory_space<vmem>>, vector<320x640xf32>
    %c0_64 = arith.constant 0 : index
    %c0_65 = arith.constant 0 : index
    %70 = vector.load %arg6[%c0_64, %c0_65] : memref<640x80xf32, #tpu.memory_space<vmem>>, vector<640x80xf32>
    %cst_66 = arith.constant dense<0.000000e+00> : vector<320x80xf32>
    %71 = tpu.matmul %69, %70, %cst_66 {dimension_numbers = #tpu.dot_dimension_numbers<[1], [0], [0], [1], [0, 0, 1, 1], [], []>} : vector<320x640xf32>, vector<640x80xf32>, vector<320x80xf32> -> vector<320x80xf32>
    %c0_67 = arith.constant 0 : index
    %c0_68 = arith.constant 0 : index
    %72 = vector.load %arg7[%c0_67, %c0_68] : memref<1x80xf32, #tpu.memory_space<vmem>>, vector<1x80xf32>
    %73 = vector.broadcast %72 : vector<1x80xf32> to vector<320x80xf32>
    %74 = arith.addf %71, %73 : vector<320x80xf32>
    %c0_69 = arith.constant 0 : index
    %c0_70 = arith.constant 0 : index
    %75 = vector.load %arg8[%c0_69, %c0_70] : memref<320x80xf32, #tpu.memory_space<vmem>>, vector<320x80xf32>
    %76 = arith.mulf %68, %75 : vector<320x80xf32>
    %c0_71 = arith.constant 0 : index
    %c0_72 = arith.constant 0 : index
    %77 = vector.load %arg9[%c0_71, %c0_72] : memref<320x80xf32, #tpu.memory_space<vmem>>, vector<320x80xf32>
    %78 = arith.mulf %74, %77 : vector<320x80xf32>
    %79 = arith.maximumf %76, %78 : vector<320x80xf32>
    %80 = vector.shape_cast %79 : vector<320x80xf32> to vector<40x8x80xf32>
    %c0_73 = arith.constant 0 : index
    %c0_74 = arith.constant 0 : index
    %c0_75 = arith.constant 0 : index
    %81 = vector.load %arg21[%c0_73, %c0_74, %c0_75] : memref<40x8x80xf32, #tpu.memory_space<vmem>>, vector<40x8x80xf32>
    tpu.vector_store %arg21[%c0_73, %c0_74, %c0_75], %80 {strides = array<i32>} : memref<40x8x80xf32, #tpu.memory_space<vmem>>, vector<40x8x80xf32>,
    %c0_76 = arith.constant 0 : index
    %c0_77 = arith.constant 0 : index
    %82 = vector.load %arg12[%c0_76, %c0_77] : memref<1x50xf32, #tpu.memory_space<vmem>>, vector<1x50xf32>
    %c0_78 = arith.constant 0 : index
    %c0_79 = arith.constant 0 : index
    %c0_80 = arith.constant 0 : index
    %83 = vector.load %arg21[%c0_78, %c0_79, %c0_80] : memref<40x8x80xf32, #tpu.memory_space<vmem>>, vector<40x1x80xf32>
    %84 = vector.shape_cast %83 : vector<40x1x80xf32> to vector<40x80xf32>
    %c0_81 = arith.constant 0 : index
    %c1_82 = arith.constant 1 : index
    %c0_83 = arith.constant 0 : index
    %85 = vector.load %arg21[%c0_81, %c1_82, %c0_83] : memref<40x8x80xf32, #tpu.memory_space<vmem>>, vector<40x1x80xf32>
    %86 = vector.shape_cast %85 : vector<40x1x80xf32> to vector<40x80xf32>
    %87 = arith.maximumf %84, %86 : vector<40x80xf32>
    %cst_84 = arith.constant 0.000000e+00 : f32
    %88 = vector.broadcast %cst_84 : f32 to vector<40x80xf32>
    %89 = arith.maximumf %87, %88 : vector<40x80xf32>
    %c0_85 = arith.constant 0 : index
    %c0_86 = arith.constant 0 : index
    %c0_87 = arith.constant 0 : index
    %90 = vector.load %arg10[%c0_85, %c0_86, %c0_87] : memref<4x40x80xf32, #tpu.memory_space<vmem>>, vector<1x40x80xf32>
    %91 = vector.shape_cast %90 : vector<1x40x80xf32> to vector<40x80xf32>
    %92 = arith.mulf %89, %91 : vector<40x80xf32>
    %c0_88 = arith.constant 0 : index
    %c0_89 = arith.constant 0 : index
    %c0_90 = arith.constant 0 : index
    %93 = vector.load %arg11[%c0_88, %c0_89, %c0_90] : memref<4x80x50xf32, #tpu.memory_space<vmem>>, vector<1x80x50xf32>
    %94 = vector.shape_cast %93 : vector<1x80x50xf32> to vector<80x50xf32>
    %cst_91 = arith.constant dense<0.000000e+00> : vector<40x50xf32>
    %95 = tpu.matmul %92, %94, %cst_91 {dimension_numbers = #tpu.dot_dimension_numbers<[1], [0], [0], [1], [0, 0, 1, 1], [], []>} : vector<40x80xf32>, vector<80x50xf32>, vector<40x50xf32> -> vector<40x50xf32>
    %96 = vector.broadcast %82 : vector<1x50xf32> to vector<40x50xf32>
    %97 = arith.addf %96, %95 : vector<40x50xf32>
    %c0_92 = arith.constant 0 : index
    %c2_93 = arith.constant 2 : index
    %c0_94 = arith.constant 0 : index
    %98 = vector.load %arg21[%c0_92, %c2_93, %c0_94] : memref<40x8x80xf32, #tpu.memory_space<vmem>>, vector<40x1x80xf32>
    %99 = vector.shape_cast %98 : vector<40x1x80xf32> to vector<40x80xf32>
    %c0_95 = arith.constant 0 : index
    %c3_96 = arith.constant 3 : index
    %c0_97 = arith.constant 0 : index
    %100 = vector.load %arg21[%c0_95, %c3_96, %c0_97] : memref<40x8x80xf32, #tpu.memory_space<vmem>>, vector<40x1x80xf32>
    %101 = vector.shape_cast %100 : vector<40x1x80xf32> to vector<40x80xf32>
    %102 = arith.maximumf %99, %101 : vector<40x80xf32>
    %cst_98 = arith.constant 0.000000e+00 : f32
    %103 = vector.broadcast %cst_98 : f32 to vector<40x80xf32>
    %104 = arith.maximumf %102, %103 : vector<40x80xf32>
    %c1_99 = arith.constant 1 : index
    %c0_100 = arith.constant 0 : index
    %c0_101 = arith.constant 0 : index
    %105 = vector.load %arg10[%c1_99, %c0_100, %c0_101] : memref<4x40x80xf32, #tpu.memory_space<vmem>>, vector<1x40x80xf32>
    %106 = vector.shape_cast %105 : vector<1x40x80xf32> to vector<40x80xf32>
    %107 = arith.mulf %104, %106 : vector<40x80xf32>
    %c1_102 = arith.constant 1 : index
    %c0_103 = arith.constant 0 : index
    %c0_104 = arith.constant 0 : index
    %108 = vector.load %arg11[%c1_102, %c0_103, %c0_104] : memref<4x80x50xf32, #tpu.memory_space<vmem>>, vector<1x80x50xf32>
    %109 = vector.shape_cast %108 : vector<1x80x50xf32> to vector<80x50xf32>
    %cst_105 = arith.constant dense<0.000000e+00> : vector<40x50xf32>
    %110 = tpu.matmul %107, %109, %cst_105 {dimension_numbers = #tpu.dot_dimension_numbers<[1], [0], [0], [1], [0, 0, 1, 1], [], []>} : vector<40x80xf32>, vector<80x50xf32>, vector<40x50xf32> -> vector<40x50xf32>
    %111 = arith.addf %97, %110 : vector<40x50xf32>
    %c0_106 = arith.constant 0 : index
    %c4_107 = arith.constant 4 : index
    %c0_108 = arith.constant 0 : index
    %112 = vector.load %arg21[%c0_106, %c4_107, %c0_108] : memref<40x8x80xf32, #tpu.memory_space<vmem>>, vector<40x1x80xf32>
    %113 = vector.shape_cast %112 : vector<40x1x80xf32> to vector<40x80xf32>
    %c0_109 = arith.constant 0 : index
    %c5 = arith.constant 5 : index
    %c0_110 = arith.constant 0 : index
    %114 = vector.load %arg21[%c0_109, %c5, %c0_110] : memref<40x8x80xf32, #tpu.memory_space<vmem>>, vector<40x1x80xf32>
    %115 = vector.shape_cast %114 : vector<40x1x80xf32> to vector<40x80xf32>
    %116 = arith.maximumf %113, %115 : vector<40x80xf32>
    %cst_111 = arith.constant 0.000000e+00 : f32
    %117 = vector.broadcast %cst_111 : f32 to vector<40x80xf32>
    %118 = arith.maximumf %116, %117 : vector<40x80xf32>
    %c2_112 = arith.constant 2 : index
    %c0_113 = arith.constant 0 : index
    %c0_114 = arith.constant 0 : index
    %119 = vector.load %arg10[%c2_112, %c0_113, %c0_114] : memref<4x40x80xf32, #tpu.memory_space<vmem>>, vector<1x40x80xf32>
    %120 = vector.shape_cast %119 : vector<1x40x80xf32> to vector<40x80xf32>
    %121 = arith.mulf %118, %120 : vector<40x80xf32>
    %c2_115 = arith.constant 2 : index
    %c0_116 = arith.constant 0 : index
    %c0_117 = arith.constant 0 : index
    %122 = vector.load %arg11[%c2_115, %c0_116, %c0_117] : memref<4x80x50xf32, #tpu.memory_space<vmem>>, vector<1x80x50xf32>
    %123 = vector.shape_cast %122 : vector<1x80x50xf32> to vector<80x50xf32>
    %cst_118 = arith.constant dense<0.000000e+00> : vector<40x50xf32>
    %124 = tpu.matmul %121, %123, %cst_118 {dimension_numbers = #tpu.dot_dimension_numbers<[1], [0], [0], [1], [0, 0, 1, 1], [], []>} : vector<40x80xf32>, vector<80x50xf32>, vector<40x50xf32> -> vector<40x50xf32>
    %125 = arith.addf %111, %124 : vector<40x50xf32>
    %c0_119 = arith.constant 0 : index
    %c6 = arith.constant 6 : index
    %c0_120 = arith.constant 0 : index
    %126 = vector.load %arg21[%c0_119, %c6, %c0_120] : memref<40x8x80xf32, #tpu.memory_space<vmem>>, vector<40x1x80xf32>
    %127 = vector.shape_cast %126 : vector<40x1x80xf32> to vector<40x80xf32>
    %c0_121 = arith.constant 0 : index
    %c7 = arith.constant 7 : index
    %c0_122 = arith.constant 0 : index
    %128 = vector.load %arg21[%c0_121, %c7, %c0_122] : memref<40x8x80xf32, #tpu.memory_space<vmem>>, vector<40x1x80xf32>
    %129 = vector.shape_cast %128 : vector<40x1x80xf32> to vector<40x80xf32>
    %130 = arith.maximumf %127, %129 : vector<40x80xf32>
    %cst_123 = arith.constant 0.000000e+00 : f32
    %131 = vector.broadcast %cst_123 : f32 to vector<40x80xf32>
    %132 = arith.maximumf %130, %131 : vector<40x80xf32>
    %c3_124 = arith.constant 3 : index
    %c0_125 = arith.constant 0 : index
    %c0_126 = arith.constant 0 : index
    %133 = vector.load %arg10[%c3_124, %c0_125, %c0_126] : memref<4x40x80xf32, #tpu.memory_space<vmem>>, vector<1x40x80xf32>
    %134 = vector.shape_cast %133 : vector<1x40x80xf32> to vector<40x80xf32>
    %135 = arith.mulf %132, %134 : vector<40x80xf32>
    %c3_127 = arith.constant 3 : index
    %c0_128 = arith.constant 0 : index
    %c0_129 = arith.constant 0 : index
    %136 = vector.load %arg11[%c3_127, %c0_128, %c0_129] : memref<4x80x50xf32, #tpu.memory_space<vmem>>, vector<1x80x50xf32>
    %137 = vector.shape_cast %136 : vector<1x80x50xf32> to vector<80x50xf32>
    %cst_130 = arith.constant dense<0.000000e+00> : vector<40x50xf32>
    %138 = tpu.matmul %135, %137, %cst_130 {dimension_numbers = #tpu.dot_dimension_numbers<[1], [0], [0], [1], [0, 0, 1, 1], [], []>} : vector<40x80xf32>, vector<80x50xf32>, vector<40x50xf32> -> vector<40x50xf32>
    %139 = arith.addf %125, %138 : vector<40x50xf32>
    %cst_131 = arith.constant 0.000000e+00 : f32
    %140 = vector.broadcast %cst_131 : f32 to vector<40x50xf32>
    %141 = arith.maximumf %139, %140 : vector<40x50xf32>
    %c0_132 = arith.constant 0 : index
    %c0_133 = arith.constant 0 : index
    %142 = vector.load %arg13[%c0_132, %c0_133] : memref<40x50xf32, #tpu.memory_space<vmem>>, vector<40x50xf32>
    %143 = arith.mulf %141, %142 : vector<40x50xf32>
    %c0_134 = arith.constant 0 : index
    %c0_135 = arith.constant 0 : index
    %144 = vector.load %arg14[%c0_134, %c0_135] : memref<50x2xf32, #tpu.memory_space<vmem>>, vector<50x2xf32>
    %cst_136 = arith.constant dense<0.000000e+00> : vector<40x2xf32>
    %145 = tpu.matmul %143, %144, %cst_136 {dimension_numbers = #tpu.dot_dimension_numbers<[1], [0], [0], [1], [0, 0, 1, 1], [], []>} : vector<40x50xf32>, vector<50x2xf32>, vector<40x2xf32> -> vector<40x2xf32>
    %c0_137 = arith.constant 0 : index
    %c0_138 = arith.constant 0 : index
    %146 = vector.load %arg15[%c0_137, %c0_138] : memref<1x2xf32, #tpu.memory_space<vmem>>, vector<1x2xf32>
    %147 = vector.broadcast %146 : vector<1x2xf32> to vector<40x2xf32>
    %148 = arith.addf %145, %147 : vector<40x2xf32>
    %cst_139 = arith.constant dense<0xFF800000> : vector<40xf32>
    %149 = vector.multi_reduction <maximumf>, %148, %cst_139 [1] : vector<40x2xf32> to vector<40xf32>
    %150 = vector.shape_cast %149 : vector<40xf32> to vector<40x1xf32>
    %151 = vector.broadcast %150 : vector<40x1xf32> to vector<40x2xf32>
    %152 = arith.subf %148, %151 : vector<40x2xf32>
    %153 = math.exp %152 : vector<40x2xf32>
    %cst_140 = arith.constant dense<0.000000e+00> : vector<40xf32>
    %154 = vector.multi_reduction <add>, %153, %cst_140 [1] : vector<40x2xf32> to vector<40xf32>
    %155 = vector.shape_cast %154 : vector<40xf32> to vector<40x1xf32>
    %156 = vector.broadcast %155 : vector<40x1xf32> to vector<40x2xf32>
    %157 = arith.divf %153, %156 : vector<40x2xf32>
    %c0_141 = arith.constant 0 : index
    %c0_142 = arith.constant 0 : index
    %158 = vector.load %arg16[%c0_141, %c0_142] : memref<2x40xf32, #tpu.memory_space<vmem>>, vector<2x40xf32>
    %cst_143 = arith.constant dense<0.000000e+00> : vector<2x2xf32>
    %159 = tpu.matmul %158, %157, %cst_143 {dimension_numbers = #tpu.dot_dimension_numbers<[1], [0], [0], [1], [0, 0, 1, 1], [], []>} : vector<2x40xf32>, vector<40x2xf32>, vector<2x2xf32> -> vector<2x2xf32>
    %c0_144 = arith.constant 0 : index
    %c0_145 = arith.constant 0 : index
    %160 = vector.load %arg17[%c0_144, %c0_145] : memref<2x2xf32, #tpu.memory_space<vmem>>, vector<2x2xf32>
    tpu.vector_store %arg17[%c0_144, %c0_145], %159 {strides = array<i32>} : memref<2x2xf32, #tpu.memory_space<vmem>>, vector<2x2xf32>,
    return
  }
}

</mosaic_0001>

<llo_original>
// kernel: tpu_custom_call.1
$region0: #{tpu_custom_call.1}
  #allocation0 [shape = 'u32[]', space=smem, size = 0x4, offset = 0x4, fixed_abs, tag = 'smem constant byte address 0x4 - core index']
  #allocation1 [shape = 'u32[144,128]{1,0:T(1,128)}', space=vmem, size = 0x12000, scoped, tag = 'internal scratch']
  #allocation2 [shape = 'f32[2,24,120]{2,1,0:T(8,128)}', space=vmem, size = 0x6000, scoped, tag = 'scratch operand']
  #allocation3 [shape = 'f32[2,12,120]{2,1,0:T(8,128)}', space=vmem, size = 0x4000, scoped, tag = 'scratch operand']
  #allocation4 [shape = 'f32[320,640]{1,0:T(8,128)}', space=vmem, size = 0xc8000, scoped, tag = 'scratch operand']
  #allocation5 [shape = 'f32[40,8,80]{2,1,0:T(8,128)}', space=vmem, size = 0x28000, scoped, tag = 'scratch operand']
  %s0 = inlined_call_operand.vmem [shape: f32[48,140], index: 0, kind: input, shape index: {}]
  %s1 = inlined_call_operand.vmem [shape: f32[140,120], index: 1, kind: input, shape index: {}]
  %s2 = inlined_call_operand.vmem [shape: f32[140,120], index: 2, kind: input, shape index: {}]
  %s3 = inlined_call_operand.vmem [shape: f32[1,120], index: 3, kind: input, shape index: {}]
  %s4 = inlined_call_operand.vmem [shape: f32[320,640], index: 4, kind: input, shape index: {}]
  %s5 = inlined_call_operand.vmem [shape: f32[640,80], index: 5, kind: input, shape index: {}]
  %s6 = inlined_call_operand.vmem [shape: f32[640,80], index: 6, kind: input, shape index: {}]
  %s7 = inlined_call_operand.vmem [shape: f32[1,80], index: 7, kind: input, shape index: {}]
  %s8 = inlined_call_operand.vmem [shape: f32[320,80], index: 8, kind: input, shape index: {}]
  %s9 = inlined_call_operand.vmem [shape: f32[320,80], index: 9, kind: input, shape index: {}]
  %s10 = inlined_call_operand.vmem [shape: f32[4,40,80], index: 10, kind: input, shape index: {}]
  %s11 = inlined_call_operand.vmem [shape: f32[4,80,50], index: 11, kind: input, shape index: {}]
  %s12 = inlined_call_operand.vmem [shape: f32[1,50], index: 12, kind: input, shape index: {}]
  %s13 = inlined_call_operand.vmem [shape: f32[40,50], index: 13, kind: input, shape index: {}]
  %s14 = inlined_call_operand.vmem [shape: f32[50,2], index: 14, kind: input, shape index: {}]
  %s15 = inlined_call_operand.vmem [shape: f32[1,2], index: 15, kind: input, shape index: {}]
  %s16 = inlined_call_operand.vmem [shape: f32[2,40], index: 16, kind: input, shape index: {}]
  %s17 = inlined_call_operand.hbm [shape: f32[2,2], index: 17, kind: output, shape index: {}]
  %s18 = sld [smem:[#allocation0]]
  $region78: #{tpu_custom_call.1} parent=0
    _
  %s20 = ssub.s32 1, %s18
  %s21 = scalar_select 0, %s20, %s18
  $region1: #{tpu_custom_call.1} parent=0
    #allocation6 [shape = 'u8[1024]{0}', space=vmem, size = 0x400, scoped, tag = 'output window, operand 0, single buffered']
    #allocation7 [shape = 's32[1]{0}', space=sflag, size = 0x4, scoped, tag = 'scoped memory for tpu_custom_call.1']
    %22 = vsyncpa [#allocation7], 0
    // Predicated region
    $region2: #{tpu_custom_call.1} parent=1 // pred_check
      _
    $region3: #{tpu_custom_call.1} parent=1 // pred_check_branch
      %24 = sbr.rel (0) target = $region5
    $region4: #{tpu_custom_call.1} parent=1 // pred_region
      _
    $region5: #{tpu_custom_call.1} parent=1 // pred_fallthru
      _
    // Predicated region
    $region6: #{tpu_custom_call.1} parent=1 // pred_check
      _
    $region7: #{tpu_custom_call.1} parent=1 // pred_check_branch
      %26 = sbr.rel (0) target = $region9
    $region8: #{tpu_custom_call.1} parent=1 // pred_region
      _
    $region9: #{tpu_custom_call.1} parent=1 // pred_fallthru
      _
    // Predicated region
    $region10: #{tpu_custom_call.1} parent=1 // pred_check
      _
    $region11: #{tpu_custom_call.1} parent=1 // pred_check_branch
      %28 = sbr.rel (0) target = $region13
    $region12: #{tpu_custom_call.1} parent=1 // pred_region
      _
    $region13: #{tpu_custom_call.1} parent=1 // pred_fallthru
      _
    // Predicated region
    $region14: #{tpu_custom_call.1} parent=1 // pred_check
      _
    $region15: #{tpu_custom_call.1} parent=1 // pred_check_branch
      %30 = sbr.rel (0) target = $region17
    $region16: #{tpu_custom_call.1} parent=1 // pred_region
      _
    $region17: #{tpu_custom_call.1} parent=1 // pred_fallthru
      _
    // Predicated region
    $region18: #{tpu_custom_call.1} parent=1 // pred_check
      _
    $region19: #{tpu_custom_call.1} parent=1 // pred_check_branch
      %32 = sbr.rel (0) target = $region21
    $region20: #{tpu_custom_call.1} parent=1 // pred_region
      _
    $region21: #{tpu_custom_call.1} parent=1 // pred_fallthru
      _
    // Predicated region
    $region22: #{tpu_custom_call.1} parent=1 // pred_check
      _
    $region23: #{tpu_custom_call.1} parent=1 // pred_check_branch
      %34 = sbr.rel (0) target = $region25
    $region24: #{tpu_custom_call.1} parent=1 // pred_region
      _
    $region25: #{tpu_custom_call.1} parent=1 // pred_fallthru
      _
    // Predicated region
    $region26: #{tpu_custom_call.1} parent=1 // pred_check
      _
    $region27: #{tpu_custom_call.1} parent=1 // pred_check_branch
      %36 = sbr.rel (0) target = $region29
    $region28: #{tpu_custom_call.1} parent=1 // pred_region
      _
    $region29: #{tpu_custom_call.1} parent=1 // pred_fallthru
      _
    // Predicated region
    $region30: #{tpu_custom_call.1} parent=1 // pred_check
      _
    $region31: #{tpu_custom_call.1} parent=1 // pred_check_branch
      %38 = sbr.rel (0) target = $region33
    $region32: #{tpu_custom_call.1} parent=1 // pred_region
      _
    $region33: #{tpu_custom_call.1} parent=1 // pred_fallthru
      _
    // Predicated region
    $region34: #{tpu_custom_call.1} parent=1 // pred_check
      _
    $region35: #{tpu_custom_call.1} parent=1 // pred_check_branch
      %40 = sbr.rel (0) target = $region37
    $region36: #{tpu_custom_call.1} parent=1 // pred_region
      _
    $region37: #{tpu_custom_call.1} parent=1 // pred_fallthru
      _
    // Predicated region
    $region38: #{tpu_custom_call.1} parent=1 // pred_check
      _
    $region39: #{tpu_custom_call.1} parent=1 // pred_check_branch
      %42 = sbr.rel (0) target = $region41
    $region40: #{tpu_custom_call.1} parent=1 // pred_region
      _
    $region41: #{tpu_custom_call.1} parent=1 // pred_fallthru
      _
    // Predicated region
    $region42: #{tpu_custom_call.1} parent=1 // pred_check
      _
    $region43: #{tpu_custom_call.1} parent=1 // pred_check_branch
      %44 = sbr.rel (0) target = $region45
    $region44: #{tpu_custom_call.1} parent=1 // pred_region
      _
    $region45: #{tpu_custom_call.1} parent=1 // pred_fallthru
      _
    // Predicated region
    $region46: #{tpu_custom_call.1} parent=1 // pred_check
      _
    $region47: #{tpu_custom_call.1} parent=1 // pred_check_branch
      %46 = sbr.rel (0) target = $region49
    $region48: #{tpu_custom_call.1} parent=1 // pred_region
      _
    $region49: #{tpu_custom_call.1} parent=1 // pred_fallthru
      _
    // Predicated region
    $region50: #{tpu_custom_call.1} parent=1 // pred_check
      _
    $region51: #{tpu_custom_call.1} parent=1 // pred_check_branch
      %48 = sbr.rel (0) target = $region53
    $region52: #{tpu_custom_call.1} parent=1 // pred_region
      _
    $region53: #{tpu_custom_call.1} parent=1 // pred_fallthru
      _
    // Predicated region
    $region54: #{tpu_custom_call.1} parent=1 // pred_check
      _
    $region55: #{tpu_custom_call.1} parent=1 // pred_check_branch
      %50 = sbr.rel (0) target = $region57
    $region56: #{tpu_custom_call.1} parent=1 // pred_region
      _
    $region57: #{tpu_custom_call.1} parent=1 // pred_fallthru
      _
    // Predicated region
    $region58: #{tpu_custom_call.1} parent=1 // pred_check
      _
    $region59: #{tpu_custom_call.1} parent=1 // pred_check_branch
      %52 = sbr.rel (0) target = $region61
    $region60: #{tpu_custom_call.1} parent=1 // pred_region
      _
    $region61: #{tpu_custom_call.1} parent=1 // pred_fallthru
      _
    // Predicated region
    $region62: #{tpu_custom_call.1} parent=1 // pred_check
      _
    $region63: #{tpu_custom_call.1} parent=1 // pred_check_branch
      %54 = sbr.rel (0) target = $region65
    $region64: #{tpu_custom_call.1} parent=1 // pred_region
      _
    $region65: #{tpu_custom_call.1} parent=1 // pred_fallthru
      _
    // Predicated region
    $region66: #{tpu_custom_call.1} parent=1 // pred_check
      _
    $region67: #{tpu_custom_call.1} parent=1 // pred_check_branch
      %56 = sbr.rel (0) target = $region69
    $region68: #{tpu_custom_call.1} parent=1 // pred_region
      _
    $region69: #{tpu_custom_call.1} parent=1 // pred_fallthru
      _
    %v57 = vld [vmem:[%s0] sm:$0xff]
    %v58 = vld [vmem:[%s0 + $0x8] sm:$0xff]
    %v59 = vld [vmem:[%s0 + $0x10] sm:$0xff]
    %v60 = vld [vmem:[%s0 + $0x18] sm:$0xff]
    %v61 = vld [vmem:[%s0 + $0x20] sm:$0xff]
    %v62 = vld [vmem:[%s0 + $0x28] sm:$0xff]
    %v63 = vld [vmem:[%s0 + $0x30] sm:$0xff]
    %v64 = vld [vmem:[%s0 + $0x38] sm:$0xff]
    %v65 = vld [vmem:[%s0 + $0x40] sm:$0xff]
    %v66 = vld [vmem:[%s0 + $0x48] sm:$0xff]
    %v67 = vld [vmem:[%s0 + $0x50] sm:$0xff]
    %v68 = vld [vmem:[%s0 + $0x58] sm:$0xff]
    %v69 = vld [vmem:[%s1] sm:$0xff]
    %v70 = vld [vmem:[%s1 + $0x8] sm:$0xff]
    %v71 = vld [vmem:[%s1 + $0x10] sm:$0xff]
    %v72 = vld [vmem:[%s1 + $0x18] sm:$0xff]
    %v73 = vld [vmem:[%s1 + $0x20] sm:$0xff]
    %v74 = vld [vmem:[%s1 + $0x28] sm:$0xff]
    %v75 = vld [vmem:[%s1 + $0x30] sm:$0xff]
    %v76 = vld [vmem:[%s1 + $0x38] sm:$0xff]
    %v77 = vld [vmem:[%s1 + $0x40] sm:$0xff]
    %v78 = vld [vmem:[%s1 + $0x48] sm:$0xff]
    %v79 = vld [vmem:[%s1 + $0x50] sm:$0xff]
    %v80 = vld [vmem:[%s1 + $0x58] sm:$0xff]
    %v81 = vld [vmem:[%s1 + $0x60] sm:$0xff]
    %v82 = vld [vmem:[%s1 + $0x68] sm:$0xff]
    %v83 = vld [vmem:[%s1 + $0x70] sm:$0xff]
    %v84 = vld [vmem:[%s1 + $0x78] sm:$0xff]
    %v85 = vld [vmem:[%s1 + $0x80] sm:$0xff]
    %v86 = vld [vmem:[%s1 + $0x88] sm:$0xf]
    %v87 = vld [vmem:[%s3] sm:$0x1]
    %v89 = vlaneseq
    %v90 = vshrl.u32 %v89, 7
    %v91 = vsub.s32 0, %v90
    %v92 = vrot.slane %v87, %v91
    %vm94 = vcmask 97280
    %v96 = vsel %vm94, %v58, 0
    %v99 = vsel %vm94, %v60, 0
    %v102 = vsel %vm94, %v62, 0
    %v105 = vsel %vm94, %v64, 0
    %v108 = vsel %vm94, %v66, 0
    %v111 = vsel %vm94, %v68, 0
    %vm113 = vcmask 1043456
    %v115 = vsel %vm113, %v86, 0
    %117 = vmatprep.subr.mxu0 0.0
    %118 = vmatpush1.msra.mxu0 %v69
    %119 = vmatprep.subr.mxu0 0.0
    %120 = vmatpush1.msra.mxu0 %v70
    %121 = vmatprep.subr.mxu0 0.0
    %122 = vmatpush1.msra.mxu0 %v71
    %123 = vmatprep.subr.mxu0 0.0
    %124 = vmatpush1.msra.mxu0 %v72
    %125 = vmatprep.subr.mxu0 0.0
    %126 = vmatpush1.msra.mxu0 %v73
    %127 = vmatprep.subr.mxu0 0.0
    %128 = vmatpush1.msra.mxu0 %v74
    %129 = vmatprep.subr.mxu0 0.0
    %130 = vmatpush1.msra.mxu0 %v75
    %131 = vmatprep.subr.mxu0 0.0
    %132 = vmatpush1.msra.mxu0 %v76
    %133 = vmatprep.subr.mxu0 0.0
    %134 = vmatpush1.msra.mxu0 %v77
    %135 = vmatprep.subr.mxu0 0.0
    %136 = vmatpush1.msra.mxu0 %v78
    %137 = vmatprep.subr.mxu0 0.0
    %138 = vmatpush1.msra.mxu0 %v79
    %139 = vmatprep.subr.mxu0 0.0
    %140 = vmatpush1.msra.mxu0 %v80
    %141 = vmatprep.subr.mxu0 0.0
    %142 = vmatpush1.msra.mxu0 %v81
    %143 = vmatprep.subr.mxu0 0.0
    %144 = vmatpush1.msra.mxu0 %v82
    %145 = vmatprep.subr.mxu0 0.0
    %146 = vmatpush1.msra.mxu0 %v83
    %147 = vmatprep.subr.mxu0 0.0
    %148 = vmatpush1.msra.mxu0 %v84
    %149 = vmatprep.subr.mxu0 0.0
    %150 = vmatpush1.msra.mxu0 %v85
    %151 = vmatprep.subr.mxu0 0.0
    %152 = vmatpush1.msra.mxu0 %v115
    %153 = vmatprep.subr.mxu0 0.0
    %154 = vmatpush1.msra.mxu0 0.0
    %155 = vmatprep.subr.mxu0 0.0
    %156 = vmatpush1.msra.mxu0 0.0
    %157 = vmatprep.subr.mxu0 0.0
    %158 = vmatpush1.msra.mxu0 0.0
    %159 = vmatprep.subr.mxu0 0.0
    %160 = vmatpush1.msra.mxu0 0.0
    %161 = vmatprep.subr.mxu0 0.0
    %162 = vmatpush1.msra.mxu0 0.0
    %163 = vmatprep.subr.mxu0 0.0
    %164 = vmatpush1.msra.mxu0 0.0
    %165 = vmatprep.subr.mxu0 0.0
    %166 = vmatpush1.msra.mxu0 0.0
    %167 = vmatprep.subr.mxu0 0.0
    %168 = vmatpush1.msra.mxu0 0.0
    %169 = vmatprep.subr.mxu0 0.0
    %170 = vmatpush1.msra.mxu0 0.0
    %171 = vmatprep.subr.mxu0 0.0
    %172 = vmatpush1.msra.mxu0 0.0
    %173 = vmatprep.subr.mxu0 0.0
    %174 = vmatpush1.msra.mxu0 0.0
    %175 = vmatprep.subr.mxu0 0.0
    %176 = vmatpush1.msra.mxu0 0.0
    %177 = vmatprep.subr.mxu0 0.0
    %178 = vmatpush1.msra.mxu0 0.0
    %179 = vmatprep.subr.mxu0 0.0
    %180 = vmatpush1.msra.mxu0 0.0
    %181 = vmatprep.mubr.f32.mxu0 %v96
    %182 = vmatmul.mubr.f32.gmra.mrb[0].mxu0 %v57
    %v183 = vpop.f32.mrb[0].mxu0
    %v184 = vadd.f32 %v92, %v183
    %v185 = vpop.f32.mrb[0].mxu0
    %186 = vmatprep.mubr.f32.mxu0 %v99
    %187 = vmatmul.mubr.f32.gmra.mrb[0].mxu0 %v59
    %v188 = vpop.f32.mrb[0].mxu0
    %v189 = vadd.f32 %v92, %v188
    %v190 = vpop.f32.mrb[0].mxu0
    %191 = vmatprep.mubr.f32.mxu0 %v102
    %192 = vmatmul.mubr.f32.gmra.mrb[0].mxu0 %v61
    %v193 = vpop.f32.mrb[0].mxu0
    %v194 = vadd.f32 %v92, %v193
    %v195 = vpop.f32.mrb[0].mxu0
    %196 = vmatprep.mubr.f32.mxu0 %v105
    %197 = vmatmul.mubr.f32.gmra.mrb[0].mxu0 %v63
    %v198 = vpop.f32.mrb[0].mxu0
    %v199 = vadd.f32 %v92, %v198
    %v200 = vpop.f32.mrb[0].mxu0
    %201 = vmatprep.mubr.f32.mxu0 %v108
    %202 = vmatmul.mubr.f32.gmra.mrb[0].mxu0 %v65
    %v203 = vpop.f32.mrb[0].mxu0
    %v204 = vadd.f32 %v92, %v203
    %v205 = vpop.f32.mrb[0].mxu0
    %206 = vmatprep.mubr.f32.mxu0 %v111
    %207 = vmatmul.mubr.f32.gmra.mrb[0].mxu0 %v67
    %v208 = vpop.f32.mrb[0].mxu0
    %v209 = vadd.f32 %v92, %v208
    %v210 = vpop.f32.mrb[0].mxu0
    %211 = vdwg.mxu0
    %v212 = vld [vmem:[%s2] sm:$0xff]
    %v213 = vld [vmem:[%s2 + $0x8] sm:$0xff]
    %v214 = vld [vmem:[%s2 + $0x10] sm:$0xff]
    %v215 = vld [vmem:[%s2 + $0x18] sm:$0xff]
    %v216 = vld [vmem:[%s2 + $0x20] sm:$0xff]
    %v217 = vld [vmem:[%s2 + $0x28] sm:$0xff]
    %v218 = vld [vmem:[%s2 + $0x30] sm:$0xff]
    %v219 = vld [vmem:[%s2 + $0x38] sm:$0xff]
    %v220 = vld [vmem:[%s2 + $0x40] sm:$0xff]
    %v221 = vld [vmem:[%s2 + $0x48] sm:$0xff]
    %v222 = vld [vmem:[%s2 + $0x50] sm:$0xff]
    %v223 = vld [vmem:[%s2 + $0x58] sm:$0xff]
    %v224 = vld [vmem:[%s2 + $0x60] sm:$0xff]
    %v225 = vld [vmem:[%s2 + $0x68] sm:$0xff]
    %v226 = vld [vmem:[%s2 + $0x70] sm:$0xff]
    %v227 = vld [vmem:[%s2 + $0x78] sm:$0xff]
    %v228 = vld [vmem:[%s2 + $0x80] sm:$0xff]
    %v229 = vld [vmem:[%s2 + $0x88] sm:$0xf]
    %v231 = vsel %vm113, %v229, 0
    %233 = vmatprep.subr.mxu0 0.0
    %234 = vmatpush1.msra.mxu0 %v212
    %235 = vmatprep.subr.mxu0 0.0
    %236 = vmatpush1.msra.mxu0 %v213
    %237 = vmatprep.subr.mxu0 0.0
    %238 = vmatpush1.msra.mxu0 %v214
    %239 = vmatprep.subr.mxu0 0.0
    %240 = vmatpush1.msra.mxu0 %v215
    %241 = vmatprep.subr.mxu0 0.0
    %242 = vmatpush1.msra.mxu0 %v216
    %243 = vmatprep.subr.mxu0 0.0
    %244 = vmatpush1.msra.mxu0 %v217
    %245 = vmatprep.subr.mxu0 0.0
    %246 = vmatpush1.msra.mxu0 %v218
    %247 = vmatprep.subr.mxu0 0.0
    %248 = vmatpush1.msra.mxu0 %v219
    %249 = vmatprep.subr.mxu0 0.0
    %250 = vmatpush1.msra.mxu0 %v220
    %251 = vmatprep.subr.mxu0 0.0
    %252 = vmatpush1.msra.mxu0 %v221
    %253 = vmatprep.subr.mxu0 0.0
    %254 = vmatpush1.msra.mxu0 %v222
    %255 = vmatprep.subr.mxu0 0.0
    %256 = vmatpush1.msra.mxu0 %v223
    %257 = vmatprep.subr.mxu0 0.0
    %258 = vmatpush1.msra.mxu0 %v224
    %259 = vmatprep.subr.mxu0 0.0
    %260 = vmatpush1.msra.mxu0 %v225
    %261 = vmatprep.subr.mxu0 0.0
    %262 = vmatpush1.msra.mxu0 %v226
    %263 = vmatprep.subr.mxu0 0.0
    %264 = vmatpush1.msra.mxu0 %v227
    %265 = vmatprep.subr.mxu0 0.0
    %266 = vmatpush1.msra.mxu0 %v228
    %267 = vmatprep.subr.mxu0 0.0
    %268 = vmatpush1.msra.mxu0 %v231
    %269 = vmatprep.subr.mxu0 0.0
    %270 = vmatpush1.msra.mxu0 0.0
    %271 = vmatprep.subr.mxu0 0.0
    %272 = vmatpush1.msra.mxu0 0.0
    %273 = vmatprep.subr.mxu0 0.0
    %274 = vmatpush1.msra.mxu0 0.0
    %275 = vmatprep.subr.mxu0 0.0
    %276 = vmatpush1.msra.mxu0 0.0
    %277 = vmatprep.subr.mxu0 0.0
    %278 = vmatpush1.msra.mxu0 0.0
    %279 = vmatprep.subr.mxu0 0.0
    %280 = vmatpush1.msra.mxu0 0.0
    %281 = vmatprep.subr.mxu0 0.0
    %282 = vmatpush1.msra.mxu0 0.0
    %283 = vmatprep.subr.mxu0 0.0
    %284 = vmatpush1.msra.mxu0 0.0
    %285 = vmatprep.subr.mxu0 0.0
    %286 = vmatpush1.msra.mxu0 0.0
    %287 = vmatprep.subr.mxu0 0.0
    %288 = vmatpush1.msra.mxu0 0.0
    %289 = vmatprep.subr.mxu0 0.0
    %290 = vmatpush1.msra.mxu0 0.0
    %291 = vmatprep.subr.mxu0 0.0
    %292 = vmatpush1.msra.mxu0 0.0
    %293 = vmatprep.subr.mxu0 0.0
    %294 = vmatpush1.msra.mxu0 0.0
    %295 = vmatprep.subr.mxu0 0.0
    %296 = vmatpush1.msra.mxu0 0.0
    %297 = vmatprep.mubr.f32.mxu0 %v96
    %298 = vmatmul.mubr.f32.gmra.mrb[0].mxu0 %v57
    %v299 = vpop.f32.mrb[0].mxu0
    %v300 = vadd.f32 %v92, %v299
    %v301 = vpop.f32.mrb[0].mxu0
    %302 = vmatprep.mubr.f32.mxu0 %v99
    %303 = vmatmul.mubr.f32.gmra.mrb[0].mxu0 %v59
    %v304 = vpop.f32.mrb[0].mxu0
    %v305 = vadd.f32 %v92, %v304
    %v306 = vpop.f32.mrb[0].mxu0
    %307 = vmatprep.mubr.f32.mxu0 %v102
    %308 = vmatmul.mubr.f32.gmra.mrb[0].mxu0 %v61
    %v309 = vpop.f32.mrb[0].mxu0
    %v310 = vadd.f32 %v92, %v309
    %v311 = vpop.f32.mrb[0].mxu0
    %312 = vmatprep.mubr.f32.mxu0 %v105
    %313 = vmatmul.mubr.f32.gmra.mrb[0].mxu0 %v63
    %v314 = vpop.f32.mrb[0].mxu0
    %v315 = vadd.f32 %v92, %v314
    %v316 = vpop.f32.mrb[0].mxu0
    %317 = vmatprep.mubr.f32.mxu0 %v108
    %318 = vmatmul.mubr.f32.gmra.mrb[0].mxu0 %v65
    %v319 = vpop.f32.mrb[0].mxu0
    %v320 = vadd.f32 %v92, %v319
    %v321 = vpop.f32.mrb[0].mxu0
    %322 = vmatprep.mubr.f32.mxu0 %v111
    %323 = vmatmul.mubr.f32.gmra.mrb[0].mxu0 %v67
    %v324 = vpop.f32.mrb[0].mxu0
    %v325 = vadd.f32 %v92, %v324
    %v326 = vpop.f32.mrb[0].mxu0
    %327 = vdwg.mxu0
    %v328 = vmax.f32 %v184, %v300
    %v329 = vmax.f32 %v189, %v305
    %v330 = vmax.f32 %v194, %v310
    %v331 = vmax.f32 %v199, %v315
    %v332 = vmax.f32 %v204, %v320
    %v333 = vmax.f32 %v209, %v325
    %vm334 = vcmask 982016
    %335 = vst.msk [vmem:[#allocation2] sm:$0xff] %vm334, %v328
    %336 = vst.msk [vmem:[#allocation2 + $0x8] sm:$0xff] %vm334, %v329
    %337 = vst.msk [vmem:[#allocation2 + $0x10] sm:$0xff] %vm334, %v330
    %338 = vst.msk [vmem:[#allocation2 + $0x18] sm:$0xff] %vm334, %v331
    %339 = vst.msk [vmem:[#allocation2 + $0x20] sm:$0xff] %vm334, %v332
    %340 = vst.msk [vmem:[#allocation2 + $0x28] sm:$0xff] %vm334, %v333
    %v341 = vld [vmem:[#allocation2] ss:$2 sm:$0xff]
    %s342 = scalar_lea.vmem [#allocation2], 16
    %v343 = vld [vmem:[%s342] ss:$2 sm:$0xf]
    %s344 = scalar_lea.vmem [#allocation2], 24
    %v345 = vld [vmem:[%s344] ss:$2 sm:$0xff]
    %s346 = scalar_lea.vmem [#allocation2], 40
    %v347 = vld [vmem:[%s346] ss:$2 sm:$0xf]
    %s348 = scalar_lea.vmem [#allocation2], 1
    %v349 = vld [vmem:[%s348] ss:$2 sm:$0xff]
    %s350 = scalar_lea.vmem [#allocation2], 17
    %v351 = vld [vmem:[%s350] ss:$2 sm:$0xf]
    %s352 = scalar_lea.vmem [#allocation2], 25
    %v353 = vld [vmem:[%s352] ss:$2 sm:$0xff]
    %s354 = scalar_lea.vmem [#allocation2], 41
    %v355 = vld [vmem:[%s354] ss:$2 sm:$0xf]
    %v356 = vmax.f32 %v341, %v349
    %v357 = vmax.f32 %v343, %v351
    %v358 = vmax.f32 %v345, %v353
    %v359 = vmax.f32 %v347, %v355
    %v360 = vmax.f32 %v356, 0.0
    %v361 = vmax.f32 %v357, 0.0
    %v362 = vmax.f32 %v358, 0.0
    %v363 = vmax.f32 %v359, 0.0
    %364 = vst.msk [vmem:[#allocation3] sm:$0xff] %vm334, %v360
    %vm365 = vcmask 977920
    %366 = vst.msk [vmem:[#allocation3 + $0x8] sm:$0xf] %vm365, %v361
    %367 = vst.msk [vmem:[#allocation3 + $0x10] sm:$0xff] %vm334, %v362
    %368 = vst.msk [vmem:[#allocation3 + $0x18] sm:$0xf] %vm365, %v363
    %369 = vst [vmem:[#allocation4] sm:$0xff] 0.0
    %370 = vst [vmem:[#allocation4 + $0x8] sm:$0xff] 0.0
    %371 = vst [vmem:[#allocation4 + $0x10] sm:$0xff] 0.0
    %372 = vst [vmem:[#allocation4 + $0x18] sm:$0xff] 0.0
    %373 = vst [vmem:[#allocation4 + $0x20] sm:$0xff] 0.0
    %374 = vst [vmem:[#allocation4 + $0x28] sm:$0xff] 0.0
    %375 = vst [vmem:[#allocation4 + $0x30] sm:$0xff] 0.0
    %376 = vst [vmem:[#allocation4 + $0x38] sm:$0xff] 0.0
    %377 = vst [vmem:[#allocation4 + $0x40] sm:$0xff] 0.0
    %378 = vst [vmem:[#allocation4 + $0x48] sm:$0xff] 0.0
    %379 = vst [vmem:[#allocation4 + $0x50] sm:$0xff] 0.0
    %380 = vst [vmem:[#allocation4 + $0x58] sm:$0xff] 0.0
    %381 = vst [vmem:[#allocation4 + $0x60] sm:$0xff] 0.0
    %382 = vst [vmem:[#allocation4 + $0x68] sm:$0xff] 0.0
    %383 = vst [vmem:[#allocation4 + $0x70] sm:$0xff] 0.0
    %384 = vst [vmem:[#allocation4 + $0x78] sm:$0xff] 0.0
    %385 = vst [vmem:[#allocation4 + $0x80] sm:$0xff] 0.0
    %386 = vst [vmem:[#allocation4 + $0x88] sm:$0xff] 0.0
    %387 = vst [vmem:[#allocation4 + $0x90] sm:$0xff] 0.0
    %388 = vst [vmem:[#allocation4 + $0x98] sm:$0xff] 0.0
    %389 = vst [vmem:[#allocation4 + $0xa0] sm:$0xff] 0.0
    %390 = vst [vmem:[#allocation4 + $0xa8] sm:$0xff] 0.0
    %391 = vst [vmem:[#allocation4 + $0xb0] sm:$0xff] 0.0
    %392 = vst [vmem:[#allocation4 + $0xb8] sm:$0xff] 0.0
    %393 = vst [vmem:[#allocation4 + $0xc0] sm:$0xff] 0.0
    %394 = vst [vmem:[#allocation4 + $0xc8] sm:$0xff] 0.0
    %395 = vst [vmem:[#allocation4 + $0xd0] sm:$0xff] 0.0
    %396 = vst [vmem:[#allocation4 + $0xd8] sm:$0xff] 0.0
    %397 = vst [vmem:[#allocation4 + $0xe0] sm:$0xff] 0.0
    %398 = vst [vmem:[#allocation4 + $0xe8] sm:$0xff] 0.0
    %399 = vst [vmem:[#allocation4 + $0xf0] sm:$0xff] 0.0
    %400 = vst [vmem:[#allocation4 + $0xf8] sm:$0xff] 0.0
    %401 = vst [vmem:[#allocation4 + $0x100] sm:$0xff] 0.0
    %402 = vst [vmem:[#allocation4 + $0x108] sm:$0xff] 0.0
    %403 = vst [vmem:[#allocation4 + $0x110] sm:$0xff] 0.0
    %404 = vst [vmem:[#allocation4 + $0x118] sm:$0xff] 0.0
    %405 = vst [vmem:[#allocation4 + $0x120] sm:$0xff] 0.0
    %406 = vst [vmem:[#allocation4 + $0x128] sm:$0xff] 0.0
    %407 = vst [vmem:[#allocation4 + $0x130] sm:$0xff] 0.0
    %408 = vst [vmem:[#allocation4 + $0x138] sm:$0xff] 0.0
    %409 = vst [vmem:[#allocation4 + $0x140] sm:$0xff] 0.0
    %410 = vst [vmem:[#allocation4 + $0x148] sm:$0xff] 0.0
    %411 = vst [vmem:[#allocation4 + $0x150] sm:$0xff] 0.0
    %412 = vst [vmem:[#allocation4 + $0x158] sm:$0xff] 0.0
    %413 = vst [vmem:[#allocation4 + $0x160] sm:$0xff] 0.0
    %414 = vst [vmem:[#allocation4 + $0x168] sm:$0xff] 0.0
    %415 = vst [vmem:[#allocation4 + $0x170] sm:$0xff] 0.0
    %416 = vst [vmem:[#allocation4 + $0x178] sm:$0xff] 0.0
    %417 = vst [vmem:[#allocation4 + $0x180] sm:$0xff] 0.0
    %418 = vst [vmem:[#allocation4 + $0x188] sm:$0xff] 0.0
    %419 = vst [vmem:[#allocation4 + $0x190] sm:$0xff] 0.0
    %420 = vst [vmem:[#allocation4 + $0x198] sm:$0xff] 0.0
    %421 = vst [vmem:[#allocation4 + $0x1a0] sm:$0xff] 0.0
    %422 = vst [vmem:[#allocation4 + $0x1a8] sm:$0xff] 0.0
    %423 = vst [vmem:[#allocation4 + $0x1b0] sm:$0xff] 0.0
    %424 = vst [vmem:[#allocation4 + $0x1b8] sm:$0xff] 0.0
    %425 = vst [vmem:[#allocation4 + $0x1c0] sm:$0xff] 0.0
    %426 = vst [vmem:[#allocation4 + $0x1c8] sm:$0xff] 0.0
    %427 = vst [vmem:[#allocation4 + $0x1d0] sm:$0xff] 0.0
    %428 = vst [vmem:[#allocation4 + $0x1d8] sm:$0xff] 0.0
    %429 = vst [vmem:[#allocation4 + $0x1e0] sm:$0xff] 0.0
    %430 = vst [vmem:[#allocation4 + $0x1e8] sm:$0xff] 0.0
    %431 = vst [vmem:[#allocation4 + $0x1f0] sm:$0xff] 0.0
    %432 = vst [vmem:[#allocation4 + $0x1f8] sm:$0xff] 0.0
    %433 = vst [vmem:[#allocation4 + $0x200] sm:$0xff] 0.0
    %434 = vst [vmem:[#allocation4 + $0x208] sm:$0xff] 0.0
    %435 = vst [vmem:[#allocation4 + $0x210] sm:$0xff] 0.0
    %436 = vst [vmem:[#allocation4 + $0x218] sm:$0xff] 0.0
    %437 = vst [vmem:[#allocation4 + $0x220] sm:$0xff] 0.0
    %438 = vst [vmem:[#allocation4 + $0x228] sm:$0xff] 0.0
    %439 = vst [vmem:[#allocation4 + $0x230] sm:$0xff] 0.0
    %440 = vst [vmem:[#allocation4 + $0x238] sm:$0xff] 0.0
    %441 = vst [vmem:[#allocation4 + $0x240] sm:$0xff] 0.0
    %442 = vst [vmem:[#allocation4 + $0x248] sm:$0xff] 0.0
    %443 = vst [vmem:[#allocation4 + $0x250] sm:$0xff] 0.0
    %444 = vst [vmem:[#allocation4 + $0x258] sm:$0xff] 0.0
    %445 = vst [vmem:[#allocation4 + $0x260] sm:$0xff] 0.0
    %446 = vst [vmem:[#allocation4 + $0x268] sm:$0xff] 0.0
    %447 = vst [vmem:[#allocation4 + $0x270] sm:$0xff] 0.0
    %448 = vst [vmem:[#allocation4 + $0x278] sm:$0xff] 0.0
    %449 = vst [vmem:[#allocation4 + $0x280] sm:$0xff] 0.0
    %450 = vst [vmem:[#allocation4 + $0x288] sm:$0xff] 0.0
    %451 = vst [vmem:[#allocation4 + $0x290] sm:$0xff] 0.0
    %452 = vst [vmem:[#allocation4 + $0x298] sm:$0xff] 0.0
    %453 = vst [vmem:[#allocation4 + $0x2a0] sm:$0xff] 0.0
    %454 = vst [vmem:[#allocation4 + $0x2a8] sm:$0xff] 0.0
    %455 = vst [vmem:[#allocation4 + $0x2b0] sm:$0xff] 0.0
    %456 = vst [vmem:[#allocation4 + $0x2b8] sm:$0xff] 0.0
    %457 = vst [vmem:[#allocation4 + $0x2c0] sm:$0xff] 0.0
    %458 = vst [vmem:[#allocation4 + $0x2c8] sm:$0xff] 0.0
    %459 = vst [vmem:[#allocation4 + $0x2d0] sm:$0xff] 0.0
    %460 = vst [vmem:[#allocation4 + $0x2d8] sm:$0xff] 0.0
    %461 = vst [vmem:[#allocation4 + $0x2e0] sm:$0xff] 0.0
    %462 = vst [vmem:[#allocation4 + $0x2e8] sm:$0xff] 0.0
    %463 = vst [vmem:[#allocation4 + $0x2f0] sm:$0xff] 0.0
    %464 = vst [vmem:[#allocation4 + $0x2f8] sm:$0xff] 0.0
    %465 = vst [vmem:[#allocation4 + $0x300] sm:$0xff] 0.0
    %466 = vst [vmem:[#allocation4 + $0x308] sm:$0xff] 0.0
    %467 = vst [vmem:[#allocation4 + $0x310] sm:$0xff] 0.0
    %468 = vst [vmem:[#allocation4 + $0x318] sm:$0xff] 0.0
    %469 = vst [vmem:[#allocation4 + $0x320] sm:$0xff] 0.0
    %470 = vst [vmem:[#allocation4 + $0x328] sm:$0xff] 0.0
    %471 = vst [vmem:[#allocation4 + $0x330] sm:$0xff] 0.0
    %472 = vst [vmem:[#allocation4 + $0x338] sm:$0xff] 0.0
    %473 = vst [vmem:[#allocation4 + $0x340] sm:$0xff] 0.0
    %474 = vst [vmem:[#allocation4 + $0x348] sm:$0xff] 0.0
    %475 = vst [vmem:[#allocation4 + $0x350] sm:$0xff] 0.0
    %476 = vst [vmem:[#allocation4 + $0x358] sm:$0xff] 0.0
    %477 = vst [vmem:[#allocation4 + $0x360] sm:$0xff] 0.0
    %478 = vst [vmem:[#allocation4 + $0x368] sm:$0xff] 0.0
    %479 = vst [vmem:[#allocation4 + $0x370] sm:$0xff] 0.0
    %480 = vst [vmem:[#allocation4 + $0x378] sm:$0xff] 0.0
    %481 = vst [vmem:[#allocation4 + $0x380] sm:$0xff] 0.0
    %482 = vst [vmem:[#allocation4 + $0x388] sm:$0xff] 0.0
    %483 = vst [vmem:[#allocation4 + $0x390] sm:$0xff] 0.0
    %484 = vst [vmem:[#allocation4 + $0x398] sm:$0xff] 0.0
    %485 = vst [vmem:[#allocation4 + $0x3a0] sm:$0xff] 0.0
    %486 = vst [vmem:[#allocation4 + $0x3a8] sm:$0xff] 0.0
    %487 = vst [vmem:[#allocation4 + $0x3b0] sm:$0xff] 0.0
    %488 = vst [vmem:[#allocation4 + $0x3b8] sm:$0xff] 0.0
    %489 = vst [vmem:[#allocation4 + $0x3c0] sm:$0xff] 0.0
    %490 = vst [vmem:[#allocation4 + $0x3c8] sm:$0xff] 0.0
    %491 = vst [vmem:[#allocation4 + $0x3d0] sm:$0xff] 0.0
    %492 = vst [vmem:[#allocation4 + $0x3d8] sm:$0xff] 0.0
    %493 = vst [vmem:[#allocation4 + $0x3e0] sm:$0xff] 0.0
    %494 = vst [vmem:[#allocation4 + $0x3e8] sm:$0xff] 0.0
    %495 = vst [vmem:[#allocation4 + $0x3f0] sm:$0xff] 0.0
    %496 = vst [vmem:[#allocation4 + $0x3f8] sm:$0xff] 0.0
    %497 = vst [vmem:[#allocation4 + $0x400] sm:$0xff] 0.0
    %498 = vst [vmem:[#allocation4 + $0x408] sm:$0xff] 0.0
    %499 = vst [vmem:[#allocation4 + $0x410] sm:$0xff] 0.0
    %500 = vst [vmem:[#allocation4 + $0x418] sm:$0xff] 0.0
    %501 = vst [vmem:[#allocation4 + $0x420] sm:$0xff] 0.0
    %502 = vst [vmem:[#allocation4 + $0x428] sm:$0xff] 0.0
    %503 = vst [vmem:[#allocation4 + $0x430] sm:$0xff] 0.0
    %504 = vst [vmem:[#allocation4 + $0x438] sm:$0xff] 0.0
    %505 = vst [vmem:[#allocation4 + $0x440] sm:$0xff] 0.0
    %506 = vst [vmem:[#allocation4 + $0x448] sm:$0xff] 0.0
    %507 = vst [vmem:[#allocation4 + $0x450] sm:$0xff] 0.0
    %508 = vst [vmem:[#allocation4 + $0x458] sm:$0xff] 0.0
    %509 = vst [vmem:[#allocation4 + $0x460] sm:$0xff] 0.0
    %510 = vst [vmem:[#allocation4 + $0x468] sm:$0xff] 0.0
    %511 = vst [vmem:[#allocation4 + $0x470] sm:$0xff] 0.0
    %512 = vst [vmem:[#allocation4 + $0x478] sm:$0xff] 0.0
    %513 = vst [vmem:[#allocation4 + $0x480] sm:$0xff] 0.0
    %514 = vst [vmem:[#allocation4 + $0x488] sm:$0xff] 0.0
    %515 = vst [vmem:[#allocation4 + $0x490] sm:$0xff] 0.0
    %516 = vst [vmem:[#allocation4 + $0x498] sm:$0xff] 0.0
    %517 = vst [vmem:[#allocation4 + $0x4a0] sm:$0xff] 0.0
    %518 = vst [vmem:[#allocation4 + $0x4a8] sm:$0xff] 0.0
    %519 = vst [vmem:[#allocation4 + $0x4b0] sm:$0xff] 0.0
    %520 = vst [vmem:[#allocation4 + $0x4b8] sm:$0xff] 0.0
    %521 = vst [vmem:[#allocation4 + $0x4c0] sm:$0xff] 0.0
    %522 = vst [vmem:[#allocation4 + $0x4c8] sm:$0xff] 0.0
    %523 = vst [vmem:[#allocation4 + $0x4d0] sm:$0xff] 0.0
    %524 = vst [vmem:[#allocation4 + $0x4d8] sm:$0xff] 0.0
    %525 = vst [vmem:[#allocation4 + $0x4e0] sm:$0xff] 0.0
    %526 = vst [vmem:[#allocation4 + $0x4e8] sm:$0xff] 0.0
    %527 = vst [vmem:[#allocation4 + $0x4f0] sm:$0xff] 0.0
    %528 = vst [vmem:[#allocation4 + $0x4f8] sm:$0xff] 0.0
    %529 = vst [vmem:[#allocation4 + $0x500] sm:$0xff] 0.0
    %530 = vst [vmem:[#allocation4 + $0x508] sm:$0xff] 0.0
    %531 = vst [vmem:[#allocation4 + $0x510] sm:$0xff] 0.0
    %532 = vst [vmem:[#allocation4 + $0x518] sm:$0xff] 0.0
    %533 = vst [vmem:[#allocation4 + $0x520] sm:$0xff] 0.0
    %534 = vst [vmem:[#allocation4 + $0x528] sm:$0xff] 0.0
    %535 = vst [vmem:[#allocation4 + $0x530] sm:$0xff] 0.0
    %536 = vst [vmem:[#allocation4 + $0x538] sm:$0xff] 0.0
    %537 = vst [vmem:[#allocation4 + $0x540] sm:$0xff] 0.0
    %538 = vst [vmem:[#allocation4 + $0x548] sm:$0xff] 0.0
    %539 = vst [vmem:[#allocation4 + $0x550] sm:$0xff] 0.0
    %540 = vst [vmem:[#allocation4 + $0x558] sm:$0xff] 0.0
    %541 = vst [vmem:[#allocation4 + $0x560] sm:$0xff] 0.0
    %542 = vst [vmem:[#allocation4 + $0x568] sm:$0xff] 0.0
    %543 = vst [vmem:[#allocation4 + $0x570] sm:$0xff] 0.0
    %544 = vst [vmem:[#allocation4 + $0x578] sm:$0xff] 0.0
    %545 = vst [vmem:[#allocation4 + $0x580] sm:$0xff] 0.0
    %546 = vst [vmem:[#allocation4 + $0x588] sm:$0xff] 0.0
    %547 = vst [vmem:[#allocation4 + $0x590] sm:$0xff] 0.0
    %548 = vst [vmem:[#allocation4 + $0x598] sm:$0xff] 0.0
    %549 = vst [vmem:[#allocation4 + $0x5a0] sm:$0xff] 0.0
    %550 = vst [vmem:[#allocation4 + $0x5a8] sm:$0xff] 0.0
    %551 = vst [vmem:[#allocation4 + $0x5b0] sm:$0xff] 0.0
    %552 = vst [vmem:[#allocation4 + $0x5b8] sm:$0xff] 0.0
    %553 = vst [vmem:[#allocation4 + $0x5c0] sm:$0xff] 0.0
    %554 = vst [vmem:[#allocation4 + $0x5c8] sm:$0xff] 0.0
    %555 = vst [vmem:[#allocation4 + $0x5d0] sm:$0xff] 0.0
    %556 = vst [vmem:[#allocation4 + $0x5d8] sm:$0xff] 0.0
    %557 = vst [vmem:[#allocation4 + $0x5e0] sm:$0xff] 0.0
    %558 = vst [vmem:[#allocation4 + $0x5e8] sm:$0xff] 0.0
    %559 = vst [vmem:[#allocation4 + $0x5f0] sm:$0xff] 0.0
    %560 = vst [vmem:[#allocation4 + $0x5f8] sm:$0xff] 0.0
    %561 = vst [vmem:[#allocation4 + $0x600] sm:$0xff] 0.0
    %562 = vst [vmem:[#allocation4 + $0x608] sm:$0xff] 0.0
    %563 = vst [vmem:[#allocation4 + $0x610] sm:$0xff] 0.0
    %564 = vst [vmem:[#allocation4 + $0x618] sm:$0xff] 0.0
    %565 = vst [vmem:[#allocation4 + $0x620] sm:$0xff] 0.0
    %566 = vst [vmem:[#allocation4 + $0x628] sm:$0xff] 0.0
    %567 = vst [vmem:[#allocation4 + $0x630] sm:$0xff] 0.0
    %568 = vst [vmem:[#allocation4 + $0x638] sm:$0xff] 0.0
    %v569 = vld [vmem:[#allocation3] sm:$0xff]
    %v570 = vld [vmem:[#allocation3 + $0x10] sm:$0xff]
    %v571 = vld [vmem:[%s4] sm:$0xff]
    %v572 = vld [vmem:[%s4 + $0x28] sm:$0xff]
    %v573 = vld [vmem:[%s4 + $0x50] sm:$0xff]
    %v574 = vld [vmem:[%s4 + $0x78] sm:$0xff]
    %v575 = vld [vmem:[%s4 + $0xa0] sm:$0xff]
    %v576 = vld [vmem:[%s4 + $0xc8] sm:$0xff]
    %v577 = vld [vmem:[%s4 + $0xf0] sm:$0xff]
    %v578 = vld [vmem:[%s4 + $0x118] sm:$0xff]
    %v579 = vld [vmem:[%s4 + $0x140] sm:$0xff]
    %v580 = vld [vmem:[%s4 + $0x168] sm:$0xff]
    %v581 = vld [vmem:[%s4 + $0x190] sm:$0xff]
    %v582 = vld [vmem:[%s4 + $0x1b8] sm:$0xff]
    %v583 = vld [vmem:[%s4 + $0x1e0] sm:$0xff]
    %v584 = vld [vmem:[%s4 + $0x208] sm:$0xff]
    %v585 = vld [vmem:[%s4 + $0x230] sm:$0xff]
    %v586 = vld [vmem:[%s4 + $0x258] sm:$0xff]
    %v587 = vld [vmem:[%s4 + $0x280] sm:$0xff]
    %v588 = vld [vmem:[%s4 + $0x2a8] sm:$0xff]
    %v589 = vld [vmem:[%s4 + $0x2d0] sm:$0xff]
    %v590 = vld [vmem:[%s4 + $0x2f8] sm:$0xff]
    %v591 = vld [vmem:[%s4 + $0x320] sm:$0xff]
    %v592 = vld [vmem:[%s4 + $0x348] sm:$0xff]
    %v593 = vld [vmem:[%s4 + $0x370] sm:$0xff]
    %v594 = vld [vmem:[%s4 + $0x398] sm:$0xff]
    %v595 = vld [vmem:[%s4 + $0x3c0] sm:$0xff]
    %v596 = vld [vmem:[%s4 + $0x3e8] sm:$0xff]
    %v597 = vld [vmem:[%s4 + $0x410] sm:$0xff]
    %v598 = vld [vmem:[%s4 + $0x438] sm:$0xff]
    %v599 = vld [vmem:[%s4 + $0x460] sm:$0xff]
    %v600 = vld [vmem:[%s4 + $0x488] sm:$0xff]
    %v601 = vld [vmem:[%s4 + $0x4b0] sm:$0xff]
    %v602 = vld [vmem:[%s4 + $0x4d8] sm:$0xff]
    %v603 = vld [vmem:[%s4 + $0x500] sm:$0xff]
    %v604 = vld [vmem:[%s4 + $0x528] sm:$0xff]
    %v605 = vld [vmem:[%s4 + $0x550] sm:$0xff]
    %v606 = vld [vmem:[%s4 + $0x578] sm:$0xff]
    %v607 = vld [vmem:[%s4 + $0x5a0] sm:$0xff]
    %v608 = vld [vmem:[%s4 + $0x5c8] sm:$0xff]
    %v609 = vld [vmem:[%s4 + $0x5f0] sm:$0xff]
    %v610 = vld [vmem:[%s4 + $0x618] sm:$0xff]
    %v611 = vmul.f32 %v569, %v571
    %v612 = vmul.f32 %v570, %v572
    %v613 = vmul.f32 %v569, %v573
    %v614 = vmul.f32 %v570, %v574
    %v615 = vmul.f32 %v569, %v575
    %v616 = vmul.f32 %v570, %v576
    %v617 = vmul.f32 %v569, %v577
    %v618 = vmul.f32 %v570, %v578
    %v619 = vmul.f32 %v569, %v579
    %v620 = vmul.f32 %v570, %v580
    %v621 = vmul.f32 %v569, %v581
    %v622 = vmul.f32 %v570, %v582
    %v623 = vmul.f32 %v569, %v583
    %v624 = vmul.f32 %v570, %v584
    %v625 = vmul.f32 %v569, %v585
    %v626 = vmul.f32 %v570, %v586
    %v627 = vmul.f32 %v569, %v587
    %v628 = vmul.f32 %v570, %v588
    %v629 = vmul.f32 %v569, %v589
    %v630 = vmul.f32 %v570, %v590
    %v631 = vmul.f32 %v569, %v591
    %v632 = vmul.f32 %v570, %v592
    %v633 = vmul.f32 %v569, %v593
    %v634 = vmul.f32 %v570, %v594
    %v635 = vmul.f32 %v569, %v595
    %v636 = vmul.f32 %v570, %v596
    %v637 = vmul.f32 %v569, %v597
    %v638 = vmul.f32 %v570, %v598
    %v639 = vmul.f32 %v569, %v599
    %v640 = vmul.f32 %v570, %v600
    %v641 = vmul.f32 %v569, %v601
    %v642 = vmul.f32 %v570, %v602
    %v643 = vmul.f32 %v569, %v603
    %v644 = vmul.f32 %v570, %v604
    %v645 = vmul.f32 %v569, %v605
    %v646 = vmul.f32 %v570, %v606
    %v647 = vmul.f32 %v569, %v607
    %v648 = vmul.f32 %v570, %v608
    %v649 = vmul.f32 %v569, %v609
    %v650 = vmul.f32 %v570, %v610
    %651 = vst.msk [vmem:[#allocation4] sm:$0xff] %vm334, %v611
    %652 = vst.msk [vmem:[#allocation4 + $0x28] sm:$0xff] %vm334, %v612
    %653 = vst.msk [vmem:[#allocation4 + $0x50] sm:$0xff] %vm334, %v613
    %654 = vst.msk [vmem:[#allocation4 + $0x78] sm:$0xff] %vm334, %v614
    %655 = vst.msk [vmem:[#allocation4 + $0xa0] sm:$0xff] %vm334, %v615
    %656 = vst.msk [vmem:[#allocation4 + $0xc8] sm:$0xff] %vm334, %v616
    %657 = vst.msk [vmem:[#allocation4 + $0xf0] sm:$0xff] %vm334, %v617
    %658 = vst.msk [vmem:[#allocation4 + $0x118] sm:$0xff] %vm334, %v618
    %659 = vst.msk [vmem:[#allocation4 + $0x140] sm:$0xff] %vm334, %v619
    %660 = vst.msk [vmem:[#allocation4 + $0x168] sm:$0xff] %vm334, %v620
    %661 = vst.msk [vmem:[#allocation4 + $0x190] sm:$0xff] %vm334, %v621
    %662 = vst.msk [vmem:[#allocation4 + $0x1b8] sm:$0xff] %vm334, %v622
    %663 = vst.msk [vmem:[#allocation4 + $0x1e0] sm:$0xff] %vm334, %v623
    %664 = vst.msk [vmem:[#allocation4 + $0x208] sm:$0xff] %vm334, %v624
    %665 = vst.msk [vmem:[#allocation4 + $0x230] sm:$0xff] %vm334, %v625
    %666 = vst.msk [vmem:[#allocation4 + $0x258] sm:$0xff] %vm334, %v626
    %667 = vst.msk [vmem:[#allocation4 + $0x280] sm:$0xff] %vm334, %v627
    %668 = vst.msk [vmem:[#allocation4 + $0x2a8] sm:$0xff] %vm334, %v628
    %669 = vst.msk [vmem:[#allocation4 + $0x2d0] sm:$0xff] %vm334, %v629
    %670 = vst.msk [vmem:[#allocation4 + $0x2f8] sm:$0xff] %vm334, %v630
    %671 = vst.msk [vmem:[#allocation4 + $0x320] sm:$0xff] %vm334, %v631
    %672 = vst.msk [vmem:[#allocation4 + $0x348] sm:$0xff] %vm334, %v632
    %673 = vst.msk [vmem:[#allocation4 + $0x370] sm:$0xff] %vm334, %v633
    %674 = vst.msk [vmem:[#allocation4 + $0x398] sm:$0xff] %vm334, %v634
    %675 = vst.msk [vmem:[#allocation4 + $0x3c0] sm:$0xff] %vm334, %v635
    %676 = vst.msk [vmem:[#allocation4 + $0x3e8] sm:$0xff] %vm334, %v636
    %677 = vst.msk [vmem:[#allocation4 + $0x410] sm:$0xff] %vm334, %v637
    %678 = vst.msk [vmem:[#allocation4 + $0x438] sm:$0xff] %vm334, %v638
    %679 = vst.msk [vmem:[#allocation4 + $0x460] sm:$0xff] %vm334, %v639
    %680 = vst.msk [vmem:[#allocation4 + $0x488] sm:$0xff] %vm334, %v640
    %681 = vst.msk [vmem:[#allocation4 + $0x4b0] sm:$0xff] %vm334, %v641
    %682 = vst.msk [vmem:[#allocation4 + $0x4d8] sm:$0xff] %vm334, %v642
    %683 = vst.msk [vmem:[#allocation4 + $0x500] sm:$0xff] %vm334, %v643
    %684 = vst.msk [vmem:[#allocation4 + $0x528] sm:$0xff] %vm334, %v644
    %685 = vst.msk [vmem:[#allocation4 + $0x550] sm:$0xff] %vm334, %v645
    %686 = vst.msk [vmem:[#allocation4 + $0x578] sm:$0xff] %vm334, %v646
    %687 = vst.msk [vmem:[#allocation4 + $0x5a0] sm:$0xff] %vm334, %v647
    %688 = vst.msk [vmem:[#allocation4 + $0x5c8] sm:$0xff] %vm334, %v648
    %689 = vst.msk [vmem:[#allocation4 + $0x5f0] sm:$0xff] %vm334, %v649
    %690 = vst.msk [vmem:[#allocation4 + $0x618] sm:$0xff] %vm334, %v650
    %v691 = vld [vmem:[#allocation3 + $0x1] sm:$0xff]
    %v692 = vld [vmem:[#allocation3 + $0x11] sm:$0xff]
    %v693 = vld [vmem:[%s4 + $0x8] sm:$0xff]
    %v694 = vld [vmem:[%s4 + $0x30] sm:$0xff]
    %v695 = vld [vmem:[%s4 + $0x58] sm:$0xff]
    %v696 = vld [vmem:[%s4 + $0x80] sm:$0xff]
    %v697 = vld [vmem:[%s4 + $0xa8] sm:$0xff]
    %v698 = vld [vmem:[%s4 + $0xd0] sm:$0xff]
    %v699 = vld [vmem:[%s4 + $0xf8] sm:$0xff]
    %v700 = vld [vmem:[%s4 + $0x120] sm:$0xff]
    %v701 = vld [vmem:[%s4 + $0x148] sm:$0xff]
    %v702 = vld [vmem:[%s4 + $0x170] sm:$0xff]
    %v703 = vld [vmem:[%s4 + $0x198] sm:$0xff]
    %v704 = vld [vmem:[%s4 + $0x1c0] sm:$0xff]
    %v705 = vld [vmem:[%s4 + $0x1e8] sm:$0xff]
    %v706 = vld [vmem:[%s4 + $0x210] sm:$0xff]
    %v707 = vld [vmem:[%s4 + $0x238] sm:$0xff]
    %v708 = vld [vmem:[%s4 + $0x260] sm:$0xff]
    %v709 = vld [vmem:[%s4 + $0x288] sm:$0xff]
    %v710 = vld [vmem:[%s4 + $0x2b0] sm:$0xff]
    %v711 = vld [vmem:[%s4 + $0x2d8] sm:$0xff]
    %v712 = vld [vmem:[%s4 + $0x300] sm:$0xff]
    %v713 = vld [vmem:[%s4 + $0x328] sm:$0xff]
    %v714 = vld [vmem:[%s4 + $0x350] sm:$0xff]
    %v715 = vld [vmem:[%s4 + $0x378] sm:$0xff]
    %v716 = vld [vmem:[%s4 + $0x3a0] sm:$0xff]
    %v717 = vld [vmem:[%s4 + $0x3c8] sm:$0xff]
    %v718 = vld [vmem:[%s4 + $0x3f0] sm:$0xff]
    %v719 = vld [vmem:[%s4 + $0x418] sm:$0xff]
    %v720 = vld [vmem:[%s4 + $0x440] sm:$0xff]
    %v721 = vld [vmem:[%s4 + $0x468] sm:$0xff]
    %v722 = vld [vmem:[%s4 + $0x490] sm:$0xff]
    %v723 = vld [vmem:[%s4 + $0x4b8] sm:$0xff]
    %v724 = vld [vmem:[%s4 + $0x4e0] sm:$0xff]
    %v725 = vld [vmem:[%s4 + $0x508] sm:$0xff]
    %v726 = vld [vmem:[%s4 + $0x530] sm:$0xff]
    %v727 = vld [vmem:[%s4 + $0x558] sm:$0xff]
    %v728 = vld [vmem:[%s4 + $0x580] sm:$0xff]
    %v729 = vld [vmem:[%s4 + $0x5a8] sm:$0xff]
    %v730 = vld [vmem:[%s4 + $0x5d0] sm:$0xff]
    %v731 = vld [vmem:[%s4 + $0x5f8] sm:$0xff]
    %v732 = vld [vmem:[%s4 + $0x620] sm:$0xff]
    %v733 = vmul.f32 %v691, %v693
    %v734 = vmul.f32 %v692, %v694
    %v735 = vmul.f32 %v691, %v695
    %v736 = vmul.f32 %v692, %v696
    %v737 = vmul.f32 %v691, %v697
    %v738 = vmul.f32 %v692, %v698
    %v739 = vmul.f32 %v691, %v699
    %v740 = vmul.f32 %v692, %v700
    %v741 = vmul.f32 %v691, %v701
    %v742 = vmul.f32 %v692, %v702
    %v743 = vmul.f32 %v691, %v703
    %v744 = vmul.f32 %v692, %v704
    %v745 = vmul.f32 %v691, %v705
    %v746 = vmul.f32 %v692, %v706
    %v747 = vmul.f32 %v691, %v707
    %v748 = vmul.f32 %v692, %v708
    %v749 = vmul.f32 %v691, %v709
    %v750 = vmul.f32 %v692, %v710
    %v751 = vmul.f32 %v691, %v711
    %v752 = vmul.f32 %v692, %v712
    %v753 = vmul.f32 %v691, %v713
    %v754 = vmul.f32 %v692, %v714
    %v755 = vmul.f32 %v691, %v715
    %v756 = vmul.f32 %v692, %v716
    %v757 = vmul.f32 %v691, %v717
    %v758 = vmul.f32 %v692, %v718
    %v759 = vmul.f32 %v691, %v719
    %v760 = vmul.f32 %v692, %v720
    %v761 = vmul.f32 %v691, %v721
    %v762 = vmul.f32 %v692, %v722
    %v763 = vmul.f32 %v691, %v723
    %v764 = vmul.f32 %v692, %v724
    %v765 = vmul.f32 %v691, %v725
    %v766 = vmul.f32 %v692, %v726
    %v767 = vmul.f32 %v691, %v727
    %v768 = vmul.f32 %v692, %v728
    %v769 = vmul.f32 %v691, %v729
    %v770 = vmul.f32 %v692, %v730
    %v771 = vmul.f32 %v691, %v731
    %v772 = vmul.f32 %v692, %v732
    %773 = vst.msk [vmem:[#allocation4 + $0x8] sm:$0xff] %vm334, %v733
    %774 = vst.msk [vmem:[#allocation4 + $0x30] sm:$0xff] %vm334, %v734
    %775 = vst.msk [vmem:[#allocation4 + $0x58] sm:$0xff] %vm334, %v735
    %776 = vst.msk [vmem:[#allocation4 + $0x80] sm:$0xff] %vm334, %v736
    %777 = vst.msk [vmem:[#allocation4 + $0xa8] sm:$0xff] %vm334, %v737
    %778 = vst.msk [vmem:[#allocation4 + $0xd0] sm:$0xff] %vm334, %v738
    %779 = vst.msk [vmem:[#allocation4 + $0xf8] sm:$0xff] %vm334, %v739
    %780 = vst.msk [vmem:[#allocation4 + $0x120] sm:$0xff] %vm334, %v740
    %781 = vst.msk [vmem:[#allocation4 + $0x148] sm:$0xff] %vm334, %v741
    %782 = vst.msk [vmem:[#allocation4 + $0x170] sm:$0xff] %vm334, %v742
    %783 = vst.msk [vmem:[#allocation4 + $0x198] sm:$0xff] %vm334, %v743
    %784 = vst.msk [vmem:[#allocation4 + $0x1c0] sm:$0xff] %vm334, %v744
    %785 = vst.msk [vmem:[#allocation4 + $0x1e8] sm:$0xff] %vm334, %v745
    %786 = vst.msk [vmem:[#allocation4 + $0x210] sm:$0xff] %vm334, %v746
    %787 = vst.msk [vmem:[#allocation4 + $0x238] sm:$0xff] %vm334, %v747
    %788 = vst.msk [vmem:[#allocation4 + $0x260] sm:$0xff] %vm334, %v748
    %789 = vst.msk [vmem:[#allocation4 + $0x288] sm:$0xff] %vm334, %v749
    %790 = vst.msk [vmem:[#allocation4 + $0x2b0] sm:$0xff] %vm334, %v750
    %791 = vst.msk [vmem:[#allocation4 + $0x2d8] sm:$0xff] %vm334, %v751
    %792 = vst.msk [vmem:[#allocation4 + $0x300] sm:$0xff] %vm334, %v752
    %793 = vst.msk [vmem:[#allocation4 + $0x328] sm:$0xff] %vm334, %v753
    %794 = vst.msk [vmem:[#allocation4 + $0x350] sm:$0xff] %vm334, %v754
    %795 = vst.msk [vmem:[#allocation4 + $0x378] sm:$0xff] %vm334, %v755
    %796 = vst.msk [vmem:[#allocation4 + $0x3a0] sm:$0xff] %vm334, %v756
    %797 = vst.msk [vmem:[#allocation4 + $0x3c8] sm:$0xff] %vm334, %v757
    %798 = vst.msk [vmem:[#allocation4 + $0x3f0] sm:$0xff] %vm334, %v758
    %799 = vst.msk [vmem:[#allocation4 + $0x418] sm:$0xff] %vm334, %v759
    %800 = vst.msk [vmem:[#allocation4 + $0x440] sm:$0xff] %vm334, %v760
    %801 = vst.msk [vmem:[#allocation4 + $0x468] sm:$0xff] %vm334, %v761
    %802 = vst.msk [vmem:[#allocation4 + $0x490] sm:$0xff] %vm334, %v762
    %803 = vst.msk [vmem:[#allocation4 + $0x4b8] sm:$0xff] %vm334, %v763
    %804 = vst.msk [vmem:[#allocation4 + $0x4e0] sm:$0xff] %vm334, %v764
    %805 = vst.msk [vmem:[#allocation4 + $0x508] sm:$0xff] %vm334, %v765
    %806 = vst.msk [vmem:[#allocation4 + $0x530] sm:$0xff] %vm334, %v766
    %807 = vst.msk [vmem:[#allocation4 + $0x558] sm:$0xff] %vm334, %v767
    %808 = vst.msk [vmem:[#allocation4 + $0x580] sm:$0xff] %vm334, %v768
    %809 = vst.msk [vmem:[#allocation4 + $0x5a8] sm:$0xff] %vm334, %v769
    %810 = vst.msk [vmem:[#allocation4 + $0x5d0] sm:$0xff] %vm334, %v770
    %811 = vst.msk [vmem:[#allocation4 + $0x5f8] sm:$0xff] %vm334, %v771
    %812 = vst.msk [vmem:[#allocation4 + $0x620] sm:$0xff] %vm334, %v772
    %v813 = vld [vmem:[#allocation3 + $0x2] sm:$0xff]
    %v814 = vld [vmem:[#allocation3 + $0x12] sm:$0xff]
    %v815 = vld [vmem:[%s4 + $0x10] sm:$0xff]
    %v816 = vld [vmem:[%s4 + $0x38] sm:$0xff]
    %v817 = vld [vmem:[%s4 + $0x60] sm:$0xff]
    %v818 = vld [vmem:[%s4 + $0x88] sm:$0xff]
    %v819 = vld [vmem:[%s4 + $0xb0] sm:$0xff]
    %v820 = vld [vmem:[%s4 + $0xd8] sm:$0xff]
    %v821 = vld [vmem:[%s4 + $0x100] sm:$0xff]
    %v822 = vld [vmem:[%s4 + $0x128] sm:$0xff]
    %v823 = vld [vmem:[%s4 + $0x150] sm:$0xff]
    %v824 = vld [vmem:[%s4 + $0x178] sm:$0xff]
    %v825 = vld [vmem:[%s4 + $0x1a0] sm:$0xff]
    %v826 = vld [vmem:[%s4 + $0x1c8] sm:$0xff]
    %v827 = vld [vmem:[%s4 + $0x1f0] sm:$0xff]
    %v828 = vld [vmem:[%s4 + $0x218] sm:$0xff]
    %v829 = vld [vmem:[%s4 + $0x240] sm:$0xff]
    %v830 = vld [vmem:[%s4 + $0x268] sm:$0xff]
    %v831 = vld [vmem:[%s4 + $0x290] sm:$0xff]
    %v832 = vld [vmem:[%s4 + $0x2b8] sm:$0xff]
    %v833 = vld [vmem:[%s4 + $0x2e0] sm:$0xff]
    %v834 = vld [vmem:[%s4 + $0x308] sm:$0xff]
    %v835 = vld [vmem:[%s4 + $0x330] sm:$0xff]
    %v836 = vld [vmem:[%s4 + $0x358] sm:$0xff]
    %v837 = vld [vmem:[%s4 + $0x380] sm:$0xff]
    %v838 = vld [vmem:[%s4 + $0x3a8] sm:$0xff]
    %v839 = vld [vmem:[%s4 + $0x3d0] sm:$0xff]
    %v840 = vld [vmem:[%s4 + $0x3f8] sm:$0xff]
    %v841 = vld [vmem:[%s4 + $0x420] sm:$0xff]
    %v842 = vld [vmem:[%s4 + $0x448] sm:$0xff]
    %v843 = vld [vmem:[%s4 + $0x470] sm:$0xff]
    %v844 = vld [vmem:[%s4 + $0x498] sm:$0xff]
    %v845 = vld [vmem:[%s4 + $0x4c0] sm:$0xff]
    %v846 = vld [vmem:[%s4 + $0x4e8] sm:$0xff]
    %v847 = vld [vmem:[%s4 + $0x510] sm:$0xff]
    %v848 = vld [vmem:[%s4 + $0x538] sm:$0xff]
    %v849 = vld [vmem:[%s4 + $0x560] sm:$0xff]
    %v850 = vld [vmem:[%s4 + $0x588] sm:$0xff]
    %v851 = vld [vmem:[%s4 + $0x5b0] sm:$0xff]
    %v852 = vld [vmem:[%s4 + $0x5d8] sm:$0xff]
    %v853 = vld [vmem:[%s4 + $0x600] sm:$0xff]
    %v854 = vld [vmem:[%s4 + $0x628] sm:$0xff]
    %v855 = vmul.f32 %v813, %v815
    %v856 = vmul.f32 %v814, %v816
    %v857 = vmul.f32 %v813, %v817
    %v858 = vmul.f32 %v814, %v818
    %v859 = vmul.f32 %v813, %v819
    %v860 = vmul.f32 %v814, %v820
    %v861 = vmul.f32 %v813, %v821
    %v862 = vmul.f32 %v814, %v822
    %v863 = vmul.f32 %v813, %v823
    %v864 = vmul.f32 %v814, %v824
    %v865 = vmul.f32 %v813, %v825
    %v866 = vmul.f32 %v814, %v826
    %v867 = vmul.f32 %v813, %v827
    %v868 = vmul.f32 %v814, %v828
    %v869 = vmul.f32 %v813, %v829
    %v870 = vmul.f32 %v814, %v830
    %v871 = vmul.f32 %v813, %v831
    %v872 = vmul.f32 %v814, %v832
    %v873 = vmul.f32 %v813, %v833
    %v874 = vmul.f32 %v814, %v834
    %v875 = vmul.f32 %v813, %v835
    %v876 = vmul.f32 %v814, %v836
    %v877 = vmul.f32 %v813, %v837
    %v878 = vmul.f32 %v814, %v838
    %v879 = vmul.f32 %v813, %v839
    %v880 = vmul.f32 %v814, %v840
    %v881 = vmul.f32 %v813, %v841
    %v882 = vmul.f32 %v814, %v842
    %v883 = vmul.f32 %v813, %v843
    %v884 = vmul.f32 %v814, %v844
    %v885 = vmul.f32 %v813, %v845
    %v886 = vmul.f32 %v814, %v846
    %v887 = vmul.f32 %v813, %v847
    %v888 = vmul.f32 %v814, %v848
    %v889 = vmul.f32 %v813, %v849
    %v890 = vmul.f32 %v814, %v850
    %v891 = vmul.f32 %v813, %v851
    %v892 = vmul.f32 %v814, %v852
    %v893 = vmul.f32 %v813, %v853
    %v894 = vmul.f32 %v814, %v854
    %895 = vst.msk [vmem:[#allocation4 + $0x10] sm:$0xff] %vm334, %v855
    %896 = vst.msk [vmem:[#allocation4 + $0x38] sm:$0xff] %vm334, %v856
    %897 = vst.msk [vmem:[#allocation4 + $0x60] sm:$0xff] %vm334, %v857
    %898 = vst.msk [vmem:[#allocation4 + $0x88] sm:$0xff] %vm334, %v858
    %899 = vst.msk [vmem:[#allocation4 + $0xb0] sm:$0xff] %vm334, %v859
    %900 = vst.msk [vmem:[#allocation4 + $0xd8] sm:$0xff] %vm334, %v860
    %901 = vst.msk [vmem:[#allocation4 + $0x100] sm:$0xff] %vm334, %v861
    %902 = vst.msk [vmem:[#allocation4 + $0x128] sm:$0xff] %vm334, %v862
    %903 = vst.msk [vmem:[#allocation4 + $0x150] sm:$0xff] %vm334, %v863
    %904 = vst.msk [vmem:[#allocation4 + $0x178] sm:$0xff] %vm334, %v864
    %905 = vst.msk [vmem:[#allocation4 + $0x1a0] sm:$0xff] %vm334, %v865
    %906 = vst.msk [vmem:[#allocation4 + $0x1c8] sm:$0xff] %vm334, %v866
    %907 = vst.msk [vmem:[#allocation4 + $0x1f0] sm:$0xff] %vm334, %v867
    %908 = vst.msk [vmem:[#allocation4 + $0x218] sm:$0xff] %vm334, %v868
    %909 = vst.msk [vmem:[#allocation4 + $0x240] sm:$0xff] %vm334, %v869
    %910 = vst.msk [vmem:[#allocation4 + $0x268] sm:$0xff] %vm334, %v870
    %911 = vst.msk [vmem:[#allocation4 + $0x290] sm:$0xff] %vm334, %v871
    %912 = vst.msk [vmem:[#allocation4 + $0x2b8] sm:$0xff] %vm334, %v872
    %913 = vst.msk [vmem:[#allocation4 + $0x2e0] sm:$0xff] %vm334, %v873
    %914 = vst.msk [vmem:[#allocation4 + $0x308] sm:$0xff] %vm334, %v874
    %915 = vst.msk [vmem:[#allocation4 + $0x330] sm:$0xff] %vm334, %v875
    %916 = vst.msk [vmem:[#allocation4 + $0x358] sm:$0xff] %vm334, %v876
    %917 = vst.msk [vmem:[#allocation4 + $0x380] sm:$0xff] %vm334, %v877
    %918 = vst.msk [vmem:[#allocation4 + $0x3a8] sm:$0xff] %vm334, %v878
    %919 = vst.msk [vmem:[#allocation4 + $0x3d0] sm:$0xff] %vm334, %v879
    %920 = vst.msk [vmem:[#allocation4 + $0x3f8] sm:$0xff] %vm334, %v880
    %921 = vst.msk [vmem:[#allocation4 + $0x420] sm:$0xff] %vm334, %v881
    %922 = vst.msk [vmem:[#allocation4 + $0x448] sm:$0xff] %vm334, %v882
    %923 = vst.msk [vmem:[#allocation4 + $0x470] sm:$0xff] %vm334, %v883
    %924 = vst.msk [vmem:[#allocation4 + $0x498] sm:$0xff] %vm334, %v884
    %925 = vst.msk [vmem:[#allocation4 + $0x4c0] sm:$0xff] %vm334, %v885
    %926 = vst.msk [vmem:[#allocation4 + $0x4e8] sm:$0xff] %vm334, %v886
    %927 = vst.msk [vmem:[#allocation4 + $0x510] sm:$0xff] %vm334, %v887
    %928 = vst.msk [vmem:[#allocation4 + $0x538] sm:$0xff] %vm334, %v888
    %929 = vst.msk [vmem:[#allocation4 + $0x560] sm:$0xff] %vm334, %v889
    %930 = vst.msk [vmem:[#allocation4 + $0x588] sm:$0xff] %vm334, %v890
    %931 = vst.msk [vmem:[#allocation4 + $0x5b0] sm:$0xff] %vm334, %v891
    %932 = vst.msk [vmem:[#allocation4 + $0x5d8] sm:$0xff] %vm334, %v892
    %933 = vst.msk [vmem:[#allocation4 + $0x600] sm:$0xff] %vm334, %v893
    %934 = vst.msk [vmem:[#allocation4 + $0x628] sm:$0xff] %vm334, %v894
    %v935 = vld [vmem:[#allocation3 + $0x3] sm:$0xff]
    %v936 = vld [vmem:[#allocation3 + $0x13] sm:$0xff]
    %v937 = vld [vmem:[%s4 + $0x18] sm:$0xff]
    %v938 = vld [vmem:[%s4 + $0x40] sm:$0xff]
    %v939 = vld [vmem:[%s4 + $0x68] sm:$0xff]
    %v940 = vld [vmem:[%s4 + $0x90] sm:$0xff]
    %v941 = vld [vmem:[%s4 + $0xb8] sm:$0xff]
    %v942 = vld [vmem:[%s4 + $0xe0] sm:$0xff]
    %v943 = vld [vmem:[%s4 + $0x108] sm:$0xff]
    %v944 = vld [vmem:[%s4 + $0x130] sm:$0xff]
    %v945 = vld [vmem:[%s4 + $0x158] sm:$0xff]
    %v946 = vld [vmem:[%s4 + $0x180] sm:$0xff]
    %v947 = vld [vmem:[%s4 + $0x1a8] sm:$0xff]
    %v948 = vld [vmem:[%s4 + $0x1d0] sm:$0xff]
    %v949 = vld [vmem:[%s4 + $0x1f8] sm:$0xff]
    %v950 = vld [vmem:[%s4 + $0x220] sm:$0xff]
    %v951 = vld [vmem:[%s4 + $0x248] sm:$0xff]
    %v952 = vld [vmem:[%s4 + $0x270] sm:$0xff]
    %v953 = vld [vmem:[%s4 + $0x298] sm:$0xff]
    %v954 = vld [vmem:[%s4 + $0x2c0] sm:$0xff]
    %v955 = vld [vmem:[%s4 + $0x2e8] sm:$0xff]
    %v956 = vld [vmem:[%s4 + $0x310] sm:$0xff]
    %v957 = vld [vmem:[%s4 + $0x338] sm:$0xff]
    %v958 = vld [vmem:[%s4 + $0x360] sm:$0xff]
    %v959 = vld [vmem:[%s4 + $0x388] sm:$0xff]
    %v960 = vld [vmem:[%s4 + $0x3b0] sm:$0xff]
    %v961 = vld [vmem:[%s4 + $0x3d8] sm:$0xff]
    %v962 = vld [vmem:[%s4 + $0x400] sm:$0xff]
    %v963 = vld [vmem:[%s4 + $0x428] sm:$0xff]
    %v964 = vld [vmem:[%s4 + $0x450] sm:$0xff]
    %v965 = vld [vmem:[%s4 + $0x478] sm:$0xff]
    %v966 = vld [vmem:[%s4 + $0x4a0] sm:$0xff]
    %v967 = vld [vmem:[%s4 + $0x4c8] sm:$0xff]
    %v968 = vld [vmem:[%s4 + $0x4f0] sm:$0xff]
    %v969 = vld [vmem:[%s4 + $0x518] sm:$0xff]
    %v970 = vld [vmem:[%s4 + $0x540] sm:$0xff]
    %v971 = vld [vmem:[%s4 + $0x568] sm:$0xff]
    %v972 = vld [vmem:[%s4 + $0x590] sm:$0xff]
    %v973 = vld [vmem:[%s4 + $0x5b8] sm:$0xff]
    %v974 = vld [vmem:[%s4 + $0x5e0] sm:$0xff]
    %v975 = vld [vmem:[%s4 + $0x608] sm:$0xff]
    %v976 = vld [vmem:[%s4 + $0x630] sm:$0xff]
    %v977 = vmul.f32 %v935, %v937
    %v978 = vmul.f32 %v936, %v938
    %v979 = vmul.f32 %v935, %v939
    %v980 = vmul.f32 %v936, %v940
    %v981 = vmul.f32 %v935, %v941
    %v982 = vmul.f32 %v936, %v942
    %v983 = vmul.f32 %v935, %v943
    %v984 = vmul.f32 %v936, %v944
    %v985 = vmul.f32 %v935, %v945
    %v986 = vmul.f32 %v936, %v946
    %v987 = vmul.f32 %v935, %v947
    %v988 = vmul.f32 %v936, %v948
    %v989 = vmul.f32 %v935, %v949
    %v990 = vmul.f32 %v936, %v950
    %v991 = vmul.f32 %v935, %v951
    %v992 = vmul.f32 %v936, %v952
    %v993 = vmul.f32 %v935, %v953
    %v994 = vmul.f32 %v936, %v954
    %v995 = vmul.f32 %v935, %v955
    %v996 = vmul.f32 %v936, %v956
    %v997 = vmul.f32 %v935, %v957
    %v998 = vmul.f32 %v936, %v958
    %v999 = vmul.f32 %v935, %v959
    %v1000 = vmul.f32 %v936, %v960
    %v1001 = vmul.f32 %v935, %v961
    %v1002 = vmul.f32 %v936, %v962
    %v1003 = vmul.f32 %v935, %v963
    %v1004 = vmul.f32 %v936, %v964
    %v1005 = vmul.f32 %v935, %v965
    %v1006 = vmul.f32 %v936, %v966
    %v1007 = vmul.f32 %v935, %v967
    %v1008 = vmul.f32 %v936, %v968
    %v1009 = vmul.f32 %v935, %v969
    %v1010 = vmul.f32 %v936, %v970
    %v1011 = vmul.f32 %v935, %v971
    %v1012 = vmul.f32 %v936, %v972
    %v1013 = vmul.f32 %v935, %v973
    %v1014 = vmul.f32 %v936, %v974
    %v1015 = vmul.f32 %v935, %v975
    %v1016 = vmul.f32 %v936, %v976
    %1017 = vst.msk [vmem:[#allocation4 + $0x18] sm:$0xff] %vm334, %v977
    %1018 = vst.msk [vmem:[#allocation4 + $0x40] sm:$0xff] %vm334, %v978
    %1019 = vst.msk [vmem:[#allocation4 + $0x68] sm:$0xff] %vm334, %v979
    %1020 = vst.msk [vmem:[#allocation4 + $0x90] sm:$0xff] %vm334, %v980
    %1021 = vst.msk [vmem:[#allocation4 + $0xb8] sm:$0xff] %vm334, %v981
    %1022 = vst.msk [vmem:[#allocation4 + $0xe0] sm:$0xff] %vm334, %v982
    %1023 = vst.msk [vmem:[#allocation4 + $0x108] sm:$0xff] %vm334, %v983
    %1024 = vst.msk [vmem:[#allocation4 + $0x130] sm:$0xff] %vm334, %v984
    %1025 = vst.msk [vmem:[#allocation4 + $0x158] sm:$0xff] %vm334, %v985
    %1026 = vst.msk [vmem:[#allocation4 + $0x180] sm:$0xff] %vm334, %v986
    %1027 = vst.msk [vmem:[#allocation4 + $0x1a8] sm:$0xff] %vm334, %v987
    %1028 = vst.msk [vmem:[#allocation4 + $0x1d0] sm:$0xff] %vm334, %v988
    %1029 = vst.msk [vmem:[#allocation4 + $0x1f8] sm:$0xff] %vm334, %v989
    %1030 = vst.msk [vmem:[#allocation4 + $0x220] sm:$0xff] %vm334, %v990
    %1031 = vst.msk [vmem:[#allocation4 + $0x248] sm:$0xff] %vm334, %v991
    %1032 = vst.msk [vmem:[#allocation4 + $0x270] sm:$0xff] %vm334, %v992
    %1033 = vst.msk [vmem:[#allocation4 + $0x298] sm:$0xff] %vm334, %v993
    %1034 = vst.msk [vmem:[#allocation4 + $0x2c0] sm:$0xff] %vm334, %v994
    %1035 = vst.msk [vmem:[#allocation4 + $0x2e8] sm:$0xff] %vm334, %v995
    %1036 = vst.msk [vmem:[#allocation4 + $0x310] sm:$0xff] %vm334, %v996
    %1037 = vst.msk [vmem:[#allocation4 + $0x338] sm:$0xff] %vm334, %v997
    %1038 = vst.msk [vmem:[#allocation4 + $0x360] sm:$0xff] %vm334, %v998
    %1039 = vst.msk [vmem:[#allocation4 + $0x388] sm:$0xff] %vm334, %v999
    %1040 = vst.msk [vmem:[#allocation4 + $0x3b0] sm:$0xff] %vm334, %v1000
    %1041 = vst.msk [vmem:[#allocation4 + $0x3d8] sm:$0xff] %vm334, %v1001
    %1042 = vst.msk [vmem:[#allocation4 + $0x400] sm:$0xff] %vm334, %v1002
    %1043 = vst.msk [vmem:[#allocation4 + $0x428] sm:$0xff] %vm334, %v1003
    %1044 = vst.msk [vmem:[#allocation4 + $0x450] sm:$0xff] %vm334, %v1004
    %1045 = vst.msk [vmem:[#allocation4 + $0x478] sm:$0xff] %vm334, %v1005
    %1046 = vst.msk [vmem:[#allocation4 + $0x4a0] sm:$0xff] %vm334, %v1006
    %1047 = vst.msk [vmem:[#allocation4 + $0x4c8] sm:$0xff] %vm334, %v1007
    %1048 = vst.msk [vmem:[#allocation4 + $0x4f0] sm:$0xff] %vm334, %v1008
    %1049 = vst.msk [vmem:[#allocation4 + $0x518] sm:$0xff] %vm334, %v1009
    %1050 = vst.msk [vmem:[#allocation4 + $0x540] sm:$0xff] %vm334, %v1010
    %1051 = vst.msk [vmem:[#allocation4 + $0x568] sm:$0xff] %vm334, %v1011
    %1052 = vst.msk [vmem:[#allocation4 + $0x590] sm:$0xff] %vm334, %v1012
    %1053 = vst.msk [vmem:[#allocation4 + $0x5b8] sm:$0xff] %vm334, %v1013
    %1054 = vst.msk [vmem:[#allocation4 + $0x5e0] sm:$0xff] %vm334, %v1014
    %1055 = vst.msk [vmem:[#allocation4 + $0x608] sm:$0xff] %vm334, %v1015
    %1056 = vst.msk [vmem:[#allocation4 + $0x630] sm:$0xff] %vm334, %v1016
    %v1057 = vld [vmem:[#allocation3 + $0x4] sm:$0xff]
    %v1058 = vld [vmem:[#allocation3 + $0x14] sm:$0xff]
    %v1059 = vld [vmem:[%s4 + $0x20] sm:$0xff]
    %v1060 = vld [vmem:[%s4 + $0x48] sm:$0xff]
    %v1061 = vld [vmem:[%s4 + $0x70] sm:$0xff]
    %v1062 = vld [vmem:[%s4 + $0x98] sm:$0xff]
    %v1063 = vld [vmem:[%s4 + $0xc0] sm:$0xff]
    %v1064 = vld [vmem:[%s4 + $0xe8] sm:$0xff]
    %v1065 = vld [vmem:[%s4 + $0x110] sm:$0xff]
    %v1066 = vld [vmem:[%s4 + $0x138] sm:$0xff]
    %v1067 = vld [vmem:[%s4 + $0x160] sm:$0xff]
    %v1068 = vld [vmem:[%s4 + $0x188] sm:$0xff]
    %v1069 = vld [vmem:[%s4 + $0x1b0] sm:$0xff]
    %v1070 = vld [vmem:[%s4 + $0x1d8] sm:$0xff]
    %v1071 = vld [vmem:[%s4 + $0x200] sm:$0xff]
    %v1072 = vld [vmem:[%s4 + $0x228] sm:$0xff]
    %v1073 = vld [vmem:[%s4 + $0x250] sm:$0xff]
    %v1074 = vld [vmem:[%s4 + $0x278] sm:$0xff]
    %v1075 = vld [vmem:[%s4 + $0x2a0] sm:$0xff]
    %v1076 = vld [vmem:[%s4 + $0x2c8] sm:$0xff]
    %v1077 = vld [vmem:[%s4 + $0x2f0] sm:$0xff]
    %v1078 = vld [vmem:[%s4 + $0x318] sm:$0xff]
    %v1079 = vld [vmem:[%s4 + $0x340] sm:$0xff]
    %v1080 = vld [vmem:[%s4 + $0x368] sm:$0xff]
    %v1081 = vld [vmem:[%s4 + $0x390] sm:$0xff]
    %v1082 = vld [vmem:[%s4 + $0x3b8] sm:$0xff]
    %v1083 = vld [vmem:[%s4 + $0x3e0] sm:$0xff]
    %v1084 = vld [vmem:[%s4 + $0x408] sm:$0xff]
    %v1085 = vld [vmem:[%s4 + $0x430] sm:$0xff]
    %v1086 = vld [vmem:[%s4 + $0x458] sm:$0xff]
    %v1087 = vld [vmem:[%s4 + $0x480] sm:$0xff]
    %v1088 = vld [vmem:[%s4 + $0x4a8] sm:$0xff]
    %v1089 = vld [vmem:[%s4 + $0x4d0] sm:$0xff]
    %v1090 = vld [vmem:[%s4 + $0x4f8] sm:$0xff]
    %v1091 = vld [vmem:[%s4 + $0x520] sm:$0xff]
    %v1092 = vld [vmem:[%s4 + $0x548] sm:$0xff]
    %v1093 = vld [vmem:[%s4 + $0x570] sm:$0xff]
    %v1094 = vld [vmem:[%s4 + $0x598] sm:$0xff]
    %v1095 = vld [vmem:[%s4 + $0x5c0] sm:$0xff]
    %v1096 = vld [vmem:[%s4 + $0x5e8] sm:$0xff]
    %v1097 = vld [vmem:[%s4 + $0x610] sm:$0xff]
    %v1098 = vld [vmem:[%s4 + $0x638] sm:$0xff]
    %v1099 = vmul.f32 %v1057, %v1059
    %v1100 = vmul.f32 %v1058, %v1060
    %v1101 = vmul.f32 %v1057, %v1061
    %v1102 = vmul.f32 %v1058, %v1062
    %v1103 = vmul.f32 %v1057, %v1063
    %v1104 = vmul.f32 %v1058, %v1064
    %v1105 = vmul.f32 %v1057, %v1065
    %v1106 = vmul.f32 %v1058, %v1066
    %v1107 = vmul.f32 %v1057, %v1067
    %v1108 = vmul.f32 %v1058, %v1068
    %v1109 = vmul.f32 %v1057, %v1069
    %v1110 = vmul.f32 %v1058, %v1070
    %v1111 = vmul.f32 %v1057, %v1071
    %v1112 = vmul.f32 %v1058, %v1072
    %v1113 = vmul.f32 %v1057, %v1073
    %v1114 = vmul.f32 %v1058, %v1074
    %v1115 = vmul.f32 %v1057, %v1075
    %v1116 = vmul.f32 %v1058, %v1076
    %v1117 = vmul.f32 %v1057, %v1077
    %v1118 = vmul.f32 %v1058, %v1078
    %v1119 = vmul.f32 %v1057, %v1079
    %v1120 = vmul.f32 %v1058, %v1080
    %v1121 = vmul.f32 %v1057, %v1081
    %v1122 = vmul.f32 %v1058, %v1082
    %v1123 = vmul.f32 %v1057, %v1083
    %v1124 = vmul.f32 %v1058, %v1084
    %v1125 = vmul.f32 %v1057, %v1085
    %v1126 = vmul.f32 %v1058, %v1086
    %v1127 = vmul.f32 %v1057, %v1087
    %v1128 = vmul.f32 %v1058, %v1088
    %v1129 = vmul.f32 %v1057, %v1089
    %v1130 = vmul.f32 %v1058, %v1090
    %v1131 = vmul.f32 %v1057, %v1091
    %v1132 = vmul.f32 %v1058, %v1092
    %v1133 = vmul.f32 %v1057, %v1093
    %v1134 = vmul.f32 %v1058, %v1094
    %v1135 = vmul.f32 %v1057, %v1095
    %v1136 = vmul.f32 %v1058, %v1096
    %v1137 = vmul.f32 %v1057, %v1097
    %v1138 = vmul.f32 %v1058, %v1098
    %1139 = vst.msk [vmem:[#allocation4 + $0x20] sm:$0xff] %vm334, %v1099
    %1140 = vst.msk [vmem:[#allocation4 + $0x48] sm:$0xff] %vm334, %v1100
    %1141 = vst.msk [vmem:[#allocation4 + $0x70] sm:$0xff] %vm334, %v1101
    %1142 = vst.msk [vmem:[#allocation4 + $0x98] sm:$0xff] %vm334, %v1102
    %1143 = vst.msk [vmem:[#allocation4 + $0xc0] sm:$0xff] %vm334, %v1103
    %1144 = vst.msk [vmem:[#allocation4 + $0xe8] sm:$0xff] %vm334, %v1104
    %1145 = vst.msk [vmem:[#allocation4 + $0x110] sm:$0xff] %vm334, %v1105
    %1146 = vst.msk [vmem:[#allocation4 + $0x138] sm:$0xff] %vm334, %v1106
    %1147 = vst.msk [vmem:[#allocation4 + $0x160] sm:$0xff] %vm334, %v1107
    %1148 = vst.msk [vmem:[#allocation4 + $0x188] sm:$0xff] %vm334, %v1108
    %1149 = vst.msk [vmem:[#allocation4 + $0x1b0] sm:$0xff] %vm334, %v1109
    %1150 = vst.msk [vmem:[#allocation4 + $0x1d8] sm:$0xff] %vm334, %v1110
    %1151 = vst.msk [vmem:[#allocation4 + $0x200] sm:$0xff] %vm334, %v1111
    %1152 = vst.msk [vmem:[#allocation4 + $0x228] sm:$0xff] %vm334, %v1112
    %1153 = vst.msk [vmem:[#allocation4 + $0x250] sm:$0xff] %vm334, %v1113
    %1154 = vst.msk [vmem:[#allocation4 + $0x278] sm:$0xff] %vm334, %v1114
    %1155 = vst.msk [vmem:[#allocation4 + $0x2a0] sm:$0xff] %vm334, %v1115
    %1156 = vst.msk [vmem:[#allocation4 + $0x2c8] sm:$0xff] %vm334, %v1116
    %1157 = vst.msk [vmem:[#allocation4 + $0x2f0] sm:$0xff] %vm334, %v1117
    %1158 = vst.msk [vmem:[#allocation4 + $0x318] sm:$0xff] %vm334, %v1118
    %1159 = vst.msk [vmem:[#allocation4 + $0x340] sm:$0xff] %vm334, %v1119
    %1160 = vst.msk [vmem:[#allocation4 + $0x368] sm:$0xff] %vm334, %v1120
    %1161 = vst.msk [vmem:[#allocation4 + $0x390] sm:$0xff] %vm334, %v1121
    %1162 = vst.msk [vmem:[#allocation4 + $0x3b8] sm:$0xff] %vm334, %v1122
    %1163 = vst.msk [vmem:[#allocation4 + $0x3e0] sm:$0xff] %vm334, %v1123
    %1164 = vst.msk [vmem:[#allocation4 + $0x408] sm:$0xff] %vm334, %v1124
    %1165 = vst.msk [vmem:[#allocation4 + $0x430] sm:$0xff] %vm334, %v1125
    %1166 = vst.msk [vmem:[#allocation4 + $0x458] sm:$0xff] %vm334, %v1126
    %1167 = vst.msk [vmem:[#allocation4 + $0x480] sm:$0xff] %vm334, %v1127
    %1168 = vst.msk [vmem:[#allocation4 + $0x4a8] sm:$0xff] %vm334, %v1128
    %1169 = vst.msk [vmem:[#allocation4 + $0x4d0] sm:$0xff] %vm334, %v1129
    %1170 = vst.msk [vmem:[#allocation4 + $0x4f8] sm:$0xff] %vm334, %v1130
    %1171 = vst.msk [vmem:[#allocation4 + $0x520] sm:$0xff] %vm334, %v1131
    %1172 = vst.msk [vmem:[#allocation4 + $0x548] sm:$0xff] %vm334, %v1132
    %1173 = vst.msk [vmem:[#allocation4 + $0x570] sm:$0xff] %vm334, %v1133
    %1174 = vst.msk [vmem:[#allocation4 + $0x598] sm:$0xff] %vm334, %v1134
    %1175 = vst.msk [vmem:[#allocation4 + $0x5c0] sm:$0xff] %vm334, %v1135
    %1176 = vst.msk [vmem:[#allocation4 + $0x5e8] sm:$0xff] %vm334, %v1136
    %1177 = vst.msk [vmem:[#allocation4 + $0x610] sm:$0xff] %vm334, %v1137
    %1178 = vst.msk [vmem:[#allocation4 + $0x638] sm:$0xff] %vm334, %v1138
    %v1179 = vld [vmem:[#allocation4] sm:$0xff]
    %v1180 = vld [vmem:[#allocation4 + $0x8] sm:$0xff]
    %v1181 = vld [vmem:[#allocation4 + $0x10] sm:$0xff]
    %v1182 = vld [vmem:[#allocation4 + $0x18] sm:$0xff]
    %v1183 = vld [vmem:[#allocation4 + $0x20] sm:$0xff]
    %v1184 = vld [vmem:[#allocation4 + $0x28] sm:$0xff]
    %v1185 = vld [vmem:[#allocation4 + $0x30] sm:$0xff]
    %v1186 = vld [vmem:[#allocation4 + $0x38] sm:$0xff]
    %v1187 = vld [vmem:[#allocation4 + $0x40] sm:$0xff]
    %v1188 = vld [vmem:[#allocation4 + $0x48] sm:$0xff]
    %v1189 = vld [vmem:[#allocation4 + $0x50] sm:$0xff]
    %v1190 = vld [vmem:[#allocation4 + $0x58] sm:$0xff]
    %v1191 = vld [vmem:[#allocation4 + $0x60] sm:$0xff]
    %v1192 = vld [vmem:[#allocation4 + $0x68] sm:$0xff]
    %v1193 = vld [vmem:[#allocation4 + $0x70] sm:$0xff]
    %v1194 = vld [vmem:[#allocation4 + $0x78] sm:$0xff]
    %v1195 = vld [vmem:[#allocation4 + $0x80] sm:$0xff]
    %v1196 = vld [vmem:[#allocation4 + $0x88] sm:$0xff]
    %v1197 = vld [vmem:[#allocation4 + $0x90] sm:$0xff]
    %v1198 = vld [vmem:[#allocation4 + $0x98] sm:$0xff]
    %v1199 = vld [vmem:[#allocation4 + $0xa0] sm:$0xff]
    %v1200 = vld [vmem:[#allocation4 + $0xa8] sm:$0xff]
    %v1201 = vld [vmem:[#allocation4 + $0xb0] sm:$0xff]
    %v1202 = vld [vmem:[#allocation4 + $0xb8] sm:$0xff]
    %v1203 = vld [vmem:[#allocation4 + $0xc0] sm:$0xff]
    %v1204 = vld [vmem:[#allocation4 + $0xc8] sm:$0xff]
    %v1205 = vld [vmem:[#allocation4 + $0xd0] sm:$0xff]
    %v1206 = vld [vmem:[#allocation4 + $0xd8] sm:$0xff]
    %v1207 = vld [vmem:[#allocation4 + $0xe0] sm:$0xff]
    %v1208 = vld [vmem:[#allocation4 + $0xe8] sm:$0xff]
    %v1209 = vld [vmem:[#allocation4 + $0xf0] sm:$0xff]
    %v1210 = vld [vmem:[#allocation4 + $0xf8] sm:$0xff]
    %v1211 = vld [vmem:[#allocation4 + $0x100] sm:$0xff]
    %v1212 = vld [vmem:[#allocation4 + $0x108] sm:$0xff]
    %v1213 = vld [vmem:[#allocation4 + $0x110] sm:$0xff]
    %v1214 = vld [vmem:[#allocation4 + $0x118] sm:$0xff]
    %v1215 = vld [vmem:[#allocation4 + $0x120] sm:$0xff]
    %v1216 = vld [vmem:[#allocation4 + $0x128] sm:$0xff]
    %v1217 = vld [vmem:[#allocation4 + $0x130] sm:$0xff]
    %v1218 = vld [vmem:[#allocation4 + $0x138] sm:$0xff]
    %v1219 = vld [vmem:[#allocation4 + $0x140] sm:$0xff]
    %v1220 = vld [vmem:[#allocation4 + $0x148] sm:$0xff]
    %v1221 = vld [vmem:[#allocation4 + $0x150] sm:$0xff]
    %v1222 = vld [vmem:[#allocation4 + $0x158] sm:$0xff]
    %v1223 = vld [vmem:[#allocation4 + $0x160] sm:$0xff]
    %v1224 = vld [vmem:[#allocation4 + $0x168] sm:$0xff]
    %v1225 = vld [vmem:[#allocation4 + $0x170] sm:$0xff]
    %v1226 = vld [vmem:[#allocation4 + $0x178] sm:$0xff]
    %v1227 = vld [vmem:[#allocation4 + $0x180] sm:$0xff]
    %v1228 = vld [vmem:[#allocation4 + $0x188] sm:$0xff]
    %v1229 = vld [vmem:[#allocation4 + $0x190] sm:$0xff]
    %v1230 = vld [vmem:[#allocation4 + $0x198] sm:$0xff]
    %v1231 = vld [vmem:[#allocation4 + $0x1a0] sm:$0xff]
    %v1232 = vld [vmem:[#allocation4 + $0x1a8] sm:$0xff]
    %v1233 = vld [vmem:[#allocation4 + $0x1b0] sm:$0xff]
    %v1234 = vld [vmem:[#allocation4 + $0x1b8] sm:$0xff]
    %v1235 = vld [vmem:[#allocation4 + $0x1c0] sm:$0xff]
    %v1236 = vld [vmem:[#allocation4 + $0x1c8] sm:$0xff]
    %v1237 = vld [vmem:[#allocation4 + $0x1d0] sm:$0xff]
    %v1238 = vld [vmem:[#allocation4 + $0x1d8] sm:$0xff]
    %v1239 = vld [vmem:[#allocation4 + $0x1e0] sm:$0xff]
    %v1240 = vld [vmem:[#allocation4 + $0x1e8] sm:$0xff]
    %v1241 = vld [vmem:[#allocation4 + $0x1f0] sm:$0xff]
    %v1242 = vld [vmem:[#allocation4 + $0x1f8] sm:$0xff]
    %v1243 = vld [vmem:[#allocation4 + $0x200] sm:$0xff]
    %v1244 = vld [vmem:[#allocation4 + $0x208] sm:$0xff]
    %v1245 = vld [vmem:[#allocation4 + $0x210] sm:$0xff]
    %v1246 = vld [vmem:[#allocation4 + $0x218] sm:$0xff]
    %v1247 = vld [vmem:[#allocation4 + $0x220] sm:$0xff]
    %v1248 = vld [vmem:[#allocation4 + $0x228] sm:$0xff]
    %v1249 = vld [vmem:[#allocation4 + $0x230] sm:$0xff]
    %v1250 = vld [vmem:[#allocation4 + $0x238] sm:$0xff]
    %v1251 = vld [vmem:[#allocation4 + $0x240] sm:$0xff]
    %v1252 = vld [vmem:[#allocation4 + $0x248] sm:$0xff]
    %v1253 = vld [vmem:[#allocation4 + $0x250] sm:$0xff]
    %v1254 = vld [vmem:[#allocation4 + $0x258] sm:$0xff]
    %v1255 = vld [vmem:[#allocation4 + $0x260] sm:$0xff]
    %v1256 = vld [vmem:[#allocation4 + $0x268] sm:$0xff]
    %v1257 = vld [vmem:[#allocation4 + $0x270] sm:$0xff]
    %v1258 = vld [vmem:[#allocation4 + $0x278] sm:$0xff]
    %v1259 = vld [vmem:[#allocation4 + $0x280] sm:$0xff]
    %v1260 = vld [vmem:[#allocation4 + $0x288] sm:$0xff]
    %v1261 = vld [vmem:[#allocation4 + $0x290] sm:$0xff]
    %v1262 = vld [vmem:[#allocation4 + $0x298] sm:$0xff]
    %v1263 = vld [vmem:[#allocation4 + $0x2a0] sm:$0xff]
    %v1264 = vld [vmem:[#allocation4 + $0x2a8] sm:$0xff]
    %v1265 = vld [vmem:[#allocation4 + $0x2b0] sm:$0xff]
    %v1266 = vld [vmem:[#allocation4 + $0x2b8] sm:$0xff]
    %v1267 = vld [vmem:[#allocation4 + $0x2c0] sm:$0xff]
    %v1268 = vld [vmem:[#allocation4 + $0x2c8] sm:$0xff]
    %v1269 = vld [vmem:[#allocation4 + $0x2d0] sm:$0xff]
    %v1270 = vld [vmem:[#allocation4 + $0x2d8] sm:$0xff]
    %v1271 = vld [vmem:[#allocation4 + $0x2e0] sm:$0xff]
    %v1272 = vld [vmem:[#allocation4 + $0x2e8] sm:$0xff]
    %v1273 = vld [vmem:[#allocation4 + $0x2f0] sm:$0xff]
    %v1274 = vld [vmem:[#allocation4 + $0x2f8] sm:$0xff]
    %v1275 = vld [vmem:[#allocation4 + $0x300] sm:$0xff]
    %v1276 = vld [vmem:[#allocation4 + $0x308] sm:$0xff]
    %v1277 = vld [vmem:[#allocation4 + $0x310] sm:$0xff]
    %v1278 = vld [vmem:[#allocation4 + $0x318] sm:$0xff]
    %v1279 = vld [vmem:[#allocation4 + $0x320] sm:$0xff]
    %v1280 = vld [vmem:[#allocation4 + $0x328] sm:$0xff]
    %v1281 = vld [vmem:[#allocation4 + $0x330] sm:$0xff]
    %v1282 = vld [vmem:[#allocation4 + $0x338] sm:$0xff]
    %v1283 = vld [vmem:[#allocation4 + $0x340] sm:$0xff]
    %v1284 = vld [vmem:[#allocation4 + $0x348] sm:$0xff]
    %v1285 = vld [vmem:[#allocation4 + $0x350] sm:$0xff]
    %v1286 = vld [vmem:[#allocation4 + $0x358] sm:$0xff]
    %v1287 = vld [vmem:[#allocation4 + $0x360] sm:$0xff]
    %v1288 = vld [vmem:[#allocation4 + $0x368] sm:$0xff]
    %v1289 = vld [vmem:[#allocation4 + $0x370] sm:$0xff]
    %v1290 = vld [vmem:[#allocation4 + $0x378] sm:$0xff]
    %v1291 = vld [vmem:[#allocation4 + $0x380] sm:$0xff]
    %v1292 = vld [vmem:[#allocation4 + $0x388] sm:$0xff]
    %v1293 = vld [vmem:[#allocation4 + $0x390] sm:$0xff]
    %v1294 = vld [vmem:[#allocation4 + $0x398] sm:$0xff]
    %v1295 = vld [vmem:[#allocation4 + $0x3a0] sm:$0xff]
    %v1296 = vld [vmem:[#allocation4 + $0x3a8] sm:$0xff]
    %v1297 = vld [vmem:[#allocation4 + $0x3b0] sm:$0xff]
    %v1298 = vld [vmem:[#allocation4 + $0x3b8] sm:$0xff]
    %v1299 = vld [vmem:[#allocation4 + $0x3c0] sm:$0xff]
    %v1300 = vld [vmem:[#allocation4 + $0x3c8] sm:$0xff]
    %v1301 = vld [vmem:[#allocation4 + $0x3d0] sm:$0xff]
    %v1302 = vld [vmem:[#allocation4 + $0x3d8] sm:$0xff]
    %v1303 = vld [vmem:[#allocation4 + $0x3e0] sm:$0xff]
    %v1304 = vld [vmem:[#allocation4 + $0x3e8] sm:$0xff]
    %v1305 = vld [vmem:[#allocation4 + $0x3f0] sm:$0xff]
    %v1306 = vld [vmem:[#allocation4 + $0x3f8] sm:$0xff]
    %v1307 = vld [vmem:[#allocation4 + $0x400] sm:$0xff]
    %v1308 = vld [vmem:[#allocation4 + $0x408] sm:$0xff]
    %v1309 = vld [vmem:[#allocation4 + $0x410] sm:$0xff]
    %v1310 = vld [vmem:[#allocation4 + $0x418] sm:$0xff]
    %v1311 = vld [vmem:[#allocation4 + $0x420] sm:$0xff]
    %v1312 = vld [vmem:[#allocation4 + $0x428] sm:$0xff]
    %v1313 = vld [vmem:[#allocation4 + $0x430] sm:$0xff]
    %v1314 = vld [vmem:[#allocation4 + $0x438] sm:$0xff]
    %v1315 = vld [vmem:[#allocation4 + $0x440] sm:$0xff]
    %v1316 = vld [vmem:[#allocation4 + $0x448] sm:$0xff]
    %v1317 = vld [vmem:[#allocation4 + $0x450] sm:$0xff]
    %v1318 = vld [vmem:[#allocation4 + $0x458] sm:$0xff]
    %v1319 = vld [vmem:[#allocation4 + $0x460] sm:$0xff]
    %v1320 = vld [vmem:[#allocation4 + $0x468] sm:$0xff]
    %v1321 = vld [vmem:[#allocation4 + $0x470] sm:$0xff]
    %v1322 = vld [vmem:[#allocation4 + $0x478] sm:$0xff]
    %v1323 = vld [vmem:[#allocation4 + $0x480] sm:$0xff]
    %v1324 = vld [vmem:[#allocation4 + $0x488] sm:$0xff]
    %v1325 = vld [vmem:[#allocation4 + $0x490] sm:$0xff]
    %v1326 = vld [vmem:[#allocation4 + $0x498] sm:$0xff]
    %v1327 = vld [vmem:[#allocation4 + $0x4a0] sm:$0xff]
    %v1328 = vld [vmem:[#allocation4 + $0x4a8] sm:$0xff]
    %v1329 = vld [vmem:[#allocation4 + $0x4b0] sm:$0xff]
    %v1330 = vld [vmem:[#allocation4 + $0x4b8] sm:$0xff]
    %v1331 = vld [vmem:[#allocation4 + $0x4c0] sm:$0xff]
    %v1332 = vld [vmem:[#allocation4 + $0x4c8] sm:$0xff]
    %v1333 = vld [vmem:[#allocation4 + $0x4d0] sm:$0xff]
    %v1334 = vld [vmem:[#allocation4 + $0x4d8] sm:$0xff]
    %v1335 = vld [vmem:[#allocation4 + $0x4e0] sm:$0xff]
    %v1336 = vld [vmem:[#allocation4 + $0x4e8] sm:$0xff]
    %v1337 = vld [vmem:[#allocation4 + $0x4f0] sm:$0xff]
    %v1338 = vld [vmem:[#allocation4 + $0x4f8] sm:$0xff]
    %v1339 = vld [vmem:[#allocation4 + $0x500] sm:$0xff]
    %v1340 = vld [vmem:[#allocation4 + $0x508] sm:$0xff]
    %v1341 = vld [vmem:[#allocation4 + $0x510] sm:$0xff]
    %v1342 = vld [vmem:[#allocation4 + $0x518] sm:$0xff]
    %v1343 = vld [vmem:[#allocation4 + $0x520] sm:$0xff]
    %v1344 = vld [vmem:[#allocation4 + $0x528] sm:$0xff]
    %v1345 = vld [vmem:[#allocation4 + $0x530] sm:$0xff]
    %v1346 = vld [vmem:[#allocation4 + $0x538] sm:$0xff]
    %v1347 = vld [vmem:[#allocation4 + $0x540] sm:$0xff]
    %v1348 = vld [vmem:[#allocation4 + $0x548] sm:$0xff]
    %v1349 = vld [vmem:[#allocation4 + $0x550] sm:$0xff]
    %v1350 = vld [vmem:[#allocation4 + $0x558] sm:$0xff]
    %v1351 = vld [vmem:[#allocation4 + $0x560] sm:$0xff]
    %v1352 = vld [vmem:[#allocation4 + $0x568] sm:$0xff]
    %v1353 = vld [vmem:[#allocation4 + $0x570] sm:$0xff]
    %v1354 = vld [vmem:[#allocation4 + $0x578] sm:$0xff]
    %v1355 = vld [vmem:[#allocation4 + $0x580] sm:$0xff]
    %v1356 = vld [vmem:[#allocation4 + $0x588] sm:$0xff]
    %v1357 = vld [vmem:[#allocation4 + $0x590] sm:$0xff]
    %v1358 = vld [vmem:[#allocation4 + $0x598] sm:$0xff]
    %v1359 = vld [vmem:[#allocation4 + $0x5a0] sm:$0xff]
    %v1360 = vld [vmem:[#allocation4 + $0x5a8] sm:$0xff]
    %v1361 = vld [vmem:[#allocation4 + $0x5b0] sm:$0xff]
    %v1362 = vld [vmem:[#allocation4 + $0x5b8] sm:$0xff]
    %v1363 = vld [vmem:[#allocation4 + $0x5c0] sm:$0xff]
    %v1364 = vld [vmem:[#allocation4 + $0x5c8] sm:$0xff]
    %v1365 = vld [vmem:[#allocation4 + $0x5d0] sm:$0xff]
    %v1366 = vld [vmem:[#allocation4 + $0x5d8] sm:$0xff]
    %v1367 = vld [vmem:[#allocation4 + $0x5e0] sm:$0xff]
    %v1368 = vld [vmem:[#allocation4 + $0x5e8] sm:$0xff]
    %v1369 = vld [vmem:[#allocation4 + $0x5f0] sm:$0xff]
    %v1370 = vld [vmem:[#allocation4 + $0x5f8] sm:$0xff]
    %v1371 = vld [vmem:[#allocation4 + $0x600] sm:$0xff]
    %v1372 = vld [vmem:[#allocation4 + $0x608] sm:$0xff]
    %v1373 = vld [vmem:[#allocation4 + $0x610] sm:$0xff]
    %v1374 = vld [vmem:[#allocation4 + $0x618] sm:$0xff]
    %v1375 = vld [vmem:[#allocation4 + $0x620] sm:$0xff]
    %v1376 = vld [vmem:[#allocation4 + $0x628] sm:$0xff]
    %v1377 = vld [vmem:[#allocation4 + $0x630] sm:$0xff]
    %v1378 = vld [vmem:[#allocation4 + $0x638] sm:$0xff]
    %v1379 = vld [vmem:[%s5] sm:$0xff]
    %v1380 = vld [vmem:[%s5 + $0x8] sm:$0xff]
    %v1381 = vld [vmem:[%s5 + $0x10] sm:$0xff]
    %v1382 = vld [vmem:[%s5 + $0x18] sm:$0xff]
    %v1383 = vld [vmem:[%s5 + $0x20] sm:$0xff]
    %v1384 = vld [vmem:[%s5 + $0x28] sm:$0xff]
    %v1385 = vld [vmem:[%s5 + $0x30] sm:$0xff]
    %v1386 = vld [vmem:[%s5 + $0x38] sm:$0xff]
    %v1387 = vld [vmem:[%s5 + $0x40] sm:$0xff]
    %v1388 = vld [vmem:[%s5 + $0x48] sm:$0xff]
    %v1389 = vld [vmem:[%s5 + $0x50] sm:$0xff]
    %v1390 = vld [vmem:[%s5 + $0x58] sm:$0xff]
    %v1391 = vld [vmem:[%s5 + $0x60] sm:$0xff]
    %v1392 = vld [vmem:[%s5 + $0x68] sm:$0xff]
    %v1393 = vld [vmem:[%s5 + $0x70] sm:$0xff]
    %v1394 = vld [vmem:[%s5 + $0x78] sm:$0xff]
    %v1395 = vld [vmem:[%s5 + $0x80] sm:$0xff]
    %v1396 = vld [vmem:[%s5 + $0x88] sm:$0xff]
    %v1397 = vld [vmem:[%s5 + $0x90] sm:$0xff]
    %v1398 = vld [vmem:[%s5 + $0x98] sm:$0xff]
    %v1399 = vld [vmem:[%s5 + $0xa0] sm:$0xff]
    %v1400 = vld [vmem:[%s5 + $0xa8] sm:$0xff]
    %v1401 = vld [vmem:[%s5 + $0xb0] sm:$0xff]
    %v1402 = vld [vmem:[%s5 + $0xb8] sm:$0xff]
    %v1403 = vld [vmem:[%s5 + $0xc0] sm:$0xff]
    %v1404 = vld [vmem:[%s5 + $0xc8] sm:$0xff]
    %v1405 = vld [vmem:[%s5 + $0xd0] sm:$0xff]
    %v1406 = vld [vmem:[%s5 + $0xd8] sm:$0xff]
    %v1407 = vld [vmem:[%s5 + $0xe0] sm:$0xff]
    %v1408 = vld [vmem:[%s5 + $0xe8] sm:$0xff]
    %v1409 = vld [vmem:[%s5 + $0xf0] sm:$0xff]
    %v1410 = vld [vmem:[%s5 + $0xf8] sm:$0xff]
    %v1411 = vld [vmem:[%s5 + $0x100] sm:$0xff]
    %v1412 = vld [vmem:[%s5 + $0x108] sm:$0xff]
    %v1413 = vld [vmem:[%s5 + $0x110] sm:$0xff]
    %v1414 = vld [vmem:[%s5 + $0x118] sm:$0xff]
    %v1415 = vld [vmem:[%s5 + $0x120] sm:$0xff]
    %v1416 = vld [vmem:[%s5 + $0x128] sm:$0xff]
    %v1417 = vld [vmem:[%s5 + $0x130] sm:$0xff]
    %v1418 = vld [vmem:[%s5 + $0x138] sm:$0xff]
    %v1419 = vld [vmem:[%s5 + $0x140] sm:$0xff]
    %v1420 = vld [vmem:[%s5 + $0x148] sm:$0xff]
    %v1421 = vld [vmem:[%s5 + $0x150] sm:$0xff]
    %v1422 = vld [vmem:[%s5 + $0x158] sm:$0xff]
    %v1423 = vld [vmem:[%s5 + $0x160] sm:$0xff]
    %v1424 = vld [vmem:[%s5 + $0x168] sm:$0xff]
    %v1425 = vld [vmem:[%s5 + $0x170] sm:$0xff]
    %v1426 = vld [vmem:[%s5 + $0x178] sm:$0xff]
    %v1427 = vld [vmem:[%s5 + $0x180] sm:$0xff]
    %v1428 = vld [vmem:[%s5 + $0x188] sm:$0xff]
    %v1429 = vld [vmem:[%s5 + $0x190] sm:$0xff]
    %v1430 = vld [vmem:[%s5 + $0x198] sm:$0xff]
    %v1431 = vld [vmem:[%s5 + $0x1a0] sm:$0xff]
    %v1432 = vld [vmem:[%s5 + $0x1a8] sm:$0xff]
    %v1433 = vld [vmem:[%s5 + $0x1b0] sm:$0xff]
    %v1434 = vld [vmem:[%s5 + $0x1b8] sm:$0xff]
    %v1435 = vld [vmem:[%s5 + $0x1c0] sm:$0xff]
    %v1436 = vld [vmem:[%s5 + $0x1c8] sm:$0xff]
    %v1437 = vld [vmem:[%s5 + $0x1d0] sm:$0xff]
    %v1438 = vld [vmem:[%s5 + $0x1d8] sm:$0xff]
    %v1439 = vld [vmem:[%s5 + $0x1e0] sm:$0xff]
    %v1440 = vld [vmem:[%s5 + $0x1e8] sm:$0xff]
    %v1441 = vld [vmem:[%s5 + $0x1f0] sm:$0xff]
    %v1442 = vld [vmem:[%s5 + $0x1f8] sm:$0xff]
    %v1443 = vld [vmem:[%s5 + $0x200] sm:$0xff]
    %v1444 = vld [vmem:[%s5 + $0x208] sm:$0xff]
    %v1445 = vld [vmem:[%s5 + $0x210] sm:$0xff]
    %v1446 = vld [vmem:[%s5 + $0x218] sm:$0xff]
    %v1447 = vld [vmem:[%s5 + $0x220] sm:$0xff]
    %v1448 = vld [vmem:[%s5 + $0x228] sm:$0xff]
    %v1449 = vld [vmem:[%s5 + $0x230] sm:$0xff]
    %v1450 = vld [vmem:[%s5 + $0x238] sm:$0xff]
    %v1451 = vld [vmem:[%s5 + $0x240] sm:$0xff]
    %v1452 = vld [vmem:[%s5 + $0x248] sm:$0xff]
    %v1453 = vld [vmem:[%s5 + $0x250] sm:$0xff]
    %v1454 = vld [vmem:[%s5 + $0x258] sm:$0xff]
    %v1455 = vld [vmem:[%s5 + $0x260] sm:$0xff]
    %v1456 = vld [vmem:[%s5 + $0x268] sm:$0xff]
    %v1457 = vld [vmem:[%s5 + $0x270] sm:$0xff]
    %v1458 = vld [vmem:[%s5 + $0x278] sm:$0xff]
    %v1459 = vld [vmem:[%s7] sm:$0x1]
    %v1461 = vlaneseq
    %v1462 = vshrl.u32 %v1461, 7
    %v1463 = vsub.s32 0, %v1462
    %v1464 = vrot.slane %v1459, %v1463
    %1466 = vmatprep.subr.mxu0 0.0
    %1467 = vmatpush1.msra.mxu0 %v1379
    %1468 = vmatprep.subr.mxu0 0.0
    %1469 = vmatpush1.msra.mxu0 %v1380
    %1470 = vmatprep.subr.mxu0 0.0
    %1471 = vmatpush1.msra.mxu0 %v1381
    %1472 = vmatprep.subr.mxu0 0.0
    %1473 = vmatpush1.msra.mxu0 %v1382
    %1474 = vmatprep.subr.mxu0 0.0
    %1475 = vmatpush1.msra.mxu0 %v1383
    %1476 = vmatprep.subr.mxu0 0.0
    %1477 = vmatpush1.msra.mxu0 %v1384
    %1478 = vmatprep.subr.mxu0 0.0
    %1479 = vmatpush1.msra.mxu0 %v1385
    %1480 = vmatprep.subr.mxu0 0.0
    %1481 = vmatpush1.msra.mxu0 %v1386
    %1482 = vmatprep.subr.mxu0 0.0
    %1483 = vmatpush1.msra.mxu0 %v1387
    %1484 = vmatprep.subr.mxu0 0.0
    %1485 = vmatpush1.msra.mxu0 %v1388
    %1486 = vmatprep.subr.mxu0 0.0
    %1487 = vmatpush1.msra.mxu0 %v1389
    %1488 = vmatprep.subr.mxu0 0.0
    %1489 = vmatpush1.msra.mxu0 %v1390
    %1490 = vmatprep.subr.mxu0 0.0
    %1491 = vmatpush1.msra.mxu0 %v1391
    %1492 = vmatprep.subr.mxu0 0.0
    %1493 = vmatpush1.msra.mxu0 %v1392
    %1494 = vmatprep.subr.mxu0 0.0
    %1495 = vmatpush1.msra.mxu0 %v1393
    %1496 = vmatprep.subr.mxu0 0.0
    %1497 = vmatpush1.msra.mxu0 %v1394
    %1498 = vmatprep.subr.mxu0 0.0
    %1499 = vmatpush1.msra.mxu0 %v1395
    %1500 = vmatprep.subr.mxu0 0.0
    %1501 = vmatpush1.msra.mxu0 %v1396
    %1502 = vmatprep.subr.mxu0 0.0
    %1503 = vmatpush1.msra.mxu0 %v1397
    %1504 = vmatprep.subr.mxu0 0.0
    %1505 = vmatpush1.msra.mxu0 %v1398
    %1506 = vmatprep.subr.mxu0 0.0
    %1507 = vmatpush1.msra.mxu0 %v1399
    %1508 = vmatprep.subr.mxu0 0.0
    %1509 = vmatpush1.msra.mxu0 %v1400
    %1510 = vmatprep.subr.mxu0 0.0
    %1511 = vmatpush1.msra.mxu0 %v1401
    %1512 = vmatprep.subr.mxu0 0.0
    %1513 = vmatpush1.msra.mxu0 %v1402
    %1514 = vmatprep.subr.mxu0 0.0
    %1515 = vmatpush1.msra.mxu0 %v1403
    %1516 = vmatprep.subr.mxu0 0.0
    %1517 = vmatpush1.msra.mxu0 %v1404
    %1518 = vmatprep.subr.mxu0 0.0
    %1519 = vmatpush1.msra.mxu0 %v1405
    %1520 = vmatprep.subr.mxu0 0.0
    %1521 = vmatpush1.msra.mxu0 %v1406
    %1522 = vmatprep.subr.mxu0 0.0
    %1523 = vmatpush1.msra.mxu0 %v1407
    %1524 = vmatprep.subr.mxu0 0.0
    %1525 = vmatpush1.msra.mxu0 %v1408
    %1526 = vmatprep.subr.mxu0 0.0
    %1527 = vmatpush1.msra.mxu0 %v1409
    %1528 = vmatprep.subr.mxu0 0.0
    %1529 = vmatpush1.msra.mxu0 %v1410
    %1530 = vmatprep.mubr.f32.mxu0 %v1180
    %1531 = vmatmul.mubr.f32.gmra.mrb[0].mxu0 %v1179
    %v1532 = vpop.f32.mrb[0].mxu0
    %v1533 = vadd.f32 %v1464, %v1532
    %v1534 = vpop.f32.mrb[0].mxu0
    %1535 = vmatprep.mubr.f32.mxu0 %v1185
    %1536 = vmatmul.mubr.f32.gmra.mrb[0].mxu0 %v1184
    %v1537 = vpop.f32.mrb[0].mxu0
    %v1538 = vadd.f32 %v1464, %v1537
    %v1539 = vpop.f32.mrb[0].mxu0
    %1540 = vmatprep.mubr.f32.mxu0 %v1190
    %1541 = vmatmul.mubr.f32.gmra.mrb[0].mxu0 %v1189
    %v1542 = vpop.f32.mrb[0].mxu0
    %v1543 = vadd.f32 %v1464, %v1542
    %v1544 = vpop.f32.mrb[0].mxu0
    %1545 = vmatprep.mubr.f32.mxu0 %v1195
    %1546 = vmatmul.mubr.f32.gmra.mrb[0].mxu0 %v1194
    %v1547 = vpop.f32.mrb[0].mxu0
    %v1548 = vadd.f32 %v1464, %v1547
    %v1549 = vpop.f32.mrb[0].mxu0
    %1550 = vmatprep.mubr.f32.mxu0 %v1200
    %1551 = vmatmul.mubr.f32.gmra.mrb[0].mxu0 %v1199
    %v1552 = vpop.f32.mrb[0].mxu0
    %v1553 = vadd.f32 %v1464, %v1552
    %v1554 = vpop.f32.mrb[0].mxu0
    %1555 = vmatprep.mubr.f32.mxu0 %v1205
    %1556 = vmatmul.mubr.f32.gmra.mrb[0].mxu0 %v1204
    %v1557 = vpop.f32.mrb[0].mxu0
    %v1558 = vadd.f32 %v1464, %v1557
    %v1559 = vpop.f32.mrb[0].mxu0
    %1560 = vmatprep.mubr.f32.mxu0 %v1210
    %1561 = vmatmul.mubr.f32.gmra.mrb[0].mxu0 %v1209
    %v1562 = vpop.f32.mrb[0].mxu0
    %v1563 = vadd.f32 %v1464, %v1562
    %v1564 = vpop.f32.mrb[0].mxu0
    %1565 = vmatprep.mubr.f32.mxu0 %v1215
    %1566 = vmatmul.mubr.f32.gmra.mrb[0].mxu0 %v1214
    %v1567 = vpop.f32.mrb[0].mxu0
    %v1568 = vadd.f32 %v1464, %v1567
    %v1569 = vpop.f32.mrb[0].mxu0
    %1570 = vmatprep.mubr.f32.mxu0 %v1220
    %1571 = vmatmul.mubr.f32.gmra.mrb[0].mxu0 %v1219
    %v1572 = vpop.f32.mrb[0].mxu0
    %v1573 = vadd.f32 %v1464, %v1572
    %v1574 = vpop.f32.mrb[0].mxu0
    %1575 = vmatprep.mubr.f32.mxu0 %v1225
    %1576 = vmatmul.mubr.f32.gmra.mrb[0].mxu0 %v1224
    %v1577 = vpop.f32.mrb[0].mxu0
    %v1578 = vadd.f32 %v1464, %v1577
    %v1579 = vpop.f32.mrb[0].mxu0
    %1580 = vmatprep.mubr.f32.mxu0 %v1230
    %1581 = vmatmul.mubr.f32.gmra.mrb[0].mxu0 %v1229
    %v1582 = vpop.f32.mrb[0].mxu0
    %v1583 = vadd.f32 %v1464, %v1582
    %v1584 = vpop.f32.mrb[0].mxu0
    %1585 = vmatprep.mubr.f32.mxu0 %v1235
    %1586 = vmatmul.mubr.f32.gmra.mrb[0].mxu0 %v1234
    %v1587 = vpop.f32.mrb[0].mxu0
    %v1588 = vadd.f32 %v1464, %v1587
    %v1589 = vpop.f32.mrb[0].mxu0
    %1590 = vmatprep.mubr.f32.mxu0 %v1240
    %1591 = vmatmul.mubr.f32.gmra.mrb[0].mxu0 %v1239
    %v1592 = vpop.f32.mrb[0].mxu0
    %v1593 = vadd.f32 %v1464, %v1592
    %v1594 = vpop.f32.mrb[0].mxu0
    %1595 = vmatprep.mubr.f32.mxu0 %v1245
    %1596 = vmatmul.mubr.f32.gmra.mrb[0].mxu0 %v1244
    %v1597 = vpop.f32.mrb[0].mxu0
    %v1598 = vadd.f32 %v1464, %v1597
    %v1599 = vpop.f32.mrb[0].mxu0
    %1600 = vmatprep.mubr.f32.mxu0 %v1250
    %1601 = vmatmul.mubr.f32.gmra.mrb[0].mxu0 %v1249
    %v1602 = vpop.f32.mrb[0].mxu0
    %v1603 = vadd.f32 %v1464, %v1602
    %v1604 = vpop.f32.mrb[0].mxu0
    %1605 = vmatprep.mubr.f32.mxu0 %v1255
    %1606 = vmatmul.mubr.f32.gmra.mrb[0].mxu0 %v1254
    %v1607 = vpop.f32.mrb[0].mxu0
    %v1608 = vadd.f32 %v1464, %v1607
    %v1609 = vpop.f32.mrb[0].mxu0
    %1610 = vmatprep.mubr.f32.mxu0 %v1260
    %1611 = vmatmul.mubr.f32.gmra.mrb[0].mxu0 %v1259
    %v1612 = vpop.f32.mrb[0].mxu0
    %v1613 = vadd.f32 %v1464, %v1612
    %v1614 = vpop.f32.mrb[0].mxu0
    %1615 = vmatprep.mubr.f32.mxu0 %v1265
    %1616 = vmatmul.mubr.f32.gmra.mrb[0].mxu0 %v1264
    %v1617 = vpop.f32.mrb[0].mxu0
    %v1618 = vadd.f32 %v1464, %v1617
    %v1619 = vpop.f32.mrb[0].mxu0
    %1620 = vmatprep.mubr.f32.mxu0 %v1270
    %1621 = vmatmul.mubr.f32.gmra.mrb[0].mxu0 %v1269
    %v1622 = vpop.f32.mrb[0].mxu0
    %v1623 = vadd.f32 %v1464, %v1622
    %v1624 = vpop.f32.mrb[0].mxu0
    %1625 = vmatprep.mubr.f32.mxu0 %v1275
    %1626 = vmatmul.mubr.f32.gmra.mrb[0].mxu0 %v1274
    %v1627 = vpop.f32.mrb[0].mxu0
    %v1628 = vadd.f32 %v1464, %v1627
    %v1629 = vpop.f32.mrb[0].mxu0
    %1630 = vmatprep.mubr.f32.mxu0 %v1280
    %1631 = vmatmul.mubr.f32.gmra.mrb[0].mxu0 %v1279
    %v1632 = vpop.f32.mrb[0].mxu0
    %v1633 = vadd.f32 %v1464, %v1632
    %v1634 = vpop.f32.mrb[0].mxu0
    %1635 = vmatprep.mubr.f32.mxu0 %v1285
    %1636 = vmatmul.mubr.f32.gmra.mrb[0].mxu0 %v1284
    %v1637 = vpop.f32.mrb[0].mxu0
    %v1638 = vadd.f32 %v1464, %v1637
    %v1639 = vpop.f32.mrb[0].mxu0
    %1640 = vmatprep.mubr.f32.mxu0 %v1290
    %1641 = vmatmul.mubr.f32.gmra.mrb[0].mxu0 %v1289
    %v1642 = vpop.f32.mrb[0].mxu0
    %v1643 = vadd.f32 %v1464, %v1642
    %v1644 = vpop.f32.mrb[0].mxu0
    %1645 = vmatprep.mubr.f32.mxu0 %v1295
    %1646 = vmatmul.mubr.f32.gmra.mrb[0].mxu0 %v1294
    %v1647 = vpop.f32.mrb[0].mxu0
    %v1648 = vadd.f32 %v1464, %v1647
    %v1649 = vpop.f32.mrb[0].mxu0
    %1650 = vmatprep.mubr.f32.mxu0 %v1300
    %1651 = vmatmul.mubr.f32.gmra.mrb[0].mxu0 %v1299
    %v1652 = vpop.f32.mrb[0].mxu0
    %v1653 = vadd.f32 %v1464, %v1652
    %v1654 = vpop.f32.mrb[0].mxu0
    %1655 = vmatprep.mubr.f32.mxu0 %v1305
    %1656 = vmatmul.mubr.f32.gmra.mrb[0].mxu0 %v1304
    %v1657 = vpop.f32.mrb[0].mxu0
    %v1658 = vadd.f32 %v1464, %v1657
    %v1659 = vpop.f32.mrb[0].mxu0
    %1660 = vmatprep.mubr.f32.mxu0 %v1310
    %1661 = vmatmul.mubr.f32.gmra.mrb[0].mxu0 %v1309
    %v1662 = vpop.f32.mrb[0].mxu0
    %v1663 = vadd.f32 %v1464, %v1662
    %v1664 = vpop.f32.mrb[0].mxu0
    %1665 = vmatprep.mubr.f32.mxu0 %v1315
    %1666 = vmatmul.mubr.f32.gmra.mrb[0].mxu0 %v1314
    %v1667 = vpop.f32.mrb[0].mxu0
    %v1668 = vadd.f32 %v1464, %v1667
    %v1669 = vpop.f32.mrb[0].mxu0
    %1670 = vmatprep.mubr.f32.mxu0 %v1320
    %1671 = vmatmul.mubr.f32.gmra.mrb[0].mxu0 %v1319
    %v1672 = vpop.f32.mrb[0].mxu0
    %v1673 = vadd.f32 %v1464, %v1672
    %v1674 = vpop.f32.mrb[0].mxu0
    %1675 = vmatprep.mubr.f32.mxu0 %v1325
    %1676 = vmatmul.mubr.f32.gmra.mrb[0].mxu0 %v1324
    %v1677 = vpop.f32.mrb[0].mxu0
    %v1678 = vadd.f32 %v1464, %v1677
    %v1679 = vpop.f32.mrb[0].mxu0
    %1680 = vmatprep.mubr.f32.mxu0 %v1330
    %1681 = vmatmul.mubr.f32.gmra.mrb[0].mxu0 %v1329
    %v1682 = vpop.f32.mrb[0].mxu0
    %v1683 = vadd.f32 %v1464, %v1682
    %v1684 = vpop.f32.mrb[0].mxu0
    %1685 = vmatprep.mubr.f32.mxu0 %v1335
    %1686 = vmatmul.mubr.f32.gmra.mrb[0].mxu0 %v1334
    %v1687 = vpop.f32.mrb[0].mxu0
    %v1688 = vadd.f32 %v1464, %v1687
    %v1689 = vpop.f32.mrb[0].mxu0
    %1690 = vmatprep.mubr.f32.mxu0 %v1340
    %1691 = vmatmul.mubr.f32.gmra.mrb[0].mxu0 %v1339
    %v1692 = vpop.f32.mrb[0].mxu0
    %v1693 = vadd.f32 %v1464, %v1692
    %v1694 = vpop.f32.mrb[0].mxu0
    %1695 = vmatprep.mubr.f32.mxu0 %v1345
    %1696 = vmatmul.mubr.f32.gmra.mrb[0].mxu0 %v1344
    %v1697 = vpop.f32.mrb[0].mxu0
    %v1698 = vadd.f32 %v1464, %v1697
    %v1699 = vpop.f32.mrb[0].mxu0
    %1700 = vmatprep.mubr.f32.mxu0 %v1350
    %1701 = vmatmul.mubr.f32.gmra.mrb[0].mxu0 %v1349
    %v1702 = vpop.f32.mrb[0].mxu0
    %v1703 = vadd.f32 %v1464, %v1702
    %v1704 = vpop.f32.mrb[0].mxu0
    %1705 = vmatprep.mubr.f32.mxu0 %v1355
    %1706 = vmatmul.mubr.f32.gmra.mrb[0].mxu0 %v1354
    %v1707 = vpop.f32.mrb[0].mxu0
    %v1708 = vadd.f32 %v1464, %v1707
    %v1709 = vpop.f32.mrb[0].mxu0
    %1710 = vmatprep.mubr.f32.mxu0 %v1360
    %1711 = vmatmul.mubr.f32.gmra.mrb[0].mxu0 %v1359
    %v1712 = vpop.f32.mrb[0].mxu0
    %v1713 = vadd.f32 %v1464, %v1712
    %v1714 = vpop.f32.mrb[0].mxu0
    %1715 = vmatprep.mubr.f32.mxu0 %v1365
    %1716 = vmatmul.mubr.f32.gmra.mrb[0].mxu0 %v1364
    %v1717 = vpop.f32.mrb[0].mxu0
    %v1718 = vadd.f32 %v1464, %v1717
    %v1719 = vpop.f32.mrb[0].mxu0
    %1720 = vmatprep.mubr.f32.mxu0 %v1370
    %1721 = vmatmul.mubr.f32.gmra.mrb[0].mxu0 %v1369
    %v1722 = vpop.f32.mrb[0].mxu0
    %v1723 = vadd.f32 %v1464, %v1722
    %v1724 = vpop.f32.mrb[0].mxu0
    %1725 = vmatprep.mubr.f32.mxu0 %v1375
    %1726 = vmatmul.mubr.f32.gmra.mrb[0].mxu0 %v1374
    %v1727 = vpop.f32.mrb[0].mxu0
    %v1728 = vadd.f32 %v1464, %v1727
    %v1729 = vpop.f32.mrb[0].mxu0
    %1730 = vdwg.mxu0
    %1731 = vmatprep.subr.mxu0 0.0
    %1732 = vmatpush1.msra.mxu0 %v1411
    %1733 = vmatprep.subr.mxu0 0.0
    %1734 = vmatpush1.msra.mxu0 %v1412
    %1735 = vmatprep.subr.mxu0 0.0
    %1736 = vmatpush1.msra.mxu0 %v1413
    %1737 = vmatprep.subr.mxu0 0.0
    %1738 = vmatpush1.msra.mxu0 %v1414
    %1739 = vmatprep.subr.mxu0 0.0
    %1740 = vmatpush1.msra.mxu0 %v1415
    %1741 = vmatprep.subr.mxu0 0.0
    %1742 = vmatpush1.msra.mxu0 %v1416
    %1743 = vmatprep.subr.mxu0 0.0
    %1744 = vmatpush1.msra.mxu0 %v1417
    %1745 = vmatprep.subr.mxu0 0.0
    %1746 = vmatpush1.msra.mxu0 %v1418
    %1747 = vmatprep.subr.mxu0 0.0
    %1748 = vmatpush1.msra.mxu0 %v1419
    %1749 = vmatprep.subr.mxu0 0.0
    %1750 = vmatpush1.msra.mxu0 %v1420
    %1751 = vmatprep.subr.mxu0 0.0
    %1752 = vmatpush1.msra.mxu0 %v1421
    %1753 = vmatprep.subr.mxu0 0.0
    %1754 = vmatpush1.msra.mxu0 %v1422
    %1755 = vmatprep.subr.mxu0 0.0
    %1756 = vmatpush1.msra.mxu0 %v1423
    %1757 = vmatprep.subr.mxu0 0.0
    %1758 = vmatpush1.msra.mxu0 %v1424
    %1759 = vmatprep.subr.mxu0 0.0
    %1760 = vmatpush1.msra.mxu0 %v1425
    %1761 = vmatprep.subr.mxu0 0.0
    %1762 = vmatpush1.msra.mxu0 %v1426
    %1763 = vmatprep.subr.mxu0 0.0
    %1764 = vmatpush1.msra.mxu0 %v1427
    %1765 = vmatprep.subr.mxu0 0.0
    %1766 = vmatpush1.msra.mxu0 %v1428
    %1767 = vmatprep.subr.mxu0 0.0
    %1768 = vmatpush1.msra.mxu0 %v1429
    %1769 = vmatprep.subr.mxu0 0.0
    %1770 = vmatpush1.msra.mxu0 %v1430
    %1771 = vmatprep.subr.mxu0 0.0
    %1772 = vmatpush1.msra.mxu0 %v1431
    %1773 = vmatprep.subr.mxu0 0.0
    %1774 = vmatpush1.msra.mxu0 %v1432
    %1775 = vmatprep.subr.mxu0 0.0
    %1776 = vmatpush1.msra.mxu0 %v1433
    %1777 = vmatprep.subr.mxu0 0.0
    %1778 = vmatpush1.msra.mxu0 %v1434
    %1779 = vmatprep.subr.mxu0 0.0
    %1780 = vmatpush1.msra.mxu0 %v1435
    %1781 = vmatprep.subr.mxu0 0.0
    %1782 = vmatpush1.msra.mxu0 %v1436
    %1783 = vmatprep.subr.mxu0 0.0
    %1784 = vmatpush1.msra.mxu0 %v1437
    %1785 = vmatprep.subr.mxu0 0.0
    %1786 = vmatpush1.msra.mxu0 %v1438
    %1787 = vmatprep.subr.mxu0 0.0
    %1788 = vmatpush1.msra.mxu0 %v1439
    %1789 = vmatprep.subr.mxu0 0.0
    %1790 = vmatpush1.msra.mxu0 %v1440
    %1791 = vmatprep.subr.mxu0 0.0
    %1792 = vmatpush1.msra.mxu0 %v1441
    %1793 = vmatprep.subr.mxu0 0.0
    %1794 = vmatpush1.msra.mxu0 %v1442
    %1795 = vmatprep.mubr.f32.mxu0 %v1182
    %1796 = vmatmul.mubr.f32.gmra.mrb[0].mxu0 %v1181
    %v1797 = vpop.f32.mrb[0].mxu0
    %v1798 = vadd.f32 %v1533, %v1797
    %v1799 = vpop.f32.mrb[0].mxu0
    %1800 = vmatprep.mubr.f32.mxu0 %v1187
    %1801 = vmatmul.mubr.f32.gmra.mrb[0].mxu0 %v1186
    %v1802 = vpop.f32.mrb[0].mxu0
    %v1803 = vadd.f32 %v1538, %v1802
    %v1804 = vpop.f32.mrb[0].mxu0
    %1805 = vmatprep.mubr.f32.mxu0 %v1192
    %1806 = vmatmul.mubr.f32.gmra.mrb[0].mxu0 %v1191
    %v1807 = vpop.f32.mrb[0].mxu0
    %v1808 = vadd.f32 %v1543, %v1807
    %v1809 = vpop.f32.mrb[0].mxu0
    %1810 = vmatprep.mubr.f32.mxu0 %v1197
    %1811 = vmatmul.mubr.f32.gmra.mrb[0].mxu0 %v1196
    %v1812 = vpop.f32.mrb[0].mxu0
    %v1813 = vadd.f32 %v1548, %v1812
    %v1814 = vpop.f32.mrb[0].mxu0
    %1815 = vmatprep.mubr.f32.mxu0 %v1202
    %1816 = vmatmul.mubr.f32.gmra.mrb[0].mxu0 %v1201
    %v1817 = vpop.f32.mrb[0].mxu0
    %v1818 = vadd.f32 %v1553, %v1817
    %v1819 = vpop.f32.mrb[0].mxu0
    %1820 = vmatprep.mubr.f32.mxu0 %v1207
    %1821 = vmatmul.mubr.f32.gmra.mrb[0].mxu0 %v1206
    %v1822 = vpop.f32.mrb[0].mxu0
    %v1823 = vadd.f32 %v1558, %v1822
    %v1824 = vpop.f32.mrb[0].mxu0
    %1825 = vmatprep.mubr.f32.mxu0 %v1212
    %1826 = vmatmul.mubr.f32.gmra.mrb[0].mxu0 %v1211
    %v1827 = vpop.f32.mrb[0].mxu0
    %v1828 = vadd.f32 %v1563, %v1827
    %v1829 = vpop.f32.mrb[0].mxu0
    %1830 = vmatprep.mubr.f32.mxu0 %v1217
    %1831 = vmatmul.mubr.f32.gmra.mrb[0].mxu0 %v1216
    %v1832 = vpop.f32.mrb[0].mxu0
    %v1833 = vadd.f32 %v1568, %v1832
    %v1834 = vpop.f32.mrb[0].mxu0
    %1835 = vmatprep.mubr.f32.mxu0 %v1222
    %1836 = vmatmul.mubr.f32.gmra.mrb[0].mxu0 %v1221
    %v1837 = vpop.f32.mrb[0].mxu0
    %v1838 = vadd.f32 %v1573, %v1837
    %v1839 = vpop.f32.mrb[0].mxu0
    %1840 = vmatprep.mubr.f32.mxu0 %v1227
    %1841 = vmatmul.mubr.f32.gmra.mrb[0].mxu0 %v1226
    %v1842 = vpop.f32.mrb[0].mxu0
    %v1843 = vadd.f32 %v1578, %v1842
    %v1844 = vpop.f32.mrb[0].mxu0
    %1845 = vmatprep.mubr.f32.mxu0 %v1232
    %1846 = vmatmul.mubr.f32.gmra.mrb[0].mxu0 %v1231
    %v1847 = vpop.f32.mrb[0].mxu0
    %v1848 = vadd.f32 %v1583, %v1847
    %v1849 = vpop.f32.mrb[0].mxu0
    %1850 = vmatprep.mubr.f32.mxu0 %v1237
    %1851 = vmatmul.mubr.f32.gmra.mrb[0].mxu0 %v1236
    %v1852 = vpop.f32.mrb[0].mxu0
    %v1853 = vadd.f32 %v1588, %v1852
    %v1854 = vpop.f32.mrb[0].mxu0
    %1855 = vmatprep.mubr.f32.mxu0 %v1242
    %1856 = vmatmul.mubr.f32.gmra.mrb[0].mxu0 %v1241
    %v1857 = vpop.f32.mrb[0].mxu0
    %v1858 = vadd.f32 %v1593, %v1857
    %v1859 = vpop.f32.mrb[0].mxu0
    %1860 = vmatprep.mubr.f32.mxu0 %v1247
    %1861 = vmatmul.mubr.f32.gmra.mrb[0].mxu0 %v1246
    %v1862 = vpop.f32.mrb[0].mxu0
    %v1863 = vadd.f32 %v1598, %v1862
    %v1864 = vpop.f32.mrb[0].mxu0
    %1865 = vmatprep.mubr.f32.mxu0 %v1252
    %1866 = vmatmul.mubr.f32.gmra.mrb[0].mxu0 %v1251
    %v1867 = vpop.f32.mrb[0].mxu0
    %v1868 = vadd.f32 %v1603, %v1867
    %v1869 = vpop.f32.mrb[0].mxu0
    %1870 = vmatprep.mubr.f32.mxu0 %v1257
    %1871 = vmatmul.mubr.f32.gmra.mrb[0].mxu0 %v1256
    %v1872 = vpop.f32.mrb[0].mxu0
    %v1873 = vadd.f32 %v1608, %v1872
    %v1874 = vpop.f32.mrb[0].mxu0
    %1875 = vmatprep.mubr.f32.mxu0 %v1262
    %1876 = vmatmul.mubr.f32.gmra.mrb[0].mxu0 %v1261
    %v1877 = vpop.f32.mrb[0].mxu0
    %v1878 = vadd.f32 %v1613, %v1877
    %v1879 = vpop.f32.mrb[0].mxu0
    %1880 = vmatprep.mubr.f32.mxu0 %v1267
    %1881 = vmatmul.mubr.f32.gmra.mrb[0].mxu0 %v1266
    %v1882 = vpop.f32.mrb[0].mxu0
    %v1883 = vadd.f32 %v1618, %v1882
    %v1884 = vpop.f32.mrb[0].mxu0
    %1885 = vmatprep.mubr.f32.mxu0 %v1272
    %1886 = vmatmul.mubr.f32.gmra.mrb[0].mxu0 %v1271
    %v1887 = vpop.f32.mrb[0].mxu0
    %v1888 = vadd.f32 %v1623, %v1887
    %v1889 = vpop.f32.mrb[0].mxu0
    %1890 = vmatprep.mubr.f32.mxu0 %v1277
    %1891 = vmatmul.mubr.f32.gmra.mrb[0].mxu0 %v1276
    %v1892 = vpop.f32.mrb[0].mxu0
    %v1893 = vadd.f32 %v1628, %v1892
    %v1894 = vpop.f32.mrb[0].mxu0
    %1895 = vmatprep.mubr.f32.mxu0 %v1282
    %1896 = vmatmul.mubr.f32.gmra.mrb[0].mxu0 %v1281
    %v1897 = vpop.f32.mrb[0].mxu0
    %v1898 = vadd.f32 %v1633, %v1897
    %v1899 = vpop.f32.mrb[0].mxu0
    %1900 = vmatprep.mubr.f32.mxu0 %v1287
    %1901 = vmatmul.mubr.f32.gmra.mrb[0].mxu0 %v1286
    %v1902 = vpop.f32.mrb[0].mxu0
    %v1903 = vadd.f32 %v1638, %v1902
    %v1904 = vpop.f32.mrb[0].mxu0
    %1905 = vmatprep.mubr.f32.mxu0 %v1292
    %1906 = vmatmul.mubr.f32.gmra.mrb[0].mxu0 %v1291
    %v1907 = vpop.f32.mrb[0].mxu0
    %v1908 = vadd.f32 %v1643, %v1907
    %v1909 = vpop.f32.mrb[0].mxu0
    %1910 = vmatprep.mubr.f32.mxu0 %v1297
    %1911 = vmatmul.mubr.f32.gmra.mrb[0].mxu0 %v1296
    %v1912 = vpop.f32.mrb[0].mxu0
    %v1913 = vadd.f32 %v1648, %v1912
    %v1914 = vpop.f32.mrb[0].mxu0
    %1915 = vmatprep.mubr.f32.mxu0 %v1302
    %1916 = vmatmul.mubr.f32.gmra.mrb[0].mxu0 %v1301
    %v1917 = vpop.f32.mrb[0].mxu0
    %v1918 = vadd.f32 %v1653, %v1917
    %v1919 = vpop.f32.mrb[0].mxu0
    %1920 = vmatprep.mubr.f32.mxu0 %v1307
    %1921 = vmatmul.mubr.f32.gmra.mrb[0].mxu0 %v1306
    %v1922 = vpop.f32.mrb[0].mxu0
    %v1923 = vadd.f32 %v1658, %v1922
    %v1924 = vpop.f32.mrb[0].mxu0
    %1925 = vmatprep.mubr.f32.mxu0 %v1312
    %1926 = vmatmul.mubr.f32.gmra.mrb[0].mxu0 %v1311
    %v1927 = vpop.f32.mrb[0].mxu0
    %v1928 = vadd.f32 %v1663, %v1927
    %v1929 = vpop.f32.mrb[0].mxu0
    %1930 = vmatprep.mubr.f32.mxu0 %v1317
    %1931 = vmatmul.mubr.f32.gmra.mrb[0].mxu0 %v1316
    %v1932 = vpop.f32.mrb[0].mxu0
    %v1933 = vadd.f32 %v1668, %v1932
    %v1934 = vpop.f32.mrb[0].mxu0
    %1935 = vmatprep.mubr.f32.mxu0 %v1322
    %1936 = vmatmul.mubr.f32.gmra.mrb[0].mxu0 %v1321
    %v1937 = vpop.f32.mrb[0].mxu0
    %v1938 = vadd.f32 %v1673, %v1937
    %v1939 = vpop.f32.mrb[0].mxu0
    %1940 = vmatprep.mubr.f32.mxu0 %v1327
    %1941 = vmatmul.mubr.f32.gmra.mrb[0].mxu0 %v1326
    %v1942 = vpop.f32.mrb[0].mxu0
    %v1943 = vadd.f32 %v1678, %v1942
    %v1944 = vpop.f32.mrb[0].mxu0
    %1945 = vmatprep.mubr.f32.mxu0 %v1332
    %1946 = vmatmul.mubr.f32.gmra.mrb[0].mxu0 %v1331
    %v1947 = vpop.f32.mrb[0].mxu0
    %v1948 = vadd.f32 %v1683, %v1947
    %v1949 = vpop.f32.mrb[0].mxu0
    %1950 = vmatprep.mubr.f32.mxu0 %v1337
    %1951 = vmatmul.mubr.f32.gmra.mrb[0].mxu0 %v1336
    %v1952 = vpop.f32.mrb[0].mxu0
    %v1953 = vadd.f32 %v1688, %v1952
    %v1954 = vpop.f32.mrb[0].mxu0
    %1955 = vmatprep.mubr.f32.mxu0 %v1342
    %1956 = vmatmul.mubr.f32.gmra.mrb[0].mxu0 %v1341
    %v1957 = vpop.f32.mrb[0].mxu0
    %v1958 = vadd.f32 %v1693, %v1957
    %v1959 = vpop.f32.mrb[0].mxu0
    %1960 = vmatprep.mubr.f32.mxu0 %v1347
    %1961 = vmatmul.mubr.f32.gmra.mrb[0].mxu0 %v1346
    %v1962 = vpop.f32.mrb[0].mxu0
    %v1963 = vadd.f32 %v1698, %v1962
    %v1964 = vpop.f32.mrb[0].mxu0
    %1965 = vmatprep.mubr.f32.mxu0 %v1352
    %1966 = vmatmul.mubr.f32.gmra.mrb[0].mxu0 %v1351
    %v1967 = vpop.f32.mrb[0].mxu0
    %v1968 = vadd.f32 %v1703, %v1967
    %v1969 = vpop.f32.mrb[0].mxu0
    %1970 = vmatprep.mubr.f32.mxu0 %v1357
    %1971 = vmatmul.mubr.f32.gmra.mrb[0].mxu0 %v1356
    %v1972 = vpop.f32.mrb[0].mxu0
    %v1973 = vadd.f32 %v1708, %v1972
    %v1974 = vpop.f32.mrb[0].mxu0
    %1975 = vmatprep.mubr.f32.mxu0 %v1362
    %1976 = vmatmul.mubr.f32.gmra.mrb[0].mxu0 %v1361
    %v1977 = vpop.f32.mrb[0].mxu0
    %v1978 = vadd.f32 %v1713, %v1977
    %v1979 = vpop.f32.mrb[0].mxu0
    %1980 = vmatprep.mubr.f32.mxu0 %v1367
    %1981 = vmatmul.mubr.f32.gmra.mrb[0].mxu0 %v1366
    %v1982 = vpop.f32.mrb[0].mxu0
    %v1983 = vadd.f32 %v1718, %v1982
    %v1984 = vpop.f32.mrb[0].mxu0
    %1985 = vmatprep.mubr.f32.mxu0 %v1372
    %1986 = vmatmul.mubr.f32.gmra.mrb[0].mxu0 %v1371
    %v1987 = vpop.f32.mrb[0].mxu0
    %v1988 = vadd.f32 %v1723, %v1987
    %v1989 = vpop.f32.mrb[0].mxu0
    %1990 = vmatprep.mubr.f32.mxu0 %v1377
    %1991 = vmatmul.mubr.f32.gmra.mrb[0].mxu0 %v1376
    %v1992 = vpop.f32.mrb[0].mxu0
    %v1993 = vadd.f32 %v1728, %v1992
    %v1994 = vpop.f32.mrb[0].mxu0
    %1995 = vdwg.mxu0
    %1996 = vmatprep.subr.mxu0 0.0
    %1997 = vmatpush1.msra.mxu0 %v1443
    %1998 = vmatprep.subr.mxu0 0.0
    %1999 = vmatpush1.msra.mxu0 %v1444
    %2000 = vmatprep.subr.mxu0 0.0
    %2001 = vmatpush1.msra.mxu0 %v1445
    %2002 = vmatprep.subr.mxu0 0.0
    %2003 = vmatpush1.msra.mxu0 %v1446
    %2004 = vmatprep.subr.mxu0 0.0
    %2005 = vmatpush1.msra.mxu0 %v1447
    %2006 = vmatprep.subr.mxu0 0.0
    %2007 = vmatpush1.msra.mxu0 %v1448
    %2008 = vmatprep.subr.mxu0 0.0
    %2009 = vmatpush1.msra.mxu0 %v1449
    %2010 = vmatprep.subr.mxu0 0.0
    %2011 = vmatpush1.msra.mxu0 %v1450
    %2012 = vmatprep.subr.mxu0 0.0
    %2013 = vmatpush1.msra.mxu0 %v1451
    %2014 = vmatprep.subr.mxu0 0.0
    %2015 = vmatpush1.msra.mxu0 %v1452
    %2016 = vmatprep.subr.mxu0 0.0
    %2017 = vmatpush1.msra.mxu0 %v1453
    %2018 = vmatprep.subr.mxu0 0.0
    %2019 = vmatpush1.msra.mxu0 %v1454
    %2020 = vmatprep.subr.mxu0 0.0
    %2021 = vmatpush1.msra.mxu0 %v1455
    %2022 = vmatprep.subr.mxu0 0.0
    %2023 = vmatpush1.msra.mxu0 %v1456
    %2024 = vmatprep.subr.mxu0 0.0
    %2025 = vmatpush1.msra.mxu0 %v1457
    %2026 = vmatprep.subr.mxu0 0.0
    %2027 = vmatpush1.msra.mxu0 %v1458
    %2028 = vmatprep.subr.mxu0 0.0
    %2029 = vmatpush1.msra.mxu0 0.0
    %2030 = vmatprep.subr.mxu0 0.0
    %2031 = vmatpush1.msra.mxu0 0.0
    %2032 = vmatprep.subr.mxu0 0.0
    %2033 = vmatpush1.msra.mxu0 0.0
    %2034 = vmatprep.subr.mxu0 0.0
    %2035 = vmatpush1.msra.mxu0 0.0
    %2036 = vmatprep.subr.mxu0 0.0
    %2037 = vmatpush1.msra.mxu0 0.0
    %2038 = vmatprep.subr.mxu0 0.0
    %2039 = vmatpush1.msra.mxu0 0.0
    %2040 = vmatprep.subr.mxu0 0.0
    %2041 = vmatpush1.msra.mxu0 0.0
    %2042 = vmatprep.subr.mxu0 0.0
    %2043 = vmatpush1.msra.mxu0 0.0
    %2044 = vmatprep.subr.mxu0 0.0
    %2045 = vmatpush1.msra.mxu0 0.0
    %2046 = vmatprep.subr.mxu0 0.0
    %2047 = vmatpush1.msra.mxu0 0.0
    %2048 = vmatprep.subr.mxu0 0.0
    %2049 = vmatpush1.msra.mxu0 0.0
    %2050 = vmatprep.subr.mxu0 0.0
    %2051 = vmatpush1.msra.mxu0 0.0
    %2052 = vmatprep.subr.mxu0 0.0
    %2053 = vmatpush1.msra.mxu0 0.0
    %2054 = vmatprep.subr.mxu0 0.0
    %2055 = vmatpush1.msra.mxu0 0.0
    %2056 = vmatprep.subr.mxu0 0.0
    %2057 = vmatpush1.msra.mxu0 0.0
    %2058 = vmatprep.subr.mxu0 0.0
    %2059 = vmatpush1.msra.mxu0 0.0
    %2060 = vmatprep.mubr.f32.mxu0 0.0
    %2061 = vmatmul.mubr.f32.gmra.mrb[0].mxu0 %v1183
    %v2062 = vpop.f32.mrb[0].mxu0
    %v2063 = vadd.f32 %v1798, %v2062
    %v2064 = vpop.f32.mrb[0].mxu0
    %2065 = vmatprep.mubr.f32.mxu0 0.0
    %2066 = vmatmul.mubr.f32.gmra.mrb[0].mxu0 %v1188
    %v2067 = vpop.f32.mrb[0].mxu0
    %v2068 = vadd.f32 %v1803, %v2067
    %v2069 = vpop.f32.mrb[0].mxu0
    %2070 = vmatprep.mubr.f32.mxu0 0.0
    %2071 = vmatmul.mubr.f32.gmra.mrb[0].mxu0 %v1193
    %v2072 = vpop.f32.mrb[0].mxu0
    %v2073 = vadd.f32 %v1808, %v2072
    %v2074 = vpop.f32.mrb[0].mxu0
    %2075 = vmatprep.mubr.f32.mxu0 0.0
    %2076 = vmatmul.mubr.f32.gmra.mrb[0].mxu0 %v1198
    %v2077 = vpop.f32.mrb[0].mxu0
    %v2078 = vadd.f32 %v1813, %v2077
    %v2079 = vpop.f32.mrb[0].mxu0
    %2080 = vmatprep.mubr.f32.mxu0 0.0
    %2081 = vmatmul.mubr.f32.gmra.mrb[0].mxu0 %v1203
    %v2082 = vpop.f32.mrb[0].mxu0
    %v2083 = vadd.f32 %v1818, %v2082
    %v2084 = vpop.f32.mrb[0].mxu0
    %2085 = vmatprep.mubr.f32.mxu0 0.0
    %2086 = vmatmul.mubr.f32.gmra.mrb[0].mxu0 %v1208
    %v2087 = vpop.f32.mrb[0].mxu0
    %v2088 = vadd.f32 %v1823, %v2087
    %v2089 = vpop.f32.mrb[0].mxu0
    %2090 = vmatprep.mubr.f32.mxu0 0.0
    %2091 = vmatmul.mubr.f32.gmra.mrb[0].mxu0 %v1213
    %v2092 = vpop.f32.mrb[0].mxu0
    %v2093 = vadd.f32 %v1828, %v2092
    %v2094 = vpop.f32.mrb[0].mxu0
    %2095 = vmatprep.mubr.f32.mxu0 0.0
    %2096 = vmatmul.mubr.f32.gmra.mrb[0].mxu0 %v1218
    %v2097 = vpop.f32.mrb[0].mxu0
    %v2098 = vadd.f32 %v1833, %v2097
    %v2099 = vpop.f32.mrb[0].mxu0
    %2100 = vmatprep.mubr.f32.mxu0 0.0
    %2101 = vmatmul.mubr.f32.gmra.mrb[0].mxu0 %v1223
    %v2102 = vpop.f32.mrb[0].mxu0
    %v2103 = vadd.f32 %v1838, %v2102
    %v2104 = vpop.f32.mrb[0].mxu0
    %2105 = vmatprep.mubr.f32.mxu0 0.0
    %2106 = vmatmul.mubr.f32.gmra.mrb[0].mxu0 %v1228
    %v2107 = vpop.f32.mrb[0].mxu0
    %v2108 = vadd.f32 %v1843, %v2107
    %v2109 = vpop.f32.mrb[0].mxu0
    %2110 = vmatprep.mubr.f32.mxu0 0.0
    %2111 = vmatmul.mubr.f32.gmra.mrb[0].mxu0 %v1233
    %v2112 = vpop.f32.mrb[0].mxu0
    %v2113 = vadd.f32 %v1848, %v2112
    %v2114 = vpop.f32.mrb[0].mxu0
    %2115 = vmatprep.mubr.f32.mxu0 0.0
    %2116 = vmatmul.mubr.f32.gmra.mrb[0].mxu0 %v1238
    %v2117 = vpop.f32.mrb[0].mxu0
    %v2118 = vadd.f32 %v1853, %v2117
    %v2119 = vpop.f32.mrb[0].mxu0
    %2120 = vmatprep.mubr.f32.mxu0 0.0
    %2121 = vmatmul.mubr.f32.gmra.mrb[0].mxu0 %v1243
    %v2122 = vpop.f32.mrb[0].mxu0
    %v2123 = vadd.f32 %v1858, %v2122
    %v2124 = vpop.f32.mrb[0].mxu0
    %2125 = vmatprep.mubr.f32.mxu0 0.0
    %2126 = vmatmul.mubr.f32.gmra.mrb[0].mxu0 %v1248
    %v2127 = vpop.f32.mrb[0].mxu0
    %v2128 = vadd.f32 %v1863, %v2127
    %v2129 = vpop.f32.mrb[0].mxu0
    %2130 = vmatprep.mubr.f32.mxu0 0.0
    %2131 = vmatmul.mubr.f32.gmra.mrb[0].mxu0 %v1253
    %v2132 = vpop.f32.mrb[0].mxu0
    %v2133 = vadd.f32 %v1868, %v2132
    %v2134 = vpop.f32.mrb[0].mxu0
    %2135 = vmatprep.mubr.f32.mxu0 0.0
    %2136 = vmatmul.mubr.f32.gmra.mrb[0].mxu0 %v1258
    %v2137 = vpop.f32.mrb[0].mxu0
    %v2138 = vadd.f32 %v1873, %v2137
    %v2139 = vpop.f32.mrb[0].mxu0
    %2140 = vmatprep.mubr.f32.mxu0 0.0
    %2141 = vmatmul.mubr.f32.gmra.mrb[0].mxu0 %v1263
    %v2142 = vpop.f32.mrb[0].mxu0
    %v2143 = vadd.f32 %v1878, %v2142
    %v2144 = vpop.f32.mrb[0].mxu0
    %2145 = vmatprep.mubr.f32.mxu0 0.0
    %2146 = vmatmul.mubr.f32.gmra.mrb[0].mxu0 %v1268
    %v2147 = vpop.f32.mrb[0].mxu0
    %v2148 = vadd.f32 %v1883, %v2147
    %v2149 = vpop.f32.mrb[0].mxu0
    %2150 = vmatprep.mubr.f32.mxu0 0.0
    %2151 = vmatmul.mubr.f32.gmra.mrb[0].mxu0 %v1273
    %v2152 = vpop.f32.mrb[0].mxu0
    %v2153 = vadd.f32 %v1888, %v2152
    %v2154 = vpop.f32.mrb[0].mxu0
    %2155 = vmatprep.mubr.f32.mxu0 0.0
    %2156 = vmatmul.mubr.f32.gmra.mrb[0].mxu0 %v1278
    %v2157 = vpop.f32.mrb[0].mxu0
    %v2158 = vadd.f32 %v1893, %v2157
    %v2159 = vpop.f32.mrb[0].mxu0
    %2160 = vmatprep.mubr.f32.mxu0 0.0
    %2161 = vmatmul.mubr.f32.gmra.mrb[0].mxu0 %v1283
    %v2162 = vpop.f32.mrb[0].mxu0
    %v2163 = vadd.f32 %v1898, %v2162
    %v2164 = vpop.f32.mrb[0].mxu0
    %2165 = vmatprep.mubr.f32.mxu0 0.0
    %2166 = vmatmul.mubr.f32.gmra.mrb[0].mxu0 %v1288
    %v2167 = vpop.f32.mrb[0].mxu0
    %v2168 = vadd.f32 %v1903, %v2167
    %v2169 = vpop.f32.mrb[0].mxu0
    %2170 = vmatprep.mubr.f32.mxu0 0.0
    %2171 = vmatmul.mubr.f32.gmra.mrb[0].mxu0 %v1293
    %v2172 = vpop.f32.mrb[0].mxu0
    %v2173 = vadd.f32 %v1908, %v2172
    %v2174 = vpop.f32.mrb[0].mxu0
    %2175 = vmatprep.mubr.f32.mxu0 0.0
    %2176 = vmatmul.mubr.f32.gmra.mrb[0].mxu0 %v1298
    %v2177 = vpop.f32.mrb[0].mxu0
    %v2178 = vadd.f32 %v1913, %v2177
    %v2179 = vpop.f32.mrb[0].mxu0
    %2180 = vmatprep.mubr.f32.mxu0 0.0
    %2181 = vmatmul.mubr.f32.gmra.mrb[0].mxu0 %v1303
    %v2182 = vpop.f32.mrb[0].mxu0
    %v2183 = vadd.f32 %v1918, %v2182
    %v2184 = vpop.f32.mrb[0].mxu0
    %2185 = vmatprep.mubr.f32.mxu0 0.0
    %2186 = vmatmul.mubr.f32.gmra.mrb[0].mxu0 %v1308
    %v2187 = vpop.f32.mrb[0].mxu0
    %v2188 = vadd.f32 %v1923, %v2187
    %v2189 = vpop.f32.mrb[0].mxu0
    %2190 = vmatprep.mubr.f32.mxu0 0.0
    %2191 = vmatmul.mubr.f32.gmra.mrb[0].mxu0 %v1313
    %v2192 = vpop.f32.mrb[0].mxu0
    %v2193 = vadd.f32 %v1928, %v2192
    %v2194 = vpop.f32.mrb[0].mxu0
    %2195 = vmatprep.mubr.f32.mxu0 0.0
    %2196 = vmatmul.mubr.f32.gmra.mrb[0].mxu0 %v1318
    %v2197 = vpop.f32.mrb[0].mxu0
    %v2198 = vadd.f32 %v1933, %v2197
    %v2199 = vpop.f32.mrb[0].mxu0
    %2200 = vmatprep.mubr.f32.mxu0 0.0
    %2201 = vmatmul.mubr.f32.gmra.mrb[0].mxu0 %v1323
    %v2202 = vpop.f32.mrb[0].mxu0
    %v2203 = vadd.f32 %v1938, %v2202
    %v2204 = vpop.f32.mrb[0].mxu0
    %2205 = vmatprep.mubr.f32.mxu0 0.0
    %2206 = vmatmul.mubr.f32.gmra.mrb[0].mxu0 %v1328
    %v2207 = vpop.f32.mrb[0].mxu0
    %v2208 = vadd.f32 %v1943, %v2207
    %v2209 = vpop.f32.mrb[0].mxu0
    %2210 = vmatprep.mubr.f32.mxu0 0.0
    %2211 = vmatmul.mubr.f32.gmra.mrb[0].mxu0 %v1333
    %v2212 = vpop.f32.mrb[0].mxu0
    %v2213 = vadd.f32 %v1948, %v2212
    %v2214 = vpop.f32.mrb[0].mxu0
    %2215 = vmatprep.mubr.f32.mxu0 0.0
    %2216 = vmatmul.mubr.f32.gmra.mrb[0].mxu0 %v1338
    %v2217 = vpop.f32.mrb[0].mxu0
    %v2218 = vadd.f32 %v1953, %v2217
    %v2219 = vpop.f32.mrb[0].mxu0
    %2220 = vmatprep.mubr.f32.mxu0 0.0
    %2221 = vmatmul.mubr.f32.gmra.mrb[0].mxu0 %v1343
    %v2222 = vpop.f32.mrb[0].mxu0
    %v2223 = vadd.f32 %v1958, %v2222
    %v2224 = vpop.f32.mrb[0].mxu0
    %2225 = vmatprep.mubr.f32.mxu0 0.0
    %2226 = vmatmul.mubr.f32.gmra.mrb[0].mxu0 %v1348
    %v2227 = vpop.f32.mrb[0].mxu0
    %v2228 = vadd.f32 %v1963, %v2227
    %v2229 = vpop.f32.mrb[0].mxu0
    %2230 = vmatprep.mubr.f32.mxu0 0.0
    %2231 = vmatmul.mubr.f32.gmra.mrb[0].mxu0 %v1353
    %v2232 = vpop.f32.mrb[0].mxu0
    %v2233 = vadd.f32 %v1968, %v2232
    %v2234 = vpop.f32.mrb[0].mxu0
    %2235 = vmatprep.mubr.f32.mxu0 0.0
    %2236 = vmatmul.mubr.f32.gmra.mrb[0].mxu0 %v1358
    %v2237 = vpop.f32.mrb[0].mxu0
    %v2238 = vadd.f32 %v1973, %v2237
    %v2239 = vpop.f32.mrb[0].mxu0
    %2240 = vmatprep.mubr.f32.mxu0 0.0
    %2241 = vmatmul.mubr.f32.gmra.mrb[0].mxu0 %v1363
    %v2242 = vpop.f32.mrb[0].mxu0
    %v2243 = vadd.f32 %v1978, %v2242
    %v2244 = vpop.f32.mrb[0].mxu0
    %2245 = vmatprep.mubr.f32.mxu0 0.0
    %2246 = vmatmul.mubr.f32.gmra.mrb[0].mxu0 %v1368
    %v2247 = vpop.f32.mrb[0].mxu0
    %v2248 = vadd.f32 %v1983, %v2247
    %v2249 = vpop.f32.mrb[0].mxu0
    %2250 = vmatprep.mubr.f32.mxu0 0.0
    %2251 = vmatmul.mubr.f32.gmra.mrb[0].mxu0 %v1373
    %v2252 = vpop.f32.mrb[0].mxu0
    %v2253 = vadd.f32 %v1988, %v2252
    %v2254 = vpop.f32.mrb[0].mxu0
    %2255 = vmatprep.mubr.f32.mxu0 0.0
    %2256 = vmatmul.mubr.f32.gmra.mrb[0].mxu0 %v1378
    %v2257 = vpop.f32.mrb[0].mxu0
    %v2258 = vadd.f32 %v1993, %v2257
    %v2259 = vpop.f32.mrb[0].mxu0
    %2260 = vdwg.mxu0
    %v2261 = vld [vmem:[%s6] sm:$0xff]
    %v2262 = vld [vmem:[%s6 + $0x8] sm:$0xff]
    %v2263 = vld [vmem:[%s6 + $0x10] sm:$0xff]
    %v2264 = vld [vmem:[%s6 + $0x18] sm:$0xff]
    %v2265 = vld [vmem:[%s6 + $0x20] sm:$0xff]
    %v2266 = vld [vmem:[%s6 + $0x28] sm:$0xff]
    %v2267 = vld [vmem:[%s6 + $0x30] sm:$0xff]
    %v2268 = vld [vmem:[%s6 + $0x38] sm:$0xff]
    %v2269 = vld [vmem:[%s6 + $0x40] sm:$0xff]
    %v2270 = vld [vmem:[%s6 + $0x48] sm:$0xff]
    %v2271 = vld [vmem:[%s6 + $0x50] sm:$0xff]
    %v2272 = vld [vmem:[%s6 + $0x58] sm:$0xff]
    %v2273 = vld [vmem:[%s6 + $0x60] sm:$0xff]
    %v2274 = vld [vmem:[%s6 + $0x68] sm:$0xff]
    %v2275 = vld [vmem:[%s6 + $0x70] sm:$0xff]
    %v2276 = vld [vmem:[%s6 + $0x78] sm:$0xff]
    %v2277 = vld [vmem:[%s6 + $0x80] sm:$0xff]
    %v2278 = vld [vmem:[%s6 + $0x88] sm:$0xff]
    %v2279 = vld [vmem:[%s6 + $0x90] sm:$0xff]
    %v2280 = vld [vmem:[%s6 + $0x98] sm:$0xff]
    %v2281 = vld [vmem:[%s6 + $0xa0] sm:$0xff]
    %v2282 = vld [vmem:[%s6 + $0xa8] sm:$0xff]
    %v2283 = vld [vmem:[%s6 + $0xb0] sm:$0xff]
    %v2284 = vld [vmem:[%s6 + $0xb8] sm:$0xff]
    %v2285 = vld [vmem:[%s6 + $0xc0] sm:$0xff]
    %v2286 = vld [vmem:[%s6 + $0xc8] sm:$0xff]
    %v2287 = vld [vmem:[%s6 + $0xd0] sm:$0xff]
    %v2288 = vld [vmem:[%s6 + $0xd8] sm:$0xff]
    %v2289 = vld [vmem:[%s6 + $0xe0] sm:$0xff]
    %v2290 = vld [vmem:[%s6 + $0xe8] sm:$0xff]
    %v2291 = vld [vmem:[%s6 + $0xf0] sm:$0xff]
    %v2292 = vld [vmem:[%s6 + $0xf8] sm:$0xff]
    %v2293 = vld [vmem:[%s6 + $0x100] sm:$0xff]
    %v2294 = vld [vmem:[%s6 + $0x108] sm:$0xff]
    %v2295 = vld [vmem:[%s6 + $0x110] sm:$0xff]
    %v2296 = vld [vmem:[%s6 + $0x118] sm:$0xff]
    %v2297 = vld [vmem:[%s6 + $0x120] sm:$0xff]
    %v2298 = vld [vmem:[%s6 + $0x128] sm:$0xff]
    %v2299 = vld [vmem:[%s6 + $0x130] sm:$0xff]
    %v2300 = vld [vmem:[%s6 + $0x138] sm:$0xff]
    %v2301 = vld [vmem:[%s6 + $0x140] sm:$0xff]
    %v2302 = vld [vmem:[%s6 + $0x148] sm:$0xff]
    %v2303 = vld [vmem:[%s6 + $0x150] sm:$0xff]
    %v2304 = vld [vmem:[%s6 + $0x158] sm:$0xff]
    %v2305 = vld [vmem:[%s6 + $0x160] sm:$0xff]
    %v2306 = vld [vmem:[%s6 + $0x168] sm:$0xff]
    %v2307 = vld [vmem:[%s6 + $0x170] sm:$0xff]
    %v2308 = vld [vmem:[%s6 + $0x178] sm:$0xff]
    %v2309 = vld [vmem:[%s6 + $0x180] sm:$0xff]
    %v2310 = vld [vmem:[%s6 + $0x188] sm:$0xff]
    %v2311 = vld [vmem:[%s6 + $0x190] sm:$0xff]
    %v2312 = vld [vmem:[%s6 + $0x198] sm:$0xff]
    %v2313 = vld [vmem:[%s6 + $0x1a0] sm:$0xff]
    %v2314 = vld [vmem:[%s6 + $0x1a8] sm:$0xff]
    %v2315 = vld [vmem:[%s6 + $0x1b0] sm:$0xff]
    %v2316 = vld [vmem:[%s6 + $0x1b8] sm:$0xff]
    %v2317 = vld [vmem:[%s6 + $0x1c0] sm:$0xff]
    %v2318 = vld [vmem:[%s6 + $0x1c8] sm:$0xff]
    %v2319 = vld [vmem:[%s6 + $0x1d0] sm:$0xff]
    %v2320 = vld [vmem:[%s6 + $0x1d8] sm:$0xff]
    %v2321 = vld [vmem:[%s6 + $0x1e0] sm:$0xff]
    %v2322 = vld [vmem:[%s6 + $0x1e8] sm:$0xff]
    %v2323 = vld [vmem:[%s6 + $0x1f0] sm:$0xff]
    %v2324 = vld [vmem:[%s6 + $0x1f8] sm:$0xff]
    %v2325 = vld [vmem:[%s6 + $0x200] sm:$0xff]
    %v2326 = vld [vmem:[%s6 + $0x208] sm:$0xff]
    %v2327 = vld [vmem:[%s6 + $0x210] sm:$0xff]
    %v2328 = vld [vmem:[%s6 + $0x218] sm:$0xff]
    %v2329 = vld [vmem:[%s6 + $0x220] sm:$0xff]
    %v2330 = vld [vmem:[%s6 + $0x228] sm:$0xff]
    %v2331 = vld [vmem:[%s6 + $0x230] sm:$0xff]
    %v2332 = vld [vmem:[%s6 + $0x238] sm:$0xff]
    %v2333 = vld [vmem:[%s6 + $0x240] sm:$0xff]
    %v2334 = vld [vmem:[%s6 + $0x248] sm:$0xff]
    %v2335 = vld [vmem:[%s6 + $0x250] sm:$0xff]
    %v2336 = vld [vmem:[%s6 + $0x258] sm:$0xff]
    %v2337 = vld [vmem:[%s6 + $0x260] sm:$0xff]
    %v2338 = vld [vmem:[%s6 + $0x268] sm:$0xff]
    %v2339 = vld [vmem:[%s6 + $0x270] sm:$0xff]
    %v2340 = vld [vmem:[%s6 + $0x278] sm:$0xff]
    %2341 = vmatprep.subr.mxu0 0.0
    %2342 = vmatpush1.msra.mxu0 %v2261
    %2343 = vmatprep.subr.mxu0 0.0
    %2344 = vmatpush1.msra.mxu0 %v2262
    %2345 = vmatprep.subr.mxu0 0.0
    %2346 = vmatpush1.msra.mxu0 %v2263
    %2347 = vmatprep.subr.mxu0 0.0
    %2348 = vmatpush1.msra.mxu0 %v2264
    %2349 = vmatprep.subr.mxu0 0.0
    %2350 = vmatpush1.msra.mxu0 %v2265
    %2351 = vmatprep.subr.mxu0 0.0
    %2352 = vmatpush1.msra.mxu0 %v2266
    %2353 = vmatprep.subr.mxu0 0.0
    %2354 = vmatpush1.msra.mxu0 %v2267
    %2355 = vmatprep.subr.mxu0 0.0
    %2356 = vmatpush1.msra.mxu0 %v2268
    %2357 = vmatprep.subr.mxu0 0.0
    %2358 = vmatpush1.msra.mxu0 %v2269
    %2359 = vmatprep.subr.mxu0 0.0
    %2360 = vmatpush1.msra.mxu0 %v2270
    %2361 = vmatprep.subr.mxu0 0.0
    %2362 = vmatpush1.msra.mxu0 %v2271
    %2363 = vmatprep.subr.mxu0 0.0
    %2364 = vmatpush1.msra.mxu0 %v2272
    %2365 = vmatprep.subr.mxu0 0.0
    %2366 = vmatpush1.msra.mxu0 %v2273
    %2367 = vmatprep.subr.mxu0 0.0
    %2368 = vmatpush1.msra.mxu0 %v2274
    %2369 = vmatprep.subr.mxu0 0.0
    %2370 = vmatpush1.msra.mxu0 %v2275
    %2371 = vmatprep.subr.mxu0 0.0
    %2372 = vmatpush1.msra.mxu0 %v2276
    %2373 = vmatprep.subr.mxu0 0.0
    %2374 = vmatpush1.msra.mxu0 %v2277
    %2375 = vmatprep.subr.mxu0 0.0
    %2376 = vmatpush1.msra.mxu0 %v2278
    %2377 = vmatprep.subr.mxu0 0.0
    %2378 = vmatpush1.msra.mxu0 %v2279
    %2379 = vmatprep.subr.mxu0 0.0
    %2380 = vmatpush1.msra.mxu0 %v2280
    %2381 = vmatprep.subr.mxu0 0.0
    %2382 = vmatpush1.msra.mxu0 %v2281
    %2383 = vmatprep.subr.mxu0 0.0
    %2384 = vmatpush1.msra.mxu0 %v2282
    %2385 = vmatprep.subr.mxu0 0.0
    %2386 = vmatpush1.msra.mxu0 %v2283
    %2387 = vmatprep.subr.mxu0 0.0
    %2388 = vmatpush1.msra.mxu0 %v2284
    %2389 = vmatprep.subr.mxu0 0.0
    %2390 = vmatpush1.msra.mxu0 %v2285
    %2391 = vmatprep.subr.mxu0 0.0
    %2392 = vmatpush1.msra.mxu0 %v2286
    %2393 = vmatprep.subr.mxu0 0.0
    %2394 = vmatpush1.msra.mxu0 %v2287
    %2395 = vmatprep.subr.mxu0 0.0
    %2396 = vmatpush1.msra.mxu0 %v2288
    %2397 = vmatprep.subr.mxu0 0.0
    %2398 = vmatpush1.msra.mxu0 %v2289
    %2399 = vmatprep.subr.mxu0 0.0
    %2400 = vmatpush1.msra.mxu0 %v2290
    %2401 = vmatprep.subr.mxu0 0.0
    %2402 = vmatpush1.msra.mxu0 %v2291
    %2403 = vmatprep.subr.mxu0 0.0
    %2404 = vmatpush1.msra.mxu0 %v2292
    %2405 = vmatprep.mubr.f32.mxu0 %v1180
    %2406 = vmatmul.mubr.f32.gmra.mrb[0].mxu0 %v1179
    %v2407 = vpop.f32.mrb[0].mxu0
    %v2408 = vadd.f32 %v1464, %v2407
    %v2409 = vpop.f32.mrb[0].mxu0
    %2410 = vmatprep.mubr.f32.mxu0 %v1185
    %2411 = vmatmul.mubr.f32.gmra.mrb[0].mxu0 %v1184
    %v2412 = vpop.f32.mrb[0].mxu0
    %v2413 = vadd.f32 %v1464, %v2412
    %v2414 = vpop.f32.mrb[0].mxu0
    %2415 = vmatprep.mubr.f32.mxu0 %v1190
    %2416 = vmatmul.mubr.f32.gmra.mrb[0].mxu0 %v1189
    %v2417 = vpop.f32.mrb[0].mxu0
    %v2418 = vadd.f32 %v1464, %v2417
    %v2419 = vpop.f32.mrb[0].mxu0
    %2420 = vmatprep.mubr.f32.mxu0 %v1195
    %2421 = vmatmul.mubr.f32.gmra.mrb[0].mxu0 %v1194
    %v2422 = vpop.f32.mrb[0].mxu0
    %v2423 = vadd.f32 %v1464, %v2422
    %v2424 = vpop.f32.mrb[0].mxu0
    %2425 = vmatprep.mubr.f32.mxu0 %v1200
    %2426 = vmatmul.mubr.f32.gmra.mrb[0].mxu0 %v1199
    %v2427 = vpop.f32.mrb[0].mxu0
    %v2428 = vadd.f32 %v1464, %v2427
    %v2429 = vpop.f32.mrb[0].mxu0
    %2430 = vmatprep.mubr.f32.mxu0 %v1205
    %2431 = vmatmul.mubr.f32.gmra.mrb[0].mxu0 %v1204
    %v2432 = vpop.f32.mrb[0].mxu0
    %v2433 = vadd.f32 %v1464, %v2432
    %v2434 = vpop.f32.mrb[0].mxu0
    %2435 = vmatprep.mubr.f32.mxu0 %v1210
    %2436 = vmatmul.mubr.f32.gmra.mrb[0].mxu0 %v1209
    %v2437 = vpop.f32.mrb[0].mxu0
    %v2438 = vadd.f32 %v1464, %v2437
    %v2439 = vpop.f32.mrb[0].mxu0
    %2440 = vmatprep.mubr.f32.mxu0 %v1215
    %2441 = vmatmul.mubr.f32.gmra.mrb[0].mxu0 %v1214
    %v2442 = vpop.f32.mrb[0].mxu0
    %v2443 = vadd.f32 %v1464, %v2442
    %v2444 = vpop.f32.mrb[0].mxu0
    %2445 = vmatprep.mubr.f32.mxu0 %v1220
    %2446 = vmatmul.mubr.f32.gmra.mrb[0].mxu0 %v1219
    %v2447 = vpop.f32.mrb[0].mxu0
    %v2448 = vadd.f32 %v1464, %v2447
    %v2449 = vpop.f32.mrb[0].mxu0
    %2450 = vmatprep.mubr.f32.mxu0 %v1225
    %2451 = vmatmul.mubr.f32.gmra.mrb[0].mxu0 %v1224
    %v2452 = vpop.f32.mrb[0].mxu0
    %v2453 = vadd.f32 %v1464, %v2452
    %v2454 = vpop.f32.mrb[0].mxu0
    %2455 = vmatprep.mubr.f32.mxu0 %v1230
    %2456 = vmatmul.mubr.f32.gmra.mrb[0].mxu0 %v1229
    %v2457 = vpop.f32.mrb[0].mxu0
    %v2458 = vadd.f32 %v1464, %v2457
    %v2459 = vpop.f32.mrb[0].mxu0
    %2460 = vmatprep.mubr.f32.mxu0 %v1235
    %2461 = vmatmul.mubr.f32.gmra.mrb[0].mxu0 %v1234
    %v2462 = vpop.f32.mrb[0].mxu0
    %v2463 = vadd.f32 %v1464, %v2462
    %v2464 = vpop.f32.mrb[0].mxu0
    %2465 = vmatprep.mubr.f32.mxu0 %v1240
    %2466 = vmatmul.mubr.f32.gmra.mrb[0].mxu0 %v1239
    %v2467 = vpop.f32.mrb[0].mxu0
    %v2468 = vadd.f32 %v1464, %v2467
    %v2469 = vpop.f32.mrb[0].mxu0
    %2470 = vmatprep.mubr.f32.mxu0 %v1245
    %2471 = vmatmul.mubr.f32.gmra.mrb[0].mxu0 %v1244
    %v2472 = vpop.f32.mrb[0].mxu0
    %v2473 = vadd.f32 %v1464, %v2472
    %v2474 = vpop.f32.mrb[0].mxu0
    %2475 = vmatprep.mubr.f32.mxu0 %v1250
    %2476 = vmatmul.mubr.f32.gmra.mrb[0].mxu0 %v1249
    %v2477 = vpop.f32.mrb[0].mxu0
    %v2478 = vadd.f32 %v1464, %v2477
    %v2479 = vpop.f32.mrb[0].mxu0
    %2480 = vmatprep.mubr.f32.mxu0 %v1255
    %2481 = vmatmul.mubr.f32.gmra.mrb[0].mxu0 %v1254
    %v2482 = vpop.f32.mrb[0].mxu0
    %v2483 = vadd.f32 %v1464, %v2482
    %v2484 = vpop.f32.mrb[0].mxu0
    %2485 = vmatprep.mubr.f32.mxu0 %v1260
    %2486 = vmatmul.mubr.f32.gmra.mrb[0].mxu0 %v1259
    %v2487 = vpop.f32.mrb[0].mxu0
    %v2488 = vadd.f32 %v1464, %v2487
    %v2489 = vpop.f32.mrb[0].mxu0
    %2490 = vmatprep.mubr.f32.mxu0 %v1265
    %2491 = vmatmul.mubr.f32.gmra.mrb[0].mxu0 %v1264
    %v2492 = vpop.f32.mrb[0].mxu0
    %v2493 = vadd.f32 %v1464, %v2492
    %v2494 = vpop.f32.mrb[0].mxu0
    %2495 = vmatprep.mubr.f32.mxu0 %v1270
    %2496 = vmatmul.mubr.f32.gmra.mrb[0].mxu0 %v1269
    %v2497 = vpop.f32.mrb[0].mxu0
    %v2498 = vadd.f32 %v1464, %v2497
    %v2499 = vpop.f32.mrb[0].mxu0
    %2500 = vmatprep.mubr.f32.mxu0 %v1275
    %2501 = vmatmul.mubr.f32.gmra.mrb[0].mxu0 %v1274
    %v2502 = vpop.f32.mrb[0].mxu0
    %v2503 = vadd.f32 %v1464, %v2502
    %v2504 = vpop.f32.mrb[0].mxu0
    %2505 = vmatprep.mubr.f32.mxu0 %v1280
    %2506 = vmatmul.mubr.f32.gmra.mrb[0].mxu0 %v1279
    %v2507 = vpop.f32.mrb[0].mxu0
    %v2508 = vadd.f32 %v1464, %v2507
    %v2509 = vpop.f32.mrb[0].mxu0
    %2510 = vmatprep.mubr.f32.mxu0 %v1285
    %2511 = vmatmul.mubr.f32.gmra.mrb[0].mxu0 %v1284
    %v2512 = vpop.f32.mrb[0].mxu0
    %v2513 = vadd.f32 %v1464, %v2512
    %v2514 = vpop.f32.mrb[0].mxu0
    %2515 = vmatprep.mubr.f32.mxu0 %v1290
    %2516 = vmatmul.mubr.f32.gmra.mrb[0].mxu0 %v1289
    %v2517 = vpop.f32.mrb[0].mxu0
    %v2518 = vadd.f32 %v1464, %v2517
    %v2519 = vpop.f32.mrb[0].mxu0
    %2520 = vmatprep.mubr.f32.mxu0 %v1295
    %2521 = vmatmul.mubr.f32.gmra.mrb[0].mxu0 %v1294
    %v2522 = vpop.f32.mrb[0].mxu0
    %v2523 = vadd.f32 %v1464, %v2522
    %v2524 = vpop.f32.mrb[0].mxu0
    %2525 = vmatprep.mubr.f32.mxu0 %v1300
    %2526 = vmatmul.mubr.f32.gmra.mrb[0].mxu0 %v1299
    %v2527 = vpop.f32.mrb[0].mxu0
    %v2528 = vadd.f32 %v1464, %v2527
    %v2529 = vpop.f32.mrb[0].mxu0
    %2530 = vmatprep.mubr.f32.mxu0 %v1305
    %2531 = vmatmul.mubr.f32.gmra.mrb[0].mxu0 %v1304
    %v2532 = vpop.f32.mrb[0].mxu0
    %v2533 = vadd.f32 %v1464, %v2532
    %v2534 = vpop.f32.mrb[0].mxu0
    %2535 = vmatprep.mubr.f32.mxu0 %v1310
    %2536 = vmatmul.mubr.f32.gmra.mrb[0].mxu0 %v1309
    %v2537 = vpop.f32.mrb[0].mxu0
    %v2538 = vadd.f32 %v1464, %v2537
    %v2539 = vpop.f32.mrb[0].mxu0
    %2540 = vmatprep.mubr.f32.mxu0 %v1315
    %2541 = vmatmul.mubr.f32.gmra.mrb[0].mxu0 %v1314
    %v2542 = vpop.f32.mrb[0].mxu0
    %v2543 = vadd.f32 %v1464, %v2542
    %v2544 = vpop.f32.mrb[0].mxu0
    %2545 = vmatprep.mubr.f32.mxu0 %v1320
    %2546 = vmatmul.mubr.f32.gmra.mrb[0].mxu0 %v1319
    %v2547 = vpop.f32.mrb[0].mxu0
    %v2548 = vadd.f32 %v1464, %v2547
    %v2549 = vpop.f32.mrb[0].mxu0
    %2550 = vmatprep.mubr.f32.mxu0 %v1325
    %2551 = vmatmul.mubr.f32.gmra.mrb[0].mxu0 %v1324
    %v2552 = vpop.f32.mrb[0].mxu0
    %v2553 = vadd.f32 %v1464, %v2552
    %v2554 = vpop.f32.mrb[0].mxu0
    %2555 = vmatprep.mubr.f32.mxu0 %v1330
    %2556 = vmatmul.mubr.f32.gmra.mrb[0].mxu0 %v1329
    %v2557 = vpop.f32.mrb[0].mxu0
    %v2558 = vadd.f32 %v1464, %v2557
    %v2559 = vpop.f32.mrb[0].mxu0
    %2560 = vmatprep.mubr.f32.mxu0 %v1335
    %2561 = vmatmul.mubr.f32.gmra.mrb[0].mxu0 %v1334
    %v2562 = vpop.f32.mrb[0].mxu0
    %v2563 = vadd.f32 %v1464, %v2562
    %v2564 = vpop.f32.mrb[0].mxu0
    %2565 = vmatprep.mubr.f32.mxu0 %v1340
    %2566 = vmatmul.mubr.f32.gmra.mrb[0].mxu0 %v1339
    %v2567 = vpop.f32.mrb[0].mxu0
    %v2568 = vadd.f32 %v1464, %v2567
    %v2569 = vpop.f32.mrb[0].mxu0
    %2570 = vmatprep.mubr.f32.mxu0 %v1345
    %2571 = vmatmul.mubr.f32.gmra.mrb[0].mxu0 %v1344
    %v2572 = vpop.f32.mrb[0].mxu0
    %v2573 = vadd.f32 %v1464, %v2572
    %v2574 = vpop.f32.mrb[0].mxu0
    %2575 = vmatprep.mubr.f32.mxu0 %v1350
    %2576 = vmatmul.mubr.f32.gmra.mrb[0].mxu0 %v1349
    %v2577 = vpop.f32.mrb[0].mxu0
    %v2578 = vadd.f32 %v1464, %v2577
    %v2579 = vpop.f32.mrb[0].mxu0
    %2580 = vmatprep.mubr.f32.mxu0 %v1355
    %2581 = vmatmul.mubr.f32.gmra.mrb[0].mxu0 %v1354
    %v2582 = vpop.f32.mrb[0].mxu0
    %v2583 = vadd.f32 %v1464, %v2582
    %v2584 = vpop.f32.mrb[0].mxu0
    %2585 = vmatprep.mubr.f32.mxu0 %v1360
    %2586 = vmatmul.mubr.f32.gmra.mrb[0].mxu0 %v1359
    %v2587 = vpop.f32.mrb[0].mxu0
    %v2588 = vadd.f32 %v1464, %v2587
    %v2589 = vpop.f32.mrb[0].mxu0
    %2590 = vmatprep.mubr.f32.mxu0 %v1365
    %2591 = vmatmul.mubr.f32.gmra.mrb[0].mxu0 %v1364
    %v2592 = vpop.f32.mrb[0].mxu0
    %v2593 = vadd.f32 %v1464, %v2592
    %v2594 = vpop.f32.mrb[0].mxu0
    %2595 = vmatprep.mubr.f32.mxu0 %v1370
    %2596 = vmatmul.mubr.f32.gmra.mrb[0].mxu0 %v1369
    %v2597 = vpop.f32.mrb[0].mxu0
    %v2598 = vadd.f32 %v1464, %v2597
    %v2599 = vpop.f32.mrb[0].mxu0
    %2600 = vmatprep.mubr.f32.mxu0 %v1375
    %2601 = vmatmul.mubr.f32.gmra.mrb[0].mxu0 %v1374
    %v2602 = vpop.f32.mrb[0].mxu0
    %v2603 = vadd.f32 %v1464, %v2602
    %v2604 = vpop.f32.mrb[0].mxu0
    %2605 = vdwg.mxu0
    %2606 = vmatprep.subr.mxu0 0.0
    %2607 = vmatpush1.msra.mxu0 %v2293
    %2608 = vmatprep.subr.mxu0 0.0
    %2609 = vmatpush1.msra.mxu0 %v2294
    %2610 = vmatprep.subr.mxu0 0.0
    %2611 = vmatpush1.msra.mxu0 %v2295
    %2612 = vmatprep.subr.mxu0 0.0
    %2613 = vmatpush1.msra.mxu0 %v2296
    %2614 = vmatprep.subr.mxu0 0.0
    %2615 = vmatpush1.msra.mxu0 %v2297
    %2616 = vmatprep.subr.mxu0 0.0
    %2617 = vmatpush1.msra.mxu0 %v2298
    %2618 = vmatprep.subr.mxu0 0.0
    %2619 = vmatpush1.msra.mxu0 %v2299
    %2620 = vmatprep.subr.mxu0 0.0
    %2621 = vmatpush1.msra.mxu0 %v2300
    %2622 = vmatprep.subr.mxu0 0.0
    %2623 = vmatpush1.msra.mxu0 %v2301
    %2624 = vmatprep.subr.mxu0 0.0
    %2625 = vmatpush1.msra.mxu0 %v2302
    %2626 = vmatprep.subr.mxu0 0.0
    %2627 = vmatpush1.msra.mxu0 %v2303
    %2628 = vmatprep.subr.mxu0 0.0
    %2629 = vmatpush1.msra.mxu0 %v2304
    %2630 = vmatprep.subr.mxu0 0.0
    %2631 = vmatpush1.msra.mxu0 %v2305
    %2632 = vmatprep.subr.mxu0 0.0
    %2633 = vmatpush1.msra.mxu0 %v2306
    %2634 = vmatprep.subr.mxu0 0.0
    %2635 = vmatpush1.msra.mxu0 %v2307
    %2636 = vmatprep.subr.mxu0 0.0
    %2637 = vmatpush1.msra.mxu0 %v2308
    %2638 = vmatprep.subr.mxu0 0.0
    %2639 = vmatpush1.msra.mxu0 %v2309
    %2640 = vmatprep.subr.mxu0 0.0
    %2641 = vmatpush1.msra.mxu0 %v2310
    %2642 = vmatprep.subr.mxu0 0.0
    %2643 = vmatpush1.msra.mxu0 %v2311
    %2644 = vmatprep.subr.mxu0 0.0
    %2645 = vmatpush1.msra.mxu0 %v2312
    %2646 = vmatprep.subr.mxu0 0.0
    %2647 = vmatpush1.msra.mxu0 %v2313
    %2648 = vmatprep.subr.mxu0 0.0
    %2649 = vmatpush1.msra.mxu0 %v2314
    %2650 = vmatprep.subr.mxu0 0.0
    %2651 = vmatpush1.msra.mxu0 %v2315
    %2652 = vmatprep.subr.mxu0 0.0
    %2653 = vmatpush1.msra.mxu0 %v2316
    %2654 = vmatprep.subr.mxu0 0.0
    %2655 = vmatpush1.msra.mxu0 %v2317
    %2656 = vmatprep.subr.mxu0 0.0
    %2657 = vmatpush1.msra.mxu0 %v2318
    %2658 = vmatprep.subr.mxu0 0.0
    %2659 = vmatpush1.msra.mxu0 %v2319
    %2660 = vmatprep.subr.mxu0 0.0
    %2661 = vmatpush1.msra.mxu0 %v2320
    %2662 = vmatprep.subr.mxu0 0.0
    %2663 = vmatpush1.msra.mxu0 %v2321
    %2664 = vmatprep.subr.mxu0 0.0
    %2665 = vmatpush1.msra.mxu0 %v2322
    %2666 = vmatprep.subr.mxu0 0.0
    %2667 = vmatpush1.msra.mxu0 %v2323
    %2668 = vmatprep.subr.mxu0 0.0
    %2669 = vmatpush1.msra.mxu0 %v2324
    %2670 = vmatprep.mubr.f32.mxu0 %v1182
    %2671 = vmatmul.mubr.f32.gmra.mrb[0].mxu0 %v1181
    %v2672 = vpop.f32.mrb[0].mxu0
    %v2673 = vadd.f32 %v2408, %v2672
    %v2674 = vpop.f32.mrb[0].mxu0
    %2675 = vmatprep.mubr.f32.mxu0 %v1187
    %2676 = vmatmul.mubr.f32.gmra.mrb[0].mxu0 %v1186
    %v2677 = vpop.f32.mrb[0].mxu0
    %v2678 = vadd.f32 %v2413, %v2677
    %v2679 = vpop.f32.mrb[0].mxu0
    %2680 = vmatprep.mubr.f32.mxu0 %v1192
    %2681 = vmatmul.mubr.f32.gmra.mrb[0].mxu0 %v1191
    %v2682 = vpop.f32.mrb[0].mxu0
    %v2683 = vadd.f32 %v2418, %v2682
    %v2684 = vpop.f32.mrb[0].mxu0
    %2685 = vmatprep.mubr.f32.mxu0 %v1197
    %2686 = vmatmul.mubr.f32.gmra.mrb[0].mxu0 %v1196
    %v2687 = vpop.f32.mrb[0].mxu0
    %v2688 = vadd.f32 %v2423, %v2687
    %v2689 = vpop.f32.mrb[0].mxu0
    %2690 = vmatprep.mubr.f32.mxu0 %v1202
    %2691 = vmatmul.mubr.f32.gmra.mrb[0].mxu0 %v1201
    %v2692 = vpop.f32.mrb[0].mxu0
    %v2693 = vadd.f32 %v2428, %v2692
    %v2694 = vpop.f32.mrb[0].mxu0
    %2695 = vmatprep.mubr.f32.mxu0 %v1207
    %2696 = vmatmul.mubr.f32.gmra.mrb[0].mxu0 %v1206
    %v2697 = vpop.f32.mrb[0].mxu0
    %v2698 = vadd.f32 %v2433, %v2697
    %v2699 = vpop.f32.mrb[0].mxu0
    %2700 = vmatprep.mubr.f32.mxu0 %v1212
    %2701 = vmatmul.mubr.f32.gmra.mrb[0].mxu0 %v1211
    %v2702 = vpop.f32.mrb[0].mxu0
    %v2703 = vadd.f32 %v2438, %v2702
    %v2704 = vpop.f32.mrb[0].mxu0
    %2705 = vmatprep.mubr.f32.mxu0 %v1217
    %2706 = vmatmul.mubr.f32.gmra.mrb[0].mxu0 %v1216
    %v2707 = vpop.f32.mrb[0].mxu0
    %v2708 = vadd.f32 %v2443, %v2707
    %v2709 = vpop.f32.mrb[0].mxu0
    %2710 = vmatprep.mubr.f32.mxu0 %v1222
    %2711 = vmatmul.mubr.f32.gmra.mrb[0].mxu0 %v1221
    %v2712 = vpop.f32.mrb[0].mxu0
    %v2713 = vadd.f32 %v2448, %v2712
    %v2714 = vpop.f32.mrb[0].mxu0
    %2715 = vmatprep.mubr.f32.mxu0 %v1227
    %2716 = vmatmul.mubr.f32.gmra.mrb[0].mxu0 %v1226
    %v2717 = vpop.f32.mrb[0].mxu0
    %v2718 = vadd.f32 %v2453, %v2717
    %v2719 = vpop.f32.mrb[0].mxu0
    %2720 = vmatprep.mubr.f32.mxu0 %v1232
    %2721 = vmatmul.mubr.f32.gmra.mrb[0].mxu0 %v1231
    %v2722 = vpop.f32.mrb[0].mxu0
    %v2723 = vadd.f32 %v2458, %v2722
    %v2724 = vpop.f32.mrb[0].mxu0
    %2725 = vmatprep.mubr.f32.mxu0 %v1237
    %2726 = vmatmul.mubr.f32.gmra.mrb[0].mxu0 %v1236
    %v2727 = vpop.f32.mrb[0].mxu0
    %v2728 = vadd.f32 %v2463, %v2727
    %v2729 = vpop.f32.mrb[0].mxu0
    %2730 = vmatprep.mubr.f32.mxu0 %v1242
    %2731 = vmatmul.mubr.f32.gmra.mrb[0].mxu0 %v1241
    %v2732 = vpop.f32.mrb[0].mxu0
    %v2733 = vadd.f32 %v2468, %v2732
    %v2734 = vpop.f32.mrb[0].mxu0
    %2735 = vmatprep.mubr.f32.mxu0 %v1247
    %2736 = vmatmul.mubr.f32.gmra.mrb[0].mxu0 %v1246
    %v2737 = vpop.f32.mrb[0].mxu0
    %v2738 = vadd.f32 %v2473, %v2737
    %v2739 = vpop.f32.mrb[0].mxu0
    %2740 = vmatprep.mubr.f32.mxu0 %v1252
    %2741 = vmatmul.mubr.f32.gmra.mrb[0].mxu0 %v1251
    %v2742 = vpop.f32.mrb[0].mxu0
    %v2743 = vadd.f32 %v2478, %v2742
    %v2744 = vpop.f32.mrb[0].mxu0
    %2745 = vmatprep.mubr.f32.mxu0 %v1257
    %2746 = vmatmul.mubr.f32.gmra.mrb[0].mxu0 %v1256
    %v2747 = vpop.f32.mrb[0].mxu0
    %v2748 = vadd.f32 %v2483, %v2747
    %v2749 = vpop.f32.mrb[0].mxu0
    %2750 = vmatprep.mubr.f32.mxu0 %v1262
    %2751 = vmatmul.mubr.f32.gmra.mrb[0].mxu0 %v1261
    %v2752 = vpop.f32.mrb[0].mxu0
    %v2753 = vadd.f32 %v2488, %v2752
    %v2754 = vpop.f32.mrb[0].mxu0
    %2755 = vmatprep.mubr.f32.mxu0 %v1267
    %2756 = vmatmul.mubr.f32.gmra.mrb[0].mxu0 %v1266
    %v2757 = vpop.f32.mrb[0].mxu0
    %v2758 = vadd.f32 %v2493, %v2757
    %v2759 = vpop.f32.mrb[0].mxu0
    %2760 = vmatprep.mubr.f32.mxu0 %v1272
    %2761 = vmatmul.mubr.f32.gmra.mrb[0].mxu0 %v1271
    %v2762 = vpop.f32.mrb[0].mxu0
    %v2763 = vadd.f32 %v2498, %v2762
    %v2764 = vpop.f32.mrb[0].mxu0
    %2765 = vmatprep.mubr.f32.mxu0 %v1277
    %2766 = vmatmul.mubr.f32.gmra.mrb[0].mxu0 %v1276
    %v2767 = vpop.f32.mrb[0].mxu0
    %v2768 = vadd.f32 %v2503, %v2767
    %v2769 = vpop.f32.mrb[0].mxu0
    %2770 = vmatprep.mubr.f32.mxu0 %v1282
    %2771 = vmatmul.mubr.f32.gmra.mrb[0].mxu0 %v1281
    %v2772 = vpop.f32.mrb[0].mxu0
    %v2773 = vadd.f32 %v2508, %v2772
    %v2774 = vpop.f32.mrb[0].mxu0
    %2775 = vmatprep.mubr.f32.mxu0 %v1287
    %2776 = vmatmul.mubr.f32.gmra.mrb[0].mxu0 %v1286
    %v2777 = vpop.f32.mrb[0].mxu0
    %v2778 = vadd.f32 %v2513, %v2777
    %v2779 = vpop.f32.mrb[0].mxu0
    %2780 = vmatprep.mubr.f32.mxu0 %v1292
    %2781 = vmatmul.mubr.f32.gmra.mrb[0].mxu0 %v1291
    %v2782 = vpop.f32.mrb[0].mxu0
    %v2783 = vadd.f32 %v2518, %v2782
    %v2784 = vpop.f32.mrb[0].mxu0
    %2785 = vmatprep.mubr.f32.mxu0 %v1297
    %2786 = vmatmul.mubr.f32.gmra.mrb[0].mxu0 %v1296
    %v2787 = vpop.f32.mrb[0].mxu0
    %v2788 = vadd.f32 %v2523, %v2787
    %v2789 = vpop.f32.mrb[0].mxu0
    %2790 = vmatprep.mubr.f32.mxu0 %v1302
    %2791 = vmatmul.mubr.f32.gmra.mrb[0].mxu0 %v1301
    %v2792 = vpop.f32.mrb[0].mxu0
    %v2793 = vadd.f32 %v2528, %v2792
    %v2794 = vpop.f32.mrb[0].mxu0
    %2795 = vmatprep.mubr.f32.mxu0 %v1307
    %2796 = vmatmul.mubr.f32.gmra.mrb[0].mxu0 %v1306
    %v2797 = vpop.f32.mrb[0].mxu0
    %v2798 = vadd.f32 %v2533, %v2797
    %v2799 = vpop.f32.mrb[0].mxu0
    %2800 = vmatprep.mubr.f32.mxu0 %v1312
    %2801 = vmatmul.mubr.f32.gmra.mrb[0].mxu0 %v1311
    %v2802 = vpop.f32.mrb[0].mxu0
    %v2803 = vadd.f32 %v2538, %v2802
    %v2804 = vpop.f32.mrb[0].mxu0
    %2805 = vmatprep.mubr.f32.mxu0 %v1317
    %2806 = vmatmul.mubr.f32.gmra.mrb[0].mxu0 %v1316
    %v2807 = vpop.f32.mrb[0].mxu0
    %v2808 = vadd.f32 %v2543, %v2807
    %v2809 = vpop.f32.mrb[0].mxu0
    %2810 = vmatprep.mubr.f32.mxu0 %v1322
    %2811 = vmatmul.mubr.f32.gmra.mrb[0].mxu0 %v1321
    %v2812 = vpop.f32.mrb[0].mxu0
    %v2813 = vadd.f32 %v2548, %v2812
    %v2814 = vpop.f32.mrb[0].mxu0
    %2815 = vmatprep.mubr.f32.mxu0 %v1327
    %2816 = vmatmul.mubr.f32.gmra.mrb[0].mxu0 %v1326
    %v2817 = vpop.f32.mrb[0].mxu0
    %v2818 = vadd.f32 %v2553, %v2817
    %v2819 = vpop.f32.mrb[0].mxu0
    %2820 = vmatprep.mubr.f32.mxu0 %v1332
    %2821 = vmatmul.mubr.f32.gmra.mrb[0].mxu0 %v1331
    %v2822 = vpop.f32.mrb[0].mxu0
    %v2823 = vadd.f32 %v2558, %v2822
    %v2824 = vpop.f32.mrb[0].mxu0
    %2825 = vmatprep.mubr.f32.mxu0 %v1337
    %2826 = vmatmul.mubr.f32.gmra.mrb[0].mxu0 %v1336
    %v2827 = vpop.f32.mrb[0].mxu0
    %v2828 = vadd.f32 %v2563, %v2827
    %v2829 = vpop.f32.mrb[0].mxu0
    %2830 = vmatprep.mubr.f32.mxu0 %v1342
    %2831 = vmatmul.mubr.f32.gmra.mrb[0].mxu0 %v1341
    %v2832 = vpop.f32.mrb[0].mxu0
    %v2833 = vadd.f32 %v2568, %v2832
    %v2834 = vpop.f32.mrb[0].mxu0
    %2835 = vmatprep.mubr.f32.mxu0 %v1347
    %2836 = vmatmul.mubr.f32.gmra.mrb[0].mxu0 %v1346
    %v2837 = vpop.f32.mrb[0].mxu0
    %v2838 = vadd.f32 %v2573, %v2837
    %v2839 = vpop.f32.mrb[0].mxu0
    %2840 = vmatprep.mubr.f32.mxu0 %v1352
    %2841 = vmatmul.mubr.f32.gmra.mrb[0].mxu0 %v1351
    %v2842 = vpop.f32.mrb[0].mxu0
    %v2843 = vadd.f32 %v2578, %v2842
    %v2844 = vpop.f32.mrb[0].mxu0
    %2845 = vmatprep.mubr.f32.mxu0 %v1357
    %2846 = vmatmul.mubr.f32.gmra.mrb[0].mxu0 %v1356
    %v2847 = vpop.f32.mrb[0].mxu0
    %v2848 = vadd.f32 %v2583, %v2847
    %v2849 = vpop.f32.mrb[0].mxu0
    %2850 = vmatprep.mubr.f32.mxu0 %v1362
    %2851 = vmatmul.mubr.f32.gmra.mrb[0].mxu0 %v1361
    %v2852 = vpop.f32.mrb[0].mxu0
    %v2853 = vadd.f32 %v2588, %v2852
    %v2854 = vpop.f32.mrb[0].mxu0
    %2855 = vmatprep.mubr.f32.mxu0 %v1367
    %2856 = vmatmul.mubr.f32.gmra.mrb[0].mxu0 %v1366
    %v2857 = vpop.f32.mrb[0].mxu0
    %v2858 = vadd.f32 %v2593, %v2857
    %v2859 = vpop.f32.mrb[0].mxu0
    %2860 = vmatprep.mubr.f32.mxu0 %v1372
    %2861 = vmatmul.mubr.f32.gmra.mrb[0].mxu0 %v1371
    %v2862 = vpop.f32.mrb[0].mxu0
    %v2863 = vadd.f32 %v2598, %v2862
    %v2864 = vpop.f32.mrb[0].mxu0
    %2865 = vmatprep.mubr.f32.mxu0 %v1377
    %2866 = vmatmul.mubr.f32.gmra.mrb[0].mxu0 %v1376
    %v2867 = vpop.f32.mrb[0].mxu0
    %v2868 = vadd.f32 %v2603, %v2867
    %v2869 = vpop.f32.mrb[0].mxu0
    %2870 = vdwg.mxu0
    %2871 = vmatprep.subr.mxu0 0.0
    %2872 = vmatpush1.msra.mxu0 %v2325
    %2873 = vmatprep.subr.mxu0 0.0
    %2874 = vmatpush1.msra.mxu0 %v2326
    %2875 = vmatprep.subr.mxu0 0.0
    %2876 = vmatpush1.msra.mxu0 %v2327
    %2877 = vmatprep.subr.mxu0 0.0
    %2878 = vmatpush1.msra.mxu0 %v2328
    %2879 = vmatprep.subr.mxu0 0.0
    %2880 = vmatpush1.msra.mxu0 %v2329
    %2881 = vmatprep.subr.mxu0 0.0
    %2882 = vmatpush1.msra.mxu0 %v2330
    %2883 = vmatprep.subr.mxu0 0.0
    %2884 = vmatpush1.msra.mxu0 %v2331
    %2885 = vmatprep.subr.mxu0 0.0
    %2886 = vmatpush1.msra.mxu0 %v2332
    %2887 = vmatprep.subr.mxu0 0.0
    %2888 = vmatpush1.msra.mxu0 %v2333
    %2889 = vmatprep.subr.mxu0 0.0
    %2890 = vmatpush1.msra.mxu0 %v2334
    %2891 = vmatprep.subr.mxu0 0.0
    %2892 = vmatpush1.msra.mxu0 %v2335
    %2893 = vmatprep.subr.mxu0 0.0
    %2894 = vmatpush1.msra.mxu0 %v2336
    %2895 = vmatprep.subr.mxu0 0.0
    %2896 = vmatpush1.msra.mxu0 %v2337
    %2897 = vmatprep.subr.mxu0 0.0
    %2898 = vmatpush1.msra.mxu0 %v2338
    %2899 = vmatprep.subr.mxu0 0.0
    %2900 = vmatpush1.msra.mxu0 %v2339
    %2901 = vmatprep.subr.mxu0 0.0
    %2902 = vmatpush1.msra.mxu0 %v2340
    %2903 = vmatprep.subr.mxu0 0.0
    %2904 = vmatpush1.msra.mxu0 0.0
    %2905 = vmatprep.subr.mxu0 0.0
    %2906 = vmatpush1.msra.mxu0 0.0
    %2907 = vmatprep.subr.mxu0 0.0
    %2908 = vmatpush1.msra.mxu0 0.0
    %2909 = vmatprep.subr.mxu0 0.0
    %2910 = vmatpush1.msra.mxu0 0.0
    %2911 = vmatprep.subr.mxu0 0.0
    %2912 = vmatpush1.msra.mxu0 0.0
    %2913 = vmatprep.subr.mxu0 0.0
    %2914 = vmatpush1.msra.mxu0 0.0
    %2915 = vmatprep.subr.mxu0 0.0
    %2916 = vmatpush1.msra.mxu0 0.0
    %2917 = vmatprep.subr.mxu0 0.0
    %2918 = vmatpush1.msra.mxu0 0.0
    %2919 = vmatprep.subr.mxu0 0.0
    %2920 = vmatpush1.msra.mxu0 0.0
    %2921 = vmatprep.subr.mxu0 0.0
    %2922 = vmatpush1.msra.mxu0 0.0
    %2923 = vmatprep.subr.mxu0 0.0
    %2924 = vmatpush1.msra.mxu0 0.0
    %2925 = vmatprep.subr.mxu0 0.0
    %2926 = vmatpush1.msra.mxu0 0.0
    %2927 = vmatprep.subr.mxu0 0.0
    %2928 = vmatpush1.msra.mxu0 0.0
    %2929 = vmatprep.subr.mxu0 0.0
    %2930 = vmatpush1.msra.mxu0 0.0
    %2931 = vmatprep.subr.mxu0 0.0
    %2932 = vmatpush1.msra.mxu0 0.0
    %2933 = vmatprep.subr.mxu0 0.0
    %2934 = vmatpush1.msra.mxu0 0.0
    %2935 = vmatprep.mubr.f32.mxu0 0.0
    %2936 = vmatmul.mubr.f32.gmra.mrb[0].mxu0 %v1183
    %v2937 = vpop.f32.mrb[0].mxu0
    %v2938 = vadd.f32 %v2673, %v2937
    %v2939 = vpop.f32.mrb[0].mxu0
    %2940 = vmatprep.mubr.f32.mxu0 0.0
    %2941 = vmatmul.mubr.f32.gmra.mrb[0].mxu0 %v1188
    %v2942 = vpop.f32.mrb[0].mxu0
    %v2943 = vadd.f32 %v2678, %v2942
    %v2944 = vpop.f32.mrb[0].mxu0
    %2945 = vmatprep.mubr.f32.mxu0 0.0
    %2946 = vmatmul.mubr.f32.gmra.mrb[0].mxu0 %v1193
    %v2947 = vpop.f32.mrb[0].mxu0
    %v2948 = vadd.f32 %v2683, %v2947
    %v2949 = vpop.f32.mrb[0].mxu0
    %2950 = vmatprep.mubr.f32.mxu0 0.0
    %2951 = vmatmul.mubr.f32.gmra.mrb[0].mxu0 %v1198
    %v2952 = vpop.f32.mrb[0].mxu0
    %v2953 = vadd.f32 %v2688, %v2952
    %v2954 = vpop.f32.mrb[0].mxu0
    %2955 = vmatprep.mubr.f32.mxu0 0.0
    %2956 = vmatmul.mubr.f32.gmra.mrb[0].mxu0 %v1203
    %v2957 = vpop.f32.mrb[0].mxu0
    %v2958 = vadd.f32 %v2693, %v2957
    %v2959 = vpop.f32.mrb[0].mxu0
    %2960 = vmatprep.mubr.f32.mxu0 0.0
    %2961 = vmatmul.mubr.f32.gmra.mrb[0].mxu0 %v1208
    %v2962 = vpop.f32.mrb[0].mxu0
    %v2963 = vadd.f32 %v2698, %v2962
    %v2964 = vpop.f32.mrb[0].mxu0
    %2965 = vmatprep.mubr.f32.mxu0 0.0
    %2966 = vmatmul.mubr.f32.gmra.mrb[0].mxu0 %v1213
    %v2967 = vpop.f32.mrb[0].mxu0
    %v2968 = vadd.f32 %v2703, %v2967
    %v2969 = vpop.f32.mrb[0].mxu0
    %2970 = vmatprep.mubr.f32.mxu0 0.0
    %2971 = vmatmul.mubr.f32.gmra.mrb[0].mxu0 %v1218
    %v2972 = vpop.f32.mrb[0].mxu0
    %v2973 = vadd.f32 %v2708, %v2972
    %v2974 = vpop.f32.mrb[0].mxu0
    %2975 = vmatprep.mubr.f32.mxu0 0.0
    %2976 = vmatmul.mubr.f32.gmra.mrb[0].mxu0 %v1223
    %v2977 = vpop.f32.mrb[0].mxu0
    %v2978 = vadd.f32 %v2713, %v2977
    %v2979 = vpop.f32.mrb[0].mxu0
    %2980 = vmatprep.mubr.f32.mxu0 0.0
    %2981 = vmatmul.mubr.f32.gmra.mrb[0].mxu0 %v1228
    %v2982 = vpop.f32.mrb[0].mxu0
    %v2983 = vadd.f32 %v2718, %v2982
    %v2984 = vpop.f32.mrb[0].mxu0
    %2985 = vmatprep.mubr.f32.mxu0 0.0
    %2986 = vmatmul.mubr.f32.gmra.mrb[0].mxu0 %v1233
    %v2987 = vpop.f32.mrb[0].mxu0
    %v2988 = vadd.f32 %v2723, %v2987
    %v2989 = vpop.f32.mrb[0].mxu0
    %2990 = vmatprep.mubr.f32.mxu0 0.0
    %2991 = vmatmul.mubr.f32.gmra.mrb[0].mxu0 %v1238
    %v2992 = vpop.f32.mrb[0].mxu0
    %v2993 = vadd.f32 %v2728, %v2992
    %v2994 = vpop.f32.mrb[0].mxu0
    %2995 = vmatprep.mubr.f32.mxu0 0.0
    %2996 = vmatmul.mubr.f32.gmra.mrb[0].mxu0 %v1243
    %v2997 = vpop.f32.mrb[0].mxu0
    %v2998 = vadd.f32 %v2733, %v2997
    %v2999 = vpop.f32.mrb[0].mxu0
    %3000 = vmatprep.mubr.f32.mxu0 0.0
    %3001 = vmatmul.mubr.f32.gmra.mrb[0].mxu0 %v1248
    %v3002 = vpop.f32.mrb[0].mxu0
    %v3003 = vadd.f32 %v2738, %v3002
    %v3004 = vpop.f32.mrb[0].mxu0
    %3005 = vmatprep.mubr.f32.mxu0 0.0
    %3006 = vmatmul.mubr.f32.gmra.mrb[0].mxu0 %v1253
    %v3007 = vpop.f32.mrb[0].mxu0
    %v3008 = vadd.f32 %v2743, %v3007
    %v3009 = vpop.f32.mrb[0].mxu0
    %3010 = vmatprep.mubr.f32.mxu0 0.0
    %3011 = vmatmul.mubr.f32.gmra.mrb[0].mxu0 %v1258
    %v3012 = vpop.f32.mrb[0].mxu0
    %v3013 = vadd.f32 %v2748, %v3012
    %v3014 = vpop.f32.mrb[0].mxu0
    %3015 = vmatprep.mubr.f32.mxu0 0.0
    %3016 = vmatmul.mubr.f32.gmra.mrb[0].mxu0 %v1263
    %v3017 = vpop.f32.mrb[0].mxu0
    %v3018 = vadd.f32 %v2753, %v3017
    %v3019 = vpop.f32.mrb[0].mxu0
    %3020 = vmatprep.mubr.f32.mxu0 0.0
    %3021 = vmatmul.mubr.f32.gmra.mrb[0].mxu0 %v1268
    %v3022 = vpop.f32.mrb[0].mxu0
    %v3023 = vadd.f32 %v2758, %v3022
    %v3024 = vpop.f32.mrb[0].mxu0
    %3025 = vmatprep.mubr.f32.mxu0 0.0
    %3026 = vmatmul.mubr.f32.gmra.mrb[0].mxu0 %v1273
    %v3027 = vpop.f32.mrb[0].mxu0
    %v3028 = vadd.f32 %v2763, %v3027
    %v3029 = vpop.f32.mrb[0].mxu0
    %3030 = vmatprep.mubr.f32.mxu0 0.0
    %3031 = vmatmul.mubr.f32.gmra.mrb[0].mxu0 %v1278
    %v3032 = vpop.f32.mrb[0].mxu0
    %v3033 = vadd.f32 %v2768, %v3032
    %v3034 = vpop.f32.mrb[0].mxu0
    %3035 = vmatprep.mubr.f32.mxu0 0.0
    %3036 = vmatmul.mubr.f32.gmra.mrb[0].mxu0 %v1283
    %v3037 = vpop.f32.mrb[0].mxu0
    %v3038 = vadd.f32 %v2773, %v3037
    %v3039 = vpop.f32.mrb[0].mxu0
    %3040 = vmatprep.mubr.f32.mxu0 0.0
    %3041 = vmatmul.mubr.f32.gmra.mrb[0].mxu0 %v1288
    %v3042 = vpop.f32.mrb[0].mxu0
    %v3043 = vadd.f32 %v2778, %v3042
    %v3044 = vpop.f32.mrb[0].mxu0
    %3045 = vmatprep.mubr.f32.mxu0 0.0
    %3046 = vmatmul.mubr.f32.gmra.mrb[0].mxu0 %v1293
    %v3047 = vpop.f32.mrb[0].mxu0
    %v3048 = vadd.f32 %v2783, %v3047
    %v3049 = vpop.f32.mrb[0].mxu0
    %3050 = vmatprep.mubr.f32.mxu0 0.0
    %3051 = vmatmul.mubr.f32.gmra.mrb[0].mxu0 %v1298
    %v3052 = vpop.f32.mrb[0].mxu0
    %v3053 = vadd.f32 %v2788, %v3052
    %v3054 = vpop.f32.mrb[0].mxu0
    %3055 = vmatprep.mubr.f32.mxu0 0.0
    %3056 = vmatmul.mubr.f32.gmra.mrb[0].mxu0 %v1303
    %v3057 = vpop.f32.mrb[0].mxu0
    %v3058 = vadd.f32 %v2793, %v3057
    %v3059 = vpop.f32.mrb[0].mxu0
    %3060 = vmatprep.mubr.f32.mxu0 0.0
    %3061 = vmatmul.mubr.f32.gmra.mrb[0].mxu0 %v1308
    %v3062 = vpop.f32.mrb[0].mxu0
    %v3063 = vadd.f32 %v2798, %v3062
    %v3064 = vpop.f32.mrb[0].mxu0
    %3065 = vmatprep.mubr.f32.mxu0 0.0
    %3066 = vmatmul.mubr.f32.gmra.mrb[0].mxu0 %v1313
    %v3067 = vpop.f32.mrb[0].mxu0
    %v3068 = vadd.f32 %v2803, %v3067
    %v3069 = vpop.f32.mrb[0].mxu0
    %3070 = vmatprep.mubr.f32.mxu0 0.0
    %3071 = vmatmul.mubr.f32.gmra.mrb[0].mxu0 %v1318
    %v3072 = vpop.f32.mrb[0].mxu0
    %v3073 = vadd.f32 %v2808, %v3072
    %v3074 = vpop.f32.mrb[0].mxu0
    %3075 = vmatprep.mubr.f32.mxu0 0.0
    %3076 = vmatmul.mubr.f32.gmra.mrb[0].mxu0 %v1323
    %v3077 = vpop.f32.mrb[0].mxu0
    %v3078 = vadd.f32 %v2813, %v3077
    %v3079 = vpop.f32.mrb[0].mxu0
    %3080 = vmatprep.mubr.f32.mxu0 0.0
    %3081 = vmatmul.mubr.f32.gmra.mrb[0].mxu0 %v1328
    %v3082 = vpop.f32.mrb[0].mxu0
    %v3083 = vadd.f32 %v2818, %v3082
    %v3084 = vpop.f32.mrb[0].mxu0
    %3085 = vmatprep.mubr.f32.mxu0 0.0
    %3086 = vmatmul.mubr.f32.gmra.mrb[0].mxu0 %v1333
    %v3087 = vpop.f32.mrb[0].mxu0
    %v3088 = vadd.f32 %v2823, %v3087
    %v3089 = vpop.f32.mrb[0].mxu0
    %3090 = vmatprep.mubr.f32.mxu0 0.0
    %3091 = vmatmul.mubr.f32.gmra.mrb[0].mxu0 %v1338
    %v3092 = vpop.f32.mrb[0].mxu0
    %v3093 = vadd.f32 %v2828, %v3092
    %v3094 = vpop.f32.mrb[0].mxu0
    %3095 = vmatprep.mubr.f32.mxu0 0.0
    %3096 = vmatmul.mubr.f32.gmra.mrb[0].mxu0 %v1343
    %v3097 = vpop.f32.mrb[0].mxu0
    %v3098 = vadd.f32 %v2833, %v3097
    %v3099 = vpop.f32.mrb[0].mxu0
    %3100 = vmatprep.mubr.f32.mxu0 0.0
    %3101 = vmatmul.mubr.f32.gmra.mrb[0].mxu0 %v1348
    %v3102 = vpop.f32.mrb[0].mxu0
    %v3103 = vadd.f32 %v2838, %v3102
    %v3104 = vpop.f32.mrb[0].mxu0
    %3105 = vmatprep.mubr.f32.mxu0 0.0
    %3106 = vmatmul.mubr.f32.gmra.mrb[0].mxu0 %v1353
    %v3107 = vpop.f32.mrb[0].mxu0
    %v3108 = vadd.f32 %v2843, %v3107
    %v3109 = vpop.f32.mrb[0].mxu0
    %3110 = vmatprep.mubr.f32.mxu0 0.0
    %3111 = vmatmul.mubr.f32.gmra.mrb[0].mxu0 %v1358
    %v3112 = vpop.f32.mrb[0].mxu0
    %v3113 = vadd.f32 %v2848, %v3112
    %v3114 = vpop.f32.mrb[0].mxu0
    %3115 = vmatprep.mubr.f32.mxu0 0.0
    %3116 = vmatmul.mubr.f32.gmra.mrb[0].mxu0 %v1363
    %v3117 = vpop.f32.mrb[0].mxu0
    %v3118 = vadd.f32 %v2853, %v3117
    %v3119 = vpop.f32.mrb[0].mxu0
    %3120 = vmatprep.mubr.f32.mxu0 0.0
    %3121 = vmatmul.mubr.f32.gmra.mrb[0].mxu0 %v1368
    %v3122 = vpop.f32.mrb[0].mxu0
    %v3123 = vadd.f32 %v2858, %v3122
    %v3124 = vpop.f32.mrb[0].mxu0
    %3125 = vmatprep.mubr.f32.mxu0 0.0
    %3126 = vmatmul.mubr.f32.gmra.mrb[0].mxu0 %v1373
    %v3127 = vpop.f32.mrb[0].mxu0
    %v3128 = vadd.f32 %v2863, %v3127
    %v3129 = vpop.f32.mrb[0].mxu0
    %3130 = vmatprep.mubr.f32.mxu0 0.0
    %3131 = vmatmul.mubr.f32.gmra.mrb[0].mxu0 %v1378
    %v3132 = vpop.f32.mrb[0].mxu0
    %v3133 = vadd.f32 %v2868, %v3132
    %v3134 = vpop.f32.mrb[0].mxu0
    %3135 = vdwg.mxu0
    %v3136 = vld [vmem:[%s8] sm:$0xff]
    %v3137 = vld [vmem:[%s8 + $0x8] sm:$0xff]
    %v3138 = vld [vmem:[%s8 + $0x10] sm:$0xff]
    %v3139 = vld [vmem:[%s8 + $0x18] sm:$0xff]
    %v3140 = vld [vmem:[%s8 + $0x20] sm:$0xff]
    %v3141 = vld [vmem:[%s8 + $0x28] sm:$0xff]
    %v3142 = vld [vmem:[%s8 + $0x30] sm:$0xff]
    %v3143 = vld [vmem:[%s8 + $0x38] sm:$0xff]
    %v3144 = vld [vmem:[%s8 + $0x40] sm:$0xff]
    %v3145 = vld [vmem:[%s8 + $0x48] sm:$0xff]
    %v3146 = vld [vmem:[%s8 + $0x50] sm:$0xff]
    %v3147 = vld [vmem:[%s8 + $0x58] sm:$0xff]
    %v3148 = vld [vmem:[%s8 + $0x60] sm:$0xff]
    %v3149 = vld [vmem:[%s8 + $0x68] sm:$0xff]
    %v3150 = vld [vmem:[%s8 + $0x70] sm:$0xff]
    %v3151 = vld [vmem:[%s8 + $0x78] sm:$0xff]
    %v3152 = vld [vmem:[%s8 + $0x80] sm:$0xff]
    %v3153 = vld [vmem:[%s8 + $0x88] sm:$0xff]
    %v3154 = vld [vmem:[%s8 + $0x90] sm:$0xff]
    %v3155 = vld [vmem:[%s8 + $0x98] sm:$0xff]
    %v3156 = vld [vmem:[%s8 + $0xa0] sm:$0xff]
    %v3157 = vld [vmem:[%s8 + $0xa8] sm:$0xff]
    %v3158 = vld [vmem:[%s8 + $0xb0] sm:$0xff]
    %v3159 = vld [vmem:[%s8 + $0xb8] sm:$0xff]
    %v3160 = vld [vmem:[%s8 + $0xc0] sm:$0xff]
    %v3161 = vld [vmem:[%s8 + $0xc8] sm:$0xff]
    %v3162 = vld [vmem:[%s8 + $0xd0] sm:$0xff]
    %v3163 = vld [vmem:[%s8 + $0xd8] sm:$0xff]
    %v3164 = vld [vmem:[%s8 + $0xe0] sm:$0xff]
    %v3165 = vld [vmem:[%s8 + $0xe8] sm:$0xff]
    %v3166 = vld [vmem:[%s8 + $0xf0] sm:$0xff]
    %v3167 = vld [vmem:[%s8 + $0xf8] sm:$0xff]
    %v3168 = vld [vmem:[%s8 + $0x100] sm:$0xff]
    %v3169 = vld [vmem:[%s8 + $0x108] sm:$0xff]
    %v3170 = vld [vmem:[%s8 + $0x110] sm:$0xff]
    %v3171 = vld [vmem:[%s8 + $0x118] sm:$0xff]
    %v3172 = vld [vmem:[%s8 + $0x120] sm:$0xff]
    %v3173 = vld [vmem:[%s8 + $0x128] sm:$0xff]
    %v3174 = vld [vmem:[%s8 + $0x130] sm:$0xff]
    %v3175 = vld [vmem:[%s8 + $0x138] sm:$0xff]
    %v3176 = vmul.f32 %v2063, %v3136
    %v3177 = vmul.f32 %v2068, %v3137
    %v3178 = vmul.f32 %v2073, %v3138
    %v3179 = vmul.f32 %v2078, %v3139
    %v3180 = vmul.f32 %v2083, %v3140
    %v3181 = vmul.f32 %v2088, %v3141
    %v3182 = vmul.f32 %v2093, %v3142
    %v3183 = vmul.f32 %v2098, %v3143
    %v3184 = vmul.f32 %v2103, %v3144
    %v3185 = vmul.f32 %v2108, %v3145
    %v3186 = vmul.f32 %v2113, %v3146
    %v3187 = vmul.f32 %v2118, %v3147
    %v3188 = vmul.f32 %v2123, %v3148
    %v3189 = vmul.f32 %v2128, %v3149
    %v3190 = vmul.f32 %v2133, %v3150
    %v3191 = vmul.f32 %v2138, %v3151
    %v3192 = vmul.f32 %v2143, %v3152
    %v3193 = vmul.f32 %v2148, %v3153
    %v3194 = vmul.f32 %v2153, %v3154
    %v3195 = vmul.f32 %v2158, %v3155
    %v3196 = vmul.f32 %v2163, %v3156
    %v3197 = vmul.f32 %v2168, %v3157
    %v3198 = vmul.f32 %v2173, %v3158
    %v3199 = vmul.f32 %v2178, %v3159
    %v3200 = vmul.f32 %v2183, %v3160
    %v3201 = vmul.f32 %v2188, %v3161
    %v3202 = vmul.f32 %v2193, %v3162
    %v3203 = vmul.f32 %v2198, %v3163
    %v3204 = vmul.f32 %v2203, %v3164
    %v3205 = vmul.f32 %v2208, %v3165
    %v3206 = vmul.f32 %v2213, %v3166
    %v3207 = vmul.f32 %v2218, %v3167
    %v3208 = vmul.f32 %v2223, %v3168
    %v3209 = vmul.f32 %v2228, %v3169
    %v3210 = vmul.f32 %v2233, %v3170
    %v3211 = vmul.f32 %v2238, %v3171
    %v3212 = vmul.f32 %v2243, %v3172
    %v3213 = vmul.f32 %v2248, %v3173
    %v3214 = vmul.f32 %v2253, %v3174
    %v3215 = vmul.f32 %v2258, %v3175
    %v3216 = vld [vmem:[%s9] sm:$0xff]
    %v3217 = vld [vmem:[%s9 + $0x8] sm:$0xff]
    %v3218 = vld [vmem:[%s9 + $0x10] sm:$0xff]
    %v3219 = vld [vmem:[%s9 + $0x18] sm:$0xff]
    %v3220 = vld [vmem:[%s9 + $0x20] sm:$0xff]
    %v3221 = vld [vmem:[%s9 + $0x28] sm:$0xff]
    %v3222 = vld [vmem:[%s9 + $0x30] sm:$0xff]
    %v3223 = vld [vmem:[%s9 + $0x38] sm:$0xff]
    %v3224 = vld [vmem:[%s9 + $0x40] sm:$0xff]
    %v3225 = vld [vmem:[%s9 + $0x48] sm:$0xff]
    %v3226 = vld [vmem:[%s9 + $0x50] sm:$0xff]
    %v3227 = vld [vmem:[%s9 + $0x58] sm:$0xff]
    %v3228 = vld [vmem:[%s9 + $0x60] sm:$0xff]
    %v3229 = vld [vmem:[%s9 + $0x68] sm:$0xff]
    %v3230 = vld [vmem:[%s9 + $0x70] sm:$0xff]
    %v3231 = vld [vmem:[%s9 + $0x78] sm:$0xff]
    %v3232 = vld [vmem:[%s9 + $0x80] sm:$0xff]
    %v3233 = vld [vmem:[%s9 + $0x88] sm:$0xff]
    %v3234 = vld [vmem:[%s9 + $0x90] sm:$0xff]
    %v3235 = vld [vmem:[%s9 + $0x98] sm:$0xff]
    %v3236 = vld [vmem:[%s9 + $0xa0] sm:$0xff]
    %v3237 = vld [vmem:[%s9 + $0xa8] sm:$0xff]
    %v3238 = vld [vmem:[%s9 + $0xb0] sm:$0xff]
    %v3239 = vld [vmem:[%s9 + $0xb8] sm:$0xff]
    %v3240 = vld [vmem:[%s9 + $0xc0] sm:$0xff]
    %v3241 = vld [vmem:[%s9 + $0xc8] sm:$0xff]
    %v3242 = vld [vmem:[%s9 + $0xd0] sm:$0xff]
    %v3243 = vld [vmem:[%s9 + $0xd8] sm:$0xff]
    %v3244 = vld [vmem:[%s9 + $0xe0] sm:$0xff]
    %v3245 = vld [vmem:[%s9 + $0xe8] sm:$0xff]
    %v3246 = vld [vmem:[%s9 + $0xf0] sm:$0xff]
    %v3247 = vld [vmem:[%s9 + $0xf8] sm:$0xff]
    %v3248 = vld [vmem:[%s9 + $0x100] sm:$0xff]
    %v3249 = vld [vmem:[%s9 + $0x108] sm:$0xff]
    %v3250 = vld [vmem:[%s9 + $0x110] sm:$0xff]
    %v3251 = vld [vmem:[%s9 + $0x118] sm:$0xff]
    %v3252 = vld [vmem:[%s9 + $0x120] sm:$0xff]
    %v3253 = vld [vmem:[%s9 + $0x128] sm:$0xff]
    %v3254 = vld [vmem:[%s9 + $0x130] sm:$0xff]
    %v3255 = vld [vmem:[%s9 + $0x138] sm:$0xff]
    %v3256 = vmul.f32 %v2938, %v3216
    %v3257 = vmul.f32 %v2943, %v3217
    %v3258 = vmul.f32 %v2948, %v3218
    %v3259 = vmul.f32 %v2953, %v3219
    %v3260 = vmul.f32 %v2958, %v3220
    %v3261 = vmul.f32 %v2963, %v3221
    %v3262 = vmul.f32 %v2968, %v3222
    %v3263 = vmul.f32 %v2973, %v3223
    %v3264 = vmul.f32 %v2978, %v3224
    %v3265 = vmul.f32 %v2983, %v3225
    %v3266 = vmul.f32 %v2988, %v3226
    %v3267 = vmul.f32 %v2993, %v3227
    %v3268 = vmul.f32 %v2998, %v3228
    %v3269 = vmul.f32 %v3003, %v3229
    %v3270 = vmul.f32 %v3008, %v3230
    %v3271 = vmul.f32 %v3013, %v3231
    %v3272 = vmul.f32 %v3018, %v3232
    %v3273 = vmul.f32 %v3023, %v3233
    %v3274 = vmul.f32 %v3028, %v3234
    %v3275 = vmul.f32 %v3033, %v3235
    %v3276 = vmul.f32 %v3038, %v3236
    %v3277 = vmul.f32 %v3043, %v3237
    %v3278 = vmul.f32 %v3048, %v3238
    %v3279 = vmul.f32 %v3053, %v3239
    %v3280 = vmul.f32 %v3058, %v3240
    %v3281 = vmul.f32 %v3063, %v3241
    %v3282 = vmul.f32 %v3068, %v3242
    %v3283 = vmul.f32 %v3073, %v3243
    %v3284 = vmul.f32 %v3078, %v3244
    %v3285 = vmul.f32 %v3083, %v3245
    %v3286 = vmul.f32 %v3088, %v3246
    %v3287 = vmul.f32 %v3093, %v3247
    %v3288 = vmul.f32 %v3098, %v3248
    %v3289 = vmul.f32 %v3103, %v3249
    %v3290 = vmul.f32 %v3108, %v3250
    %v3291 = vmul.f32 %v3113, %v3251
    %v3292 = vmul.f32 %v3118, %v3252
    %v3293 = vmul.f32 %v3123, %v3253
    %v3294 = vmul.f32 %v3128, %v3254
    %v3295 = vmul.f32 %v3133, %v3255
    %v3296 = vmax.f32 %v3176, %v3256
    %v3297 = vmax.f32 %v3177, %v3257
    %v3298 = vmax.f32 %v3178, %v3258
    %v3299 = vmax.f32 %v3179, %v3259
    %v3300 = vmax.f32 %v3180, %v3260
    %v3301 = vmax.f32 %v3181, %v3261
    %v3302 = vmax.f32 %v3182, %v3262
    %v3303 = vmax.f32 %v3183, %v3263
    %v3304 = vmax.f32 %v3184, %v3264
    %v3305 = vmax.f32 %v3185, %v3265
    %v3306 = vmax.f32 %v3186, %v3266
    %v3307 = vmax.f32 %v3187, %v3267
    %v3308 = vmax.f32 %v3188, %v3268
    %v3309 = vmax.f32 %v3189, %v3269
    %v3310 = vmax.f32 %v3190, %v3270
    %v3311 = vmax.f32 %v3191, %v3271
    %v3312 = vmax.f32 %v3192, %v3272
    %v3313 = vmax.f32 %v3193, %v3273
    %v3314 = vmax.f32 %v3194, %v3274
    %v3315 = vmax.f32 %v3195, %v3275
    %v3316 = vmax.f32 %v3196, %v3276
    %v3317 = vmax.f32 %v3197, %v3277
    %v3318 = vmax.f32 %v3198, %v3278
    %v3319 = vmax.f32 %v3199, %v3279
    %v3320 = vmax.f32 %v3200, %v3280
    %v3321 = vmax.f32 %v3201, %v3281
    %v3322 = vmax.f32 %v3202, %v3282
    %v3323 = vmax.f32 %v3203, %v3283
    %v3324 = vmax.f32 %v3204, %v3284
    %v3325 = vmax.f32 %v3205, %v3285
    %v3326 = vmax.f32 %v3206, %v3286
    %v3327 = vmax.f32 %v3207, %v3287
    %v3328 = vmax.f32 %v3208, %v3288
    %v3329 = vmax.f32 %v3209, %v3289
    %v3330 = vmax.f32 %v3210, %v3290
    %v3331 = vmax.f32 %v3211, %v3291
    %v3332 = vmax.f32 %v3212, %v3292
    %v3333 = vmax.f32 %v3213, %v3293
    %v3334 = vmax.f32 %v3214, %v3294
    %v3335 = vmax.f32 %v3215, %v3295
    %vm3336 = vcmask 654336
    %3337 = vst.msk [vmem:[#allocation5] sm:$0xff] %vm3336, %v3296
    %3338 = vst.msk [vmem:[#allocation5 + $0x8] sm:$0xff] %vm3336, %v3297
    %3339 = vst.msk [vmem:[#allocation5 + $0x10] sm:$0xff] %vm3336, %v3298
    %3340 = vst.msk [vmem:[#allocation5 + $0x18] sm:$0xff] %vm3336, %v3299
    %3341 = vst.msk [vmem:[#allocation5 + $0x20] sm:$0xff] %vm3336, %v3300
    %3342 = vst.msk [vmem:[#allocation5 + $0x28] sm:$0xff] %vm3336, %v3301
    %3343 = vst.msk [vmem:[#allocation5 + $0x30] sm:$0xff] %vm3336, %v3302
    %3344 = vst.msk [vmem:[#allocation5 + $0x38] sm:$0xff] %vm3336, %v3303
    %3345 = vst.msk [vmem:[#allocation5 + $0x40] sm:$0xff] %vm3336, %v3304
    %3346 = vst.msk [vmem:[#allocation5 + $0x48] sm:$0xff] %vm3336, %v3305
    %3347 = vst.msk [vmem:[#allocation5 + $0x50] sm:$0xff] %vm3336, %v3306
    %3348 = vst.msk [vmem:[#allocation5 + $0x58] sm:$0xff] %vm3336, %v3307
    %3349 = vst.msk [vmem:[#allocation5 + $0x60] sm:$0xff] %vm3336, %v3308
    %3350 = vst.msk [vmem:[#allocation5 + $0x68] sm:$0xff] %vm3336, %v3309
    %3351 = vst.msk [vmem:[#allocation5 + $0x70] sm:$0xff] %vm3336, %v3310
    %3352 = vst.msk [vmem:[#allocation5 + $0x78] sm:$0xff] %vm3336, %v3311
    %3353 = vst.msk [vmem:[#allocation5 + $0x80] sm:$0xff] %vm3336, %v3312
    %3354 = vst.msk [vmem:[#allocation5 + $0x88] sm:$0xff] %vm3336, %v3313
    %3355 = vst.msk [vmem:[#allocation5 + $0x90] sm:$0xff] %vm3336, %v3314
    %3356 = vst.msk [vmem:[#allocation5 + $0x98] sm:$0xff] %vm3336, %v3315
    %3357 = vst.msk [vmem:[#allocation5 + $0xa0] sm:$0xff] %vm3336, %v3316
    %3358 = vst.msk [vmem:[#allocation5 + $0xa8] sm:$0xff] %vm3336, %v3317
    %3359 = vst.msk [vmem:[#allocation5 + $0xb0] sm:$0xff] %vm3336, %v3318
    %3360 = vst.msk [vmem:[#allocation5 + $0xb8] sm:$0xff] %vm3336, %v3319
    %3361 = vst.msk [vmem:[#allocation5 + $0xc0] sm:$0xff] %vm3336, %v3320
    %3362 = vst.msk [vmem:[#allocation5 + $0xc8] sm:$0xff] %vm3336, %v3321
    %3363 = vst.msk [vmem:[#allocation5 + $0xd0] sm:$0xff] %vm3336, %v3322
    %3364 = vst.msk [vmem:[#allocation5 + $0xd8] sm:$0xff] %vm3336, %v3323
    %3365 = vst.msk [vmem:[#allocation5 + $0xe0] sm:$0xff] %vm3336, %v3324
    %3366 = vst.msk [vmem:[#allocation5 + $0xe8] sm:$0xff] %vm3336, %v3325
    %3367 = vst.msk [vmem:[#allocation5 + $0xf0] sm:$0xff] %vm3336, %v3326
    %3368 = vst.msk [vmem:[#allocation5 + $0xf8] sm:$0xff] %vm3336, %v3327
    %3369 = vst.msk [vmem:[#allocation5 + $0x100] sm:$0xff] %vm3336, %v3328
    %3370 = vst.msk [vmem:[#allocation5 + $0x108] sm:$0xff] %vm3336, %v3329
    %3371 = vst.msk [vmem:[#allocation5 + $0x110] sm:$0xff] %vm3336, %v3330
    %3372 = vst.msk [vmem:[#allocation5 + $0x118] sm:$0xff] %vm3336, %v3331
    %3373 = vst.msk [vmem:[#allocation5 + $0x120] sm:$0xff] %vm3336, %v3332
    %3374 = vst.msk [vmem:[#allocation5 + $0x128] sm:$0xff] %vm3336, %v3333
    %3375 = vst.msk [vmem:[#allocation5 + $0x130] sm:$0xff] %vm3336, %v3334
    %3376 = vst.msk [vmem:[#allocation5 + $0x138] sm:$0xff] %vm3336, %v3335
    %v3377 = vld [vmem:[%s12] sm:$0x1]
    %v3378 = vld [vmem:[#allocation5] sm:$0x1]
    %v3379 = vld [vmem:[#allocation5 + $0x8] sm:$0x1]
    %v3380 = vld [vmem:[#allocation5 + $0x10] sm:$0x1]
    %v3381 = vld [vmem:[#allocation5 + $0x18] sm:$0x1]
    %v3382 = vld [vmem:[#allocation5 + $0x20] sm:$0x1]
    %v3383 = vld [vmem:[#allocation5 + $0x28] sm:$0x1]
    %v3384 = vld [vmem:[#allocation5 + $0x30] sm:$0x1]
    %v3385 = vld [vmem:[#allocation5 + $0x38] sm:$0x1]
    %v3386 = vld [vmem:[#allocation5 + $0x40] sm:$0x1]
    %v3387 = vld [vmem:[#allocation5 + $0x48] sm:$0x1]
    %v3388 = vld [vmem:[#allocation5 + $0x50] sm:$0x1]
    %v3389 = vld [vmem:[#allocation5 + $0x58] sm:$0x1]
    %v3390 = vld [vmem:[#allocation5 + $0x60] sm:$0x1]
    %v3391 = vld [vmem:[#allocation5 + $0x68] sm:$0x1]
    %v3392 = vld [vmem:[#allocation5 + $0x70] sm:$0x1]
    %v3393 = vld [vmem:[#allocation5 + $0x78] sm:$0x1]
    %v3394 = vld [vmem:[#allocation5 + $0x80] sm:$0x1]
    %v3395 = vld [vmem:[#allocation5 + $0x88] sm:$0x1]
    %v3396 = vld [vmem:[#allocation5 + $0x90] sm:$0x1]
    %v3397 = vld [vmem:[#allocation5 + $0x98] sm:$0x1]
    %v3398 = vld [vmem:[#allocation5 + $0xa0] sm:$0x1]
    %v3399 = vld [vmem:[#allocation5 + $0xa8] sm:$0x1]
    %v3400 = vld [vmem:[#allocation5 + $0xb0] sm:$0x1]
    %v3401 = vld [vmem:[#allocation5 + $0xb8] sm:$0x1]
    %v3402 = vld [vmem:[#allocation5 + $0xc0] sm:$0x1]
    %v3403 = vld [vmem:[#allocation5 + $0xc8] sm:$0x1]
    %v3404 = vld [vmem:[#allocation5 + $0xd0] sm:$0x1]
    %v3405 = vld [vmem:[#allocation5 + $0xd8] sm:$0x1]
    %v3406 = vld [vmem:[#allocation5 + $0xe0] sm:$0x1]
    %v3407 = vld [vmem:[#allocation5 + $0xe8] sm:$0x1]
    %v3408 = vld [vmem:[#allocation5 + $0xf0] sm:$0x1]
    %v3409 = vld [vmem:[#allocation5 + $0xf8] sm:$0x1]
    %v3410 = vld [vmem:[#allocation5 + $0x100] sm:$0x1]
    %v3411 = vld [vmem:[#allocation5 + $0x108] sm:$0x1]
    %v3412 = vld [vmem:[#allocation5 + $0x110] sm:$0x1]
    %v3413 = vld [vmem:[#allocation5 + $0x118] sm:$0x1]
    %v3414 = vld [vmem:[#allocation5 + $0x120] sm:$0x1]
    %v3415 = vld [vmem:[#allocation5 + $0x128] sm:$0x1]
    %v3416 = vld [vmem:[#allocation5 + $0x130] sm:$0x1]
    %v3417 = vld [vmem:[#allocation5 + $0x138] sm:$0x1]
    %v3418 = vld [vmem:[#allocation5 + $0x1] sm:$0x1]
    %v3419 = vld [vmem:[#allocation5 + $0x9] sm:$0x1]
    %v3420 = vld [vmem:[#allocation5 + $0x11] sm:$0x1]
    %v3421 = vld [vmem:[#allocation5 + $0x19] sm:$0x1]
    %v3422 = vld [vmem:[#allocation5 + $0x21] sm:$0x1]
    %v3423 = vld [vmem:[#allocation5 + $0x29] sm:$0x1]
    %v3424 = vld [vmem:[#allocation5 + $0x31] sm:$0x1]
    %v3425 = vld [vmem:[#allocation5 + $0x39] sm:$0x1]
    %v3426 = vld [vmem:[#allocation5 + $0x41] sm:$0x1]
    %v3427 = vld [vmem:[#allocation5 + $0x49] sm:$0x1]
    %v3428 = vld [vmem:[#allocation5 + $0x51] sm:$0x1]
    %v3429 = vld [vmem:[#allocation5 + $0x59] sm:$0x1]
    %v3430 = vld [vmem:[#allocation5 + $0x61] sm:$0x1]
    %v3431 = vld [vmem:[#allocation5 + $0x69] sm:$0x1]
    %v3432 = vld [vmem:[#allocation5 + $0x71] sm:$0x1]
    %v3433 = vld [vmem:[#allocation5 + $0x79] sm:$0x1]
    %v3434 = vld [vmem:[#allocation5 + $0x81] sm:$0x1]
    %v3435 = vld [vmem:[#allocation5 + $0x89] sm:$0x1]
    %v3436 = vld [vmem:[#allocation5 + $0x91] sm:$0x1]
    %v3437 = vld [vmem:[#allocation5 + $0x99] sm:$0x1]
    %v3438 = vld [vmem:[#allocation5 + $0xa1] sm:$0x1]
    %v3439 = vld [vmem:[#allocation5 + $0xa9] sm:$0x1]
    %v3440 = vld [vmem:[#allocation5 + $0xb1] sm:$0x1]
    %v3441 = vld [vmem:[#allocation5 + $0xb9] sm:$0x1]
    %v3442 = vld [vmem:[#allocation5 + $0xc1] sm:$0x1]
    %v3443 = vld [vmem:[#allocation5 + $0xc9] sm:$0x1]
    %v3444 = vld [vmem:[#allocation5 + $0xd1] sm:$0x1]
    %v3445 = vld [vmem:[#allocation5 + $0xd9] sm:$0x1]
    %v3446 = vld [vmem:[#allocation5 + $0xe1] sm:$0x1]
    %v3447 = vld [vmem:[#allocation5 + $0xe9] sm:$0x1]
    %v3448 = vld [vmem:[#allocation5 + $0xf1] sm:$0x1]
    %v3449 = vld [vmem:[#allocation5 + $0xf9] sm:$0x1]
    %v3450 = vld [vmem:[#allocation5 + $0x101] sm:$0x1]
    %v3451 = vld [vmem:[#allocation5 + $0x109] sm:$0x1]
    %v3452 = vld [vmem:[#allocation5 + $0x111] sm:$0x1]
    %v3453 = vld [vmem:[#allocation5 + $0x119] sm:$0x1]
    %v3454 = vld [vmem:[#allocation5 + $0x121] sm:$0x1]
    %v3455 = vld [vmem:[#allocation5 + $0x129] sm:$0x1]
    %v3456 = vld [vmem:[#allocation5 + $0x131] sm:$0x1]
    %v3457 = vld [vmem:[#allocation5 + $0x139] sm:$0x1]
    %v3458 = vmax.f32 %v3378, %v3418
    %v3459 = vmax.f32 %v3379, %v3419
    %v3460 = vmax.f32 %v3380, %v3420
    %v3461 = vmax.f32 %v3381, %v3421
    %v3462 = vmax.f32 %v3382, %v3422
    %v3463 = vmax.f32 %v3383, %v3423
    %v3464 = vmax.f32 %v3384, %v3424
    %v3465 = vmax.f32 %v3385, %v3425
    %v3466 = vmax.f32 %v3386, %v3426
    %v3467 = vmax.f32 %v3387, %v3427
    %v3468 = vmax.f32 %v3388, %v3428
    %v3469 = vmax.f32 %v3389, %v3429
    %v3470 = vmax.f32 %v3390, %v3430
    %v3471 = vmax.f32 %v3391, %v3431
    %v3472 = vmax.f32 %v3392, %v3432
    %v3473 = vmax.f32 %v3393, %v3433
    %v3474 = vmax.f32 %v3394, %v3434
    %v3475 = vmax.f32 %v3395, %v3435
    %v3476 = vmax.f32 %v3396, %v3436
    %v3477 = vmax.f32 %v3397, %v3437
    %v3478 = vmax.f32 %v3398, %v3438
    %v3479 = vmax.f32 %v3399, %v3439
    %v3480 = vmax.f32 %v3400, %v3440
    %v3481 = vmax.f32 %v3401, %v3441
    %v3482 = vmax.f32 %v3402, %v3442
    %v3483 = vmax.f32 %v3403, %v3443
    %v3484 = vmax.f32 %v3404, %v3444
    %v3485 = vmax.f32 %v3405, %v3445
    %v3486 = vmax.f32 %v3406, %v3446
    %v3487 = vmax.f32 %v3407, %v3447
    %v3488 = vmax.f32 %v3408, %v3448
    %v3489 = vmax.f32 %v3409, %v3449
    %v3490 = vmax.f32 %v3410, %v3450
    %v3491 = vmax.f32 %v3411, %v3451
    %v3492 = vmax.f32 %v3412, %v3452
    %v3493 = vmax.f32 %v3413, %v3453
    %v3494 = vmax.f32 %v3414, %v3454
    %v3495 = vmax.f32 %v3415, %v3455
    %v3496 = vmax.f32 %v3416, %v3456
    %v3497 = vmax.f32 %v3417, %v3457
    %v3498 = vmax.f32 %v3458, 0.0
    %v3499 = vmax.f32 %v3459, 0.0
    %v3500 = vmax.f32 %v3460, 0.0
    %v3501 = vmax.f32 %v3461, 0.0
    %v3502 = vmax.f32 %v3462, 0.0
    %v3503 = vmax.f32 %v3463, 0.0
    %v3504 = vmax.f32 %v3464, 0.0
    %v3505 = vmax.f32 %v3465, 0.0
    %v3506 = vmax.f32 %v3466, 0.0
    %v3507 = vmax.f32 %v3467, 0.0
    %v3508 = vmax.f32 %v3468, 0.0
    %v3509 = vmax.f32 %v3469, 0.0
    %v3510 = vmax.f32 %v3470, 0.0
    %v3511 = vmax.f32 %v3471, 0.0
    %v3512 = vmax.f32 %v3472, 0.0
    %v3513 = vmax.f32 %v3473, 0.0
    %v3514 = vmax.f32 %v3474, 0.0
    %v3515 = vmax.f32 %v3475, 0.0
    %v3516 = vmax.f32 %v3476, 0.0
    %v3517 = vmax.f32 %v3477, 0.0
    %v3518 = vmax.f32 %v3478, 0.0
    %v3519 = vmax.f32 %v3479, 0.0
    %v3520 = vmax.f32 %v3480, 0.0
    %v3521 = vmax.f32 %v3481, 0.0
    %v3522 = vmax.f32 %v3482, 0.0
    %v3523 = vmax.f32 %v3483, 0.0
    %v3524 = vmax.f32 %v3484, 0.0
    %v3525 = vmax.f32 %v3485, 0.0
    %v3526 = vmax.f32 %v3486, 0.0
    %v3527 = vmax.f32 %v3487, 0.0
    %v3528 = vmax.f32 %v3488, 0.0
    %v3529 = vmax.f32 %v3489, 0.0
    %v3530 = vmax.f32 %v3490, 0.0
    %v3531 = vmax.f32 %v3491, 0.0
    %v3532 = vmax.f32 %v3492, 0.0
    %v3533 = vmax.f32 %v3493, 0.0
    %v3534 = vmax.f32 %v3494, 0.0
    %v3535 = vmax.f32 %v3495, 0.0
    %v3536 = vmax.f32 %v3496, 0.0
    %v3537 = vmax.f32 %v3497, 0.0
    %v3538 = vld [vmem:[%s10] sm:$0xff]
    %v3539 = vld [vmem:[%s10 + $0x8] sm:$0xff]
    %v3540 = vld [vmem:[%s10 + $0x10] sm:$0xff]
    %v3541 = vld [vmem:[%s10 + $0x18] sm:$0xff]
    %v3542 = vld [vmem:[%s10 + $0x20] sm:$0xff]
    %v3548 = vrot.slane %v3538, 1
    %v3549 = vrot.slane %v3538, 2
    %v3550 = vrot.slane %v3538, 3
    %v3551 = vrot.slane %v3538, 4
    %v3552 = vrot.slane %v3538, 5
    %v3553 = vrot.slane %v3538, 6
    %v3554 = vrot.slane %v3538, 7
    %v3555 = vrot.slane %v3539, 1
    %v3556 = vrot.slane %v3539, 2
    %v3557 = vrot.slane %v3539, 3
    %v3558 = vrot.slane %v3539, 4
    %v3559 = vrot.slane %v3539, 5
    %v3560 = vrot.slane %v3539, 6
    %v3561 = vrot.slane %v3539, 7
    %v3562 = vrot.slane %v3540, 1
    %v3563 = vrot.slane %v3540, 2
    %v3564 = vrot.slane %v3540, 3
    %v3565 = vrot.slane %v3540, 4
    %v3566 = vrot.slane %v3540, 5
    %v3567 = vrot.slane %v3540, 6
    %v3568 = vrot.slane %v3540, 7
    %v3569 = vrot.slane %v3541, 1
    %v3570 = vrot.slane %v3541, 2
    %v3571 = vrot.slane %v3541, 3
    %v3572 = vrot.slane %v3541, 4
    %v3573 = vrot.slane %v3541, 5
    %v3574 = vrot.slane %v3541, 6
    %v3575 = vrot.slane %v3541, 7
    %v3576 = vrot.slane %v3542, 1
    %v3577 = vrot.slane %v3542, 2
    %v3578 = vrot.slane %v3542, 3
    %v3579 = vrot.slane %v3542, 4
    %v3580 = vrot.slane %v3542, 5
    %v3581 = vrot.slane %v3542, 6
    %v3582 = vrot.slane %v3542, 7
    %v3623 = vmul.f32 %v3498, %v3538
    %v3624 = vmul.f32 %v3499, %v3548
    %v3625 = vmul.f32 %v3500, %v3549
    %v3626 = vmul.f32 %v3501, %v3550
    %v3627 = vmul.f32 %v3502, %v3551
    %v3628 = vmul.f32 %v3503, %v3552
    %v3629 = vmul.f32 %v3504, %v3553
    %v3630 = vmul.f32 %v3505, %v3554
    %v3631 = vmul.f32 %v3506, %v3539
    %v3632 = vmul.f32 %v3507, %v3555
    %v3633 = vmul.f32 %v3508, %v3556
    %v3634 = vmul.f32 %v3509, %v3557
    %v3635 = vmul.f32 %v3510, %v3558
    %v3636 = vmul.f32 %v3511, %v3559
    %v3637 = vmul.f32 %v3512, %v3560
    %v3638 = vmul.f32 %v3513, %v3561
    %v3639 = vmul.f32 %v3514, %v3540
    %v3640 = vmul.f32 %v3515, %v3562
    %v3641 = vmul.f32 %v3516, %v3563
    %v3642 = vmul.f32 %v3517, %v3564
    %v3643 = vmul.f32 %v3518, %v3565
    %v3644 = vmul.f32 %v3519, %v3566
    %v3645 = vmul.f32 %v3520, %v3567
    %v3646 = vmul.f32 %v3521, %v3568
    %v3647 = vmul.f32 %v3522, %v3541
    %v3648 = vmul.f32 %v3523, %v3569
    %v3649 = vmul.f32 %v3524, %v3570
    %v3650 = vmul.f32 %v3525, %v3571
    %v3651 = vmul.f32 %v3526, %v3572
    %v3652 = vmul.f32 %v3527, %v3573
    %v3653 = vmul.f32 %v3528, %v3574
    %v3654 = vmul.f32 %v3529, %v3575
    %v3655 = vmul.f32 %v3530, %v3542
    %v3656 = vmul.f32 %v3531, %v3576
    %v3657 = vmul.f32 %v3532, %v3577
    %v3658 = vmul.f32 %v3533, %v3578
    %v3659 = vmul.f32 %v3534, %v3579
    %v3660 = vmul.f32 %v3535, %v3580
    %v3661 = vmul.f32 %v3536, %v3581
    %v3662 = vmul.f32 %v3537, %v3582
    %v3663 = vld [vmem:[%s11] sm:$0xff]
    %v3664 = vld [vmem:[%s11 + $0x8] sm:$0xff]
    %v3665 = vld [vmem:[%s11 + $0x10] sm:$0xff]
    %v3666 = vld [vmem:[%s11 + $0x18] sm:$0xff]
    %v3667 = vld [vmem:[%s11 + $0x20] sm:$0xff]
    %v3668 = vld [vmem:[%s11 + $0x28] sm:$0xff]
    %v3669 = vld [vmem:[%s11 + $0x30] sm:$0xff]
    %v3670 = vld [vmem:[%s11 + $0x38] sm:$0xff]
    %v3671 = vld [vmem:[%s11 + $0x40] sm:$0xff]
    %v3672 = vld [vmem:[%s11 + $0x48] sm:$0xff]
    %v3713 = vrot.slane %v3624, 7
    %vm3714 = vcmask 1041409
    %v3715 = vsel %vm3714, %v3713, %v3623
    %v3716 = vrot.slane %v3625, 6
    %vm3717 = vcmask 1042434
    %v3718 = vsel %vm3717, %v3716, %v3715
    %v3719 = vrot.slane %v3626, 5
    %vm3720 = vcmask 1043459
    %v3721 = vsel %vm3720, %v3719, %v3718
    %v3722 = vrot.slane %v3627, 4
    %vm3723 = vcmask 1044484
    %v3724 = vsel %vm3723, %v3722, %v3721
    %v3725 = vrot.slane %v3628, 3
    %vm3726 = vcmask 1045509
    %v3727 = vsel %vm3726, %v3725, %v3724
    %v3728 = vrot.slane %v3629, 2
    %vm3729 = vcmask 1046534
    %v3730 = vsel %vm3729, %v3728, %v3727
    %v3731 = vrot.slane %v3630, 1
    %vm3732 = vcmask 1047559
    %v3733 = vsel %vm3732, %v3731, %v3730
    %v3734 = vrot.slane %v3632, 7
    %v3735 = vsel %vm3714, %v3734, %v3631
    %v3736 = vrot.slane %v3633, 6
    %v3737 = vsel %vm3717, %v3736, %v3735
    %v3738 = vrot.slane %v3634, 5
    %v3739 = vsel %vm3720, %v3738, %v3737
    %v3740 = vrot.slane %v3635, 4
    %v3741 = vsel %vm3723, %v3740, %v3739
    %v3742 = vrot.slane %v3636, 3
    %v3743 = vsel %vm3726, %v3742, %v3741
    %v3744 = vrot.slane %v3637, 2
    %v3745 = vsel %vm3729, %v3744, %v3743
    %v3746 = vrot.slane %v3638, 1
    %v3747 = vsel %vm3732, %v3746, %v3745
    %v3748 = vrot.slane %v3640, 7
    %v3749 = vsel %vm3714, %v3748, %v3639
    %v3750 = vrot.slane %v3641, 6
    %v3751 = vsel %vm3717, %v3750, %v3749
    %v3752 = vrot.slane %v3642, 5
    %v3753 = vsel %vm3720, %v3752, %v3751
    %v3754 = vrot.slane %v3643, 4
    %v3755 = vsel %vm3723, %v3754, %v3753
    %v3756 = vrot.slane %v3644, 3
    %v3757 = vsel %vm3726, %v3756, %v3755
    %v3758 = vrot.slane %v3645, 2
    %v3759 = vsel %vm3729, %v3758, %v3757
    %v3760 = vrot.slane %v3646, 1
    %v3761 = vsel %vm3732, %v3760, %v3759
    %v3762 = vrot.slane %v3648, 7
    %v3763 = vsel %vm3714, %v3762, %v3647
    %v3764 = vrot.slane %v3649, 6
    %v3765 = vsel %vm3717, %v3764, %v3763
    %v3766 = vrot.slane %v3650, 5
    %v3767 = vsel %vm3720, %v3766, %v3765
    %v3768 = vrot.slane %v3651, 4
    %v3769 = vsel %vm3723, %v3768, %v3767
    %v3770 = vrot.slane %v3652, 3
    %v3771 = vsel %vm3726, %v3770, %v3769
    %v3772 = vrot.slane %v3653, 2
    %v3773 = vsel %vm3729, %v3772, %v3771
    %v3774 = vrot.slane %v3654, 1
    %v3775 = vsel %vm3732, %v3774, %v3773
    %v3776 = vrot.slane %v3656, 7
    %v3777 = vsel %vm3714, %v3776, %v3655
    %v3778 = vrot.slane %v3657, 6
    %v3779 = vsel %vm3717, %v3778, %v3777
    %v3780 = vrot.slane %v3658, 5
    %v3781 = vsel %vm3720, %v3780, %v3779
    %v3782 = vrot.slane %v3659, 4
    %v3783 = vsel %vm3723, %v3782, %v3781
    %v3784 = vrot.slane %v3660, 3
    %v3785 = vsel %vm3726, %v3784, %v3783
    %v3786 = vrot.slane %v3661, 2
    %v3787 = vsel %vm3729, %v3786, %v3785
    %v3788 = vrot.slane %v3662, 1
    %v3789 = vsel %vm3732, %v3788, %v3787
    %v3790 = vsel %vm3336, %v3733, 0
    %v3792 = vsel %vm3336, %v3747, 0
    %v3794 = vsel %vm3336, %v3761, 0
    %v3796 = vsel %vm3336, %v3775, 0
    %v3798 = vsel %vm3336, %v3789, 0
    %3800 = vmatprep.subr.mxu0 0.0
    %3801 = vmatpush1.msra.mxu0 %v3663
    %3802 = vmatprep.subr.mxu0 0.0
    %3803 = vmatpush1.msra.mxu0 %v3664
    %3804 = vmatprep.subr.mxu0 0.0
    %3805 = vmatpush1.msra.mxu0 %v3665
    %3806 = vmatprep.subr.mxu0 0.0
    %3807 = vmatpush1.msra.mxu0 %v3666
    %3808 = vmatprep.subr.mxu0 0.0
    %3809 = vmatpush1.msra.mxu0 %v3667
    %3810 = vmatprep.subr.mxu0 0.0
    %3811 = vmatpush1.msra.mxu0 %v3668
    %3812 = vmatprep.subr.mxu0 0.0
    %3813 = vmatpush1.msra.mxu0 %v3669
    %3814 = vmatprep.subr.mxu0 0.0
    %3815 = vmatpush1.msra.mxu0 %v3670
    %3816 = vmatprep.subr.mxu0 0.0
    %3817 = vmatpush1.msra.mxu0 %v3671
    %3818 = vmatprep.subr.mxu0 0.0
    %3819 = vmatpush1.msra.mxu0 %v3672
    %3820 = vmatprep.subr.mxu0 0.0
    %3821 = vmatpush1.msra.mxu0 0.0
    %3822 = vmatprep.subr.mxu0 0.0
    %3823 = vmatpush1.msra.mxu0 0.0
    %3824 = vmatprep.subr.mxu0 0.0
    %3825 = vmatpush1.msra.mxu0 0.0
    %3826 = vmatprep.subr.mxu0 0.0
    %3827 = vmatpush1.msra.mxu0 0.0
    %3828 = vmatprep.subr.mxu0 0.0
    %3829 = vmatpush1.msra.mxu0 0.0
    %3830 = vmatprep.subr.mxu0 0.0
    %3831 = vmatpush1.msra.mxu0 0.0
    %3832 = vmatprep.subr.mxu0 0.0
    %3833 = vmatpush1.msra.mxu0 0.0
    %3834 = vmatprep.subr.mxu0 0.0
    %3835 = vmatpush1.msra.mxu0 0.0
    %3836 = vmatprep.subr.mxu0 0.0
    %3837 = vmatpush1.msra.mxu0 0.0
    %3838 = vmatprep.subr.mxu0 0.0
    %3839 = vmatpush1.msra.mxu0 0.0
    %3840 = vmatprep.subr.mxu0 0.0
    %3841 = vmatpush1.msra.mxu0 0.0
    %3842 = vmatprep.subr.mxu0 0.0
    %3843 = vmatpush1.msra.mxu0 0.0
    %3844 = vmatprep.subr.mxu0 0.0
    %3845 = vmatpush1.msra.mxu0 0.0
    %3846 = vmatprep.subr.mxu0 0.0
    %3847 = vmatpush1.msra.mxu0 0.0
    %3848 = vmatprep.subr.mxu0 0.0
    %3849 = vmatpush1.msra.mxu0 0.0
    %3850 = vmatprep.subr.mxu0 0.0
    %3851 = vmatpush1.msra.mxu0 0.0
    %3852 = vmatprep.subr.mxu0 0.0
    %3853 = vmatpush1.msra.mxu0 0.0
    %3854 = vmatprep.subr.mxu0 0.0
    %3855 = vmatpush1.msra.mxu0 0.0
    %3856 = vmatprep.subr.mxu0 0.0
    %3857 = vmatpush1.msra.mxu0 0.0
    %3858 = vmatprep.subr.mxu0 0.0
    %3859 = vmatpush1.msra.mxu0 0.0
    %3860 = vmatprep.subr.mxu0 0.0
    %3861 = vmatpush1.msra.mxu0 0.0
    %3862 = vmatprep.subr.mxu0 0.0
    %3863 = vmatpush1.msra.mxu0 0.0
    %3864 = vmatprep.mubr.f32.mxu0 0.0
    %3865 = vmatmul.mubr.f32.gmra.mrb[0].mxu0 %v3790
    %v3866 = vpop.f32.mrb[0].mxu0
    %v3867 = vadd.f32 0.0, %v3866
    %v3868 = vpop.f32.mrb[0].mxu0
    %3869 = vmatprep.mubr.f32.mxu0 0.0
    %3870 = vmatmul.mubr.f32.gmra.mrb[0].mxu0 %v3792
    %v3871 = vpop.f32.mrb[0].mxu0
    %v3872 = vadd.f32 0.0, %v3871
    %v3873 = vpop.f32.mrb[0].mxu0
    %3874 = vmatprep.mubr.f32.mxu0 0.0
    %3875 = vmatmul.mubr.f32.gmra.mrb[0].mxu0 %v3794
    %v3876 = vpop.f32.mrb[0].mxu0
    %v3877 = vadd.f32 0.0, %v3876
    %v3878 = vpop.f32.mrb[0].mxu0
    %3879 = vmatprep.mubr.f32.mxu0 0.0
    %3880 = vmatmul.mubr.f32.gmra.mrb[0].mxu0 %v3796
    %v3881 = vpop.f32.mrb[0].mxu0
    %v3882 = vadd.f32 0.0, %v3881
    %v3883 = vpop.f32.mrb[0].mxu0
    %3884 = vmatprep.mubr.f32.mxu0 0.0
    %3885 = vmatmul.mubr.f32.gmra.mrb[0].mxu0 %v3798
    %v3886 = vpop.f32.mrb[0].mxu0
    %v3887 = vadd.f32 0.0, %v3886
    %v3888 = vpop.f32.mrb[0].mxu0
    %3889 = vdwg.mxu0
    %v3891 = vlaneseq
    %v3892 = vshrl.u32 %v3891, 7
    %v3893 = vsub.s32 0, %v3892
    %v3894 = vrot.slane %v3377, %v3893
    %v3896 = vadd.f32 %v3894, %v3867
    %v3897 = vadd.f32 %v3894, %v3872
    %v3898 = vadd.f32 %v3894, %v3877
    %v3899 = vadd.f32 %v3894, %v3882
    %v3900 = vadd.f32 %v3894, %v3887
    %v3901 = vld [vmem:[#allocation5 + $0x2] sm:$0x1]
    %v3902 = vld [vmem:[#allocation5 + $0xa] sm:$0x1]
    %v3903 = vld [vmem:[#allocation5 + $0x12] sm:$0x1]
    %v3904 = vld [vmem:[#allocation5 + $0x1a] sm:$0x1]
    %v3905 = vld [vmem:[#allocation5 + $0x22] sm:$0x1]
    %v3906 = vld [vmem:[#allocation5 + $0x2a] sm:$0x1]
    %v3907 = vld [vmem:[#allocation5 + $0x32] sm:$0x1]
    %v3908 = vld [vmem:[#allocation5 + $0x3a] sm:$0x1]
    %v3909 = vld [vmem:[#allocation5 + $0x42] sm:$0x1]
    %v3910 = vld [vmem:[#allocation5 + $0x4a] sm:$0x1]
    %v3911 = vld [vmem:[#allocation5 + $0x52] sm:$0x1]
    %v3912 = vld [vmem:[#allocation5 + $0x5a] sm:$0x1]
    %v3913 = vld [vmem:[#allocation5 + $0x62] sm:$0x1]
    %v3914 = vld [vmem:[#allocation5 + $0x6a] sm:$0x1]
    %v3915 = vld [vmem:[#allocation5 + $0x72] sm:$0x1]
    %v3916 = vld [vmem:[#allocation5 + $0x7a] sm:$0x1]
    %v3917 = vld [vmem:[#allocation5 + $0x82] sm:$0x1]
    %v3918 = vld [vmem:[#allocation5 + $0x8a] sm:$0x1]
    %v3919 = vld [vmem:[#allocation5 + $0x92] sm:$0x1]
    %v3920 = vld [vmem:[#allocation5 + $0x9a] sm:$0x1]
    %v3921 = vld [vmem:[#allocation5 + $0xa2] sm:$0x1]
    %v3922 = vld [vmem:[#allocation5 + $0xaa] sm:$0x1]
    %v3923 = vld [vmem:[#allocation5 + $0xb2] sm:$0x1]
    %v3924 = vld [vmem:[#allocation5 + $0xba] sm:$0x1]
    %v3925 = vld [vmem:[#allocation5 + $0xc2] sm:$0x1]
    %v3926 = vld [vmem:[#allocation5 + $0xca] sm:$0x1]
    %v3927 = vld [vmem:[#allocation5 + $0xd2] sm:$0x1]
    %v3928 = vld [vmem:[#allocation5 + $0xda] sm:$0x1]
    %v3929 = vld [vmem:[#allocation5 + $0xe2] sm:$0x1]
    %v3930 = vld [vmem:[#allocation5 + $0xea] sm:$0x1]
    %v3931 = vld [vmem:[#allocation5 + $0xf2] sm:$0x1]
    %v3932 = vld [vmem:[#allocation5 + $0xfa] sm:$0x1]
    %v3933 = vld [vmem:[#allocation5 + $0x102] sm:$0x1]
    %v3934 = vld [vmem:[#allocation5 + $0x10a] sm:$0x1]
    %v3935 = vld [vmem:[#allocation5 + $0x112] sm:$0x1]
    %v3936 = vld [vmem:[#allocation5 + $0x11a] sm:$0x1]
    %v3937 = vld [vmem:[#allocation5 + $0x122] sm:$0x1]
    %v3938 = vld [vmem:[#allocation5 + $0x12a] sm:$0x1]
    %v3939 = vld [vmem:[#allocation5 + $0x132] sm:$0x1]
    %v3940 = vld [vmem:[#allocation5 + $0x13a] sm:$0x1]
    %v3941 = vld [vmem:[#allocation5 + $0x3] sm:$0x1]
    %v3942 = vld [vmem:[#allocation5 + $0xb] sm:$0x1]
    %v3943 = vld [vmem:[#allocation5 + $0x13] sm:$0x1]
    %v3944 = vld [vmem:[#allocation5 + $0x1b] sm:$0x1]
    %v3945 = vld [vmem:[#allocation5 + $0x23] sm:$0x1]
    %v3946 = vld [vmem:[#allocation5 + $0x2b] sm:$0x1]
    %v3947 = vld [vmem:[#allocation5 + $0x33] sm:$0x1]
    %v3948 = vld [vmem:[#allocation5 + $0x3b] sm:$0x1]
    %v3949 = vld [vmem:[#allocation5 + $0x43] sm:$0x1]
    %v3950 = vld [vmem:[#allocation5 + $0x4b] sm:$0x1]
    %v3951 = vld [vmem:[#allocation5 + $0x53] sm:$0x1]
    %v3952 = vld [vmem:[#allocation5 + $0x5b] sm:$0x1]
    %v3953 = vld [vmem:[#allocation5 + $0x63] sm:$0x1]
    %v3954 = vld [vmem:[#allocation5 + $0x6b] sm:$0x1]
    %v3955 = vld [vmem:[#allocation5 + $0x73] sm:$0x1]
    %v3956 = vld [vmem:[#allocation5 + $0x7b] sm:$0x1]
    %v3957 = vld [vmem:[#allocation5 + $0x83] sm:$0x1]
    %v3958 = vld [vmem:[#allocation5 + $0x8b] sm:$0x1]
    %v3959 = vld [vmem:[#allocation5 + $0x93] sm:$0x1]
    %v3960 = vld [vmem:[#allocation5 + $0x9b] sm:$0x1]
    %v3961 = vld [vmem:[#allocation5 + $0xa3] sm:$0x1]
    %v3962 = vld [vmem:[#allocation5 + $0xab] sm:$0x1]
    %v3963 = vld [vmem:[#allocation5 + $0xb3] sm:$0x1]
    %v3964 = vld [vmem:[#allocation5 + $0xbb] sm:$0x1]
    %v3965 = vld [vmem:[#allocation5 + $0xc3] sm:$0x1]
    %v3966 = vld [vmem:[#allocation5 + $0xcb] sm:$0x1]
    %v3967 = vld [vmem:[#allocation5 + $0xd3] sm:$0x1]
    %v3968 = vld [vmem:[#allocation5 + $0xdb] sm:$0x1]
    %v3969 = vld [vmem:[#allocation5 + $0xe3] sm:$0x1]
    %v3970 = vld [vmem:[#allocation5 + $0xeb] sm:$0x1]
    %v3971 = vld [vmem:[#allocation5 + $0xf3] sm:$0x1]
    %v3972 = vld [vmem:[#allocation5 + $0xfb] sm:$0x1]
    %v3973 = vld [vmem:[#allocation5 + $0x103] sm:$0x1]
    %v3974 = vld [vmem:[#allocation5 + $0x10b] sm:$0x1]
    %v3975 = vld [vmem:[#allocation5 + $0x113] sm:$0x1]
    %v3976 = vld [vmem:[#allocation5 + $0x11b] sm:$0x1]
    %v3977 = vld [vmem:[#allocation5 + $0x123] sm:$0x1]
    %v3978 = vld [vmem:[#allocation5 + $0x12b] sm:$0x1]
    %v3979 = vld [vmem:[#allocation5 + $0x133] sm:$0x1]
    %v3980 = vld [vmem:[#allocation5 + $0x13b] sm:$0x1]
    %v3981 = vmax.f32 %v3901, %v3941
    %v3982 = vmax.f32 %v3902, %v3942
    %v3983 = vmax.f32 %v3903, %v3943
    %v3984 = vmax.f32 %v3904, %v3944
    %v3985 = vmax.f32 %v3905, %v3945
    %v3986 = vmax.f32 %v3906, %v3946
    %v3987 = vmax.f32 %v3907, %v3947
    %v3988 = vmax.f32 %v3908, %v3948
    %v3989 = vmax.f32 %v3909, %v3949
    %v3990 = vmax.f32 %v3910, %v3950
    %v3991 = vmax.f32 %v3911, %v3951
    %v3992 = vmax.f32 %v3912, %v3952
    %v3993 = vmax.f32 %v3913, %v3953
    %v3994 = vmax.f32 %v3914, %v3954
    %v3995 = vmax.f32 %v3915, %v3955
    %v3996 = vmax.f32 %v3916, %v3956
    %v3997 = vmax.f32 %v3917, %v3957
    %v3998 = vmax.f32 %v3918, %v3958
    %v3999 = vmax.f32 %v3919, %v3959
    %v4000 = vmax.f32 %v3920, %v3960
    %v4001 = vmax.f32 %v3921, %v3961
    %v4002 = vmax.f32 %v3922, %v3962
    %v4003 = vmax.f32 %v3923, %v3963
    %v4004 = vmax.f32 %v3924, %v3964
    %v4005 = vmax.f32 %v3925, %v3965
    %v4006 = vmax.f32 %v3926, %v3966
    %v4007 = vmax.f32 %v3927, %v3967
    %v4008 = vmax.f32 %v3928, %v3968
    %v4009 = vmax.f32 %v3929, %v3969
    %v4010 = vmax.f32 %v3930, %v3970
    %v4011 = vmax.f32 %v3931, %v3971
    %v4012 = vmax.f32 %v3932, %v3972
    %v4013 = vmax.f32 %v3933, %v3973
    %v4014 = vmax.f32 %v3934, %v3974
    %v4015 = vmax.f32 %v3935, %v3975
    %v4016 = vmax.f32 %v3936, %v3976
    %v4017 = vmax.f32 %v3937, %v3977
    %v4018 = vmax.f32 %v3938, %v3978
    %v4019 = vmax.f32 %v3939, %v3979
    %v4020 = vmax.f32 %v3940, %v3980
    %v4021 = vmax.f32 %v3981, 0.0
    %v4022 = vmax.f32 %v3982, 0.0
    %v4023 = vmax.f32 %v3983, 0.0
    %v4024 = vmax.f32 %v3984, 0.0
    %v4025 = vmax.f32 %v3985, 0.0
    %v4026 = vmax.f32 %v3986, 0.0
    %v4027 = vmax.f32 %v3987, 0.0
    %v4028 = vmax.f32 %v3988, 0.0
    %v4029 = vmax.f32 %v3989, 0.0
    %v4030 = vmax.f32 %v3990, 0.0
    %v4031 = vmax.f32 %v3991, 0.0
    %v4032 = vmax.f32 %v3992, 0.0
    %v4033 = vmax.f32 %v3993, 0.0
    %v4034 = vmax.f32 %v3994, 0.0
    %v4035 = vmax.f32 %v3995, 0.0
    %v4036 = vmax.f32 %v3996, 0.0
    %v4037 = vmax.f32 %v3997, 0.0
    %v4038 = vmax.f32 %v3998, 0.0
    %v4039 = vmax.f32 %v3999, 0.0
    %v4040 = vmax.f32 %v4000, 0.0
    %v4041 = vmax.f32 %v4001, 0.0
    %v4042 = vmax.f32 %v4002, 0.0
    %v4043 = vmax.f32 %v4003, 0.0
    %v4044 = vmax.f32 %v4004, 0.0
    %v4045 = vmax.f32 %v4005, 0.0
    %v4046 = vmax.f32 %v4006, 0.0
    %v4047 = vmax.f32 %v4007, 0.0
    %v4048 = vmax.f32 %v4008, 0.0
    %v4049 = vmax.f32 %v4009, 0.0
    %v4050 = vmax.f32 %v4010, 0.0
    %v4051 = vmax.f32 %v4011, 0.0
    %v4052 = vmax.f32 %v4012, 0.0
    %v4053 = vmax.f32 %v4013, 0.0
    %v4054 = vmax.f32 %v4014, 0.0
    %v4055 = vmax.f32 %v4015, 0.0
    %v4056 = vmax.f32 %v4016, 0.0
    %v4057 = vmax.f32 %v4017, 0.0
    %v4058 = vmax.f32 %v4018, 0.0
    %v4059 = vmax.f32 %v4019, 0.0
    %v4060 = vmax.f32 %v4020, 0.0
    %s4061 = scalar_lea.vmem %s10, 40
    %v4062 = vld [vmem:[%s4061] sm:$0xff]
    %v4063 = vld [vmem:[%s4061 + $0x8] sm:$0xff]
    %v4064 = vld [vmem:[%s4061 + $0x10] sm:$0xff]
    %v4065 = vld [vmem:[%s4061 + $0x18] sm:$0xff]
    %v4066 = vld [vmem:[%s4061 + $0x20] sm:$0xff]
    %v4072 = vrot.slane %v4062, 1
    %v4073 = vrot.slane %v4062, 2
    %v4074 = vrot.slane %v4062, 3
    %v4075 = vrot.slane %v4062, 4
    %v4076 = vrot.slane %v4062, 5
    %v4077 = vrot.slane %v4062, 6
    %v4078 = vrot.slane %v4062, 7
    %v4079 = vrot.slane %v4063, 1
    %v4080 = vrot.slane %v4063, 2
    %v4081 = vrot.slane %v4063, 3
    %v4082 = vrot.slane %v4063, 4
    %v4083 = vrot.slane %v4063, 5
    %v4084 = vrot.slane %v4063, 6
    %v4085 = vrot.slane %v4063, 7
    %v4086 = vrot.slane %v4064, 1
    %v4087 = vrot.slane %v4064, 2
    %v4088 = vrot.slane %v4064, 3
    %v4089 = vrot.slane %v4064, 4
    %v4090 = vrot.slane %v4064, 5
    %v4091 = vrot.slane %v4064, 6
    %v4092 = vrot.slane %v4064, 7
    %v4093 = vrot.slane %v4065, 1
    %v4094 = vrot.slane %v4065, 2
    %v4095 = vrot.slane %v4065, 3
    %v4096 = vrot.slane %v4065, 4
    %v4097 = vrot.slane %v4065, 5
    %v4098 = vrot.slane %v4065, 6
    %v4099 = vrot.slane %v4065, 7
    %v4100 = vrot.slane %v4066, 1
    %v4101 = vrot.slane %v4066, 2
    %v4102 = vrot.slane %v4066, 3
    %v4103 = vrot.slane %v4066, 4
    %v4104 = vrot.slane %v4066, 5
    %v4105 = vrot.slane %v4066, 6
    %v4106 = vrot.slane %v4066, 7
    %v4147 = vmul.f32 %v4021, %v4062
    %v4148 = vmul.f32 %v4022, %v4072
    %v4149 = vmul.f32 %v4023, %v4073
    %v4150 = vmul.f32 %v4024, %v4074
    %v4151 = vmul.f32 %v4025, %v4075
    %v4152 = vmul.f32 %v4026, %v4076
    %v4153 = vmul.f32 %v4027, %v4077
    %v4154 = vmul.f32 %v4028, %v4078
    %v4155 = vmul.f32 %v4029, %v4063
    %v4156 = vmul.f32 %v4030, %v4079
    %v4157 = vmul.f32 %v4031, %v4080
    %v4158 = vmul.f32 %v4032, %v4081
    %v4159 = vmul.f32 %v4033, %v4082
    %v4160 = vmul.f32 %v4034, %v4083
    %v4161 = vmul.f32 %v4035, %v4084
    %v4162 = vmul.f32 %v4036, %v4085
    %v4163 = vmul.f32 %v4037, %v4064
    %v4164 = vmul.f32 %v4038, %v4086
    %v4165 = vmul.f32 %v4039, %v4087
    %v4166 = vmul.f32 %v4040, %v4088
    %v4167 = vmul.f32 %v4041, %v4089
    %v4168 = vmul.f32 %v4042, %v4090
    %v4169 = vmul.f32 %v4043, %v4091
    %v4170 = vmul.f32 %v4044, %v4092
    %v4171 = vmul.f32 %v4045, %v4065
    %v4172 = vmul.f32 %v4046, %v4093
    %v4173 = vmul.f32 %v4047, %v4094
    %v4174 = vmul.f32 %v4048, %v4095
    %v4175 = vmul.f32 %v4049, %v4096
    %v4176 = vmul.f32 %v4050, %v4097
    %v4177 = vmul.f32 %v4051, %v4098
    %v4178 = vmul.f32 %v4052, %v4099
    %v4179 = vmul.f32 %v4053, %v4066
    %v4180 = vmul.f32 %v4054, %v4100
    %v4181 = vmul.f32 %v4055, %v4101
    %v4182 = vmul.f32 %v4056, %v4102
    %v4183 = vmul.f32 %v4057, %v4103
    %v4184 = vmul.f32 %v4058, %v4104
    %v4185 = vmul.f32 %v4059, %v4105
    %v4186 = vmul.f32 %v4060, %v4106
    %s4187 = scalar_lea.vmem %s11, 80
    %v4188 = vld [vmem:[%s4187] sm:$0xff]
    %v4189 = vld [vmem:[%s4187 + $0x8] sm:$0xff]
    %v4190 = vld [vmem:[%s4187 + $0x10] sm:$0xff]
    %v4191 = vld [vmem:[%s4187 + $0x18] sm:$0xff]
    %v4192 = vld [vmem:[%s4187 + $0x20] sm:$0xff]
    %v4193 = vld [vmem:[%s4187 + $0x28] sm:$0xff]
    %v4194 = vld [vmem:[%s4187 + $0x30] sm:$0xff]
    %v4195 = vld [vmem:[%s4187 + $0x38] sm:$0xff]
    %v4196 = vld [vmem:[%s4187 + $0x40] sm:$0xff]
    %v4197 = vld [vmem:[%s4187 + $0x48] sm:$0xff]
    %v4238 = vrot.slane %v4148, 7
    %v4239 = vsel %vm3714, %v4238, %v4147
    %v4240 = vrot.slane %v4149, 6
    %v4241 = vsel %vm3717, %v4240, %v4239
    %v4242 = vrot.slane %v4150, 5
    %v4243 = vsel %vm3720, %v4242, %v4241
    %v4244 = vrot.slane %v4151, 4
    %v4245 = vsel %vm3723, %v4244, %v4243
    %v4246 = vrot.slane %v4152, 3
    %v4247 = vsel %vm3726, %v4246, %v4245
    %v4248 = vrot.slane %v4153, 2
    %v4249 = vsel %vm3729, %v4248, %v4247
    %v4250 = vrot.slane %v4154, 1
    %v4251 = vsel %vm3732, %v4250, %v4249
    %v4252 = vrot.slane %v4156, 7
    %v4253 = vsel %vm3714, %v4252, %v4155
    %v4254 = vrot.slane %v4157, 6
    %v4255 = vsel %vm3717, %v4254, %v4253
    %v4256 = vrot.slane %v4158, 5
    %v4257 = vsel %vm3720, %v4256, %v4255
    %v4258 = vrot.slane %v4159, 4
    %v4259 = vsel %vm3723, %v4258, %v4257
    %v4260 = vrot.slane %v4160, 3
    %v4261 = vsel %vm3726, %v4260, %v4259
    %v4262 = vrot.slane %v4161, 2
    %v4263 = vsel %vm3729, %v4262, %v4261
    %v4264 = vrot.slane %v4162, 1
    %v4265 = vsel %vm3732, %v4264, %v4263
    %v4266 = vrot.slane %v4164, 7
    %v4267 = vsel %vm3714, %v4266, %v4163
    %v4268 = vrot.slane %v4165, 6
    %v4269 = vsel %vm3717, %v4268, %v4267
    %v4270 = vrot.slane %v4166, 5
    %v4271 = vsel %vm3720, %v4270, %v4269
    %v4272 = vrot.slane %v4167, 4
    %v4273 = vsel %vm3723, %v4272, %v4271
    %v4274 = vrot.slane %v4168, 3
    %v4275 = vsel %vm3726, %v4274, %v4273
    %v4276 = vrot.slane %v4169, 2
    %v4277 = vsel %vm3729, %v4276, %v4275
    %v4278 = vrot.slane %v4170, 1
    %v4279 = vsel %vm3732, %v4278, %v4277
    %v4280 = vrot.slane %v4172, 7
    %v4281 = vsel %vm3714, %v4280, %v4171
    %v4282 = vrot.slane %v4173, 6
    %v4283 = vsel %vm3717, %v4282, %v4281
    %v4284 = vrot.slane %v4174, 5
    %v4285 = vsel %vm3720, %v4284, %v4283
    %v4286 = vrot.slane %v4175, 4
    %v4287 = vsel %vm3723, %v4286, %v4285
    %v4288 = vrot.slane %v4176, 3
    %v4289 = vsel %vm3726, %v4288, %v4287
    %v4290 = vrot.slane %v4177, 2
    %v4291 = vsel %vm3729, %v4290, %v4289
    %v4292 = vrot.slane %v4178, 1
    %v4293 = vsel %vm3732, %v4292, %v4291
    %v4294 = vrot.slane %v4180, 7
    %v4295 = vsel %vm3714, %v4294, %v4179
    %v4296 = vrot.slane %v4181, 6
    %v4297 = vsel %vm3717, %v4296, %v4295
    %v4298 = vrot.slane %v4182, 5
    %v4299 = vsel %vm3720, %v4298, %v4297
    %v4300 = vrot.slane %v4183, 4
    %v4301 = vsel %vm3723, %v4300, %v4299
    %v4302 = vrot.slane %v4184, 3
    %v4303 = vsel %vm3726, %v4302, %v4301
    %v4304 = vrot.slane %v4185, 2
    %v4305 = vsel %vm3729, %v4304, %v4303
    %v4306 = vrot.slane %v4186, 1
    %v4307 = vsel %vm3732, %v4306, %v4305
    %v4308 = vsel %vm3336, %v4251, 0
    %v4310 = vsel %vm3336, %v4265, 0
    %v4312 = vsel %vm3336, %v4279, 0
    %v4314 = vsel %vm3336, %v4293, 0
    %v4316 = vsel %vm3336, %v4307, 0
    %4318 = vmatprep.subr.mxu0 0.0
    %4319 = vmatpush1.msra.mxu0 %v4188
    %4320 = vmatprep.subr.mxu0 0.0
    %4321 = vmatpush1.msra.mxu0 %v4189
    %4322 = vmatprep.subr.mxu0 0.0
    %4323 = vmatpush1.msra.mxu0 %v4190
    %4324 = vmatprep.subr.mxu0 0.0
    %4325 = vmatpush1.msra.mxu0 %v4191
    %4326 = vmatprep.subr.mxu0 0.0
    %4327 = vmatpush1.msra.mxu0 %v4192
    %4328 = vmatprep.subr.mxu0 0.0
    %4329 = vmatpush1.msra.mxu0 %v4193
    %4330 = vmatprep.subr.mxu0 0.0
    %4331 = vmatpush1.msra.mxu0 %v4194
    %4332 = vmatprep.subr.mxu0 0.0
    %4333 = vmatpush1.msra.mxu0 %v4195
    %4334 = vmatprep.subr.mxu0 0.0
    %4335 = vmatpush1.msra.mxu0 %v4196
    %4336 = vmatprep.subr.mxu0 0.0
    %4337 = vmatpush1.msra.mxu0 %v4197
    %4338 = vmatprep.subr.mxu0 0.0
    %4339 = vmatpush1.msra.mxu0 0.0
    %4340 = vmatprep.subr.mxu0 0.0
    %4341 = vmatpush1.msra.mxu0 0.0
    %4342 = vmatprep.subr.mxu0 0.0
    %4343 = vmatpush1.msra.mxu0 0.0
    %4344 = vmatprep.subr.mxu0 0.0
    %4345 = vmatpush1.msra.mxu0 0.0
    %4346 = vmatprep.subr.mxu0 0.0
    %4347 = vmatpush1.msra.mxu0 0.0
    %4348 = vmatprep.subr.mxu0 0.0
    %4349 = vmatpush1.msra.mxu0 0.0
    %4350 = vmatprep.subr.mxu0 0.0
    %4351 = vmatpush1.msra.mxu0 0.0
    %4352 = vmatprep.subr.mxu0 0.0
    %4353 = vmatpush1.msra.mxu0 0.0
    %4354 = vmatprep.subr.mxu0 0.0
    %4355 = vmatpush1.msra.mxu0 0.0
    %4356 = vmatprep.subr.mxu0 0.0
    %4357 = vmatpush1.msra.mxu0 0.0
    %4358 = vmatprep.subr.mxu0 0.0
    %4359 = vmatpush1.msra.mxu0 0.0
    %4360 = vmatprep.subr.mxu0 0.0
    %4361 = vmatpush1.msra.mxu0 0.0
    %4362 = vmatprep.subr.mxu0 0.0
    %4363 = vmatpush1.msra.mxu0 0.0
    %4364 = vmatprep.subr.mxu0 0.0
    %4365 = vmatpush1.msra.mxu0 0.0
    %4366 = vmatprep.subr.mxu0 0.0
    %4367 = vmatpush1.msra.mxu0 0.0
    %4368 = vmatprep.subr.mxu0 0.0
    %4369 = vmatpush1.msra.mxu0 0.0
    %4370 = vmatprep.subr.mxu0 0.0
    %4371 = vmatpush1.msra.mxu0 0.0
    %4372 = vmatprep.subr.mxu0 0.0
    %4373 = vmatpush1.msra.mxu0 0.0
    %4374 = vmatprep.subr.mxu0 0.0
    %4375 = vmatpush1.msra.mxu0 0.0
    %4376 = vmatprep.subr.mxu0 0.0
    %4377 = vmatpush1.msra.mxu0 0.0
    %4378 = vmatprep.subr.mxu0 0.0
    %4379 = vmatpush1.msra.mxu0 0.0
    %4380 = vmatprep.subr.mxu0 0.0
    %4381 = vmatpush1.msra.mxu0 0.0
    %4382 = vmatprep.mubr.f32.mxu0 0.0
    %4383 = vmatmul.mubr.f32.gmra.mrb[0].mxu0 %v4308
    %v4384 = vpop.f32.mrb[0].mxu0
    %v4385 = vadd.f32 0.0, %v4384
    %v4386 = vpop.f32.mrb[0].mxu0
    %4387 = vmatprep.mubr.f32.mxu0 0.0
    %4388 = vmatmul.mubr.f32.gmra.mrb[0].mxu0 %v4310
    %v4389 = vpop.f32.mrb[0].mxu0
    %v4390 = vadd.f32 0.0, %v4389
    %v4391 = vpop.f32.mrb[0].mxu0
    %4392 = vmatprep.mubr.f32.mxu0 0.0
    %4393 = vmatmul.mubr.f32.gmra.mrb[0].mxu0 %v4312
    %v4394 = vpop.f32.mrb[0].mxu0
    %v4395 = vadd.f32 0.0, %v4394
    %v4396 = vpop.f32.mrb[0].mxu0
    %4397 = vmatprep.mubr.f32.mxu0 0.0
    %4398 = vmatmul.mubr.f32.gmra.mrb[0].mxu0 %v4314
    %v4399 = vpop.f32.mrb[0].mxu0
    %v4400 = vadd.f32 0.0, %v4399
    %v4401 = vpop.f32.mrb[0].mxu0
    %4402 = vmatprep.mubr.f32.mxu0 0.0
    %4403 = vmatmul.mubr.f32.gmra.mrb[0].mxu0 %v4316
    %v4404 = vpop.f32.mrb[0].mxu0
    %v4405 = vadd.f32 0.0, %v4404
    %v4406 = vpop.f32.mrb[0].mxu0
    %4407 = vdwg.mxu0
    %v4408 = vadd.f32 %v3896, %v4385
    %v4409 = vadd.f32 %v3897, %v4390
    %v4410 = vadd.f32 %v3898, %v4395
    %v4411 = vadd.f32 %v3899, %v4400
    %v4412 = vadd.f32 %v3900, %v4405
    %v4413 = vld [vmem:[#allocation5 + $0x4] sm:$0x1]
    %v4414 = vld [vmem:[#allocation5 + $0xc] sm:$0x1]
    %v4415 = vld [vmem:[#allocation5 + $0x14] sm:$0x1]
    %v4416 = vld [vmem:[#allocation5 + $0x1c] sm:$0x1]
    %v4417 = vld [vmem:[#allocation5 + $0x24] sm:$0x1]
    %v4418 = vld [vmem:[#allocation5 + $0x2c] sm:$0x1]
    %v4419 = vld [vmem:[#allocation5 + $0x34] sm:$0x1]
    %v4420 = vld [vmem:[#allocation5 + $0x3c] sm:$0x1]
    %v4421 = vld [vmem:[#allocation5 + $0x44] sm:$0x1]
    %v4422 = vld [vmem:[#allocation5 + $0x4c] sm:$0x1]
    %v4423 = vld [vmem:[#allocation5 + $0x54] sm:$0x1]
    %v4424 = vld [vmem:[#allocation5 + $0x5c] sm:$0x1]
    %v4425 = vld [vmem:[#allocation5 + $0x64] sm:$0x1]
    %v4426 = vld [vmem:[#allocation5 + $0x6c] sm:$0x1]
    %v4427 = vld [vmem:[#allocation5 + $0x74] sm:$0x1]
    %v4428 = vld [vmem:[#allocation5 + $0x7c] sm:$0x1]
    %v4429 = vld [vmem:[#allocation5 + $0x84] sm:$0x1]
    %v4430 = vld [vmem:[#allocation5 + $0x8c] sm:$0x1]
    %v4431 = vld [vmem:[#allocation5 + $0x94] sm:$0x1]
    %v4432 = vld [vmem:[#allocation5 + $0x9c] sm:$0x1]
    %v4433 = vld [vmem:[#allocation5 + $0xa4] sm:$0x1]
    %v4434 = vld [vmem:[#allocation5 + $0xac] sm:$0x1]
    %v4435 = vld [vmem:[#allocation5 + $0xb4] sm:$0x1]
    %v4436 = vld [vmem:[#allocation5 + $0xbc] sm:$0x1]
    %v4437 = vld [vmem:[#allocation5 + $0xc4] sm:$0x1]
    %v4438 = vld [vmem:[#allocation5 + $0xcc] sm:$0x1]
    %v4439 = vld [vmem:[#allocation5 + $0xd4] sm:$0x1]
    %v4440 = vld [vmem:[#allocation5 + $0xdc] sm:$0x1]
    %v4441 = vld [vmem:[#allocation5 + $0xe4] sm:$0x1]
    %v4442 = vld [vmem:[#allocation5 + $0xec] sm:$0x1]
    %v4443 = vld [vmem:[#allocation5 + $0xf4] sm:$0x1]
    %v4444 = vld [vmem:[#allocation5 + $0xfc] sm:$0x1]
    %v4445 = vld [vmem:[#allocation5 + $0x104] sm:$0x1]
    %v4446 = vld [vmem:[#allocation5 + $0x10c] sm:$0x1]
    %v4447 = vld [vmem:[#allocation5 + $0x114] sm:$0x1]
    %v4448 = vld [vmem:[#allocation5 + $0x11c] sm:$0x1]
    %v4449 = vld [vmem:[#allocation5 + $0x124] sm:$0x1]
    %v4450 = vld [vmem:[#allocation5 + $0x12c] sm:$0x1]
    %v4451 = vld [vmem:[#allocation5 + $0x134] sm:$0x1]
    %v4452 = vld [vmem:[#allocation5 + $0x13c] sm:$0x1]
    %v4453 = vld [vmem:[#allocation5 + $0x5] sm:$0x1]
    %v4454 = vld [vmem:[#allocation5 + $0xd] sm:$0x1]
    %v4455 = vld [vmem:[#allocation5 + $0x15] sm:$0x1]
    %v4456 = vld [vmem:[#allocation5 + $0x1d] sm:$0x1]
    %v4457 = vld [vmem:[#allocation5 + $0x25] sm:$0x1]
    %v4458 = vld [vmem:[#allocation5 + $0x2d] sm:$0x1]
    %v4459 = vld [vmem:[#allocation5 + $0x35] sm:$0x1]
    %v4460 = vld [vmem:[#allocation5 + $0x3d] sm:$0x1]
    %v4461 = vld [vmem:[#allocation5 + $0x45] sm:$0x1]
    %v4462 = vld [vmem:[#allocation5 + $0x4d] sm:$0x1]
    %v4463 = vld [vmem:[#allocation5 + $0x55] sm:$0x1]
    %v4464 = vld [vmem:[#allocation5 + $0x5d] sm:$0x1]
    %v4465 = vld [vmem:[#allocation5 + $0x65] sm:$0x1]
    %v4466 = vld [vmem:[#allocation5 + $0x6d] sm:$0x1]
    %v4467 = vld [vmem:[#allocation5 + $0x75] sm:$0x1]
    %v4468 = vld [vmem:[#allocation5 + $0x7d] sm:$0x1]
    %v4469 = vld [vmem:[#allocation5 + $0x85] sm:$0x1]
    %v4470 = vld [vmem:[#allocation5 + $0x8d] sm:$0x1]
    %v4471 = vld [vmem:[#allocation5 + $0x95] sm:$0x1]
    %v4472 = vld [vmem:[#allocation5 + $0x9d] sm:$0x1]
    %v4473 = vld [vmem:[#allocation5 + $0xa5] sm:$0x1]
    %v4474 = vld [vmem:[#allocation5 + $0xad] sm:$0x1]
    %v4475 = vld [vmem:[#allocation5 + $0xb5] sm:$0x1]
    %v4476 = vld [vmem:[#allocation5 + $0xbd] sm:$0x1]
    %v4477 = vld [vmem:[#allocation5 + $0xc5] sm:$0x1]
    %v4478 = vld [vmem:[#allocation5 + $0xcd] sm:$0x1]
    %v4479 = vld [vmem:[#allocation5 + $0xd5] sm:$0x1]
    %v4480 = vld [vmem:[#allocation5 + $0xdd] sm:$0x1]
    %v4481 = vld [vmem:[#allocation5 + $0xe5] sm:$0x1]
    %v4482 = vld [vmem:[#allocation5 + $0xed] sm:$0x1]
    %v4483 = vld [vmem:[#allocation5 + $0xf5] sm:$0x1]
    %v4484 = vld [vmem:[#allocation5 + $0xfd] sm:$0x1]
    %v4485 = vld [vmem:[#allocation5 + $0x105] sm:$0x1]
    %v4486 = vld [vmem:[#allocation5 + $0x10d] sm:$0x1]
    %v4487 = vld [vmem:[#allocation5 + $0x115] sm:$0x1]
    %v4488 = vld [vmem:[#allocation5 + $0x11d] sm:$0x1]
    %v4489 = vld [vmem:[#allocation5 + $0x125] sm:$0x1]
    %v4490 = vld [vmem:[#allocation5 + $0x12d] sm:$0x1]
    %v4491 = vld [vmem:[#allocation5 + $0x135] sm:$0x1]
    %v4492 = vld [vmem:[#allocation5 + $0x13d] sm:$0x1]
    %v4493 = vmax.f32 %v4413, %v4453
    %v4494 = vmax.f32 %v4414, %v4454
    %v4495 = vmax.f32 %v4415, %v4455
    %v4496 = vmax.f32 %v4416, %v4456
    %v4497 = vmax.f32 %v4417, %v4457
    %v4498 = vmax.f32 %v4418, %v4458
    %v4499 = vmax.f32 %v4419, %v4459
    %v4500 = vmax.f32 %v4420, %v4460
    %v4501 = vmax.f32 %v4421, %v4461
    %v4502 = vmax.f32 %v4422, %v4462
    %v4503 = vmax.f32 %v4423, %v4463
    %v4504 = vmax.f32 %v4424, %v4464
    %v4505 = vmax.f32 %v4425, %v4465
    %v4506 = vmax.f32 %v4426, %v4466
    %v4507 = vmax.f32 %v4427, %v4467
    %v4508 = vmax.f32 %v4428, %v4468
    %v4509 = vmax.f32 %v4429, %v4469
    %v4510 = vmax.f32 %v4430, %v4470
    %v4511 = vmax.f32 %v4431, %v4471
    %v4512 = vmax.f32 %v4432, %v4472
    %v4513 = vmax.f32 %v4433, %v4473
    %v4514 = vmax.f32 %v4434, %v4474
    %v4515 = vmax.f32 %v4435, %v4475
    %v4516 = vmax.f32 %v4436, %v4476
    %v4517 = vmax.f32 %v4437, %v4477
    %v4518 = vmax.f32 %v4438, %v4478
    %v4519 = vmax.f32 %v4439, %v4479
    %v4520 = vmax.f32 %v4440, %v4480
    %v4521 = vmax.f32 %v4441, %v4481
    %v4522 = vmax.f32 %v4442, %v4482
    %v4523 = vmax.f32 %v4443, %v4483
    %v4524 = vmax.f32 %v4444, %v4484
    %v4525 = vmax.f32 %v4445, %v4485
    %v4526 = vmax.f32 %v4446, %v4486
    %v4527 = vmax.f32 %v4447, %v4487
    %v4528 = vmax.f32 %v4448, %v4488
    %v4529 = vmax.f32 %v4449, %v4489
    %v4530 = vmax.f32 %v4450, %v4490
    %v4531 = vmax.f32 %v4451, %v4491
    %v4532 = vmax.f32 %v4452, %v4492
    %v4533 = vmax.f32 %v4493, 0.0
    %v4534 = vmax.f32 %v4494, 0.0
    %v4535 = vmax.f32 %v4495, 0.0
    %v4536 = vmax.f32 %v4496, 0.0
    %v4537 = vmax.f32 %v4497, 0.0
    %v4538 = vmax.f32 %v4498, 0.0
    %v4539 = vmax.f32 %v4499, 0.0
    %v4540 = vmax.f32 %v4500, 0.0
    %v4541 = vmax.f32 %v4501, 0.0
    %v4542 = vmax.f32 %v4502, 0.0
    %v4543 = vmax.f32 %v4503, 0.0
    %v4544 = vmax.f32 %v4504, 0.0
    %v4545 = vmax.f32 %v4505, 0.0
    %v4546 = vmax.f32 %v4506, 0.0
    %v4547 = vmax.f32 %v4507, 0.0
    %v4548 = vmax.f32 %v4508, 0.0
    %v4549 = vmax.f32 %v4509, 0.0
    %v4550 = vmax.f32 %v4510, 0.0
    %v4551 = vmax.f32 %v4511, 0.0
    %v4552 = vmax.f32 %v4512, 0.0
    %v4553 = vmax.f32 %v4513, 0.0
    %v4554 = vmax.f32 %v4514, 0.0
    %v4555 = vmax.f32 %v4515, 0.0
    %v4556 = vmax.f32 %v4516, 0.0
    %v4557 = vmax.f32 %v4517, 0.0
    %v4558 = vmax.f32 %v4518, 0.0
    %v4559 = vmax.f32 %v4519, 0.0
    %v4560 = vmax.f32 %v4520, 0.0
    %v4561 = vmax.f32 %v4521, 0.0
    %v4562 = vmax.f32 %v4522, 0.0
    %v4563 = vmax.f32 %v4523, 0.0
    %v4564 = vmax.f32 %v4524, 0.0
    %v4565 = vmax.f32 %v4525, 0.0
    %v4566 = vmax.f32 %v4526, 0.0
    %v4567 = vmax.f32 %v4527, 0.0
    %v4568 = vmax.f32 %v4528, 0.0
    %v4569 = vmax.f32 %v4529, 0.0
    %v4570 = vmax.f32 %v4530, 0.0
    %v4571 = vmax.f32 %v4531, 0.0
    %v4572 = vmax.f32 %v4532, 0.0
    %s4573 = scalar_lea.vmem %s10, 80
    %v4574 = vld [vmem:[%s4573] sm:$0xff]
    %v4575 = vld [vmem:[%s4573 + $0x8] sm:$0xff]
    %v4576 = vld [vmem:[%s4573 + $0x10] sm:$0xff]
    %v4577 = vld [vmem:[%s4573 + $0x18] sm:$0xff]
    %v4578 = vld [vmem:[%s4573 + $0x20] sm:$0xff]
    %v4584 = vrot.slane %v4574, 1
    %v4585 = vrot.slane %v4574, 2
    %v4586 = vrot.slane %v4574, 3
    %v4587 = vrot.slane %v4574, 4
    %v4588 = vrot.slane %v4574, 5
    %v4589 = vrot.slane %v4574, 6
    %v4590 = vrot.slane %v4574, 7
    %v4591 = vrot.slane %v4575, 1
    %v4592 = vrot.slane %v4575, 2
    %v4593 = vrot.slane %v4575, 3
    %v4594 = vrot.slane %v4575, 4
    %v4595 = vrot.slane %v4575, 5
    %v4596 = vrot.slane %v4575, 6
    %v4597 = vrot.slane %v4575, 7
    %v4598 = vrot.slane %v4576, 1
    %v4599 = vrot.slane %v4576, 2
    %v4600 = vrot.slane %v4576, 3
    %v4601 = vrot.slane %v4576, 4
    %v4602 = vrot.slane %v4576, 5
    %v4603 = vrot.slane %v4576, 6
    %v4604 = vrot.slane %v4576, 7
    %v4605 = vrot.slane %v4577, 1
    %v4606 = vrot.slane %v4577, 2
    %v4607 = vrot.slane %v4577, 3
    %v4608 = vrot.slane %v4577, 4
    %v4609 = vrot.slane %v4577, 5
    %v4610 = vrot.slane %v4577, 6
    %v4611 = vrot.slane %v4577, 7
    %v4612 = vrot.slane %v4578, 1
    %v4613 = vrot.slane %v4578, 2
    %v4614 = vrot.slane %v4578, 3
    %v4615 = vrot.slane %v4578, 4
    %v4616 = vrot.slane %v4578, 5
    %v4617 = vrot.slane %v4578, 6
    %v4618 = vrot.slane %v4578, 7
    %v4659 = vmul.f32 %v4533, %v4574
    %v4660 = vmul.f32 %v4534, %v4584
    %v4661 = vmul.f32 %v4535, %v4585
    %v4662 = vmul.f32 %v4536, %v4586
    %v4663 = vmul.f32 %v4537, %v4587
    %v4664 = vmul.f32 %v4538, %v4588
    %v4665 = vmul.f32 %v4539, %v4589
    %v4666 = vmul.f32 %v4540, %v4590
    %v4667 = vmul.f32 %v4541, %v4575
    %v4668 = vmul.f32 %v4542, %v4591
    %v4669 = vmul.f32 %v4543, %v4592
    %v4670 = vmul.f32 %v4544, %v4593
    %v4671 = vmul.f32 %v4545, %v4594
    %v4672 = vmul.f32 %v4546, %v4595
    %v4673 = vmul.f32 %v4547, %v4596
    %v4674 = vmul.f32 %v4548, %v4597
    %v4675 = vmul.f32 %v4549, %v4576
    %v4676 = vmul.f32 %v4550, %v4598
    %v4677 = vmul.f32 %v4551, %v4599
    %v4678 = vmul.f32 %v4552, %v4600
    %v4679 = vmul.f32 %v4553, %v4601
    %v4680 = vmul.f32 %v4554, %v4602
    %v4681 = vmul.f32 %v4555, %v4603
    %v4682 = vmul.f32 %v4556, %v4604
    %v4683 = vmul.f32 %v4557, %v4577
    %v4684 = vmul.f32 %v4558, %v4605
    %v4685 = vmul.f32 %v4559, %v4606
    %v4686 = vmul.f32 %v4560, %v4607
    %v4687 = vmul.f32 %v4561, %v4608
    %v4688 = vmul.f32 %v4562, %v4609
    %v4689 = vmul.f32 %v4563, %v4610
    %v4690 = vmul.f32 %v4564, %v4611
    %v4691 = vmul.f32 %v4565, %v4578
    %v4692 = vmul.f32 %v4566, %v4612
    %v4693 = vmul.f32 %v4567, %v4613
    %v4694 = vmul.f32 %v4568, %v4614
    %v4695 = vmul.f32 %v4569, %v4615
    %v4696 = vmul.f32 %v4570, %v4616
    %v4697 = vmul.f32 %v4571, %v4617
    %v4698 = vmul.f32 %v4572, %v4618
    %s4699 = scalar_lea.vmem %s11, 160
    %v4700 = vld [vmem:[%s4699] sm:$0xff]
    %v4701 = vld [vmem:[%s4699 + $0x8] sm:$0xff]
    %v4702 = vld [vmem:[%s4699 + $0x10] sm:$0xff]
    %v4703 = vld [vmem:[%s4699 + $0x18] sm:$0xff]
    %v4704 = vld [vmem:[%s4699 + $0x20] sm:$0xff]
    %v4705 = vld [vmem:[%s4699 + $0x28] sm:$0xff]
    %v4706 = vld [vmem:[%s4699 + $0x30] sm:$0xff]
    %v4707 = vld [vmem:[%s4699 + $0x38] sm:$0xff]
    %v4708 = vld [vmem:[%s4699 + $0x40] sm:$0xff]
    %v4709 = vld [vmem:[%s4699 + $0x48] sm:$0xff]
    %v4750 = vrot.slane %v4660, 7
    %v4751 = vsel %vm3714, %v4750, %v4659
    %v4752 = vrot.slane %v4661, 6
    %v4753 = vsel %vm3717, %v4752, %v4751
    %v4754 = vrot.slane %v4662, 5
    %v4755 = vsel %vm3720, %v4754, %v4753
    %v4756 = vrot.slane %v4663, 4
    %v4757 = vsel %vm3723, %v4756, %v4755
    %v4758 = vrot.slane %v4664, 3
    %v4759 = vsel %vm3726, %v4758, %v4757
    %v4760 = vrot.slane %v4665, 2
    %v4761 = vsel %vm3729, %v4760, %v4759
    %v4762 = vrot.slane %v4666, 1
    %v4763 = vsel %vm3732, %v4762, %v4761
    %v4764 = vrot.slane %v4668, 7
    %v4765 = vsel %vm3714, %v4764, %v4667
    %v4766 = vrot.slane %v4669, 6
    %v4767 = vsel %vm3717, %v4766, %v4765
    %v4768 = vrot.slane %v4670, 5
    %v4769 = vsel %vm3720, %v4768, %v4767
    %v4770 = vrot.slane %v4671, 4
    %v4771 = vsel %vm3723, %v4770, %v4769
    %v4772 = vrot.slane %v4672, 3
    %v4773 = vsel %vm3726, %v4772, %v4771
    %v4774 = vrot.slane %v4673, 2
    %v4775 = vsel %vm3729, %v4774, %v4773
    %v4776 = vrot.slane %v4674, 1
    %v4777 = vsel %vm3732, %v4776, %v4775
    %v4778 = vrot.slane %v4676, 7
    %v4779 = vsel %vm3714, %v4778, %v4675
    %v4780 = vrot.slane %v4677, 6
    %v4781 = vsel %vm3717, %v4780, %v4779
    %v4782 = vrot.slane %v4678, 5
    %v4783 = vsel %vm3720, %v4782, %v4781
    %v4784 = vrot.slane %v4679, 4
    %v4785 = vsel %vm3723, %v4784, %v4783
    %v4786 = vrot.slane %v4680, 3
    %v4787 = vsel %vm3726, %v4786, %v4785
    %v4788 = vrot.slane %v4681, 2
    %v4789 = vsel %vm3729, %v4788, %v4787
    %v4790 = vrot.slane %v4682, 1
    %v4791 = vsel %vm3732, %v4790, %v4789
    %v4792 = vrot.slane %v4684, 7
    %v4793 = vsel %vm3714, %v4792, %v4683
    %v4794 = vrot.slane %v4685, 6
    %v4795 = vsel %vm3717, %v4794, %v4793
    %v4796 = vrot.slane %v4686, 5
    %v4797 = vsel %vm3720, %v4796, %v4795
    %v4798 = vrot.slane %v4687, 4
    %v4799 = vsel %vm3723, %v4798, %v4797
    %v4800 = vrot.slane %v4688, 3
    %v4801 = vsel %vm3726, %v4800, %v4799
    %v4802 = vrot.slane %v4689, 2
    %v4803 = vsel %vm3729, %v4802, %v4801
    %v4804 = vrot.slane %v4690, 1
    %v4805 = vsel %vm3732, %v4804, %v4803
    %v4806 = vrot.slane %v4692, 7
    %v4807 = vsel %vm3714, %v4806, %v4691
    %v4808 = vrot.slane %v4693, 6
    %v4809 = vsel %vm3717, %v4808, %v4807
    %v4810 = vrot.slane %v4694, 5
    %v4811 = vsel %vm3720, %v4810, %v4809
    %v4812 = vrot.slane %v4695, 4
    %v4813 = vsel %vm3723, %v4812, %v4811
    %v4814 = vrot.slane %v4696, 3
    %v4815 = vsel %vm3726, %v4814, %v4813
    %v4816 = vrot.slane %v4697, 2
    %v4817 = vsel %vm3729, %v4816, %v4815
    %v4818 = vrot.slane %v4698, 1
    %v4819 = vsel %vm3732, %v4818, %v4817
    %v4820 = vsel %vm3336, %v4763, 0
    %v4822 = vsel %vm3336, %v4777, 0
    %v4824 = vsel %vm3336, %v4791, 0
    %v4826 = vsel %vm3336, %v4805, 0
    %v4828 = vsel %vm3336, %v4819, 0
    %4830 = vmatprep.subr.mxu0 0.0
    %4831 = vmatpush1.msra.mxu0 %v4700
    %4832 = vmatprep.subr.mxu0 0.0
    %4833 = vmatpush1.msra.mxu0 %v4701
    %4834 = vmatprep.subr.mxu0 0.0
    %4835 = vmatpush1.msra.mxu0 %v4702
    %4836 = vmatprep.subr.mxu0 0.0
    %4837 = vmatpush1.msra.mxu0 %v4703
    %4838 = vmatprep.subr.mxu0 0.0
    %4839 = vmatpush1.msra.mxu0 %v4704
    %4840 = vmatprep.subr.mxu0 0.0
    %4841 = vmatpush1.msra.mxu0 %v4705
    %4842 = vmatprep.subr.mxu0 0.0
    %4843 = vmatpush1.msra.mxu0 %v4706
    %4844 = vmatprep.subr.mxu0 0.0
    %4845 = vmatpush1.msra.mxu0 %v4707
    %4846 = vmatprep.subr.mxu0 0.0
    %4847 = vmatpush1.msra.mxu0 %v4708
    %4848 = vmatprep.subr.mxu0 0.0
    %4849 = vmatpush1.msra.mxu0 %v4709
    %4850 = vmatprep.subr.mxu0 0.0
    %4851 = vmatpush1.msra.mxu0 0.0
    %4852 = vmatprep.subr.mxu0 0.0
    %4853 = vmatpush1.msra.mxu0 0.0
    %4854 = vmatprep.subr.mxu0 0.0
    %4855 = vmatpush1.msra.mxu0 0.0
    %4856 = vmatprep.subr.mxu0 0.0
    %4857 = vmatpush1.msra.mxu0 0.0
    %4858 = vmatprep.subr.mxu0 0.0
    %4859 = vmatpush1.msra.mxu0 0.0
    %4860 = vmatprep.subr.mxu0 0.0
    %4861 = vmatpush1.msra.mxu0 0.0
    %4862 = vmatprep.subr.mxu0 0.0
    %4863 = vmatpush1.msra.mxu0 0.0
    %4864 = vmatprep.subr.mxu0 0.0
    %4865 = vmatpush1.msra.mxu0 0.0
    %4866 = vmatprep.subr.mxu0 0.0
    %4867 = vmatpush1.msra.mxu0 0.0
    %4868 = vmatprep.subr.mxu0 0.0
    %4869 = vmatpush1.msra.mxu0 0.0
    %4870 = vmatprep.subr.mxu0 0.0
    %4871 = vmatpush1.msra.mxu0 0.0
    %4872 = vmatprep.subr.mxu0 0.0
    %4873 = vmatpush1.msra.mxu0 0.0
    %4874 = vmatprep.subr.mxu0 0.0
    %4875 = vmatpush1.msra.mxu0 0.0
    %4876 = vmatprep.subr.mxu0 0.0
    %4877 = vmatpush1.msra.mxu0 0.0
    %4878 = vmatprep.subr.mxu0 0.0
    %4879 = vmatpush1.msra.mxu0 0.0
    %4880 = vmatprep.subr.mxu0 0.0
    %4881 = vmatpush1.msra.mxu0 0.0
    %4882 = vmatprep.subr.mxu0 0.0
    %4883 = vmatpush1.msra.mxu0 0.0
    %4884 = vmatprep.subr.mxu0 0.0
    %4885 = vmatpush1.msra.mxu0 0.0
    %4886 = vmatprep.subr.mxu0 0.0
    %4887 = vmatpush1.msra.mxu0 0.0
    %4888 = vmatprep.subr.mxu0 0.0
    %4889 = vmatpush1.msra.mxu0 0.0
    %4890 = vmatprep.subr.mxu0 0.0
    %4891 = vmatpush1.msra.mxu0 0.0
    %4892 = vmatprep.subr.mxu0 0.0
    %4893 = vmatpush1.msra.mxu0 0.0
    %4894 = vmatprep.mubr.f32.mxu0 0.0
    %4895 = vmatmul.mubr.f32.gmra.mrb[0].mxu0 %v4820
    %v4896 = vpop.f32.mrb[0].mxu0
    %v4897 = vadd.f32 0.0, %v4896
    %v4898 = vpop.f32.mrb[0].mxu0
    %4899 = vmatprep.mubr.f32.mxu0 0.0
    %4900 = vmatmul.mubr.f32.gmra.mrb[0].mxu0 %v4822
    %v4901 = vpop.f32.mrb[0].mxu0
    %v4902 = vadd.f32 0.0, %v4901
    %v4903 = vpop.f32.mrb[0].mxu0
    %4904 = vmatprep.mubr.f32.mxu0 0.0
    %4905 = vmatmul.mubr.f32.gmra.mrb[0].mxu0 %v4824
    %v4906 = vpop.f32.mrb[0].mxu0
    %v4907 = vadd.f32 0.0, %v4906
    %v4908 = vpop.f32.mrb[0].mxu0
    %4909 = vmatprep.mubr.f32.mxu0 0.0
    %4910 = vmatmul.mubr.f32.gmra.mrb[0].mxu0 %v4826
    %v4911 = vpop.f32.mrb[0].mxu0
    %v4912 = vadd.f32 0.0, %v4911
    %v4913 = vpop.f32.mrb[0].mxu0
    %4914 = vmatprep.mubr.f32.mxu0 0.0
    %4915 = vmatmul.mubr.f32.gmra.mrb[0].mxu0 %v4828
    %v4916 = vpop.f32.mrb[0].mxu0
    %v4917 = vadd.f32 0.0, %v4916
    %v4918 = vpop.f32.mrb[0].mxu0
    %4919 = vdwg.mxu0
    %v4920 = vadd.f32 %v4408, %v4897
    %v4921 = vadd.f32 %v4409, %v4902
    %v4922 = vadd.f32 %v4410, %v4907
    %v4923 = vadd.f32 %v4411, %v4912
    %v4924 = vadd.f32 %v4412, %v4917
    %v4925 = vld [vmem:[#allocation5 + $0x6] sm:$0x1]
    %v4926 = vld [vmem:[#allocation5 + $0xe] sm:$0x1]
    %v4927 = vld [vmem:[#allocation5 + $0x16] sm:$0x1]
    %v4928 = vld [vmem:[#allocation5 + $0x1e] sm:$0x1]
    %v4929 = vld [vmem:[#allocation5 + $0x26] sm:$0x1]
    %v4930 = vld [vmem:[#allocation5 + $0x2e] sm:$0x1]
    %v4931 = vld [vmem:[#allocation5 + $0x36] sm:$0x1]
    %v4932 = vld [vmem:[#allocation5 + $0x3e] sm:$0x1]
    %v4933 = vld [vmem:[#allocation5 + $0x46] sm:$0x1]
    %v4934 = vld [vmem:[#allocation5 + $0x4e] sm:$0x1]
    %v4935 = vld [vmem:[#allocation5 + $0x56] sm:$0x1]
    %v4936 = vld [vmem:[#allocation5 + $0x5e] sm:$0x1]
    %v4937 = vld [vmem:[#allocation5 + $0x66] sm:$0x1]
    %v4938 = vld [vmem:[#allocation5 + $0x6e] sm:$0x1]
    %v4939 = vld [vmem:[#allocation5 + $0x76] sm:$0x1]
    %v4940 = vld [vmem:[#allocation5 + $0x7e] sm:$0x1]
    %v4941 = vld [vmem:[#allocation5 + $0x86] sm:$0x1]
    %v4942 = vld [vmem:[#allocation5 + $0x8e] sm:$0x1]
    %v4943 = vld [vmem:[#allocation5 + $0x96] sm:$0x1]
    %v4944 = vld [vmem:[#allocation5 + $0x9e] sm:$0x1]
    %v4945 = vld [vmem:[#allocation5 + $0xa6] sm:$0x1]
    %v4946 = vld [vmem:[#allocation5 + $0xae] sm:$0x1]
    %v4947 = vld [vmem:[#allocation5 + $0xb6] sm:$0x1]
    %v4948 = vld [vmem:[#allocation5 + $0xbe] sm:$0x1]
    %v4949 = vld [vmem:[#allocation5 + $0xc6] sm:$0x1]
    %v4950 = vld [vmem:[#allocation5 + $0xce] sm:$0x1]
    %v4951 = vld [vmem:[#allocation5 + $0xd6] sm:$0x1]
    %v4952 = vld [vmem:[#allocation5 + $0xde] sm:$0x1]
    %v4953 = vld [vmem:[#allocation5 + $0xe6] sm:$0x1]
    %v4954 = vld [vmem:[#allocation5 + $0xee] sm:$0x1]
    %v4955 = vld [vmem:[#allocation5 + $0xf6] sm:$0x1]
    %v4956 = vld [vmem:[#allocation5 + $0xfe] sm:$0x1]
    %v4957 = vld [vmem:[#allocation5 + $0x106] sm:$0x1]
    %v4958 = vld [vmem:[#allocation5 + $0x10e] sm:$0x1]
    %v4959 = vld [vmem:[#allocation5 + $0x116] sm:$0x1]
    %v4960 = vld [vmem:[#allocation5 + $0x11e] sm:$0x1]
    %v4961 = vld [vmem:[#allocation5 + $0x126] sm:$0x1]
    %v4962 = vld [vmem:[#allocation5 + $0x12e] sm:$0x1]
    %v4963 = vld [vmem:[#allocation5 + $0x136] sm:$0x1]
    %v4964 = vld [vmem:[#allocation5 + $0x13e] sm:$0x1]
    %v4965 = vld [vmem:[#allocation5 + $0x7] sm:$0x1]
    %v4966 = vld [vmem:[#allocation5 + $0xf] sm:$0x1]
    %v4967 = vld [vmem:[#allocation5 + $0x17] sm:$0x1]
    %v4968 = vld [vmem:[#allocation5 + $0x1f] sm:$0x1]
    %v4969 = vld [vmem:[#allocation5 + $0x27] sm:$0x1]
    %v4970 = vld [vmem:[#allocation5 + $0x2f] sm:$0x1]
    %v4971 = vld [vmem:[#allocation5 + $0x37] sm:$0x1]
    %v4972 = vld [vmem:[#allocation5 + $0x3f] sm:$0x1]
    %v4973 = vld [vmem:[#allocation5 + $0x47] sm:$0x1]
    %v4974 = vld [vmem:[#allocation5 + $0x4f] sm:$0x1]
    %v4975 = vld [vmem:[#allocation5 + $0x57] sm:$0x1]
    %v4976 = vld [vmem:[#allocation5 + $0x5f] sm:$0x1]
    %v4977 = vld [vmem:[#allocation5 + $0x67] sm:$0x1]
    %v4978 = vld [vmem:[#allocation5 + $0x6f] sm:$0x1]
    %v4979 = vld [vmem:[#allocation5 + $0x77] sm:$0x1]
    %v4980 = vld [vmem:[#allocation5 + $0x7f] sm:$0x1]
    %v4981 = vld [vmem:[#allocation5 + $0x87] sm:$0x1]
    %v4982 = vld [vmem:[#allocation5 + $0x8f] sm:$0x1]
    %v4983 = vld [vmem:[#allocation5 + $0x97] sm:$0x1]
    %v4984 = vld [vmem:[#allocation5 + $0x9f] sm:$0x1]
    %v4985 = vld [vmem:[#allocation5 + $0xa7] sm:$0x1]
    %v4986 = vld [vmem:[#allocation5 + $0xaf] sm:$0x1]
    %v4987 = vld [vmem:[#allocation5 + $0xb7] sm:$0x1]
    %v4988 = vld [vmem:[#allocation5 + $0xbf] sm:$0x1]
    %v4989 = vld [vmem:[#allocation5 + $0xc7] sm:$0x1]
    %v4990 = vld [vmem:[#allocation5 + $0xcf] sm:$0x1]
    %v4991 = vld [vmem:[#allocation5 + $0xd7] sm:$0x1]
    %v4992 = vld [vmem:[#allocation5 + $0xdf] sm:$0x1]
    %v4993 = vld [vmem:[#allocation5 + $0xe7] sm:$0x1]
    %v4994 = vld [vmem:[#allocation5 + $0xef] sm:$0x1]
    %v4995 = vld [vmem:[#allocation5 + $0xf7] sm:$0x1]
    %v4996 = vld [vmem:[#allocation5 + $0xff] sm:$0x1]
    %v4997 = vld [vmem:[#allocation5 + $0x107] sm:$0x1]
    %v4998 = vld [vmem:[#allocation5 + $0x10f] sm:$0x1]
    %v4999 = vld [vmem:[#allocation5 + $0x117] sm:$0x1]
    %v5000 = vld [vmem:[#allocation5 + $0x11f] sm:$0x1]
    %v5001 = vld [vmem:[#allocation5 + $0x127] sm:$0x1]
    %v5002 = vld [vmem:[#allocation5 + $0x12f] sm:$0x1]
    %v5003 = vld [vmem:[#allocation5 + $0x137] sm:$0x1]
    %v5004 = vld [vmem:[#allocation5 + $0x13f] sm:$0x1]
    %v5005 = vmax.f32 %v4925, %v4965
    %v5006 = vmax.f32 %v4926, %v4966
    %v5007 = vmax.f32 %v4927, %v4967
    %v5008 = vmax.f32 %v4928, %v4968
    %v5009 = vmax.f32 %v4929, %v4969
    %v5010 = vmax.f32 %v4930, %v4970
    %v5011 = vmax.f32 %v4931, %v4971
    %v5012 = vmax.f32 %v4932, %v4972
    %v5013 = vmax.f32 %v4933, %v4973
    %v5014 = vmax.f32 %v4934, %v4974
    %v5015 = vmax.f32 %v4935, %v4975
    %v5016 = vmax.f32 %v4936, %v4976
    %v5017 = vmax.f32 %v4937, %v4977
    %v5018 = vmax.f32 %v4938, %v4978
    %v5019 = vmax.f32 %v4939, %v4979
    %v5020 = vmax.f32 %v4940, %v4980
    %v5021 = vmax.f32 %v4941, %v4981
    %v5022 = vmax.f32 %v4942, %v4982
    %v5023 = vmax.f32 %v4943, %v4983
    %v5024 = vmax.f32 %v4944, %v4984
    %v5025 = vmax.f32 %v4945, %v4985
    %v5026 = vmax.f32 %v4946, %v4986
    %v5027 = vmax.f32 %v4947, %v4987
    %v5028 = vmax.f32 %v4948, %v4988
    %v5029 = vmax.f32 %v4949, %v4989
    %v5030 = vmax.f32 %v4950, %v4990
    %v5031 = vmax.f32 %v4951, %v4991
    %v5032 = vmax.f32 %v4952, %v4992
    %v5033 = vmax.f32 %v4953, %v4993
    %v5034 = vmax.f32 %v4954, %v4994
    %v5035 = vmax.f32 %v4955, %v4995
    %v5036 = vmax.f32 %v4956, %v4996
    %v5037 = vmax.f32 %v4957, %v4997
    %v5038 = vmax.f32 %v4958, %v4998
    %v5039 = vmax.f32 %v4959, %v4999
    %v5040 = vmax.f32 %v4960, %v5000
    %v5041 = vmax.f32 %v4961, %v5001
    %v5042 = vmax.f32 %v4962, %v5002
    %v5043 = vmax.f32 %v4963, %v5003
    %v5044 = vmax.f32 %v4964, %v5004
    %v5045 = vmax.f32 %v5005, 0.0
    %v5046 = vmax.f32 %v5006, 0.0
    %v5047 = vmax.f32 %v5007, 0.0
    %v5048 = vmax.f32 %v5008, 0.0
    %v5049 = vmax.f32 %v5009, 0.0
    %v5050 = vmax.f32 %v5010, 0.0
    %v5051 = vmax.f32 %v5011, 0.0
    %v5052 = vmax.f32 %v5012, 0.0
    %v5053 = vmax.f32 %v5013, 0.0
    %v5054 = vmax.f32 %v5014, 0.0
    %v5055 = vmax.f32 %v5015, 0.0
    %v5056 = vmax.f32 %v5016, 0.0
    %v5057 = vmax.f32 %v5017, 0.0
    %v5058 = vmax.f32 %v5018, 0.0
    %v5059 = vmax.f32 %v5019, 0.0
    %v5060 = vmax.f32 %v5020, 0.0
    %v5061 = vmax.f32 %v5021, 0.0
    %v5062 = vmax.f32 %v5022, 0.0
    %v5063 = vmax.f32 %v5023, 0.0
    %v5064 = vmax.f32 %v5024, 0.0
    %v5065 = vmax.f32 %v5025, 0.0
    %v5066 = vmax.f32 %v5026, 0.0
    %v5067 = vmax.f32 %v5027, 0.0
    %v5068 = vmax.f32 %v5028, 0.0
    %v5069 = vmax.f32 %v5029, 0.0
    %v5070 = vmax.f32 %v5030, 0.0
    %v5071 = vmax.f32 %v5031, 0.0
    %v5072 = vmax.f32 %v5032, 0.0
    %v5073 = vmax.f32 %v5033, 0.0
    %v5074 = vmax.f32 %v5034, 0.0
    %v5075 = vmax.f32 %v5035, 0.0
    %v5076 = vmax.f32 %v5036, 0.0
    %v5077 = vmax.f32 %v5037, 0.0
    %v5078 = vmax.f32 %v5038, 0.0
    %v5079 = vmax.f32 %v5039, 0.0
    %v5080 = vmax.f32 %v5040, 0.0
    %v5081 = vmax.f32 %v5041, 0.0
    %v5082 = vmax.f32 %v5042, 0.0
    %v5083 = vmax.f32 %v5043, 0.0
    %v5084 = vmax.f32 %v5044, 0.0
    %s5085 = scalar_lea.vmem %s10, 120
    %v5086 = vld [vmem:[%s5085] sm:$0xff]
    %v5087 = vld [vmem:[%s5085 + $0x8] sm:$0xff]
    %v5088 = vld [vmem:[%s5085 + $0x10] sm:$0xff]
    %v5089 = vld [vmem:[%s5085 + $0x18] sm:$0xff]
    %v5090 = vld [vmem:[%s5085 + $0x20] sm:$0xff]
    %v5096 = vrot.slane %v5086, 1
    %v5097 = vrot.slane %v5086, 2
    %v5098 = vrot.slane %v5086, 3
    %v5099 = vrot.slane %v5086, 4
    %v5100 = vrot.slane %v5086, 5
    %v5101 = vrot.slane %v5086, 6
    %v5102 = vrot.slane %v5086, 7
    %v5103 = vrot.slane %v5087, 1
    %v5104 = vrot.slane %v5087, 2
    %v5105 = vrot.slane %v5087, 3
    %v5106 = vrot.slane %v5087, 4
    %v5107 = vrot.slane %v5087, 5
    %v5108 = vrot.slane %v5087, 6
    %v5109 = vrot.slane %v5087, 7
    %v5110 = vrot.slane %v5088, 1
    %v5111 = vrot.slane %v5088, 2
    %v5112 = vrot.slane %v5088, 3
    %v5113 = vrot.slane %v5088, 4
    %v5114 = vrot.slane %v5088, 5
    %v5115 = vrot.slane %v5088, 6
    %v5116 = vrot.slane %v5088, 7
    %v5117 = vrot.slane %v5089, 1
    %v5118 = vrot.slane %v5089, 2
    %v5119 = vrot.slane %v5089, 3
    %v5120 = vrot.slane %v5089, 4
    %v5121 = vrot.slane %v5089, 5
    %v5122 = vrot.slane %v5089, 6
    %v5123 = vrot.slane %v5089, 7
    %v5124 = vrot.slane %v5090, 1
    %v5125 = vrot.slane %v5090, 2
    %v5126 = vrot.slane %v5090, 3
    %v5127 = vrot.slane %v5090, 4
    %v5128 = vrot.slane %v5090, 5
    %v5129 = vrot.slane %v5090, 6
    %v5130 = vrot.slane %v5090, 7
    %v5171 = vmul.f32 %v5045, %v5086
    %v5172 = vmul.f32 %v5046, %v5096
    %v5173 = vmul.f32 %v5047, %v5097
    %v5174 = vmul.f32 %v5048, %v5098
    %v5175 = vmul.f32 %v5049, %v5099
    %v5176 = vmul.f32 %v5050, %v5100
    %v5177 = vmul.f32 %v5051, %v5101
    %v5178 = vmul.f32 %v5052, %v5102
    %v5179 = vmul.f32 %v5053, %v5087
    %v5180 = vmul.f32 %v5054, %v5103
    %v5181 = vmul.f32 %v5055, %v5104
    %v5182 = vmul.f32 %v5056, %v5105
    %v5183 = vmul.f32 %v5057, %v5106
    %v5184 = vmul.f32 %v5058, %v5107
    %v5185 = vmul.f32 %v5059, %v5108
    %v5186 = vmul.f32 %v5060, %v5109
    %v5187 = vmul.f32 %v5061, %v5088
    %v5188 = vmul.f32 %v5062, %v5110
    %v5189 = vmul.f32 %v5063, %v5111
    %v5190 = vmul.f32 %v5064, %v5112
    %v5191 = vmul.f32 %v5065, %v5113
    %v5192 = vmul.f32 %v5066, %v5114
    %v5193 = vmul.f32 %v5067, %v5115
    %v5194 = vmul.f32 %v5068, %v5116
    %v5195 = vmul.f32 %v5069, %v5089
    %v5196 = vmul.f32 %v5070, %v5117
    %v5197 = vmul.f32 %v5071, %v5118
    %v5198 = vmul.f32 %v5072, %v5119
    %v5199 = vmul.f32 %v5073, %v5120
    %v5200 = vmul.f32 %v5074, %v5121
    %v5201 = vmul.f32 %v5075, %v5122
    %v5202 = vmul.f32 %v5076, %v5123
    %v5203 = vmul.f32 %v5077, %v5090
    %v5204 = vmul.f32 %v5078, %v5124
    %v5205 = vmul.f32 %v5079, %v5125
    %v5206 = vmul.f32 %v5080, %v5126
    %v5207 = vmul.f32 %v5081, %v5127
    %v5208 = vmul.f32 %v5082, %v5128
    %v5209 = vmul.f32 %v5083, %v5129
    %v5210 = vmul.f32 %v5084, %v5130
    %s5211 = scalar_lea.vmem %s11, 240
    %v5212 = vld [vmem:[%s5211] sm:$0xff]
    %v5213 = vld [vmem:[%s5211 + $0x8] sm:$0xff]
    %v5214 = vld [vmem:[%s5211 + $0x10] sm:$0xff]
    %v5215 = vld [vmem:[%s5211 + $0x18] sm:$0xff]
    %v5216 = vld [vmem:[%s5211 + $0x20] sm:$0xff]
    %v5217 = vld [vmem:[%s5211 + $0x28] sm:$0xff]
    %v5218 = vld [vmem:[%s5211 + $0x30] sm:$0xff]
    %v5219 = vld [vmem:[%s5211 + $0x38] sm:$0xff]
    %v5220 = vld [vmem:[%s5211 + $0x40] sm:$0xff]
    %v5221 = vld [vmem:[%s5211 + $0x48] sm:$0xff]
    %v5262 = vrot.slane %v5172, 7
    %v5263 = vsel %vm3714, %v5262, %v5171
    %v5264 = vrot.slane %v5173, 6
    %v5265 = vsel %vm3717, %v5264, %v5263
    %v5266 = vrot.slane %v5174, 5
    %v5267 = vsel %vm3720, %v5266, %v5265
    %v5268 = vrot.slane %v5175, 4
    %v5269 = vsel %vm3723, %v5268, %v5267
    %v5270 = vrot.slane %v5176, 3
    %v5271 = vsel %vm3726, %v5270, %v5269
    %v5272 = vrot.slane %v5177, 2
    %v5273 = vsel %vm3729, %v5272, %v5271
    %v5274 = vrot.slane %v5178, 1
    %v5275 = vsel %vm3732, %v5274, %v5273
    %v5276 = vrot.slane %v5180, 7
    %v5277 = vsel %vm3714, %v5276, %v5179
    %v5278 = vrot.slane %v5181, 6
    %v5279 = vsel %vm3717, %v5278, %v5277
    %v5280 = vrot.slane %v5182, 5
    %v5281 = vsel %vm3720, %v5280, %v5279
    %v5282 = vrot.slane %v5183, 4
    %v5283 = vsel %vm3723, %v5282, %v5281
    %v5284 = vrot.slane %v5184, 3
    %v5285 = vsel %vm3726, %v5284, %v5283
    %v5286 = vrot.slane %v5185, 2
    %v5287 = vsel %vm3729, %v5286, %v5285
    %v5288 = vrot.slane %v5186, 1
    %v5289 = vsel %vm3732, %v5288, %v5287
    %v5290 = vrot.slane %v5188, 7
    %v5291 = vsel %vm3714, %v5290, %v5187
    %v5292 = vrot.slane %v5189, 6
    %v5293 = vsel %vm3717, %v5292, %v5291
    %v5294 = vrot.slane %v5190, 5
    %v5295 = vsel %vm3720, %v5294, %v5293
    %v5296 = vrot.slane %v5191, 4
    %v5297 = vsel %vm3723, %v5296, %v5295
    %v5298 = vrot.slane %v5192, 3
    %v5299 = vsel %vm3726, %v5298, %v5297
    %v5300 = vrot.slane %v5193, 2
    %v5301 = vsel %vm3729, %v5300, %v5299
    %v5302 = vrot.slane %v5194, 1
    %v5303 = vsel %vm3732, %v5302, %v5301
    %v5304 = vrot.slane %v5196, 7
    %v5305 = vsel %vm3714, %v5304, %v5195
    %v5306 = vrot.slane %v5197, 6
    %v5307 = vsel %vm3717, %v5306, %v5305
    %v5308 = vrot.slane %v5198, 5
    %v5309 = vsel %vm3720, %v5308, %v5307
    %v5310 = vrot.slane %v5199, 4
    %v5311 = vsel %vm3723, %v5310, %v5309
    %v5312 = vrot.slane %v5200, 3
    %v5313 = vsel %vm3726, %v5312, %v5311
    %v5314 = vrot.slane %v5201, 2
    %v5315 = vsel %vm3729, %v5314, %v5313
    %v5316 = vrot.slane %v5202, 1
    %v5317 = vsel %vm3732, %v5316, %v5315
    %v5318 = vrot.slane %v5204, 7
    %v5319 = vsel %vm3714, %v5318, %v5203
    %v5320 = vrot.slane %v5205, 6
    %v5321 = vsel %vm3717, %v5320, %v5319
    %v5322 = vrot.slane %v5206, 5
    %v5323 = vsel %vm3720, %v5322, %v5321
    %v5324 = vrot.slane %v5207, 4
    %v5325 = vsel %vm3723, %v5324, %v5323
    %v5326 = vrot.slane %v5208, 3
    %v5327 = vsel %vm3726, %v5326, %v5325
    %v5328 = vrot.slane %v5209, 2
    %v5329 = vsel %vm3729, %v5328, %v5327
    %v5330 = vrot.slane %v5210, 1
    %v5331 = vsel %vm3732, %v5330, %v5329
    %v5332 = vsel %vm3336, %v5275, 0
    %v5334 = vsel %vm3336, %v5289, 0
    %v5336 = vsel %vm3336, %v5303, 0
    %v5338 = vsel %vm3336, %v5317, 0
    %v5340 = vsel %vm3336, %v5331, 0
    %5342 = vmatprep.subr.mxu0 0.0
    %5343 = vmatpush1.msra.mxu0 %v5212
    %5344 = vmatprep.subr.mxu0 0.0
    %5345 = vmatpush1.msra.mxu0 %v5213
    %5346 = vmatprep.subr.mxu0 0.0
    %5347 = vmatpush1.msra.mxu0 %v5214
    %5348 = vmatprep.subr.mxu0 0.0
    %5349 = vmatpush1.msra.mxu0 %v5215
    %5350 = vmatprep.subr.mxu0 0.0
    %5351 = vmatpush1.msra.mxu0 %v5216
    %5352 = vmatprep.subr.mxu0 0.0
    %5353 = vmatpush1.msra.mxu0 %v5217
    %5354 = vmatprep.subr.mxu0 0.0
    %5355 = vmatpush1.msra.mxu0 %v5218
    %5356 = vmatprep.subr.mxu0 0.0
    %5357 = vmatpush1.msra.mxu0 %v5219
    %5358 = vmatprep.subr.mxu0 0.0
    %5359 = vmatpush1.msra.mxu0 %v5220
    %5360 = vmatprep.subr.mxu0 0.0
    %5361 = vmatpush1.msra.mxu0 %v5221
    %5362 = vmatprep.subr.mxu0 0.0
    %5363 = vmatpush1.msra.mxu0 0.0
    %5364 = vmatprep.subr.mxu0 0.0
    %5365 = vmatpush1.msra.mxu0 0.0
    %5366 = vmatprep.subr.mxu0 0.0
    %5367 = vmatpush1.msra.mxu0 0.0
    %5368 = vmatprep.subr.mxu0 0.0
    %5369 = vmatpush1.msra.mxu0 0.0
    %5370 = vmatprep.subr.mxu0 0.0
    %5371 = vmatpush1.msra.mxu0 0.0
    %5372 = vmatprep.subr.mxu0 0.0
    %5373 = vmatpush1.msra.mxu0 0.0
    %5374 = vmatprep.subr.mxu0 0.0
    %5375 = vmatpush1.msra.mxu0 0.0
    %5376 = vmatprep.subr.mxu0 0.0
    %5377 = vmatpush1.msra.mxu0 0.0
    %5378 = vmatprep.subr.mxu0 0.0
    %5379 = vmatpush1.msra.mxu0 0.0
    %5380 = vmatprep.subr.mxu0 0.0
    %5381 = vmatpush1.msra.mxu0 0.0
    %5382 = vmatprep.subr.mxu0 0.0
    %5383 = vmatpush1.msra.mxu0 0.0
    %5384 = vmatprep.subr.mxu0 0.0
    %5385 = vmatpush1.msra.mxu0 0.0
    %5386 = vmatprep.subr.mxu0 0.0
    %5387 = vmatpush1.msra.mxu0 0.0
    %5388 = vmatprep.subr.mxu0 0.0
    %5389 = vmatpush1.msra.mxu0 0.0
    %5390 = vmatprep.subr.mxu0 0.0
    %5391 = vmatpush1.msra.mxu0 0.0
    %5392 = vmatprep.subr.mxu0 0.0
    %5393 = vmatpush1.msra.mxu0 0.0
    %5394 = vmatprep.subr.mxu0 0.0
    %5395 = vmatpush1.msra.mxu0 0.0
    %5396 = vmatprep.subr.mxu0 0.0
    %5397 = vmatpush1.msra.mxu0 0.0
    %5398 = vmatprep.subr.mxu0 0.0
    %5399 = vmatpush1.msra.mxu0 0.0
    %5400 = vmatprep.subr.mxu0 0.0
    %5401 = vmatpush1.msra.mxu0 0.0
    %5402 = vmatprep.subr.mxu0 0.0
    %5403 = vmatpush1.msra.mxu0 0.0
    %5404 = vmatprep.subr.mxu0 0.0
    %5405 = vmatpush1.msra.mxu0 0.0
    %5406 = vmatprep.mubr.f32.mxu0 0.0
    %5407 = vmatmul.mubr.f32.gmra.mrb[0].mxu0 %v5332
    %v5408 = vpop.f32.mrb[0].mxu0
    %v5409 = vadd.f32 0.0, %v5408
    %v5410 = vpop.f32.mrb[0].mxu0
    %5411 = vmatprep.mubr.f32.mxu0 0.0
    %5412 = vmatmul.mubr.f32.gmra.mrb[0].mxu0 %v5334
    %v5413 = vpop.f32.mrb[0].mxu0
    %v5414 = vadd.f32 0.0, %v5413
    %v5415 = vpop.f32.mrb[0].mxu0
    %5416 = vmatprep.mubr.f32.mxu0 0.0
    %5417 = vmatmul.mubr.f32.gmra.mrb[0].mxu0 %v5336
    %v5418 = vpop.f32.mrb[0].mxu0
    %v5419 = vadd.f32 0.0, %v5418
    %v5420 = vpop.f32.mrb[0].mxu0
    %5421 = vmatprep.mubr.f32.mxu0 0.0
    %5422 = vmatmul.mubr.f32.gmra.mrb[0].mxu0 %v5338
    %v5423 = vpop.f32.mrb[0].mxu0
    %v5424 = vadd.f32 0.0, %v5423
    %v5425 = vpop.f32.mrb[0].mxu0
    %5426 = vmatprep.mubr.f32.mxu0 0.0
    %5427 = vmatmul.mubr.f32.gmra.mrb[0].mxu0 %v5340
    %v5428 = vpop.f32.mrb[0].mxu0
    %v5429 = vadd.f32 0.0, %v5428
    %v5430 = vpop.f32.mrb[0].mxu0
    %5431 = vdwg.mxu0
    %v5432 = vadd.f32 %v4920, %v5409
    %v5433 = vadd.f32 %v4921, %v5414
    %v5434 = vadd.f32 %v4922, %v5419
    %v5435 = vadd.f32 %v4923, %v5424
    %v5436 = vadd.f32 %v4924, %v5429
    %v5437 = vmax.f32 %v5432, 0.0
    %v5438 = vmax.f32 %v5433, 0.0
    %v5439 = vmax.f32 %v5434, 0.0
    %v5440 = vmax.f32 %v5435, 0.0
    %v5441 = vmax.f32 %v5436, 0.0
    %v5442 = vld [vmem:[%s13] sm:$0xff]
    %v5443 = vld [vmem:[%s13 + $0x8] sm:$0xff]
    %v5444 = vld [vmem:[%s13 + $0x10] sm:$0xff]
    %v5445 = vld [vmem:[%s13 + $0x18] sm:$0xff]
    %v5446 = vld [vmem:[%s13 + $0x20] sm:$0xff]
    %v5447 = vmul.f32 %v5437, %v5442
    %v5448 = vmul.f32 %v5438, %v5443
    %v5449 = vmul.f32 %v5439, %v5444
    %v5450 = vmul.f32 %v5440, %v5445
    %v5451 = vmul.f32 %v5441, %v5446
    %v5452 = vld [vmem:[%s14] sm:$0xff]
    %v5453 = vld [vmem:[%s14 + $0x8] sm:$0xff]
    %v5454 = vld [vmem:[%s14 + $0x10] sm:$0xff]
    %v5455 = vld [vmem:[%s14 + $0x18] sm:$0xff]
    %v5456 = vld [vmem:[%s14 + $0x20] sm:$0xff]
    %v5457 = vld [vmem:[%s14 + $0x28] sm:$0xff]
    %v5458 = vld [vmem:[%s14 + $0x30] sm:$0x3]
    %v5459 = vld [vmem:[%s15] sm:$0x1]
    %v5461 = vlaneseq
    %v5462 = vshrl.u32 %v5461, 7
    %v5463 = vsub.s32 0, %v5462
    %v5464 = vrot.slane %v5459, %v5463
    %vm5466 = vcmask 408576
    %v5468 = vsel %vm5466, %v5447, 0
    %v5471 = vsel %vm5466, %v5448, 0
    %v5474 = vsel %vm5466, %v5449, 0
    %v5477 = vsel %vm5466, %v5450, 0
    %v5480 = vsel %vm5466, %v5451, 0
    %vm5482 = vcmask 1041408
    %v5484 = vsel %vm5482, %v5458, 0
    %5486 = vmatprep.subr.mxu0 0.0
    %5487 = vmatpush1.msra.mxu0 %v5452
    %5488 = vmatprep.subr.mxu0 0.0
    %5489 = vmatpush1.msra.mxu0 %v5453
    %5490 = vmatprep.subr.mxu0 0.0
    %5491 = vmatpush1.msra.mxu0 %v5454
    %5492 = vmatprep.subr.mxu0 0.0
    %5493 = vmatpush1.msra.mxu0 %v5455
    %5494 = vmatprep.subr.mxu0 0.0
    %5495 = vmatpush1.msra.mxu0 %v5456
    %5496 = vmatprep.subr.mxu0 0.0
    %5497 = vmatpush1.msra.mxu0 %v5457
    %5498 = vmatprep.subr.mxu0 0.0
    %5499 = vmatpush1.msra.mxu0 %v5484
    %5500 = vmatprep.subr.mxu0 0.0
    %5501 = vmatpush1.msra.mxu0 0.0
    %5502 = vmatprep.subr.mxu0 0.0
    %5503 = vmatpush1.msra.mxu0 0.0
    %5504 = vmatprep.subr.mxu0 0.0
    %5505 = vmatpush1.msra.mxu0 0.0
    %5506 = vmatprep.subr.mxu0 0.0
    %5507 = vmatpush1.msra.mxu0 0.0
    %5508 = vmatprep.subr.mxu0 0.0
    %5509 = vmatpush1.msra.mxu0 0.0
    %5510 = vmatprep.subr.mxu0 0.0
    %5511 = vmatpush1.msra.mxu0 0.0
    %5512 = vmatprep.subr.mxu0 0.0
    %5513 = vmatpush1.msra.mxu0 0.0
    %5514 = vmatprep.subr.mxu0 0.0
    %5515 = vmatpush1.msra.mxu0 0.0
    %5516 = vmatprep.subr.mxu0 0.0
    %5517 = vmatpush1.msra.mxu0 0.0
    %5518 = vmatprep.subr.mxu0 0.0
    %5519 = vmatpush1.msra.mxu0 0.0
    %5520 = vmatprep.subr.mxu0 0.0
    %5521 = vmatpush1.msra.mxu0 0.0
    %5522 = vmatprep.subr.mxu0 0.0
    %5523 = vmatpush1.msra.mxu0 0.0
    %5524 = vmatprep.subr.mxu0 0.0
    %5525 = vmatpush1.msra.mxu0 0.0
    %5526 = vmatprep.subr.mxu0 0.0
    %5527 = vmatpush1.msra.mxu0 0.0
    %5528 = vmatprep.subr.mxu0 0.0
    %5529 = vmatpush1.msra.mxu0 0.0
    %5530 = vmatprep.subr.mxu0 0.0
    %5531 = vmatpush1.msra.mxu0 0.0
    %5532 = vmatprep.subr.mxu0 0.0
    %5533 = vmatpush1.msra.mxu0 0.0
    %5534 = vmatprep.subr.mxu0 0.0
    %5535 = vmatpush1.msra.mxu0 0.0
    %5536 = vmatprep.subr.mxu0 0.0
    %5537 = vmatpush1.msra.mxu0 0.0
    %5538 = vmatprep.subr.mxu0 0.0
    %5539 = vmatpush1.msra.mxu0 0.0
    %5540 = vmatprep.subr.mxu0 0.0
    %5541 = vmatpush1.msra.mxu0 0.0
    %5542 = vmatprep.subr.mxu0 0.0
    %5543 = vmatpush1.msra.mxu0 0.0
    %5544 = vmatprep.subr.mxu0 0.0
    %5545 = vmatpush1.msra.mxu0 0.0
    %5546 = vmatprep.subr.mxu0 0.0
    %5547 = vmatpush1.msra.mxu0 0.0
    %5548 = vmatprep.subr.mxu0 0.0
    %5549 = vmatpush1.msra.mxu0 0.0
    %5550 = vmatprep.mubr.f32.mxu0 0.0
    %5551 = vmatmul.mubr.f32.gmra.mrb[0].mxu0 %v5468
    %v5552 = vpop.f32.mrb[0].mxu0
    %v5553 = vadd.f32 %v5464, %v5552
    %v5554 = vpop.f32.mrb[0].mxu0
    %5555 = vmatprep.mubr.f32.mxu0 0.0
    %5556 = vmatmul.mubr.f32.gmra.mrb[0].mxu0 %v5471
    %v5557 = vpop.f32.mrb[0].mxu0
    %v5558 = vadd.f32 %v5464, %v5557
    %v5559 = vpop.f32.mrb[0].mxu0
    %5560 = vmatprep.mubr.f32.mxu0 0.0
    %5561 = vmatmul.mubr.f32.gmra.mrb[0].mxu0 %v5474
    %v5562 = vpop.f32.mrb[0].mxu0
    %v5563 = vadd.f32 %v5464, %v5562
    %v5564 = vpop.f32.mrb[0].mxu0
    %5565 = vmatprep.mubr.f32.mxu0 0.0
    %5566 = vmatmul.mubr.f32.gmra.mrb[0].mxu0 %v5477
    %v5567 = vpop.f32.mrb[0].mxu0
    %v5568 = vadd.f32 %v5464, %v5567
    %v5569 = vpop.f32.mrb[0].mxu0
    %5570 = vmatprep.mubr.f32.mxu0 0.0
    %5571 = vmatmul.mubr.f32.gmra.mrb[0].mxu0 %v5480
    %v5572 = vpop.f32.mrb[0].mxu0
    %v5573 = vadd.f32 %v5464, %v5572
    %v5574 = vpop.f32.mrb[0].mxu0
    %5575 = vdwg.mxu0
    %vm5576 = vcmask 15360
    %v5577 = vsel %vm5576, %v5553, -inf
    %5578 = vmax.xlane.f32.xlu0 %v5577
    %v5579 = vpop.xlane.xlu0 %5578
    %v5580 = vsel %vm5576, %v5558, -inf
    %5581 = vmax.xlane.f32.xlu0 %v5580
    %v5582 = vpop.xlane.xlu0 %5581
    %v5583 = vsel %vm5576, %v5563, -inf
    %5584 = vmax.xlane.f32.xlu0 %v5583
    %v5585 = vpop.xlane.xlu0 %5584
    %v5586 = vsel %vm5576, %v5568, -inf
    %5587 = vmax.xlane.f32.xlu0 %v5586
    %v5588 = vpop.xlane.xlu0 %5587
    %v5589 = vsel %vm5576, %v5573, -inf
    %5590 = vmax.xlane.f32.xlu0 %v5589
    %v5591 = vpop.xlane.xlu0 %5590
    %v5592 = vsub.f32 %v5553, %v5579
    %v5593 = vsub.f32 %v5558, %v5582
    %v5594 = vsub.f32 %v5563, %v5585
    %v5595 = vsub.f32 %v5568, %v5588
    %v5596 = vsub.f32 %v5573, %v5591
    %v5597 = vmul.f32 %v5592, 1.442695
    %v5598 = vpow.pop %v5597
    %v5599 = vmul.f32 %v5593, 1.442695
    %v5600 = vpow.pop %v5599
    %v5601 = vmul.f32 %v5594, 1.442695
    %v5602 = vpow.pop %v5601
    %v5603 = vmul.f32 %v5595, 1.442695
    %v5604 = vpow.pop %v5603
    %v5605 = vmul.f32 %v5596, 1.442695
    %v5606 = vpow.pop %v5605
    %v5607 = vsel %vm5576, %v5598, 0.0
    %5608 = vadd.xlane.f32.xlu0 %v5607
    %v5609 = vpop.xlane.xlu0 %5608
    %v5610 = vsel %vm5576, %v5600, 0.0
    %5611 = vadd.xlane.f32.xlu0 %v5610
    %v5612 = vpop.xlane.xlu0 %5611
    %v5613 = vsel %vm5576, %v5602, 0.0
    %5614 = vadd.xlane.f32.xlu0 %v5613
    %v5615 = vpop.xlane.xlu0 %5614
    %v5616 = vsel %vm5576, %v5604, 0.0
    %5617 = vadd.xlane.f32.xlu0 %v5616
    %v5618 = vpop.xlane.xlu0 %5617
    %v5619 = vsel %vm5576, %v5606, 0.0
    %5620 = vadd.xlane.f32.xlu0 %v5619
    %v5621 = vpop.xlane.xlu0 %5620
    %v5622 = vrcp.pop %v5609
    %v5623 = vmul.f32 %v5598, %v5622
    %v5624 = vrcp.pop %v5612
    %v5625 = vmul.f32 %v5600, %v5624
    %v5626 = vrcp.pop %v5615
    %v5627 = vmul.f32 %v5602, %v5626
    %v5628 = vrcp.pop %v5618
    %v5629 = vmul.f32 %v5604, %v5628
    %v5630 = vrcp.pop %v5621
    %v5631 = vmul.f32 %v5606, %v5630
    %v5632 = vld [vmem:[%s16] sm:$0x3]
    %vm5633 = vcmask 326656
    %v5635 = vsel %vm5633, %v5632, 0
    %5637 = vmatprep.subr.mxu0 0.0
    %5638 = vmatpush1.msra.mxu0 %v5623
    %5639 = vmatprep.subr.mxu0 0.0
    %5640 = vmatpush1.msra.mxu0 %v5625
    %5641 = vmatprep.subr.mxu0 0.0
    %5642 = vmatpush1.msra.mxu0 %v5627
    %5643 = vmatprep.subr.mxu0 0.0
    %5644 = vmatpush1.msra.mxu0 %v5629
    %5645 = vmatprep.subr.mxu0 0.0
    %5646 = vmatpush1.msra.mxu0 %v5631
    %5647 = vmatprep.subr.mxu0 0.0
    %5648 = vmatpush1.msra.mxu0 0.0
    %5649 = vmatprep.subr.mxu0 0.0
    %5650 = vmatpush1.msra.mxu0 0.0
    %5651 = vmatprep.subr.mxu0 0.0
    %5652 = vmatpush1.msra.mxu0 0.0
    %5653 = vmatprep.subr.mxu0 0.0
    %5654 = vmatpush1.msra.mxu0 0.0
    %5655 = vmatprep.subr.mxu0 0.0
    %5656 = vmatpush1.msra.mxu0 0.0
    %5657 = vmatprep.subr.mxu0 0.0
    %5658 = vmatpush1.msra.mxu0 0.0
    %5659 = vmatprep.subr.mxu0 0.0
    %5660 = vmatpush1.msra.mxu0 0.0
    %5661 = vmatprep.subr.mxu0 0.0
    %5662 = vmatpush1.msra.mxu0 0.0
    %5663 = vmatprep.subr.mxu0 0.0
    %5664 = vmatpush1.msra.mxu0 0.0
    %5665 = vmatprep.subr.mxu0 0.0
    %5666 = vmatpush1.msra.mxu0 0.0
    %5667 = vmatprep.subr.mxu0 0.0
    %5668 = vmatpush1.msra.mxu0 0.0
    %5669 = vmatprep.subr.mxu0 0.0
    %5670 = vmatpush1.msra.mxu0 0.0
    %5671 = vmatprep.subr.mxu0 0.0
    %5672 = vmatpush1.msra.mxu0 0.0
    %5673 = vmatprep.subr.mxu0 0.0
    %5674 = vmatpush1.msra.mxu0 0.0
    %5675 = vmatprep.subr.mxu0 0.0
    %5676 = vmatpush1.msra.mxu0 0.0
    %5677 = vmatprep.subr.mxu0 0.0
    %5678 = vmatpush1.msra.mxu0 0.0
    %5679 = vmatprep.subr.mxu0 0.0
    %5680 = vmatpush1.msra.mxu0 0.0
    %5681 = vmatprep.subr.mxu0 0.0
    %5682 = vmatpush1.msra.mxu0 0.0
    %5683 = vmatprep.subr.mxu0 0.0
    %5684 = vmatpush1.msra.mxu0 0.0
    %5685 = vmatprep.subr.mxu0 0.0
    %5686 = vmatpush1.msra.mxu0 0.0
    %5687 = vmatprep.subr.mxu0 0.0
    %5688 = vmatpush1.msra.mxu0 0.0
    %5689 = vmatprep.subr.mxu0 0.0
    %5690 = vmatpush1.msra.mxu0 0.0
    %5691 = vmatprep.subr.mxu0 0.0
    %5692 = vmatpush1.msra.mxu0 0.0
    %5693 = vmatprep.subr.mxu0 0.0
    %5694 = vmatpush1.msra.mxu0 0.0
    %5695 = vmatprep.subr.mxu0 0.0
    %5696 = vmatpush1.msra.mxu0 0.0
    %5697 = vmatprep.subr.mxu0 0.0
    %5698 = vmatpush1.msra.mxu0 0.0
    %5699 = vmatprep.subr.mxu0 0.0
    %5700 = vmatpush1.msra.mxu0 0.0
    %5701 = vmatprep.mubr.f32.mxu0 0.0
    %5702 = vmatmul.mubr.f32.gmra.mrb[0].mxu0 %v5635
    %v5703 = vpop.f32.mrb[0].mxu0
    %v5704 = vadd.f32 0.0, %v5703
    %v5705 = vpop.f32.mrb[0].mxu0
    %5706 = vdwg.mxu0
    %vm5707 = vcmask 9216
    %5708 = vst.msk [vmem:[#allocation6] sm:$0x3] %vm5707, %v5704
    // Predicated region
    $region70: #{tpu_custom_call.1} parent=1 // pred_check
      _
    $region71: #{tpu_custom_call.1} parent=1 // pred_check_branch
      %5710 = sbr.rel (0) target = $region73
    $region72: #{tpu_custom_call.1} parent=1 // pred_region
      %s5712 = ssub.s32 32, 32
      %5713 = vsyncadd [#allocation7], %s5712
      %s5715 = sshll.u32 [#allocation6], 4
      %s5716 = int_to_ptr.vmem [resolvable:$true] %s5715
      %5718 = dma.vmem_to_hbm [thread:$0]  %s5716, 32, %s17, [#allocation7]
    $region73: #{tpu_custom_call.1} parent=1 // pred_fallthru
      _
    // Predicated region
    $region74: #{tpu_custom_call.1} parent=1 // pred_check
      _
    $region75: #{tpu_custom_call.1} parent=1 // pred_check_branch
      %5720 = sbr.rel (0) target = $region77
    $region76: #{tpu_custom_call.1} parent=1 // pred_region
      %5721 = dma.done [#allocation7], 32
    $region77: #{tpu_custom_call.1} parent=1 // pred_fallthru
      _
    %5722 = vsyncpa [#allocation7], 1

</llo_original>
